<compile_context>
chip_gen: v7x
topology: tpu7x:2x2x1
jax: 0.10.0
libtpu: 0.0.40
codegen_flags: <defaults>
</compile_context>

<pallas_src>
import math

import jax
import jax.numpy as jnp
from jax import lax
from jax.experimental import pallas as pl
from jax.experimental.pallas import tpu as pltpu


def _swish(z):
    return z * jax.nn.sigmoid(z)              # logistic -> EUP slot


def _layer_norm(z, g, b, eps=1e-5):
    mu = jnp.mean(z, axis=-1, keepdims=True)
    var = jnp.mean((z - mu) ** 2, axis=-1, keepdims=True)
    return (z - mu) * lax.rsqrt(var + eps) * g + b


def _make_kernel(tb, a_dim, h_out):
    n = tb * a_dim

    def kernel(x_ref, conn_ref, wqkv_ref, vecs_ref, w12_ref, o_ref):
        x = x_ref[...]                                          # (N, H_in) slab

        # Fused QKV projection on the flat slab (1/scale folded into wq).
        qkv = jnp.dot(x, wqkv_ref[...], preferred_element_type=jnp.float32)
        # Sublane-only split (A == 8 == native f32 sublane count): free relabel.
        qkv3 = qkv.reshape(tb, a_dim, 3 * h_out)
        q = qkv3[:, :, :h_out]
        k = qkv3[:, :, h_out:2 * h_out]
        v = qkv3[:, :, 2 * h_out:]

        # Batched (tb, A, A) attention; connectivity bias synthesized in-kernel.
        scores = jnp.einsum("bqd,bkd->bqk", q, k,
                            preferred_element_type=jnp.float32)
        bias = jnp.where(conn_ref[...] == 0.0,
                         jnp.float32(-1.0e9), jnp.float32(0.0))
        scores = scores + bias
        m = jnp.max(scores, axis=-1, keepdims=True)
        e = jnp.exp(scores - m)
        alpha = e / jnp.sum(e, axis=-1, keepdims=True)          # exact divide
        h3 = jnp.einsum("bqk,bkd->bqd", alpha, v,
                        preferred_element_type=jnp.float32)     # (tb, A, H_out)
        h = h3.reshape(n, h_out)                                # back to flat slab

        # Packed LayerNorm / bias vectors.
        g1, b1l = vecs_ref[0:1, :], vecs_ref[1:2, :]
        bias1 = vecs_ref[2:3, :]
        g2, b2l = vecs_ref[3:4, :], vecs_ref[4:5, :]
        bias2 = vecs_ref[5:6, :]
        g3, b3l = vecs_ref[6:7, :], vecs_ref[7:8, :]
        w1 = w12_ref[:, :h_out]
        w2 = w12_ref[:, h_out:]

        # forward_proj: Swish -> LN -> Linear -> Swish -> LN -> Linear
        t = _swish(h)
        t = _layer_norm(t, g1, b1l)
        t = jnp.dot(t, w1, preferred_element_type=jnp.float32) + bias1
        t = _swish(t)
        t = _layer_norm(t, g2, b2l)
        t = jnp.dot(t, w2, preferred_element_type=jnp.float32) + bias2

        # final self.norm
        o_ref[...] = _layer_norm(t, g3, b3l).astype(o_ref.dtype)

    return kernel


def dot_gat_head(x, connectivity, params, *, batch_tile=32):
    """x: (B, A, H_in) f32, connectivity: (B, A, A), params: dict."""
    B, A, H_in = x.shape
    H_out = params["wq"].shape[1]
    scale = math.sqrt(H_out)

    x = x.astype(jnp.float32)
    connectivity = connectivity.astype(jnp.float32)

    # ---- tile-size selection -------------------------------------------------
    step = 8 // math.gcd(A, 8)              # smallest tb granularity so tb*A % 8 == 0
    tb = max(step, (min(batch_tile, max(B, 1)) // step) * step)
    n_tiles = -(-B // tb)
    if n_tiles < 2 and B > step:            # keep >= 2 grid steps (v7x has 2 TCs)
        tb = max(step, ((-(-B // 2)) + step - 1) // step * step)
        n_tiles = -(-B // tb)
    Bp = n_tiles * tb
    N = tb * A

    if Bp != B:                             # pad batch to a tile multiple
        pad = Bp - B
        x = jnp.pad(x, ((0, pad), (0, 0), (0, 0)))
        connectivity = jnp.pad(connectivity, ((0, pad), (0, 0), (0, 0)))
        # padded rows get an all -1e9 score row -> uniform softmax; sliced off.

    x2 = x.reshape(Bp * A, H_in)

    # Fused QKV weight, 1/scale folded into Q.
    wqkv = jnp.concatenate(
        [params["wq"] * jnp.float32(1.0 / scale), params["wk"], params["wv"]],
        axis=1)
    # Pack MLP weights into one stream.
    w12 = jnp.concatenate([params["w1"], params["w2"]], axis=1)
    # Pack the eight (1, H_out) LN / bias vectors into a single (8, H_out).
    vecs = jnp.concatenate(
        [params["ln1_g"], params["ln1_b"], params["b1"],
         params["ln2_g"], params["ln2_b"], params["b2"],
         params["ln3_g"], params["ln3_b"]], axis=0)

    # Advisory cost estimate (per full call).
    flops = (2 * Bp * A * H_in * 3 * H_out          # QKV projection
             + 2 * Bp * A * A * H_out * 2           # scores + alpha @ V
             + 2 * Bp * A * H_out * H_out * 2)      # two MLP linears
    transcendentals = Bp * A * (A + 2 * H_out)      # exp + two sigmoids
    bytes_accessed = 4 * (Bp * A * H_in + Bp * A * A + Bp * A * H_out
                          + H_in * 3 * H_out + 8 * H_out + H_out * 2 * H_out)

    out = pl.pallas_call(
        _make_kernel(tb, A, H_out),
        out_shape=jax.ShapeDtypeStruct((Bp * A, H_out), jnp.float32),
        grid_spec=pltpu.PrefetchScalarGridSpec(
            num_scalar_prefetch=0,
            grid=(n_tiles,),
            in_specs=[
                pl.BlockSpec((N, H_in), lambda i: (i, 0)),           # x slab
                pl.BlockSpec((tb, A, A), lambda i: (i, 0, 0)),       # connectivity
                pl.BlockSpec((H_in, 3 * H_out), lambda i: (0, 0)),   # fused QKV W
                pl.BlockSpec((8, H_out), lambda i: (0, 0)),          # packed LN/bias
                pl.BlockSpec((H_out, 2 * H_out), lambda i: (0, 0)),  # packed [w1|w2]
            ],
            out_specs=pl.BlockSpec((N, H_out), lambda i: (i, 0)),
        ),
        compiler_params=pltpu.CompilerParams(
            dimension_semantics=("parallel",)),
        cost_estimate=pl.CostEstimate(
            flops=flops, transcendentals=transcendentals,
            bytes_accessed=bytes_accessed),
    )(x2, connectivity, wqkv, vecs, w12)

    return out.reshape(Bp, A, H_out)[:B]


def dot_gat_head_ref(x, connectivity, params):
    """Pure-JAX reference, mirrors the PyTorch forward exactly."""
    scale = math.sqrt(params["wq"].shape[1])
    q = x @ params["wq"]
    k = x @ params["wk"]
    v = x @ params["wv"]
    scores = jnp.einsum("bad,bcd->bac", q, k) / scale
    scores = scores + jnp.where(connectivity == 0.0, -1.0e9, 0.0)
    alpha = jax.nn.softmax(scores, axis=-1)
    h = jnp.einsum("bac,bcd->bad", alpha, v)

    def ln(z, g, b):
        mu = jnp.mean(z, -1, keepdims=True)
        var = jnp.mean((z - mu) ** 2, -1, keepdims=True)
        return (z - mu) * jax.lax.rsqrt(var + 1e-5) * g + b

    t = h * jax.nn.sigmoid(h)
    t = ln(t, params["ln1_g"], params["ln1_b"])
    t = t @ params["w1"] + params["b1"]
    t = t * jax.nn.sigmoid(t)
    t = ln(t, params["ln2_g"], params["ln2_b"])
    t = t @ params["w2"] + params["b2"]
    return ln(t, params["ln3_g"], params["ln3_b"])


def init_params(key, in_features, out_features):
    ks = jax.random.split(key, 8)
    s_in = 1.0 / math.sqrt(in_features)
    s_out = 1.0 / math.sqrt(out_features)
    return {
        # Linear weights stored pre-transposed: (in, out)
        "wq": jax.random.uniform(ks[0], (in_features, out_features), jnp.float32, -s_in, s_in),
        "wk": jax.random.uniform(ks[1], (in_features, out_features), jnp.float32, -s_in, s_in),
        "wv": jax.random.uniform(ks[2], (in_features, out_features), jnp.float32, -s_in, s_in),
        "ln1_g": jnp.ones((1, out_features), jnp.float32),
        "ln1_b": jnp.zeros((1, out_features), jnp.float32),
        "w1": jax.random.uniform(ks[3], (out_features, out_features), jnp.float32, -s_out, s_out),
        "b1": jax.random.uniform(ks[4], (1, out_features), jnp.float32, -s_out, s_out),
        "ln2_g": jnp.ones((1, out_features), jnp.float32),
        "ln2_b": jnp.zeros((1, out_features), jnp.float32),
        "w2": jax.random.uniform(ks[5], (out_features, out_features), jnp.float32, -s_out, s_out),
        "b2": jax.random.uniform(ks[6], (1, out_features), jnp.float32, -s_out, s_out),
        "ln3_g": jnp.ones((1, out_features), jnp.float32),
        "ln3_b": jnp.zeros((1, out_features), jnp.float32),
    }


if __name__ == "__main__":
    # B deliberately not a multiple of the batch tile -> exercises padding, and
    # gives 3 grid steps (>= 2 so a v7x chip keeps both TensorCores busy).
    B, A, IN_F, OUT_F = 72, 8, 32, 32

    key = jax.random.PRNGKey(0)
    k_x, k_c, k_p = jax.random.split(key, 3)

    x = jax.random.normal(k_x, (B, A, IN_F), jnp.float32)
    # Binary connectivity (graph adjacency); guarantee self-connections so no
    # row is fully masked.
    conn = (jax.random.uniform(k_c, (B, A, A)) > 0.5).astype(jnp.float32)
    conn = jnp.maximum(conn, jnp.eye(A, dtype=jnp.float32)[None])

    params = init_params(k_p, IN_F, OUT_F)

    out = dot_gat_head(x, conn, params, batch_tile=32)
    jax.block_until_ready(out)

    ref = dot_gat_head_ref(x, conn, params)
    assert out.shape == (B, A, OUT_F)
    assert jnp.allclose(out, ref, rtol=2e-3, atol=2e-3), "mismatch vs reference"

    print("KERNEL_OK")
</pallas_src>

<mosaic_0001>
module attributes {stable_mosaic.version = 11 : i64} {
  func.func @kernel(%arg0: i32, %arg1: memref<256x32xf32, #tpu.memory_space<vmem>>, %arg2: memref<32x8x8xf32, #tpu.memory_space<vmem>>, %arg3: memref<32x96xf32, #tpu.memory_space<vmem>>, %arg4: memref<8x32xf32, #tpu.memory_space<vmem>>, %arg5: memref<32x64xf32, #tpu.memory_space<vmem>>, %arg6: memref<256x32xf32, #tpu.memory_space<vmem>>) attributes {dimension_semantics = [#tpu.dimension_semantics<parallel>], iteration_bounds = array<i64: 3>, scalar_prefetch = 0 : i64, scratch_operands = 0 : i64, tpu.core_type = #tpu.core_type<tc>, window_params = [{transform_indices = @transform_0, window_bounds = array<i64: 256, 32>}, {transform_indices = @transform_1, window_bounds = array<i64: 32, 8, 8>}, {pipeline_mode = #tpu.pipeline_mode<synchronous>, transform_indices = @transform_2, window_bounds = array<i64: 32, 96>}, {pipeline_mode = #tpu.pipeline_mode<synchronous>, transform_indices = @transform_3, window_bounds = array<i64: 8, 32>}, {pipeline_mode = #tpu.pipeline_mode<synchronous>, transform_indices = @transform_4, window_bounds = array<i64: 32, 64>}, {transform_indices = @transform_5, window_bounds = array<i64: 256, 32>}]} {
    %c0 = arith.constant 0 : index
    %c0_0 = arith.constant 0 : index
    %0 = vector.load %arg1[%c0, %c0_0] : memref<256x32xf32, #tpu.memory_space<vmem>>, vector<256x32xf32>
    %c0_1 = arith.constant 0 : index
    %c0_2 = arith.constant 0 : index
    %1 = vector.load %arg3[%c0_1, %c0_2] : memref<32x96xf32, #tpu.memory_space<vmem>>, vector<32x96xf32>
    %cst = arith.constant dense<0.000000e+00> : vector<256x96xf32>
    %2 = tpu.matmul %0, %1, %cst {dimension_numbers = #tpu.dot_dimension_numbers<[1], [0], [0], [1], [0, 0, 1, 1], [], []>} : vector<256x32xf32>, vector<32x96xf32>, vector<256x96xf32> -> vector<256x96xf32>
    %3 = vector.shape_cast %2 : vector<256x96xf32> to vector<32x8x96xf32>
    %4 = vector.extract_strided_slice %3 {offsets = [0, 0, 0], sizes = [32, 8, 32], strides = [1, 1, 1]} : vector<32x8x96xf32> to vector<32x8x32xf32>
    %5 = vector.extract_strided_slice %3 {offsets = [0, 0, 32], sizes = [32, 8, 32], strides = [1, 1, 1]} : vector<32x8x96xf32> to vector<32x8x32xf32>
    %6 = vector.extract_strided_slice %3 {offsets = [0, 0, 64], sizes = [32, 8, 32], strides = [1, 1, 1]} : vector<32x8x96xf32> to vector<32x8x32xf32>
    "tpu.trace_start"() <{level = 10 : i32, message = "bqd,bkd->bqk"}> : () -> ()
    %cst_3 = arith.constant dense<0.000000e+00> : vector<32x8x8xf32>
    %7 = tpu.matmul %4, %5, %cst_3 {dimension_numbers = #tpu.dot_dimension_numbers<[2], [2], [1], [1], [0, 0, 0, 1, 1, 1], [0], [0]>} : vector<32x8x32xf32>, vector<32x8x32xf32>, vector<32x8x8xf32> -> vector<32x8x8xf32>
    "tpu.trace_stop"() : () -> ()
    %c0_4 = arith.constant 0 : index
    %c0_5 = arith.constant 0 : index
    %c0_6 = arith.constant 0 : index
    %8 = vector.load %arg2[%c0_4, %c0_5, %c0_6] : memref<32x8x8xf32, #tpu.memory_space<vmem>>, vector<32x8x8xf32>
    %cst_7 = arith.constant 0.000000e+00 : f32
    %9 = vector.broadcast %cst_7 : f32 to vector<32x8x8xf32>
    %10 = arith.cmpf oeq, %8, %9 : vector<32x8x8xf32>
    %cst_8 = arith.constant -1.000000e+09 : f32
    %cst_9 = arith.constant 0.000000e+00 : f32
    %11 = vector.broadcast %cst_8 : f32 to vector<32x8x8xf32>
    %12 = vector.broadcast %cst_9 : f32 to vector<32x8x8xf32>
    %13 = arith.select %10, %11, %12 : vector<32x8x8xi1>, vector<32x8x8xf32>
    %14 = arith.addf %7, %13 : vector<32x8x8xf32>
    %cst_10 = arith.constant dense<0xFF800000> : vector<32x8xf32>
    %15 = vector.multi_reduction <maximumf>, %14, %cst_10 [2] : vector<32x8x8xf32> to vector<32x8xf32>
    %16 = vector.shape_cast %15 : vector<32x8xf32> to vector<32x8x1xf32>
    %17 = vector.broadcast %16 : vector<32x8x1xf32> to vector<32x8x8xf32>
    %18 = arith.subf %14, %17 : vector<32x8x8xf32>
    %19 = math.exp %18 : vector<32x8x8xf32>
    %cst_11 = arith.constant dense<0.000000e+00> : vector<32x8xf32>
    %20 = vector.multi_reduction <add>, %19, %cst_11 [2] : vector<32x8x8xf32> to vector<32x8xf32>
    %21 = vector.shape_cast %20 : vector<32x8xf32> to vector<32x8x1xf32>
    %22 = vector.broadcast %21 : vector<32x8x1xf32> to vector<32x8x8xf32>
    %23 = arith.divf %19, %22 : vector<32x8x8xf32>
    "tpu.trace_start"() <{level = 10 : i32, message = "bqk,bkd->bqd"}> : () -> ()
    %cst_12 = arith.constant dense<0.000000e+00> : vector<32x8x32xf32>
    %24 = tpu.matmul %23, %6, %cst_12 {dimension_numbers = #tpu.dot_dimension_numbers<[2], [1], [1], [2], [0, 0, 0, 1, 1, 2], [0], [0]>} : vector<32x8x8xf32>, vector<32x8x32xf32>, vector<32x8x32xf32> -> vector<32x8x32xf32>
    "tpu.trace_stop"() : () -> ()
    %25 = vector.shape_cast %24 : vector<32x8x32xf32> to vector<256x32xf32>
    %c0_13 = arith.constant 0 : index
    %c0_14 = arith.constant 0 : index
    %26 = vector.load %arg4[%c0_13, %c0_14] : memref<8x32xf32, #tpu.memory_space<vmem>>, vector<1x32xf32>
    %c1 = arith.constant 1 : index
    %c0_15 = arith.constant 0 : index
    %27 = vector.load %arg4[%c1, %c0_15] : memref<8x32xf32, #tpu.memory_space<vmem>>, vector<1x32xf32>
    %c2 = arith.constant 2 : index
    %c0_16 = arith.constant 0 : index
    %28 = vector.load %arg4[%c2, %c0_16] : memref<8x32xf32, #tpu.memory_space<vmem>>, vector<1x32xf32>
    %c3 = arith.constant 3 : index
    %c0_17 = arith.constant 0 : index
    %29 = vector.load %arg4[%c3, %c0_17] : memref<8x32xf32, #tpu.memory_space<vmem>>, vector<1x32xf32>
    %c4 = arith.constant 4 : index
    %c0_18 = arith.constant 0 : index
    %30 = vector.load %arg4[%c4, %c0_18] : memref<8x32xf32, #tpu.memory_space<vmem>>, vector<1x32xf32>
    %c5 = arith.constant 5 : index
    %c0_19 = arith.constant 0 : index
    %31 = vector.load %arg4[%c5, %c0_19] : memref<8x32xf32, #tpu.memory_space<vmem>>, vector<1x32xf32>
    %c6 = arith.constant 6 : index
    %c0_20 = arith.constant 0 : index
    %32 = vector.load %arg4[%c6, %c0_20] : memref<8x32xf32, #tpu.memory_space<vmem>>, vector<1x32xf32>
    %c7 = arith.constant 7 : index
    %c0_21 = arith.constant 0 : index
    %33 = vector.load %arg4[%c7, %c0_21] : memref<8x32xf32, #tpu.memory_space<vmem>>, vector<1x32xf32>
    %c0_22 = arith.constant 0 : index
    %c0_23 = arith.constant 0 : index
    %34 = vector.load %arg5[%c0_22, %c0_23] : memref<32x64xf32, #tpu.memory_space<vmem>>, vector<32x32xf32>
    %c0_24 = arith.constant 0 : index
    %c32 = arith.constant 32 : index
    %35 = vector.load %arg5[%c0_24, %c32] : memref<32x64xf32, #tpu.memory_space<vmem>>, vector<32x32xf32>
    %36 = arith.negf %25 : vector<256x32xf32>
    %37 = math.exp %36 : vector<256x32xf32>
    %cst_25 = arith.constant 1.000000e+00 : f32
    %38 = vector.broadcast %cst_25 : f32 to vector<256x32xf32>
    %39 = arith.addf %38, %37 : vector<256x32xf32>
    %40 = arith.divf %38, %39 : vector<256x32xf32>
    %41 = arith.mulf %25, %40 : vector<256x32xf32>
    %cst_26 = arith.constant dense<0.000000e+00> : vector<256xf32>
    %42 = vector.multi_reduction <add>, %41, %cst_26 [1] : vector<256x32xf32> to vector<256xf32>
    %43 = vector.shape_cast %42 : vector<256xf32> to vector<256x1xf32>
    %cst_27 = arith.constant 3.200000e+01 : f32
    %44 = vector.broadcast %cst_27 : f32 to vector<256x1xf32>
    %45 = arith.divf %43, %44 : vector<256x1xf32>
    %46 = vector.broadcast %45 : vector<256x1xf32> to vector<256x32xf32>
    %47 = arith.subf %41, %46 : vector<256x32xf32>
    %48 = arith.mulf %47, %47 : vector<256x32xf32>
    %cst_28 = arith.constant dense<0.000000e+00> : vector<256xf32>
    %49 = vector.multi_reduction <add>, %48, %cst_28 [1] : vector<256x32xf32> to vector<256xf32>
    %50 = vector.shape_cast %49 : vector<256xf32> to vector<256x1xf32>
    %cst_29 = arith.constant 3.200000e+01 : f32
    %51 = vector.broadcast %cst_29 : f32 to vector<256x1xf32>
    %52 = arith.divf %50, %51 : vector<256x1xf32>
    %53 = vector.broadcast %45 : vector<256x1xf32> to vector<256x32xf32>
    %54 = arith.subf %41, %53 : vector<256x32xf32>
    %cst_30 = arith.constant 9.99999974E-6 : f32
    %55 = vector.broadcast %cst_30 : f32 to vector<256x1xf32>
    %56 = arith.addf %52, %55 : vector<256x1xf32>
    %57 = math.rsqrt %56 : vector<256x1xf32>
    %58 = vector.broadcast %57 : vector<256x1xf32> to vector<256x32xf32>
    %59 = arith.mulf %54, %58 : vector<256x32xf32>
    %60 = vector.broadcast %26 : vector<1x32xf32> to vector<256x32xf32>
    %61 = arith.mulf %59, %60 : vector<256x32xf32>
    %62 = vector.broadcast %27 : vector<1x32xf32> to vector<256x32xf32>
    %63 = arith.addf %61, %62 : vector<256x32xf32>
    %cst_31 = arith.constant dense<0.000000e+00> : vector<256x32xf32>
    %64 = tpu.matmul %63, %34, %cst_31 {dimension_numbers = #tpu.dot_dimension_numbers<[1], [0], [0], [1], [0, 0, 1, 1], [], []>} : vector<256x32xf32>, vector<32x32xf32>, vector<256x32xf32> -> vector<256x32xf32>
    %65 = vector.broadcast %28 : vector<1x32xf32> to vector<256x32xf32>
    %66 = arith.addf %64, %65 : vector<256x32xf32>
    %67 = arith.negf %66 : vector<256x32xf32>
    %68 = math.exp %67 : vector<256x32xf32>
    %cst_32 = arith.constant 1.000000e+00 : f32
    %69 = vector.broadcast %cst_32 : f32 to vector<256x32xf32>
    %70 = arith.addf %69, %68 : vector<256x32xf32>
    %71 = arith.divf %69, %70 : vector<256x32xf32>
    %72 = arith.mulf %66, %71 : vector<256x32xf32>
    %cst_33 = arith.constant dense<0.000000e+00> : vector<256xf32>
    %73 = vector.multi_reduction <add>, %72, %cst_33 [1] : vector<256x32xf32> to vector<256xf32>
    %74 = vector.shape_cast %73 : vector<256xf32> to vector<256x1xf32>
    %cst_34 = arith.constant 3.200000e+01 : f32
    %75 = vector.broadcast %cst_34 : f32 to vector<256x1xf32>
    %76 = arith.divf %74, %75 : vector<256x1xf32>
    %77 = vector.broadcast %76 : vector<256x1xf32> to vector<256x32xf32>
    %78 = arith.subf %72, %77 : vector<256x32xf32>
    %79 = arith.mulf %78, %78 : vector<256x32xf32>
    %cst_35 = arith.constant dense<0.000000e+00> : vector<256xf32>
    %80 = vector.multi_reduction <add>, %79, %cst_35 [1] : vector<256x32xf32> to vector<256xf32>
    %81 = vector.shape_cast %80 : vector<256xf32> to vector<256x1xf32>
    %cst_36 = arith.constant 3.200000e+01 : f32
    %82 = vector.broadcast %cst_36 : f32 to vector<256x1xf32>
    %83 = arith.divf %81, %82 : vector<256x1xf32>
    %84 = vector.broadcast %76 : vector<256x1xf32> to vector<256x32xf32>
    %85 = arith.subf %72, %84 : vector<256x32xf32>
    %cst_37 = arith.constant 9.99999974E-6 : f32
    %86 = vector.broadcast %cst_37 : f32 to vector<256x1xf32>
    %87 = arith.addf %83, %86 : vector<256x1xf32>
    %88 = math.rsqrt %87 : vector<256x1xf32>
    %89 = vector.broadcast %88 : vector<256x1xf32> to vector<256x32xf32>
    %90 = arith.mulf %85, %89 : vector<256x32xf32>
    %91 = vector.broadcast %29 : vector<1x32xf32> to vector<256x32xf32>
    %92 = arith.mulf %90, %91 : vector<256x32xf32>
    %93 = vector.broadcast %30 : vector<1x32xf32> to vector<256x32xf32>
    %94 = arith.addf %92, %93 : vector<256x32xf32>
    %cst_38 = arith.constant dense<0.000000e+00> : vector<256x32xf32>
    %95 = tpu.matmul %94, %35, %cst_38 {dimension_numbers = #tpu.dot_dimension_numbers<[1], [0], [0], [1], [0, 0, 1, 1], [], []>} : vector<256x32xf32>, vector<32x32xf32>, vector<256x32xf32> -> vector<256x32xf32>
    %96 = vector.broadcast %31 : vector<1x32xf32> to vector<256x32xf32>
    %97 = arith.addf %95, %96 : vector<256x32xf32>
    %cst_39 = arith.constant dense<0.000000e+00> : vector<256xf32>
    %98 = vector.multi_reduction <add>, %97, %cst_39 [1] : vector<256x32xf32> to vector<256xf32>
    %99 = vector.shape_cast %98 : vector<256xf32> to vector<256x1xf32>
    %cst_40 = arith.constant 3.200000e+01 : f32
    %100 = vector.broadcast %cst_40 : f32 to vector<256x1xf32>
    %101 = arith.divf %99, %100 : vector<256x1xf32>
    %102 = vector.broadcast %101 : vector<256x1xf32> to vector<256x32xf32>
    %103 = arith.subf %97, %102 : vector<256x32xf32>
    %104 = arith.mulf %103, %103 : vector<256x32xf32>
    %cst_41 = arith.constant dense<0.000000e+00> : vector<256xf32>
    %105 = vector.multi_reduction <add>, %104, %cst_41 [1] : vector<256x32xf32> to vector<256xf32>
    %106 = vector.shape_cast %105 : vector<256xf32> to vector<256x1xf32>
    %cst_42 = arith.constant 3.200000e+01 : f32
    %107 = vector.broadcast %cst_42 : f32 to vector<256x1xf32>
    %108 = arith.divf %106, %107 : vector<256x1xf32>
    %109 = vector.broadcast %101 : vector<256x1xf32> to vector<256x32xf32>
    %110 = arith.subf %97, %109 : vector<256x32xf32>
    %cst_43 = arith.constant 9.99999974E-6 : f32
    %111 = vector.broadcast %cst_43 : f32 to vector<256x1xf32>
    %112 = arith.addf %108, %111 : vector<256x1xf32>
    %113 = math.rsqrt %112 : vector<256x1xf32>
    %114 = vector.broadcast %113 : vector<256x1xf32> to vector<256x32xf32>
    %115 = arith.mulf %110, %114 : vector<256x32xf32>
    %116 = vector.broadcast %32 : vector<1x32xf32> to vector<256x32xf32>
    %117 = arith.mulf %115, %116 : vector<256x32xf32>
    %118 = vector.broadcast %33 : vector<1x32xf32> to vector<256x32xf32>
    %119 = arith.addf %117, %118 : vector<256x32xf32>
    %c0_44 = arith.constant 0 : index
    %c0_45 = arith.constant 0 : index
    %120 = vector.load %arg6[%c0_44, %c0_45] : memref<256x32xf32, #tpu.memory_space<vmem>>, vector<256x32xf32>
    tpu.vector_store %arg6[%c0_44, %c0_45], %119 {strides = array<i32>} : memref<256x32xf32, #tpu.memory_space<vmem>>, vector<256x32xf32>,
    return
  }
  func.func @transform_0(%arg0: i32) -> (i32, i32) {
    %c0_i32 = arith.constant 0 : i32
    %c0_i32_0 = arith.constant 0 : i32
    return %arg0, %c0_i32 : i32, i32
  }
  func.func @transform_1(%arg0: i32) -> (i32, i32, i32) {
    %c0_i32 = arith.constant 0 : i32
    %c0_i32_0 = arith.constant 0 : i32
    %c0_i32_1 = arith.constant 0 : i32
    return %arg0, %c0_i32, %c0_i32_0 : i32, i32, i32
  }
  func.func @transform_2(%arg0: i32) -> (i32, i32) {
    %c0_i32 = arith.constant 0 : i32
    %c0_i32_0 = arith.constant 0 : i32
    %c0_i32_1 = arith.constant 0 : i32
    return %c0_i32, %c0_i32_0 : i32, i32
  }
  func.func @transform_3(%arg0: i32) -> (i32, i32) {
    %c0_i32 = arith.constant 0 : i32
    %c0_i32_0 = arith.constant 0 : i32
    %c0_i32_1 = arith.constant 0 : i32
    return %c0_i32, %c0_i32_0 : i32, i32
  }
  func.func @transform_4(%arg0: i32) -> (i32, i32) {
    %c0_i32 = arith.constant 0 : i32
    %c0_i32_0 = arith.constant 0 : i32
    %c0_i32_1 = arith.constant 0 : i32
    return %c0_i32, %c0_i32_0 : i32, i32
  }
  func.func @transform_5(%arg0: i32) -> (i32, i32) {
    %c0_i32 = arith.constant 0 : i32
    %c0_i32_0 = arith.constant 0 : i32
    return %arg0, %c0_i32 : i32, i32
  }
}

</mosaic_0001>

<llo_original>
// kernel: tpu_custom_call.1
$region0: #{tpu_custom_call.1}
  #allocation0 [shape = 'u32[]', space=smem, size = 0x4, offset = 0x4, fixed_abs, tag = 'smem constant byte address 0x4 - core index']
  #allocation1 [shape = 'u32[144,128]{1,0:T(1,128)}', space=vmem, size = 0x12000, scoped, tag = 'internal scratch']
  %s0 = inlined_call_operand.vmem [shape: f32[768,32], index: 0, kind: input, shape index: {}]
  %s1 = inlined_call_operand.vmem [shape: f32[96,8,8], index: 1, kind: input, shape index: {}]
  %s2 = inlined_call_operand.vmem [shape: f32[32,96], index: 2, kind: input, shape index: {}]
  %s3 = inlined_call_operand.vmem [shape: f32[8,32], index: 3, kind: input, shape index: {}]
  %s4 = inlined_call_operand.vmem [shape: f32[32,64], index: 4, kind: input, shape index: {}]
  %s5 = inlined_call_operand.vmem [shape: f32[768,32], index: 5, kind: output, shape index: {}]
  %s6 = sld [smem:[#allocation0]]
  $region53: #{tpu_custom_call.1} parent=0
    _
  %s8 = ssub.s32 1, %s6
  %s9 = scalar_select 0, %s8, %s6
  loop: start=0, step=1, limit=5
  $region2: #{tpu_custom_call.1} parent=0 // loop_pre_header
    _
  $region3: #{tpu_custom_call.1} parent=0 // loop_header
    %s11 = sphi 0, %s15
    %p12 = scmp.ge.s32.totalorder %s11, 5
    %s21 = sphi 0, %s23
    %s24 = sphi 0, %s21
    %s25 = sphi 0, %s24
    %s41 = sphi 0, %s25
    %s47 = sphi 0, %s49
    %s50 = sphi 0, %s47
    %s51 = sphi 0, %s50
    %s67 = sphi 0, %s51
    %s71 = sphi 0, %s71
    %s73 = sphi 0, %s71
    %s74 = sphi 0, %s73
    %s88 = sphi 0, %s74
    %s92 = sphi 0, %s92
    %s94 = sphi 0, %s92
    %s95 = sphi 0, %s94
    %s109 = sphi 0, %s95
    %s113 = sphi 0, %s113
    %s115 = sphi 0, %s113
    %s116 = sphi 0, %s115
    %s130 = sphi 0, %s116
    %s136 = sphi 0, %s138
    %s139 = sphi 0, %s136
    %s140 = sphi 0, %s139
    %s156 = sphi 0, %s140
  $region4: #{tpu_custom_call.1} parent=0 // loop_header_branch
    %14 = sbr.rel (%p12) target = $region8
  $region5: #{tpu_custom_call.1} parent=0 // loop_body
    %s16 = ssub.s32 %s11, 1
    %s17 = ssub.s32 %s11, 2
    %s18 = sadd.s32 %s11, 1
    %s19 = ssub.s32 %s11, %s18
    %p20 = scmp.eq.s32.totalorder %s19, 0
    %s22 = sadd.s32 %s21, 1
    %s23 = scalar_select %p20, %s21, %s22
    %p26 = pneg %p20
    %p27 = scmp.eq.s32.totalorder %s11, 2
    %p28 = por %p26, %p27
    %p29 = scmp.ne.s32.totalorder %s21, %s24
    %p30 = scmp.eq.s32.totalorder %s11, 0
    %p31 = por %p29, %p30
    %p32 = scmp.ne.s32.totalorder %s21, %s24
    %p33 = scmp.eq.s32.totalorder %s16, 2
    %p34 = por %p32, %p33
    %p35 = scmp.ne.s32.totalorder %s24, %s25
    %p36 = scmp.eq.s32.totalorder %s16, 0
    %p37 = por %p35, %p36
    %p38 = scmp.ne.s32.totalorder %s24, %s25
    %p39 = scmp.eq.s32.totalorder %s17, 2
    %p40 = por %p38, %p39
    %p42 = scmp.ne.s32.totalorder %s25, %s41
    %p43 = scmp.eq.s32.totalorder %s17, 0
    %p44 = por %p42, %p43
    %s45 = ssub.s32 %s11, %s18
    %p46 = scmp.eq.s32.totalorder %s45, 0
    %s48 = sadd.s32 %s47, 1
    %s49 = scalar_select %p46, %s47, %s48
    %p52 = pneg %p46
    %p53 = scmp.eq.s32.totalorder %s11, 2
    %p54 = por %p52, %p53
    %p55 = scmp.ne.s32.totalorder %s47, %s50
    %p56 = scmp.eq.s32.totalorder %s11, 0
    %p57 = por %p55, %p56
    %p58 = scmp.ne.s32.totalorder %s47, %s50
    %p59 = scmp.eq.s32.totalorder %s16, 2
    %p60 = por %p58, %p59
    %p61 = scmp.ne.s32.totalorder %s50, %s51
    %p62 = scmp.eq.s32.totalorder %s16, 0
    %p63 = por %p61, %p62
    %p64 = scmp.ne.s32.totalorder %s50, %s51
    %p65 = scmp.eq.s32.totalorder %s17, 2
    %p66 = por %p64, %p65
    %p68 = scmp.ne.s32.totalorder %s51, %s67
    %p69 = scmp.eq.s32.totalorder %s17, 0
    %p70 = por %p68, %p69
    %s72 = sadd.s32 %s71, 1
    %p75 = scmp.eq.s32.totalorder %s11, 2
    %p76 = scmp.ne.s32.totalorder %s71, %s73
    %p77 = scmp.eq.s32.totalorder %s11, 0
    %p78 = por %p76, %p77
    %p79 = scmp.ne.s32.totalorder %s71, %s73
    %p80 = scmp.eq.s32.totalorder %s16, 2
    %p81 = por %p79, %p80
    %p82 = scmp.ne.s32.totalorder %s73, %s74
    %p83 = scmp.eq.s32.totalorder %s16, 0
    %p84 = por %p82, %p83
    %p85 = scmp.ne.s32.totalorder %s73, %s74
    %p86 = scmp.eq.s32.totalorder %s17, 2
    %p87 = por %p85, %p86
    %p89 = scmp.ne.s32.totalorder %s74, %s88
    %p90 = scmp.eq.s32.totalorder %s17, 0
    %p91 = por %p89, %p90
    %s93 = sadd.s32 %s92, 1
    %p96 = scmp.eq.s32.totalorder %s11, 2
    %p97 = scmp.ne.s32.totalorder %s92, %s94
    %p98 = scmp.eq.s32.totalorder %s11, 0
    %p99 = por %p97, %p98
    %p100 = scmp.ne.s32.totalorder %s92, %s94
    %p101 = scmp.eq.s32.totalorder %s16, 2
    %p102 = por %p100, %p101
    %p103 = scmp.ne.s32.totalorder %s94, %s95
    %p104 = scmp.eq.s32.totalorder %s16, 0
    %p105 = por %p103, %p104
    %p106 = scmp.ne.s32.totalorder %s94, %s95
    %p107 = scmp.eq.s32.totalorder %s17, 2
    %p108 = por %p106, %p107
    %p110 = scmp.ne.s32.totalorder %s95, %s109
    %p111 = scmp.eq.s32.totalorder %s17, 0
    %p112 = por %p110, %p111
    %s114 = sadd.s32 %s113, 1
    %p117 = scmp.eq.s32.totalorder %s11, 2
    %p118 = scmp.ne.s32.totalorder %s113, %s115
    %p119 = scmp.eq.s32.totalorder %s11, 0
    %p120 = por %p118, %p119
    %p121 = scmp.ne.s32.totalorder %s113, %s115
    %p122 = scmp.eq.s32.totalorder %s16, 2
    %p123 = por %p121, %p122
    %p124 = scmp.ne.s32.totalorder %s115, %s116
    %p125 = scmp.eq.s32.totalorder %s16, 0
    %p126 = por %p124, %p125
    %p127 = scmp.ne.s32.totalorder %s115, %s116
    %p128 = scmp.eq.s32.totalorder %s17, 2
    %p129 = por %p127, %p128
    %p131 = scmp.ne.s32.totalorder %s116, %s130
    %p132 = scmp.eq.s32.totalorder %s17, 0
    %p133 = por %p131, %p132
    %s134 = ssub.s32 %s11, %s18
    %p135 = scmp.eq.s32.totalorder %s134, 0
    %s137 = sadd.s32 %s136, 1
    %s138 = scalar_select %p135, %s136, %s137
    %p141 = pneg %p135
    %p142 = scmp.eq.s32.totalorder %s11, 2
    %p143 = por %p141, %p142
    %p144 = scmp.ne.s32.totalorder %s136, %s139
    %p145 = scmp.eq.s32.totalorder %s11, 0
    %p146 = por %p144, %p145
    %p147 = scmp.ne.s32.totalorder %s136, %s139
    %p148 = scmp.eq.s32.totalorder %s16, 2
    %p149 = por %p147, %p148
    %p150 = scmp.ne.s32.totalorder %s139, %s140
    %p151 = scmp.eq.s32.totalorder %s16, 0
    %p152 = por %p150, %p151
    %p153 = scmp.ne.s32.totalorder %s139, %s140
    %p154 = scmp.eq.s32.totalorder %s17, 2
    %p155 = por %p153, %p154
    %p157 = scmp.ne.s32.totalorder %s140, %s156
    %p158 = scmp.eq.s32.totalorder %s17, 0
    %p159 = por %p157, %p158
    %p160 = scmp.le.s32.totalorder 1, %s11
    %p161 = scmp.lt.s32.totalorder %s11, 4
    %p162 = pnand %p160, %p161
    %p163 = pneg %p162
    // Predicated region
    $region9: #{tpu_custom_call.1} parent=5 // pred_check
      _
    $region10: #{tpu_custom_call.1} parent=5 // pred_check_branch
      %165 = sbr.rel (%p162) target = $region12
    $region11: #{tpu_custom_call.1} parent=5 // pred_region
      %s166 = ssub.s32 %s11, 1
      // Predicated region
      $region13: #{tpu_custom_call.1} parent=11 // pred_check
        %p167 = pneg %p84
      $region14: #{tpu_custom_call.1} parent=11 // pred_check_branch
        %169 = sbr.rel (%p167) target = $region16
      $region15: #{tpu_custom_call.1} parent=11 // pred_region
        _
      $region16: #{tpu_custom_call.1} parent=11 // pred_fallthru
        _
      // Predicated region
      $region17: #{tpu_custom_call.1} parent=11 // pred_check
        %p170 = pneg %p105
      $region18: #{tpu_custom_call.1} parent=11 // pred_check_branch
        %172 = sbr.rel (%p170) target = $region20
      $region19: #{tpu_custom_call.1} parent=11 // pred_region
        _
      $region20: #{tpu_custom_call.1} parent=11 // pred_fallthru
        _
      // Predicated region
      $region21: #{tpu_custom_call.1} parent=11 // pred_check
        %p173 = pneg %p126
      $region22: #{tpu_custom_call.1} parent=11 // pred_check_branch
        %175 = sbr.rel (%p173) target = $region24
      $region23: #{tpu_custom_call.1} parent=11 // pred_region
        _
      $region24: #{tpu_custom_call.1} parent=11 // pred_fallthru
        _
    $region12: #{tpu_custom_call.1} parent=5 // pred_fallthru
      _
    %p176 = scmp.lt.s32.totalorder %s11, 3
    // Predicated region
    $region25: #{tpu_custom_call.1} parent=5 // pred_check
      %p177 = pneg %p176
    $region26: #{tpu_custom_call.1} parent=5 // pred_check_branch
      %179 = sbr.rel (%p177) target = $region28
    $region27: #{tpu_custom_call.1} parent=5 // pred_region
      // Predicated region
      $region29: #{tpu_custom_call.1} parent=27 // pred_check
        %p180 = pneg %p31
      $region30: #{tpu_custom_call.1} parent=27 // pred_check_branch
        %182 = sbr.rel (%p180) target = $region32
      $region31: #{tpu_custom_call.1} parent=27 // pred_region
        %s183 = smul.u32 32, %s11
        %p184 = scmp.lt.s32.totalorder %s183, 95
        %s185 = scalar_select %p184, %s183, 95
        %s186 = smul.addr %s185, 8
        %s187 = scalar_lea.vmem %s0, %s186
        %s188 = smul.u32 32, %s11
      $region32: #{tpu_custom_call.1} parent=27 // pred_fallthru
        _
      // Predicated region
      $region33: #{tpu_custom_call.1} parent=27 // pred_check
        %p189 = pneg %p57
      $region34: #{tpu_custom_call.1} parent=27 // pred_check_branch
        %191 = sbr.rel (%p189) target = $region36
      $region35: #{tpu_custom_call.1} parent=27 // pred_region
        %s192 = smul.u32 32, %s11
        %p193 = scmp.lt.s32.totalorder %s192, 95
        %s194 = scalar_select %p193, %s192, 95
        %s195 = smul.addr %s194, 8
        %s196 = scalar_lea.vmem %s1, %s195
        %s197 = smul.u32 32, %s11
      $region36: #{tpu_custom_call.1} parent=27 // pred_fallthru
        _
    $region28: #{tpu_custom_call.1} parent=5 // pred_fallthru
      _
    %p198 = scmp.le.s32.totalorder 1, %s11
    %p199 = scmp.lt.s32.totalorder %s11, 4
    %p200 = pnand %p198, %p199
    %p201 = pneg %p200
    // Predicated region
    $region37: #{tpu_custom_call.1} parent=5 // pred_check
      _
    $region38: #{tpu_custom_call.1} parent=5 // pred_check_branch
      %203 = sbr.rel (%p200) target = $region40
    $region39: #{tpu_custom_call.1} parent=5 // pred_region
      %s204 = ssub.s32 %s11, 1
      %s205 = smul.u32 32, %s16
      %p206 = scmp.lt.s32.totalorder %s205, 95
      %s207 = scalar_select %p206, %s205, 95
      %s208 = smul.addr %s207, 8
      %s209 = scalar_lea.vmem %s0, %s208
      %p210 = pneg %p37
      %p211 = pneg %p34
      %s212 = smul.u32 32, %s16
      %p213 = scmp.lt.s32.totalorder %s212, 95
      %s214 = scalar_select %p213, %s212, 95
      %s215 = smul.addr %s214, 8
      %s216 = scalar_lea.vmem %s1, %s215
      %p217 = pneg %p63
      %p218 = pneg %p60
      %p219 = pneg %p84
      %p220 = pneg %p81
      %p221 = pneg %p105
      %p222 = pneg %p102
      %p223 = pneg %p126
      %p224 = pneg %p123
      %p225 = pneg %p152
      %p226 = pneg %p149
      %s227 = smul.u32 32, %s16
      %p228 = scmp.lt.s32.totalorder %s227, 95
      %s229 = scalar_select %p228, %s227, 95
      %s230 = smul.addr %s229, 8
      %s231 = scalar_lea.vmem %s5, %s230
      %s232 = smul.u32 32, %s16
      %p233 = scmp.lt.s32.totalorder %s232, 95
      %s234 = scalar_select %p233, %s232, 95
      %s235 = smul.addr %s234, 8
      %s236 = scalar_lea.vmem %s0, %s235
      %s237 = smul.u32 32, %s16
      %s238 = smul.u32 32, %s16
      %p239 = scmp.lt.s32.totalorder %s238, 95
      %s240 = scalar_select %p239, %s238, 95
      %s241 = smul.addr %s240, 8
      %s242 = scalar_lea.vmem %s1, %s241
      %s243 = smul.u32 32, %s16
      %s244 = smul.u32 32, %s16
      %p245 = scmp.lt.s32.totalorder %s244, 95
      %s246 = scalar_select %p245, %s244, 95
      %s247 = smul.addr %s246, 8
      %s248 = scalar_lea.vmem %s5, %s247
      %s249 = smul.u32 32, %s16
      %v250 = vld [vmem:[%s236] sm:$0xff]
      %v251 = vld [vmem:[%s236 + $0x8] sm:$0xff]
      %v252 = vld [vmem:[%s236 + $0x10] sm:$0xff]
      %v253 = vld [vmem:[%s236 + $0x18] sm:$0xff]
      %v254 = vld [vmem:[%s236 + $0x20] sm:$0xff]
      %v255 = vld [vmem:[%s236 + $0x28] sm:$0xff]
      %v256 = vld [vmem:[%s236 + $0x30] sm:$0xff]
      %v257 = vld [vmem:[%s236 + $0x38] sm:$0xff]
      %v258 = vld [vmem:[%s236 + $0x40] sm:$0xff]
      %v259 = vld [vmem:[%s236 + $0x48] sm:$0xff]
      %v260 = vld [vmem:[%s236 + $0x50] sm:$0xff]
      %v261 = vld [vmem:[%s236 + $0x58] sm:$0xff]
      %v262 = vld [vmem:[%s236 + $0x60] sm:$0xff]
      %v263 = vld [vmem:[%s236 + $0x68] sm:$0xff]
      %v264 = vld [vmem:[%s236 + $0x70] sm:$0xff]
      %v265 = vld [vmem:[%s236 + $0x78] sm:$0xff]
      %v266 = vld [vmem:[%s236 + $0x80] sm:$0xff]
      %v267 = vld [vmem:[%s236 + $0x88] sm:$0xff]
      %v268 = vld [vmem:[%s236 + $0x90] sm:$0xff]
      %v269 = vld [vmem:[%s236 + $0x98] sm:$0xff]
      %v270 = vld [vmem:[%s236 + $0xa0] sm:$0xff]
      %v271 = vld [vmem:[%s236 + $0xa8] sm:$0xff]
      %v272 = vld [vmem:[%s236 + $0xb0] sm:$0xff]
      %v273 = vld [vmem:[%s236 + $0xb8] sm:$0xff]
      %v274 = vld [vmem:[%s236 + $0xc0] sm:$0xff]
      %v275 = vld [vmem:[%s236 + $0xc8] sm:$0xff]
      %v276 = vld [vmem:[%s236 + $0xd0] sm:$0xff]
      %v277 = vld [vmem:[%s236 + $0xd8] sm:$0xff]
      %v278 = vld [vmem:[%s236 + $0xe0] sm:$0xff]
      %v279 = vld [vmem:[%s236 + $0xe8] sm:$0xff]
      %v280 = vld [vmem:[%s236 + $0xf0] sm:$0xff]
      %v281 = vld [vmem:[%s236 + $0xf8] sm:$0xff]
      %v282 = vld [vmem:[%s2] sm:$0xff]
      %v283 = vld [vmem:[%s2 + $0x8] sm:$0xff]
      %v284 = vld [vmem:[%s2 + $0x10] sm:$0xff]
      %v285 = vld [vmem:[%s2 + $0x18] sm:$0xff]
      %vm286 = vcmask 261120
      %v288 = vsel %vm286, %v250, 0
      %v291 = vsel %vm286, %v251, 0
      %v294 = vsel %vm286, %v252, 0
      %v297 = vsel %vm286, %v253, 0
      %v300 = vsel %vm286, %v254, 0
      %v303 = vsel %vm286, %v255, 0
      %v306 = vsel %vm286, %v256, 0
      %v309 = vsel %vm286, %v257, 0
      %v312 = vsel %vm286, %v258, 0
      %v315 = vsel %vm286, %v259, 0
      %v318 = vsel %vm286, %v260, 0
      %v321 = vsel %vm286, %v261, 0
      %v324 = vsel %vm286, %v262, 0
      %v327 = vsel %vm286, %v263, 0
      %v330 = vsel %vm286, %v264, 0
      %v333 = vsel %vm286, %v265, 0
      %v336 = vsel %vm286, %v266, 0
      %v339 = vsel %vm286, %v267, 0
      %v342 = vsel %vm286, %v268, 0
      %v345 = vsel %vm286, %v269, 0
      %v348 = vsel %vm286, %v270, 0
      %v351 = vsel %vm286, %v271, 0
      %v354 = vsel %vm286, %v272, 0
      %v357 = vsel %vm286, %v273, 0
      %v360 = vsel %vm286, %v274, 0
      %v363 = vsel %vm286, %v275, 0
      %v366 = vsel %vm286, %v276, 0
      %v369 = vsel %vm286, %v277, 0
      %v372 = vsel %vm286, %v278, 0
      %v375 = vsel %vm286, %v279, 0
      %v378 = vsel %vm286, %v280, 0
      %v381 = vsel %vm286, %v281, 0
      %383 = vmatprep.subr.mxu0 0.0
      %384 = vmatpush1.msra.mxu0 %v282
      %385 = vmatprep.subr.mxu0 0.0
      %386 = vmatpush1.msra.mxu0 %v283
      %387 = vmatprep.subr.mxu0 0.0
      %388 = vmatpush1.msra.mxu0 %v284
      %389 = vmatprep.subr.mxu0 0.0
      %390 = vmatpush1.msra.mxu0 %v285
      %391 = vmatprep.subr.mxu0 0.0
      %392 = vmatpush1.msra.mxu0 0.0
      %393 = vmatprep.subr.mxu0 0.0
      %394 = vmatpush1.msra.mxu0 0.0
      %395 = vmatprep.subr.mxu0 0.0
      %396 = vmatpush1.msra.mxu0 0.0
      %397 = vmatprep.subr.mxu0 0.0
      %398 = vmatpush1.msra.mxu0 0.0
      %399 = vmatprep.subr.mxu0 0.0
      %400 = vmatpush1.msra.mxu0 0.0
      %401 = vmatprep.subr.mxu0 0.0
      %402 = vmatpush1.msra.mxu0 0.0
      %403 = vmatprep.subr.mxu0 0.0
      %404 = vmatpush1.msra.mxu0 0.0
      %405 = vmatprep.subr.mxu0 0.0
      %406 = vmatpush1.msra.mxu0 0.0
      %407 = vmatprep.subr.mxu0 0.0
      %408 = vmatpush1.msra.mxu0 0.0
      %409 = vmatprep.subr.mxu0 0.0
      %410 = vmatpush1.msra.mxu0 0.0
      %411 = vmatprep.subr.mxu0 0.0
      %412 = vmatpush1.msra.mxu0 0.0
      %413 = vmatprep.subr.mxu0 0.0
      %414 = vmatpush1.msra.mxu0 0.0
      %415 = vmatprep.subr.mxu0 0.0
      %416 = vmatpush1.msra.mxu0 0.0
      %417 = vmatprep.subr.mxu0 0.0
      %418 = vmatpush1.msra.mxu0 0.0
      %419 = vmatprep.subr.mxu0 0.0
      %420 = vmatpush1.msra.mxu0 0.0
      %421 = vmatprep.subr.mxu0 0.0
      %422 = vmatpush1.msra.mxu0 0.0
      %423 = vmatprep.subr.mxu0 0.0
      %424 = vmatpush1.msra.mxu0 0.0
      %425 = vmatprep.subr.mxu0 0.0
      %426 = vmatpush1.msra.mxu0 0.0
      %427 = vmatprep.subr.mxu0 0.0
      %428 = vmatpush1.msra.mxu0 0.0
      %429 = vmatprep.subr.mxu0 0.0
      %430 = vmatpush1.msra.mxu0 0.0
      %431 = vmatprep.subr.mxu0 0.0
      %432 = vmatpush1.msra.mxu0 0.0
      %433 = vmatprep.subr.mxu0 0.0
      %434 = vmatpush1.msra.mxu0 0.0
      %435 = vmatprep.subr.mxu0 0.0
      %436 = vmatpush1.msra.mxu0 0.0
      %437 = vmatprep.subr.mxu0 0.0
      %438 = vmatpush1.msra.mxu0 0.0
      %439 = vmatprep.subr.mxu0 0.0
      %440 = vmatpush1.msra.mxu0 0.0
      %441 = vmatprep.subr.mxu0 0.0
      %442 = vmatpush1.msra.mxu0 0.0
      %443 = vmatprep.subr.mxu0 0.0
      %444 = vmatpush1.msra.mxu0 0.0
      %445 = vmatprep.subr.mxu0 0.0
      %446 = vmatpush1.msra.mxu0 0.0
      %447 = vmatprep.mubr.f32.mxu0 0.0
      %448 = vmatmul.mubr.f32.gmra.mrb[0].mxu0 %v288
      %v449 = vpop.f32.mrb[0].mxu0
      %v450 = vadd.f32 0.0, %v449
      %v451 = vpop.f32.mrb[0].mxu0
      %452 = vmatprep.mubr.f32.mxu0 0.0
      %453 = vmatmul.mubr.f32.gmra.mrb[0].mxu0 %v291
      %v454 = vpop.f32.mrb[0].mxu0
      %v455 = vadd.f32 0.0, %v454
      %v456 = vpop.f32.mrb[0].mxu0
      %457 = vmatprep.mubr.f32.mxu0 0.0
      %458 = vmatmul.mubr.f32.gmra.mrb[0].mxu0 %v294
      %v459 = vpop.f32.mrb[0].mxu0
      %v460 = vadd.f32 0.0, %v459
      %v461 = vpop.f32.mrb[0].mxu0
      %462 = vmatprep.mubr.f32.mxu0 0.0
      %463 = vmatmul.mubr.f32.gmra.mrb[0].mxu0 %v297
      %v464 = vpop.f32.mrb[0].mxu0
      %v465 = vadd.f32 0.0, %v464
      %v466 = vpop.f32.mrb[0].mxu0
      %467 = vmatprep.mubr.f32.mxu0 0.0
      %468 = vmatmul.mubr.f32.gmra.mrb[0].mxu0 %v300
      %v469 = vpop.f32.mrb[0].mxu0
      %v470 = vadd.f32 0.0, %v469
      %v471 = vpop.f32.mrb[0].mxu0
      %472 = vmatprep.mubr.f32.mxu0 0.0
      %473 = vmatmul.mubr.f32.gmra.mrb[0].mxu0 %v303
      %v474 = vpop.f32.mrb[0].mxu0
      %v475 = vadd.f32 0.0, %v474
      %v476 = vpop.f32.mrb[0].mxu0
      %477 = vmatprep.mubr.f32.mxu0 0.0
      %478 = vmatmul.mubr.f32.gmra.mrb[0].mxu0 %v306
      %v479 = vpop.f32.mrb[0].mxu0
      %v480 = vadd.f32 0.0, %v479
      %v481 = vpop.f32.mrb[0].mxu0
      %482 = vmatprep.mubr.f32.mxu0 0.0
      %483 = vmatmul.mubr.f32.gmra.mrb[0].mxu0 %v309
      %v484 = vpop.f32.mrb[0].mxu0
      %v485 = vadd.f32 0.0, %v484
      %v486 = vpop.f32.mrb[0].mxu0
      %487 = vmatprep.mubr.f32.mxu0 0.0
      %488 = vmatmul.mubr.f32.gmra.mrb[0].mxu0 %v312
      %v489 = vpop.f32.mrb[0].mxu0
      %v490 = vadd.f32 0.0, %v489
      %v491 = vpop.f32.mrb[0].mxu0
      %492 = vmatprep.mubr.f32.mxu0 0.0
      %493 = vmatmul.mubr.f32.gmra.mrb[0].mxu0 %v315
      %v494 = vpop.f32.mrb[0].mxu0
      %v495 = vadd.f32 0.0, %v494
      %v496 = vpop.f32.mrb[0].mxu0
      %497 = vmatprep.mubr.f32.mxu0 0.0
      %498 = vmatmul.mubr.f32.gmra.mrb[0].mxu0 %v318
      %v499 = vpop.f32.mrb[0].mxu0
      %v500 = vadd.f32 0.0, %v499
      %v501 = vpop.f32.mrb[0].mxu0
      %502 = vmatprep.mubr.f32.mxu0 0.0
      %503 = vmatmul.mubr.f32.gmra.mrb[0].mxu0 %v321
      %v504 = vpop.f32.mrb[0].mxu0
      %v505 = vadd.f32 0.0, %v504
      %v506 = vpop.f32.mrb[0].mxu0
      %507 = vmatprep.mubr.f32.mxu0 0.0
      %508 = vmatmul.mubr.f32.gmra.mrb[0].mxu0 %v324
      %v509 = vpop.f32.mrb[0].mxu0
      %v510 = vadd.f32 0.0, %v509
      %v511 = vpop.f32.mrb[0].mxu0
      %512 = vmatprep.mubr.f32.mxu0 0.0
      %513 = vmatmul.mubr.f32.gmra.mrb[0].mxu0 %v327
      %v514 = vpop.f32.mrb[0].mxu0
      %v515 = vadd.f32 0.0, %v514
      %v516 = vpop.f32.mrb[0].mxu0
      %517 = vmatprep.mubr.f32.mxu0 0.0
      %518 = vmatmul.mubr.f32.gmra.mrb[0].mxu0 %v330
      %v519 = vpop.f32.mrb[0].mxu0
      %v520 = vadd.f32 0.0, %v519
      %v521 = vpop.f32.mrb[0].mxu0
      %522 = vmatprep.mubr.f32.mxu0 0.0
      %523 = vmatmul.mubr.f32.gmra.mrb[0].mxu0 %v333
      %v524 = vpop.f32.mrb[0].mxu0
      %v525 = vadd.f32 0.0, %v524
      %v526 = vpop.f32.mrb[0].mxu0
      %527 = vmatprep.mubr.f32.mxu0 0.0
      %528 = vmatmul.mubr.f32.gmra.mrb[0].mxu0 %v336
      %v529 = vpop.f32.mrb[0].mxu0
      %v530 = vadd.f32 0.0, %v529
      %v531 = vpop.f32.mrb[0].mxu0
      %532 = vmatprep.mubr.f32.mxu0 0.0
      %533 = vmatmul.mubr.f32.gmra.mrb[0].mxu0 %v339
      %v534 = vpop.f32.mrb[0].mxu0
      %v535 = vadd.f32 0.0, %v534
      %v536 = vpop.f32.mrb[0].mxu0
      %537 = vmatprep.mubr.f32.mxu0 0.0
      %538 = vmatmul.mubr.f32.gmra.mrb[0].mxu0 %v342
      %v539 = vpop.f32.mrb[0].mxu0
      %v540 = vadd.f32 0.0, %v539
      %v541 = vpop.f32.mrb[0].mxu0
      %542 = vmatprep.mubr.f32.mxu0 0.0
      %543 = vmatmul.mubr.f32.gmra.mrb[0].mxu0 %v345
      %v544 = vpop.f32.mrb[0].mxu0
      %v545 = vadd.f32 0.0, %v544
      %v546 = vpop.f32.mrb[0].mxu0
      %547 = vmatprep.mubr.f32.mxu0 0.0
      %548 = vmatmul.mubr.f32.gmra.mrb[0].mxu0 %v348
      %v549 = vpop.f32.mrb[0].mxu0
      %v550 = vadd.f32 0.0, %v549
      %v551 = vpop.f32.mrb[0].mxu0
      %552 = vmatprep.mubr.f32.mxu0 0.0
      %553 = vmatmul.mubr.f32.gmra.mrb[0].mxu0 %v351
      %v554 = vpop.f32.mrb[0].mxu0
      %v555 = vadd.f32 0.0, %v554
      %v556 = vpop.f32.mrb[0].mxu0
      %557 = vmatprep.mubr.f32.mxu0 0.0
      %558 = vmatmul.mubr.f32.gmra.mrb[0].mxu0 %v354
      %v559 = vpop.f32.mrb[0].mxu0
      %v560 = vadd.f32 0.0, %v559
      %v561 = vpop.f32.mrb[0].mxu0
      %562 = vmatprep.mubr.f32.mxu0 0.0
      %563 = vmatmul.mubr.f32.gmra.mrb[0].mxu0 %v357
      %v564 = vpop.f32.mrb[0].mxu0
      %v565 = vadd.f32 0.0, %v564
      %v566 = vpop.f32.mrb[0].mxu0
      %567 = vmatprep.mubr.f32.mxu0 0.0
      %568 = vmatmul.mubr.f32.gmra.mrb[0].mxu0 %v360
      %v569 = vpop.f32.mrb[0].mxu0
      %v570 = vadd.f32 0.0, %v569
      %v571 = vpop.f32.mrb[0].mxu0
      %572 = vmatprep.mubr.f32.mxu0 0.0
      %573 = vmatmul.mubr.f32.gmra.mrb[0].mxu0 %v363
      %v574 = vpop.f32.mrb[0].mxu0
      %v575 = vadd.f32 0.0, %v574
      %v576 = vpop.f32.mrb[0].mxu0
      %577 = vmatprep.mubr.f32.mxu0 0.0
      %578 = vmatmul.mubr.f32.gmra.mrb[0].mxu0 %v366
      %v579 = vpop.f32.mrb[0].mxu0
      %v580 = vadd.f32 0.0, %v579
      %v581 = vpop.f32.mrb[0].mxu0
      %582 = vmatprep.mubr.f32.mxu0 0.0
      %583 = vmatmul.mubr.f32.gmra.mrb[0].mxu0 %v369
      %v584 = vpop.f32.mrb[0].mxu0
      %v585 = vadd.f32 0.0, %v584
      %v586 = vpop.f32.mrb[0].mxu0
      %587 = vmatprep.mubr.f32.mxu0 0.0
      %588 = vmatmul.mubr.f32.gmra.mrb[0].mxu0 %v372
      %v589 = vpop.f32.mrb[0].mxu0
      %v590 = vadd.f32 0.0, %v589
      %v591 = vpop.f32.mrb[0].mxu0
      %592 = vmatprep.mubr.f32.mxu0 0.0
      %593 = vmatmul.mubr.f32.gmra.mrb[0].mxu0 %v375
      %v594 = vpop.f32.mrb[0].mxu0
      %v595 = vadd.f32 0.0, %v594
      %v596 = vpop.f32.mrb[0].mxu0
      %597 = vmatprep.mubr.f32.mxu0 0.0
      %598 = vmatmul.mubr.f32.gmra.mrb[0].mxu0 %v378
      %v599 = vpop.f32.mrb[0].mxu0
      %v600 = vadd.f32 0.0, %v599
      %v601 = vpop.f32.mrb[0].mxu0
      %602 = vmatprep.mubr.f32.mxu0 0.0
      %603 = vmatmul.mubr.f32.gmra.mrb[0].mxu0 %v381
      %v604 = vpop.f32.mrb[0].mxu0
      %v605 = vadd.f32 0.0, %v604
      %v606 = vpop.f32.mrb[0].mxu0
      %607 = vdwg.mxu0
      %v608 = vld [vmem:[%s242] sm:$0xff]
      %v609 = vld [vmem:[%s242 + $0x8] sm:$0xff]
      %v610 = vld [vmem:[%s242 + $0x10] sm:$0xff]
      %v611 = vld [vmem:[%s242 + $0x18] sm:$0xff]
      %v612 = vld [vmem:[%s242 + $0x20] sm:$0xff]
      %v613 = vld [vmem:[%s242 + $0x28] sm:$0xff]
      %v614 = vld [vmem:[%s242 + $0x30] sm:$0xff]
      %v615 = vld [vmem:[%s242 + $0x38] sm:$0xff]
      %v616 = vld [vmem:[%s242 + $0x40] sm:$0xff]
      %v617 = vld [vmem:[%s242 + $0x48] sm:$0xff]
      %v618 = vld [vmem:[%s242 + $0x50] sm:$0xff]
      %v619 = vld [vmem:[%s242 + $0x58] sm:$0xff]
      %v620 = vld [vmem:[%s242 + $0x60] sm:$0xff]
      %v621 = vld [vmem:[%s242 + $0x68] sm:$0xff]
      %v622 = vld [vmem:[%s242 + $0x70] sm:$0xff]
      %v623 = vld [vmem:[%s242 + $0x78] sm:$0xff]
      %v624 = vld [vmem:[%s242 + $0x80] sm:$0xff]
      %v625 = vld [vmem:[%s242 + $0x88] sm:$0xff]
      %v626 = vld [vmem:[%s242 + $0x90] sm:$0xff]
      %v627 = vld [vmem:[%s242 + $0x98] sm:$0xff]
      %v628 = vld [vmem:[%s242 + $0xa0] sm:$0xff]
      %v629 = vld [vmem:[%s242 + $0xa8] sm:$0xff]
      %v630 = vld [vmem:[%s242 + $0xb0] sm:$0xff]
      %v631 = vld [vmem:[%s242 + $0xb8] sm:$0xff]
      %v632 = vld [vmem:[%s242 + $0xc0] sm:$0xff]
      %v633 = vld [vmem:[%s242 + $0xc8] sm:$0xff]
      %v634 = vld [vmem:[%s242 + $0xd0] sm:$0xff]
      %v635 = vld [vmem:[%s242 + $0xd8] sm:$0xff]
      %v636 = vld [vmem:[%s242 + $0xe0] sm:$0xff]
      %v637 = vld [vmem:[%s242 + $0xe8] sm:$0xff]
      %v638 = vld [vmem:[%s242 + $0xf0] sm:$0xff]
      %v639 = vld [vmem:[%s242 + $0xf8] sm:$0xff]
      %vm640 = vcmp.eq.f32.partialorder %v608, 0.0
      %vm641 = vcmp.eq.f32.partialorder %v609, 0.0
      %vm642 = vcmp.eq.f32.partialorder %v610, 0.0
      %vm643 = vcmp.eq.f32.partialorder %v611, 0.0
      %vm644 = vcmp.eq.f32.partialorder %v612, 0.0
      %vm645 = vcmp.eq.f32.partialorder %v613, 0.0
      %vm646 = vcmp.eq.f32.partialorder %v614, 0.0
      %vm647 = vcmp.eq.f32.partialorder %v615, 0.0
      %vm648 = vcmp.eq.f32.partialorder %v616, 0.0
      %vm649 = vcmp.eq.f32.partialorder %v617, 0.0
      %vm650 = vcmp.eq.f32.partialorder %v618, 0.0
      %vm651 = vcmp.eq.f32.partialorder %v619, 0.0
      %vm652 = vcmp.eq.f32.partialorder %v620, 0.0
      %vm653 = vcmp.eq.f32.partialorder %v621, 0.0
      %vm654 = vcmp.eq.f32.partialorder %v622, 0.0
      %vm655 = vcmp.eq.f32.partialorder %v623, 0.0
      %vm656 = vcmp.eq.f32.partialorder %v624, 0.0
      %vm657 = vcmp.eq.f32.partialorder %v625, 0.0
      %vm658 = vcmp.eq.f32.partialorder %v626, 0.0
      %vm659 = vcmp.eq.f32.partialorder %v627, 0.0
      %vm660 = vcmp.eq.f32.partialorder %v628, 0.0
      %vm661 = vcmp.eq.f32.partialorder %v629, 0.0
      %vm662 = vcmp.eq.f32.partialorder %v630, 0.0
      %vm663 = vcmp.eq.f32.partialorder %v631, 0.0
      %vm664 = vcmp.eq.f32.partialorder %v632, 0.0
      %vm665 = vcmp.eq.f32.partialorder %v633, 0.0
      %vm666 = vcmp.eq.f32.partialorder %v634, 0.0
      %vm667 = vcmp.eq.f32.partialorder %v635, 0.0
      %vm668 = vcmp.eq.f32.partialorder %v636, 0.0
      %vm669 = vcmp.eq.f32.partialorder %v637, 0.0
      %vm670 = vcmp.eq.f32.partialorder %v638, 0.0
      %vm671 = vcmp.eq.f32.partialorder %v639, 0.0
      %v672 = vsel %vm640, -1e+09, 0.0
      %v673 = vsel %vm641, -1e+09, 0.0
      %v674 = vsel %vm642, -1e+09, 0.0
      %v675 = vsel %vm643, -1e+09, 0.0
      %v676 = vsel %vm644, -1e+09, 0.0
      %v677 = vsel %vm645, -1e+09, 0.0
      %v678 = vsel %vm646, -1e+09, 0.0
      %v679 = vsel %vm647, -1e+09, 0.0
      %v680 = vsel %vm648, -1e+09, 0.0
      %v681 = vsel %vm649, -1e+09, 0.0
      %v682 = vsel %vm650, -1e+09, 0.0
      %v683 = vsel %vm651, -1e+09, 0.0
      %v684 = vsel %vm652, -1e+09, 0.0
      %v685 = vsel %vm653, -1e+09, 0.0
      %v686 = vsel %vm654, -1e+09, 0.0
      %v687 = vsel %vm655, -1e+09, 0.0
      %v688 = vsel %vm656, -1e+09, 0.0
      %v689 = vsel %vm657, -1e+09, 0.0
      %v690 = vsel %vm658, -1e+09, 0.0
      %v691 = vsel %vm659, -1e+09, 0.0
      %v692 = vsel %vm660, -1e+09, 0.0
      %v693 = vsel %vm661, -1e+09, 0.0
      %v694 = vsel %vm662, -1e+09, 0.0
      %v695 = vsel %vm663, -1e+09, 0.0
      %v696 = vsel %vm664, -1e+09, 0.0
      %v697 = vsel %vm665, -1e+09, 0.0
      %v698 = vsel %vm666, -1e+09, 0.0
      %v699 = vsel %vm667, -1e+09, 0.0
      %v700 = vsel %vm668, -1e+09, 0.0
      %v701 = vsel %vm669, -1e+09, 0.0
      %v702 = vsel %vm670, -1e+09, 0.0
      %v703 = vsel %vm671, -1e+09, 0.0
      %705 = vrot.lane.b32.xlu0 %v450, 96
      %v706 = vpop.permute.xlu0 %705
      %v707 = vsel %vm286, %v450, 0
      %v709 = vsel %vm286, %v706, 0
      %711 = vmatprep.subr.mxu0 0.0
      %712 = vmatpush1.xpose.msra.mxu0 %v709
      %713 = vmatprep.subr.mxu0 0.0
      %714 = vmatpush1.xpose.msra.mxu0 0.0
      %715 = vmatprep.subr.mxu0 0.0
      %716 = vmatpush1.xpose.msra.mxu0 0.0
      %717 = vmatprep.subr.mxu0 0.0
      %718 = vmatpush1.xpose.msra.mxu0 0.0
      %719 = vmatprep.subr.mxu0 0.0
      %720 = vmatpush1.xpose.msra.mxu0 0.0
      %721 = vmatprep.subr.mxu0 0.0
      %722 = vmatpush1.xpose.msra.mxu0 0.0
      %723 = vmatprep.subr.mxu0 0.0
      %724 = vmatpush1.xpose.msra.mxu0 0.0
      %725 = vmatprep.subr.mxu0 0.0
      %726 = vmatpush1.xpose.msra.mxu0 0.0
      %727 = vmatprep.subr.mxu0 0.0
      %728 = vmatpush1.xpose.msra.mxu0 0.0
      %729 = vmatprep.subr.mxu0 0.0
      %730 = vmatpush1.xpose.msra.mxu0 0.0
      %731 = vmatprep.subr.mxu0 0.0
      %732 = vmatpush1.xpose.msra.mxu0 0.0
      %733 = vmatprep.subr.mxu0 0.0
      %734 = vmatpush1.xpose.msra.mxu0 0.0
      %735 = vmatprep.subr.mxu0 0.0
      %736 = vmatpush1.xpose.msra.mxu0 0.0
      %737 = vmatprep.subr.mxu0 0.0
      %738 = vmatpush1.xpose.msra.mxu0 0.0
      %739 = vmatprep.subr.mxu0 0.0
      %740 = vmatpush1.xpose.msra.mxu0 0.0
      %741 = vmatprep.subr.mxu0 0.0
      %742 = vmatpush1.xpose.msra.mxu0 0.0
      %743 = vmatprep.subr.mxu0 0.0
      %744 = vmatpush1.xpose.msra.mxu0 0.0
      %745 = vmatprep.subr.mxu0 0.0
      %746 = vmatpush1.xpose.msra.mxu0 0.0
      %747 = vmatprep.subr.mxu0 0.0
      %748 = vmatpush1.xpose.msra.mxu0 0.0
      %749 = vmatprep.subr.mxu0 0.0
      %750 = vmatpush1.xpose.msra.mxu0 0.0
      %751 = vmatprep.subr.mxu0 0.0
      %752 = vmatpush1.xpose.msra.mxu0 0.0
      %753 = vmatprep.subr.mxu0 0.0
      %754 = vmatpush1.xpose.msra.mxu0 0.0
      %755 = vmatprep.subr.mxu0 0.0
      %756 = vmatpush1.xpose.msra.mxu0 0.0
      %757 = vmatprep.subr.mxu0 0.0
      %758 = vmatpush1.xpose.msra.mxu0 0.0
      %759 = vmatprep.subr.mxu0 0.0
      %760 = vmatpush1.xpose.msra.mxu0 0.0
      %761 = vmatprep.subr.mxu0 0.0
      %762 = vmatpush1.xpose.msra.mxu0 0.0
      %763 = vmatprep.subr.mxu0 0.0
      %764 = vmatpush1.xpose.msra.mxu0 0.0
      %765 = vmatprep.subr.mxu0 0.0
      %766 = vmatpush1.xpose.msra.mxu0 0.0
      %767 = vmatprep.subr.mxu0 0.0
      %768 = vmatpush1.xpose.msra.mxu0 0.0
      %769 = vmatprep.subr.mxu0 0.0
      %770 = vmatpush1.xpose.msra.mxu0 0.0
      %771 = vmatprep.subr.mxu0 0.0
      %772 = vmatpush1.xpose.msra.mxu0 0.0
      %773 = vmatprep.subr.mxu0 0.0
      %774 = vmatpush1.xpose.msra.mxu0 0.0
      %775 = vmatprep.mubr.f32.mxu0 0.0
      %776 = vmatmul.mubr.f32.gmra.mrb[0].mxu0 %v707
      %v777 = vpop.f32.mrb[0].mxu0
      %v778 = vadd.f32 %v672, %v777
      %v779 = vpop.f32.mrb[0].mxu0
      %780 = vdwg.mxu0
      %782 = vrot.lane.b32.xlu0 %v455, 96
      %v783 = vpop.permute.xlu0 %782
      %v784 = vsel %vm286, %v455, 0
      %v786 = vsel %vm286, %v783, 0
      %788 = vmatprep.subr.mxu0 0.0
      %789 = vmatpush1.xpose.msra.mxu0 %v786
      %790 = vmatprep.subr.mxu0 0.0
      %791 = vmatpush1.xpose.msra.mxu0 0.0
      %792 = vmatprep.subr.mxu0 0.0
      %793 = vmatpush1.xpose.msra.mxu0 0.0
      %794 = vmatprep.subr.mxu0 0.0
      %795 = vmatpush1.xpose.msra.mxu0 0.0
      %796 = vmatprep.subr.mxu0 0.0
      %797 = vmatpush1.xpose.msra.mxu0 0.0
      %798 = vmatprep.subr.mxu0 0.0
      %799 = vmatpush1.xpose.msra.mxu0 0.0
      %800 = vmatprep.subr.mxu0 0.0
      %801 = vmatpush1.xpose.msra.mxu0 0.0
      %802 = vmatprep.subr.mxu0 0.0
      %803 = vmatpush1.xpose.msra.mxu0 0.0
      %804 = vmatprep.subr.mxu0 0.0
      %805 = vmatpush1.xpose.msra.mxu0 0.0
      %806 = vmatprep.subr.mxu0 0.0
      %807 = vmatpush1.xpose.msra.mxu0 0.0
      %808 = vmatprep.subr.mxu0 0.0
      %809 = vmatpush1.xpose.msra.mxu0 0.0
      %810 = vmatprep.subr.mxu0 0.0
      %811 = vmatpush1.xpose.msra.mxu0 0.0
      %812 = vmatprep.subr.mxu0 0.0
      %813 = vmatpush1.xpose.msra.mxu0 0.0
      %814 = vmatprep.subr.mxu0 0.0
      %815 = vmatpush1.xpose.msra.mxu0 0.0
      %816 = vmatprep.subr.mxu0 0.0
      %817 = vmatpush1.xpose.msra.mxu0 0.0
      %818 = vmatprep.subr.mxu0 0.0
      %819 = vmatpush1.xpose.msra.mxu0 0.0
      %820 = vmatprep.subr.mxu0 0.0
      %821 = vmatpush1.xpose.msra.mxu0 0.0
      %822 = vmatprep.subr.mxu0 0.0
      %823 = vmatpush1.xpose.msra.mxu0 0.0
      %824 = vmatprep.subr.mxu0 0.0
      %825 = vmatpush1.xpose.msra.mxu0 0.0
      %826 = vmatprep.subr.mxu0 0.0
      %827 = vmatpush1.xpose.msra.mxu0 0.0
      %828 = vmatprep.subr.mxu0 0.0
      %829 = vmatpush1.xpose.msra.mxu0 0.0
      %830 = vmatprep.subr.mxu0 0.0
      %831 = vmatpush1.xpose.msra.mxu0 0.0
      %832 = vmatprep.subr.mxu0 0.0
      %833 = vmatpush1.xpose.msra.mxu0 0.0
      %834 = vmatprep.subr.mxu0 0.0
      %835 = vmatpush1.xpose.msra.mxu0 0.0
      %836 = vmatprep.subr.mxu0 0.0
      %837 = vmatpush1.xpose.msra.mxu0 0.0
      %838 = vmatprep.subr.mxu0 0.0
      %839 = vmatpush1.xpose.msra.mxu0 0.0
      %840 = vmatprep.subr.mxu0 0.0
      %841 = vmatpush1.xpose.msra.mxu0 0.0
      %842 = vmatprep.subr.mxu0 0.0
      %843 = vmatpush1.xpose.msra.mxu0 0.0
      %844 = vmatprep.subr.mxu0 0.0
      %845 = vmatpush1.xpose.msra.mxu0 0.0
      %846 = vmatprep.subr.mxu0 0.0
      %847 = vmatpush1.xpose.msra.mxu0 0.0
      %848 = vmatprep.subr.mxu0 0.0
      %849 = vmatpush1.xpose.msra.mxu0 0.0
      %850 = vmatprep.subr.mxu0 0.0
      %851 = vmatpush1.xpose.msra.mxu0 0.0
      %852 = vmatprep.mubr.f32.mxu0 0.0
      %853 = vmatmul.mubr.f32.gmra.mrb[0].mxu0 %v784
      %v854 = vpop.f32.mrb[0].mxu0
      %v855 = vadd.f32 %v673, %v854
      %v856 = vpop.f32.mrb[0].mxu0
      %857 = vdwg.mxu0
      %859 = vrot.lane.b32.xlu0 %v460, 96
      %v860 = vpop.permute.xlu0 %859
      %v861 = vsel %vm286, %v460, 0
      %v863 = vsel %vm286, %v860, 0
      %865 = vmatprep.subr.mxu0 0.0
      %866 = vmatpush1.xpose.msra.mxu0 %v863
      %867 = vmatprep.subr.mxu0 0.0
      %868 = vmatpush1.xpose.msra.mxu0 0.0
      %869 = vmatprep.subr.mxu0 0.0
      %870 = vmatpush1.xpose.msra.mxu0 0.0
      %871 = vmatprep.subr.mxu0 0.0
      %872 = vmatpush1.xpose.msra.mxu0 0.0
      %873 = vmatprep.subr.mxu0 0.0
      %874 = vmatpush1.xpose.msra.mxu0 0.0
      %875 = vmatprep.subr.mxu0 0.0
      %876 = vmatpush1.xpose.msra.mxu0 0.0
      %877 = vmatprep.subr.mxu0 0.0
      %878 = vmatpush1.xpose.msra.mxu0 0.0
      %879 = vmatprep.subr.mxu0 0.0
      %880 = vmatpush1.xpose.msra.mxu0 0.0
      %881 = vmatprep.subr.mxu0 0.0
      %882 = vmatpush1.xpose.msra.mxu0 0.0
      %883 = vmatprep.subr.mxu0 0.0
      %884 = vmatpush1.xpose.msra.mxu0 0.0
      %885 = vmatprep.subr.mxu0 0.0
      %886 = vmatpush1.xpose.msra.mxu0 0.0
      %887 = vmatprep.subr.mxu0 0.0
      %888 = vmatpush1.xpose.msra.mxu0 0.0
      %889 = vmatprep.subr.mxu0 0.0
      %890 = vmatpush1.xpose.msra.mxu0 0.0
      %891 = vmatprep.subr.mxu0 0.0
      %892 = vmatpush1.xpose.msra.mxu0 0.0
      %893 = vmatprep.subr.mxu0 0.0
      %894 = vmatpush1.xpose.msra.mxu0 0.0
      %895 = vmatprep.subr.mxu0 0.0
      %896 = vmatpush1.xpose.msra.mxu0 0.0
      %897 = vmatprep.subr.mxu0 0.0
      %898 = vmatpush1.xpose.msra.mxu0 0.0
      %899 = vmatprep.subr.mxu0 0.0
      %900 = vmatpush1.xpose.msra.mxu0 0.0
      %901 = vmatprep.subr.mxu0 0.0
      %902 = vmatpush1.xpose.msra.mxu0 0.0
      %903 = vmatprep.subr.mxu0 0.0
      %904 = vmatpush1.xpose.msra.mxu0 0.0
      %905 = vmatprep.subr.mxu0 0.0
      %906 = vmatpush1.xpose.msra.mxu0 0.0
      %907 = vmatprep.subr.mxu0 0.0
      %908 = vmatpush1.xpose.msra.mxu0 0.0
      %909 = vmatprep.subr.mxu0 0.0
      %910 = vmatpush1.xpose.msra.mxu0 0.0
      %911 = vmatprep.subr.mxu0 0.0
      %912 = vmatpush1.xpose.msra.mxu0 0.0
      %913 = vmatprep.subr.mxu0 0.0
      %914 = vmatpush1.xpose.msra.mxu0 0.0
      %915 = vmatprep.subr.mxu0 0.0
      %916 = vmatpush1.xpose.msra.mxu0 0.0
      %917 = vmatprep.subr.mxu0 0.0
      %918 = vmatpush1.xpose.msra.mxu0 0.0
      %919 = vmatprep.subr.mxu0 0.0
      %920 = vmatpush1.xpose.msra.mxu0 0.0
      %921 = vmatprep.subr.mxu0 0.0
      %922 = vmatpush1.xpose.msra.mxu0 0.0
      %923 = vmatprep.subr.mxu0 0.0
      %924 = vmatpush1.xpose.msra.mxu0 0.0
      %925 = vmatprep.subr.mxu0 0.0
      %926 = vmatpush1.xpose.msra.mxu0 0.0
      %927 = vmatprep.subr.mxu0 0.0
      %928 = vmatpush1.xpose.msra.mxu0 0.0
      %929 = vmatprep.mubr.f32.mxu0 0.0
      %930 = vmatmul.mubr.f32.gmra.mrb[0].mxu0 %v861
      %v931 = vpop.f32.mrb[0].mxu0
      %v932 = vadd.f32 %v674, %v931
      %v933 = vpop.f32.mrb[0].mxu0
      %934 = vdwg.mxu0
      %936 = vrot.lane.b32.xlu0 %v465, 96
      %v937 = vpop.permute.xlu0 %936
      %v938 = vsel %vm286, %v465, 0
      %v940 = vsel %vm286, %v937, 0
      %942 = vmatprep.subr.mxu0 0.0
      %943 = vmatpush1.xpose.msra.mxu0 %v940
      %944 = vmatprep.subr.mxu0 0.0
      %945 = vmatpush1.xpose.msra.mxu0 0.0
      %946 = vmatprep.subr.mxu0 0.0
      %947 = vmatpush1.xpose.msra.mxu0 0.0
      %948 = vmatprep.subr.mxu0 0.0
      %949 = vmatpush1.xpose.msra.mxu0 0.0
      %950 = vmatprep.subr.mxu0 0.0
      %951 = vmatpush1.xpose.msra.mxu0 0.0
      %952 = vmatprep.subr.mxu0 0.0
      %953 = vmatpush1.xpose.msra.mxu0 0.0
      %954 = vmatprep.subr.mxu0 0.0
      %955 = vmatpush1.xpose.msra.mxu0 0.0
      %956 = vmatprep.subr.mxu0 0.0
      %957 = vmatpush1.xpose.msra.mxu0 0.0
      %958 = vmatprep.subr.mxu0 0.0
      %959 = vmatpush1.xpose.msra.mxu0 0.0
      %960 = vmatprep.subr.mxu0 0.0
      %961 = vmatpush1.xpose.msra.mxu0 0.0
      %962 = vmatprep.subr.mxu0 0.0
      %963 = vmatpush1.xpose.msra.mxu0 0.0
      %964 = vmatprep.subr.mxu0 0.0
      %965 = vmatpush1.xpose.msra.mxu0 0.0
      %966 = vmatprep.subr.mxu0 0.0
      %967 = vmatpush1.xpose.msra.mxu0 0.0
      %968 = vmatprep.subr.mxu0 0.0
      %969 = vmatpush1.xpose.msra.mxu0 0.0
      %970 = vmatprep.subr.mxu0 0.0
      %971 = vmatpush1.xpose.msra.mxu0 0.0
      %972 = vmatprep.subr.mxu0 0.0
      %973 = vmatpush1.xpose.msra.mxu0 0.0
      %974 = vmatprep.subr.mxu0 0.0
      %975 = vmatpush1.xpose.msra.mxu0 0.0
      %976 = vmatprep.subr.mxu0 0.0
      %977 = vmatpush1.xpose.msra.mxu0 0.0
      %978 = vmatprep.subr.mxu0 0.0
      %979 = vmatpush1.xpose.msra.mxu0 0.0
      %980 = vmatprep.subr.mxu0 0.0
      %981 = vmatpush1.xpose.msra.mxu0 0.0
      %982 = vmatprep.subr.mxu0 0.0
      %983 = vmatpush1.xpose.msra.mxu0 0.0
      %984 = vmatprep.subr.mxu0 0.0
      %985 = vmatpush1.xpose.msra.mxu0 0.0
      %986 = vmatprep.subr.mxu0 0.0
      %987 = vmatpush1.xpose.msra.mxu0 0.0
      %988 = vmatprep.subr.mxu0 0.0
      %989 = vmatpush1.xpose.msra.mxu0 0.0
      %990 = vmatprep.subr.mxu0 0.0
      %991 = vmatpush1.xpose.msra.mxu0 0.0
      %992 = vmatprep.subr.mxu0 0.0
      %993 = vmatpush1.xpose.msra.mxu0 0.0
      %994 = vmatprep.subr.mxu0 0.0
      %995 = vmatpush1.xpose.msra.mxu0 0.0
      %996 = vmatprep.subr.mxu0 0.0
      %997 = vmatpush1.xpose.msra.mxu0 0.0
      %998 = vmatprep.subr.mxu0 0.0
      %999 = vmatpush1.xpose.msra.mxu0 0.0
      %1000 = vmatprep.subr.mxu0 0.0
      %1001 = vmatpush1.xpose.msra.mxu0 0.0
      %1002 = vmatprep.subr.mxu0 0.0
      %1003 = vmatpush1.xpose.msra.mxu0 0.0
      %1004 = vmatprep.subr.mxu0 0.0
      %1005 = vmatpush1.xpose.msra.mxu0 0.0
      %1006 = vmatprep.mubr.f32.mxu0 0.0
      %1007 = vmatmul.mubr.f32.gmra.mrb[0].mxu0 %v938
      %v1008 = vpop.f32.mrb[0].mxu0
      %v1009 = vadd.f32 %v675, %v1008
      %v1010 = vpop.f32.mrb[0].mxu0
      %1011 = vdwg.mxu0
      %1013 = vrot.lane.b32.xlu0 %v470, 96
      %v1014 = vpop.permute.xlu0 %1013
      %v1015 = vsel %vm286, %v470, 0
      %v1017 = vsel %vm286, %v1014, 0
      %1019 = vmatprep.subr.mxu0 0.0
      %1020 = vmatpush1.xpose.msra.mxu0 %v1017
      %1021 = vmatprep.subr.mxu0 0.0
      %1022 = vmatpush1.xpose.msra.mxu0 0.0
      %1023 = vmatprep.subr.mxu0 0.0
      %1024 = vmatpush1.xpose.msra.mxu0 0.0
      %1025 = vmatprep.subr.mxu0 0.0
      %1026 = vmatpush1.xpose.msra.mxu0 0.0
      %1027 = vmatprep.subr.mxu0 0.0
      %1028 = vmatpush1.xpose.msra.mxu0 0.0
      %1029 = vmatprep.subr.mxu0 0.0
      %1030 = vmatpush1.xpose.msra.mxu0 0.0
      %1031 = vmatprep.subr.mxu0 0.0
      %1032 = vmatpush1.xpose.msra.mxu0 0.0
      %1033 = vmatprep.subr.mxu0 0.0
      %1034 = vmatpush1.xpose.msra.mxu0 0.0
      %1035 = vmatprep.subr.mxu0 0.0
      %1036 = vmatpush1.xpose.msra.mxu0 0.0
      %1037 = vmatprep.subr.mxu0 0.0
      %1038 = vmatpush1.xpose.msra.mxu0 0.0
      %1039 = vmatprep.subr.mxu0 0.0
      %1040 = vmatpush1.xpose.msra.mxu0 0.0
      %1041 = vmatprep.subr.mxu0 0.0
      %1042 = vmatpush1.xpose.msra.mxu0 0.0
      %1043 = vmatprep.subr.mxu0 0.0
      %1044 = vmatpush1.xpose.msra.mxu0 0.0
      %1045 = vmatprep.subr.mxu0 0.0
      %1046 = vmatpush1.xpose.msra.mxu0 0.0
      %1047 = vmatprep.subr.mxu0 0.0
      %1048 = vmatpush1.xpose.msra.mxu0 0.0
      %1049 = vmatprep.subr.mxu0 0.0
      %1050 = vmatpush1.xpose.msra.mxu0 0.0
      %1051 = vmatprep.subr.mxu0 0.0
      %1052 = vmatpush1.xpose.msra.mxu0 0.0
      %1053 = vmatprep.subr.mxu0 0.0
      %1054 = vmatpush1.xpose.msra.mxu0 0.0
      %1055 = vmatprep.subr.mxu0 0.0
      %1056 = vmatpush1.xpose.msra.mxu0 0.0
      %1057 = vmatprep.subr.mxu0 0.0
      %1058 = vmatpush1.xpose.msra.mxu0 0.0
      %1059 = vmatprep.subr.mxu0 0.0
      %1060 = vmatpush1.xpose.msra.mxu0 0.0
      %1061 = vmatprep.subr.mxu0 0.0
      %1062 = vmatpush1.xpose.msra.mxu0 0.0
      %1063 = vmatprep.subr.mxu0 0.0
      %1064 = vmatpush1.xpose.msra.mxu0 0.0
      %1065 = vmatprep.subr.mxu0 0.0
      %1066 = vmatpush1.xpose.msra.mxu0 0.0
      %1067 = vmatprep.subr.mxu0 0.0
      %1068 = vmatpush1.xpose.msra.mxu0 0.0
      %1069 = vmatprep.subr.mxu0 0.0
      %1070 = vmatpush1.xpose.msra.mxu0 0.0
      %1071 = vmatprep.subr.mxu0 0.0
      %1072 = vmatpush1.xpose.msra.mxu0 0.0
      %1073 = vmatprep.subr.mxu0 0.0
      %1074 = vmatpush1.xpose.msra.mxu0 0.0
      %1075 = vmatprep.subr.mxu0 0.0
      %1076 = vmatpush1.xpose.msra.mxu0 0.0
      %1077 = vmatprep.subr.mxu0 0.0
      %1078 = vmatpush1.xpose.msra.mxu0 0.0
      %1079 = vmatprep.subr.mxu0 0.0
      %1080 = vmatpush1.xpose.msra.mxu0 0.0
      %1081 = vmatprep.subr.mxu0 0.0
      %1082 = vmatpush1.xpose.msra.mxu0 0.0
      %1083 = vmatprep.mubr.f32.mxu0 0.0
      %1084 = vmatmul.mubr.f32.gmra.mrb[0].mxu0 %v1015
      %v1085 = vpop.f32.mrb[0].mxu0
      %v1086 = vadd.f32 %v676, %v1085
      %v1087 = vpop.f32.mrb[0].mxu0
      %1088 = vdwg.mxu0
      %1090 = vrot.lane.b32.xlu0 %v475, 96
      %v1091 = vpop.permute.xlu0 %1090
      %v1092 = vsel %vm286, %v475, 0
      %v1094 = vsel %vm286, %v1091, 0
      %1096 = vmatprep.subr.mxu0 0.0
      %1097 = vmatpush1.xpose.msra.mxu0 %v1094
      %1098 = vmatprep.subr.mxu0 0.0
      %1099 = vmatpush1.xpose.msra.mxu0 0.0
      %1100 = vmatprep.subr.mxu0 0.0
      %1101 = vmatpush1.xpose.msra.mxu0 0.0
      %1102 = vmatprep.subr.mxu0 0.0
      %1103 = vmatpush1.xpose.msra.mxu0 0.0
      %1104 = vmatprep.subr.mxu0 0.0
      %1105 = vmatpush1.xpose.msra.mxu0 0.0
      %1106 = vmatprep.subr.mxu0 0.0
      %1107 = vmatpush1.xpose.msra.mxu0 0.0
      %1108 = vmatprep.subr.mxu0 0.0
      %1109 = vmatpush1.xpose.msra.mxu0 0.0
      %1110 = vmatprep.subr.mxu0 0.0
      %1111 = vmatpush1.xpose.msra.mxu0 0.0
      %1112 = vmatprep.subr.mxu0 0.0
      %1113 = vmatpush1.xpose.msra.mxu0 0.0
      %1114 = vmatprep.subr.mxu0 0.0
      %1115 = vmatpush1.xpose.msra.mxu0 0.0
      %1116 = vmatprep.subr.mxu0 0.0
      %1117 = vmatpush1.xpose.msra.mxu0 0.0
      %1118 = vmatprep.subr.mxu0 0.0
      %1119 = vmatpush1.xpose.msra.mxu0 0.0
      %1120 = vmatprep.subr.mxu0 0.0
      %1121 = vmatpush1.xpose.msra.mxu0 0.0
      %1122 = vmatprep.subr.mxu0 0.0
      %1123 = vmatpush1.xpose.msra.mxu0 0.0
      %1124 = vmatprep.subr.mxu0 0.0
      %1125 = vmatpush1.xpose.msra.mxu0 0.0
      %1126 = vmatprep.subr.mxu0 0.0
      %1127 = vmatpush1.xpose.msra.mxu0 0.0
      %1128 = vmatprep.subr.mxu0 0.0
      %1129 = vmatpush1.xpose.msra.mxu0 0.0
      %1130 = vmatprep.subr.mxu0 0.0
      %1131 = vmatpush1.xpose.msra.mxu0 0.0
      %1132 = vmatprep.subr.mxu0 0.0
      %1133 = vmatpush1.xpose.msra.mxu0 0.0
      %1134 = vmatprep.subr.mxu0 0.0
      %1135 = vmatpush1.xpose.msra.mxu0 0.0
      %1136 = vmatprep.subr.mxu0 0.0
      %1137 = vmatpush1.xpose.msra.mxu0 0.0
      %1138 = vmatprep.subr.mxu0 0.0
      %1139 = vmatpush1.xpose.msra.mxu0 0.0
      %1140 = vmatprep.subr.mxu0 0.0
      %1141 = vmatpush1.xpose.msra.mxu0 0.0
      %1142 = vmatprep.subr.mxu0 0.0
      %1143 = vmatpush1.xpose.msra.mxu0 0.0
      %1144 = vmatprep.subr.mxu0 0.0
      %1145 = vmatpush1.xpose.msra.mxu0 0.0
      %1146 = vmatprep.subr.mxu0 0.0
      %1147 = vmatpush1.xpose.msra.mxu0 0.0
      %1148 = vmatprep.subr.mxu0 0.0
      %1149 = vmatpush1.xpose.msra.mxu0 0.0
      %1150 = vmatprep.subr.mxu0 0.0
      %1151 = vmatpush1.xpose.msra.mxu0 0.0
      %1152 = vmatprep.subr.mxu0 0.0
      %1153 = vmatpush1.xpose.msra.mxu0 0.0
      %1154 = vmatprep.subr.mxu0 0.0
      %1155 = vmatpush1.xpose.msra.mxu0 0.0
      %1156 = vmatprep.subr.mxu0 0.0
      %1157 = vmatpush1.xpose.msra.mxu0 0.0
      %1158 = vmatprep.subr.mxu0 0.0
      %1159 = vmatpush1.xpose.msra.mxu0 0.0
      %1160 = vmatprep.mubr.f32.mxu0 0.0
      %1161 = vmatmul.mubr.f32.gmra.mrb[0].mxu0 %v1092
      %v1162 = vpop.f32.mrb[0].mxu0
      %v1163 = vadd.f32 %v677, %v1162
      %v1164 = vpop.f32.mrb[0].mxu0
      %1165 = vdwg.mxu0
      %1167 = vrot.lane.b32.xlu0 %v480, 96
      %v1168 = vpop.permute.xlu0 %1167
      %v1169 = vsel %vm286, %v480, 0
      %v1171 = vsel %vm286, %v1168, 0
      %1173 = vmatprep.subr.mxu0 0.0
      %1174 = vmatpush1.xpose.msra.mxu0 %v1171
      %1175 = vmatprep.subr.mxu0 0.0
      %1176 = vmatpush1.xpose.msra.mxu0 0.0
      %1177 = vmatprep.subr.mxu0 0.0
      %1178 = vmatpush1.xpose.msra.mxu0 0.0
      %1179 = vmatprep.subr.mxu0 0.0
      %1180 = vmatpush1.xpose.msra.mxu0 0.0
      %1181 = vmatprep.subr.mxu0 0.0
      %1182 = vmatpush1.xpose.msra.mxu0 0.0
      %1183 = vmatprep.subr.mxu0 0.0
      %1184 = vmatpush1.xpose.msra.mxu0 0.0
      %1185 = vmatprep.subr.mxu0 0.0
      %1186 = vmatpush1.xpose.msra.mxu0 0.0
      %1187 = vmatprep.subr.mxu0 0.0
      %1188 = vmatpush1.xpose.msra.mxu0 0.0
      %1189 = vmatprep.subr.mxu0 0.0
      %1190 = vmatpush1.xpose.msra.mxu0 0.0
      %1191 = vmatprep.subr.mxu0 0.0
      %1192 = vmatpush1.xpose.msra.mxu0 0.0
      %1193 = vmatprep.subr.mxu0 0.0
      %1194 = vmatpush1.xpose.msra.mxu0 0.0
      %1195 = vmatprep.subr.mxu0 0.0
      %1196 = vmatpush1.xpose.msra.mxu0 0.0
      %1197 = vmatprep.subr.mxu0 0.0
      %1198 = vmatpush1.xpose.msra.mxu0 0.0
      %1199 = vmatprep.subr.mxu0 0.0
      %1200 = vmatpush1.xpose.msra.mxu0 0.0
      %1201 = vmatprep.subr.mxu0 0.0
      %1202 = vmatpush1.xpose.msra.mxu0 0.0
      %1203 = vmatprep.subr.mxu0 0.0
      %1204 = vmatpush1.xpose.msra.mxu0 0.0
      %1205 = vmatprep.subr.mxu0 0.0
      %1206 = vmatpush1.xpose.msra.mxu0 0.0
      %1207 = vmatprep.subr.mxu0 0.0
      %1208 = vmatpush1.xpose.msra.mxu0 0.0
      %1209 = vmatprep.subr.mxu0 0.0
      %1210 = vmatpush1.xpose.msra.mxu0 0.0
      %1211 = vmatprep.subr.mxu0 0.0
      %1212 = vmatpush1.xpose.msra.mxu0 0.0
      %1213 = vmatprep.subr.mxu0 0.0
      %1214 = vmatpush1.xpose.msra.mxu0 0.0
      %1215 = vmatprep.subr.mxu0 0.0
      %1216 = vmatpush1.xpose.msra.mxu0 0.0
      %1217 = vmatprep.subr.mxu0 0.0
      %1218 = vmatpush1.xpose.msra.mxu0 0.0
      %1219 = vmatprep.subr.mxu0 0.0
      %1220 = vmatpush1.xpose.msra.mxu0 0.0
      %1221 = vmatprep.subr.mxu0 0.0
      %1222 = vmatpush1.xpose.msra.mxu0 0.0
      %1223 = vmatprep.subr.mxu0 0.0
      %1224 = vmatpush1.xpose.msra.mxu0 0.0
      %1225 = vmatprep.subr.mxu0 0.0
      %1226 = vmatpush1.xpose.msra.mxu0 0.0
      %1227 = vmatprep.subr.mxu0 0.0
      %1228 = vmatpush1.xpose.msra.mxu0 0.0
      %1229 = vmatprep.subr.mxu0 0.0
      %1230 = vmatpush1.xpose.msra.mxu0 0.0
      %1231 = vmatprep.subr.mxu0 0.0
      %1232 = vmatpush1.xpose.msra.mxu0 0.0
      %1233 = vmatprep.subr.mxu0 0.0
      %1234 = vmatpush1.xpose.msra.mxu0 0.0
      %1235 = vmatprep.subr.mxu0 0.0
      %1236 = vmatpush1.xpose.msra.mxu0 0.0
      %1237 = vmatprep.mubr.f32.mxu0 0.0
      %1238 = vmatmul.mubr.f32.gmra.mrb[0].mxu0 %v1169
      %v1239 = vpop.f32.mrb[0].mxu0
      %v1240 = vadd.f32 %v678, %v1239
      %v1241 = vpop.f32.mrb[0].mxu0
      %1242 = vdwg.mxu0
      %1244 = vrot.lane.b32.xlu0 %v485, 96
      %v1245 = vpop.permute.xlu0 %1244
      %v1246 = vsel %vm286, %v485, 0
      %v1248 = vsel %vm286, %v1245, 0
      %1250 = vmatprep.subr.mxu0 0.0
      %1251 = vmatpush1.xpose.msra.mxu0 %v1248
      %1252 = vmatprep.subr.mxu0 0.0
      %1253 = vmatpush1.xpose.msra.mxu0 0.0
      %1254 = vmatprep.subr.mxu0 0.0
      %1255 = vmatpush1.xpose.msra.mxu0 0.0
      %1256 = vmatprep.subr.mxu0 0.0
      %1257 = vmatpush1.xpose.msra.mxu0 0.0
      %1258 = vmatprep.subr.mxu0 0.0
      %1259 = vmatpush1.xpose.msra.mxu0 0.0
      %1260 = vmatprep.subr.mxu0 0.0
      %1261 = vmatpush1.xpose.msra.mxu0 0.0
      %1262 = vmatprep.subr.mxu0 0.0
      %1263 = vmatpush1.xpose.msra.mxu0 0.0
      %1264 = vmatprep.subr.mxu0 0.0
      %1265 = vmatpush1.xpose.msra.mxu0 0.0
      %1266 = vmatprep.subr.mxu0 0.0
      %1267 = vmatpush1.xpose.msra.mxu0 0.0
      %1268 = vmatprep.subr.mxu0 0.0
      %1269 = vmatpush1.xpose.msra.mxu0 0.0
      %1270 = vmatprep.subr.mxu0 0.0
      %1271 = vmatpush1.xpose.msra.mxu0 0.0
      %1272 = vmatprep.subr.mxu0 0.0
      %1273 = vmatpush1.xpose.msra.mxu0 0.0
      %1274 = vmatprep.subr.mxu0 0.0
      %1275 = vmatpush1.xpose.msra.mxu0 0.0
      %1276 = vmatprep.subr.mxu0 0.0
      %1277 = vmatpush1.xpose.msra.mxu0 0.0
      %1278 = vmatprep.subr.mxu0 0.0
      %1279 = vmatpush1.xpose.msra.mxu0 0.0
      %1280 = vmatprep.subr.mxu0 0.0
      %1281 = vmatpush1.xpose.msra.mxu0 0.0
      %1282 = vmatprep.subr.mxu0 0.0
      %1283 = vmatpush1.xpose.msra.mxu0 0.0
      %1284 = vmatprep.subr.mxu0 0.0
      %1285 = vmatpush1.xpose.msra.mxu0 0.0
      %1286 = vmatprep.subr.mxu0 0.0
      %1287 = vmatpush1.xpose.msra.mxu0 0.0
      %1288 = vmatprep.subr.mxu0 0.0
      %1289 = vmatpush1.xpose.msra.mxu0 0.0
      %1290 = vmatprep.subr.mxu0 0.0
      %1291 = vmatpush1.xpose.msra.mxu0 0.0
      %1292 = vmatprep.subr.mxu0 0.0
      %1293 = vmatpush1.xpose.msra.mxu0 0.0
      %1294 = vmatprep.subr.mxu0 0.0
      %1295 = vmatpush1.xpose.msra.mxu0 0.0
      %1296 = vmatprep.subr.mxu0 0.0
      %1297 = vmatpush1.xpose.msra.mxu0 0.0
      %1298 = vmatprep.subr.mxu0 0.0
      %1299 = vmatpush1.xpose.msra.mxu0 0.0
      %1300 = vmatprep.subr.mxu0 0.0
      %1301 = vmatpush1.xpose.msra.mxu0 0.0
      %1302 = vmatprep.subr.mxu0 0.0
      %1303 = vmatpush1.xpose.msra.mxu0 0.0
      %1304 = vmatprep.subr.mxu0 0.0
      %1305 = vmatpush1.xpose.msra.mxu0 0.0
      %1306 = vmatprep.subr.mxu0 0.0
      %1307 = vmatpush1.xpose.msra.mxu0 0.0
      %1308 = vmatprep.subr.mxu0 0.0
      %1309 = vmatpush1.xpose.msra.mxu0 0.0
      %1310 = vmatprep.subr.mxu0 0.0
      %1311 = vmatpush1.xpose.msra.mxu0 0.0
      %1312 = vmatprep.subr.mxu0 0.0
      %1313 = vmatpush1.xpose.msra.mxu0 0.0
      %1314 = vmatprep.mubr.f32.mxu0 0.0
      %1315 = vmatmul.mubr.f32.gmra.mrb[0].mxu0 %v1246
      %v1316 = vpop.f32.mrb[0].mxu0
      %v1317 = vadd.f32 %v679, %v1316
      %v1318 = vpop.f32.mrb[0].mxu0
      %1319 = vdwg.mxu0
      %1321 = vrot.lane.b32.xlu0 %v490, 96
      %v1322 = vpop.permute.xlu0 %1321
      %v1323 = vsel %vm286, %v490, 0
      %v1325 = vsel %vm286, %v1322, 0
      %1327 = vmatprep.subr.mxu0 0.0
      %1328 = vmatpush1.xpose.msra.mxu0 %v1325
      %1329 = vmatprep.subr.mxu0 0.0
      %1330 = vmatpush1.xpose.msra.mxu0 0.0
      %1331 = vmatprep.subr.mxu0 0.0
      %1332 = vmatpush1.xpose.msra.mxu0 0.0
      %1333 = vmatprep.subr.mxu0 0.0
      %1334 = vmatpush1.xpose.msra.mxu0 0.0
      %1335 = vmatprep.subr.mxu0 0.0
      %1336 = vmatpush1.xpose.msra.mxu0 0.0
      %1337 = vmatprep.subr.mxu0 0.0
      %1338 = vmatpush1.xpose.msra.mxu0 0.0
      %1339 = vmatprep.subr.mxu0 0.0
      %1340 = vmatpush1.xpose.msra.mxu0 0.0
      %1341 = vmatprep.subr.mxu0 0.0
      %1342 = vmatpush1.xpose.msra.mxu0 0.0
      %1343 = vmatprep.subr.mxu0 0.0
      %1344 = vmatpush1.xpose.msra.mxu0 0.0
      %1345 = vmatprep.subr.mxu0 0.0
      %1346 = vmatpush1.xpose.msra.mxu0 0.0
      %1347 = vmatprep.subr.mxu0 0.0
      %1348 = vmatpush1.xpose.msra.mxu0 0.0
      %1349 = vmatprep.subr.mxu0 0.0
      %1350 = vmatpush1.xpose.msra.mxu0 0.0
      %1351 = vmatprep.subr.mxu0 0.0
      %1352 = vmatpush1.xpose.msra.mxu0 0.0
      %1353 = vmatprep.subr.mxu0 0.0
      %1354 = vmatpush1.xpose.msra.mxu0 0.0
      %1355 = vmatprep.subr.mxu0 0.0
      %1356 = vmatpush1.xpose.msra.mxu0 0.0
      %1357 = vmatprep.subr.mxu0 0.0
      %1358 = vmatpush1.xpose.msra.mxu0 0.0
      %1359 = vmatprep.subr.mxu0 0.0
      %1360 = vmatpush1.xpose.msra.mxu0 0.0
      %1361 = vmatprep.subr.mxu0 0.0
      %1362 = vmatpush1.xpose.msra.mxu0 0.0
      %1363 = vmatprep.subr.mxu0 0.0
      %1364 = vmatpush1.xpose.msra.mxu0 0.0
      %1365 = vmatprep.subr.mxu0 0.0
      %1366 = vmatpush1.xpose.msra.mxu0 0.0
      %1367 = vmatprep.subr.mxu0 0.0
      %1368 = vmatpush1.xpose.msra.mxu0 0.0
      %1369 = vmatprep.subr.mxu0 0.0
      %1370 = vmatpush1.xpose.msra.mxu0 0.0
      %1371 = vmatprep.subr.mxu0 0.0
      %1372 = vmatpush1.xpose.msra.mxu0 0.0
      %1373 = vmatprep.subr.mxu0 0.0
      %1374 = vmatpush1.xpose.msra.mxu0 0.0
      %1375 = vmatprep.subr.mxu0 0.0
      %1376 = vmatpush1.xpose.msra.mxu0 0.0
      %1377 = vmatprep.subr.mxu0 0.0
      %1378 = vmatpush1.xpose.msra.mxu0 0.0
      %1379 = vmatprep.subr.mxu0 0.0
      %1380 = vmatpush1.xpose.msra.mxu0 0.0
      %1381 = vmatprep.subr.mxu0 0.0
      %1382 = vmatpush1.xpose.msra.mxu0 0.0
      %1383 = vmatprep.subr.mxu0 0.0
      %1384 = vmatpush1.xpose.msra.mxu0 0.0
      %1385 = vmatprep.subr.mxu0 0.0
      %1386 = vmatpush1.xpose.msra.mxu0 0.0
      %1387 = vmatprep.subr.mxu0 0.0
      %1388 = vmatpush1.xpose.msra.mxu0 0.0
      %1389 = vmatprep.subr.mxu0 0.0
      %1390 = vmatpush1.xpose.msra.mxu0 0.0
      %1391 = vmatprep.mubr.f32.mxu0 0.0
      %1392 = vmatmul.mubr.f32.gmra.mrb[0].mxu0 %v1323
      %v1393 = vpop.f32.mrb[0].mxu0
      %v1394 = vadd.f32 %v680, %v1393
      %v1395 = vpop.f32.mrb[0].mxu0
      %1396 = vdwg.mxu0
      %1398 = vrot.lane.b32.xlu0 %v495, 96
      %v1399 = vpop.permute.xlu0 %1398
      %v1400 = vsel %vm286, %v495, 0
      %v1402 = vsel %vm286, %v1399, 0
      %1404 = vmatprep.subr.mxu0 0.0
      %1405 = vmatpush1.xpose.msra.mxu0 %v1402
      %1406 = vmatprep.subr.mxu0 0.0
      %1407 = vmatpush1.xpose.msra.mxu0 0.0
      %1408 = vmatprep.subr.mxu0 0.0
      %1409 = vmatpush1.xpose.msra.mxu0 0.0
      %1410 = vmatprep.subr.mxu0 0.0
      %1411 = vmatpush1.xpose.msra.mxu0 0.0
      %1412 = vmatprep.subr.mxu0 0.0
      %1413 = vmatpush1.xpose.msra.mxu0 0.0
      %1414 = vmatprep.subr.mxu0 0.0
      %1415 = vmatpush1.xpose.msra.mxu0 0.0
      %1416 = vmatprep.subr.mxu0 0.0
      %1417 = vmatpush1.xpose.msra.mxu0 0.0
      %1418 = vmatprep.subr.mxu0 0.0
      %1419 = vmatpush1.xpose.msra.mxu0 0.0
      %1420 = vmatprep.subr.mxu0 0.0
      %1421 = vmatpush1.xpose.msra.mxu0 0.0
      %1422 = vmatprep.subr.mxu0 0.0
      %1423 = vmatpush1.xpose.msra.mxu0 0.0
      %1424 = vmatprep.subr.mxu0 0.0
      %1425 = vmatpush1.xpose.msra.mxu0 0.0
      %1426 = vmatprep.subr.mxu0 0.0
      %1427 = vmatpush1.xpose.msra.mxu0 0.0
      %1428 = vmatprep.subr.mxu0 0.0
      %1429 = vmatpush1.xpose.msra.mxu0 0.0
      %1430 = vmatprep.subr.mxu0 0.0
      %1431 = vmatpush1.xpose.msra.mxu0 0.0
      %1432 = vmatprep.subr.mxu0 0.0
      %1433 = vmatpush1.xpose.msra.mxu0 0.0
      %1434 = vmatprep.subr.mxu0 0.0
      %1435 = vmatpush1.xpose.msra.mxu0 0.0
      %1436 = vmatprep.subr.mxu0 0.0
      %1437 = vmatpush1.xpose.msra.mxu0 0.0
      %1438 = vmatprep.subr.mxu0 0.0
      %1439 = vmatpush1.xpose.msra.mxu0 0.0
      %1440 = vmatprep.subr.mxu0 0.0
      %1441 = vmatpush1.xpose.msra.mxu0 0.0
      %1442 = vmatprep.subr.mxu0 0.0
      %1443 = vmatpush1.xpose.msra.mxu0 0.0
      %1444 = vmatprep.subr.mxu0 0.0
      %1445 = vmatpush1.xpose.msra.mxu0 0.0
      %1446 = vmatprep.subr.mxu0 0.0
      %1447 = vmatpush1.xpose.msra.mxu0 0.0
      %1448 = vmatprep.subr.mxu0 0.0
      %1449 = vmatpush1.xpose.msra.mxu0 0.0
      %1450 = vmatprep.subr.mxu0 0.0
      %1451 = vmatpush1.xpose.msra.mxu0 0.0
      %1452 = vmatprep.subr.mxu0 0.0
      %1453 = vmatpush1.xpose.msra.mxu0 0.0
      %1454 = vmatprep.subr.mxu0 0.0
      %1455 = vmatpush1.xpose.msra.mxu0 0.0
      %1456 = vmatprep.subr.mxu0 0.0
      %1457 = vmatpush1.xpose.msra.mxu0 0.0
      %1458 = vmatprep.subr.mxu0 0.0
      %1459 = vmatpush1.xpose.msra.mxu0 0.0
      %1460 = vmatprep.subr.mxu0 0.0
      %1461 = vmatpush1.xpose.msra.mxu0 0.0
      %1462 = vmatprep.subr.mxu0 0.0
      %1463 = vmatpush1.xpose.msra.mxu0 0.0
      %1464 = vmatprep.subr.mxu0 0.0
      %1465 = vmatpush1.xpose.msra.mxu0 0.0
      %1466 = vmatprep.subr.mxu0 0.0
      %1467 = vmatpush1.xpose.msra.mxu0 0.0
      %1468 = vmatprep.mubr.f32.mxu0 0.0
      %1469 = vmatmul.mubr.f32.gmra.mrb[0].mxu0 %v1400
      %v1470 = vpop.f32.mrb[0].mxu0
      %v1471 = vadd.f32 %v681, %v1470
      %v1472 = vpop.f32.mrb[0].mxu0
      %1473 = vdwg.mxu0
      %1475 = vrot.lane.b32.xlu0 %v500, 96
      %v1476 = vpop.permute.xlu0 %1475
      %v1477 = vsel %vm286, %v500, 0
      %v1479 = vsel %vm286, %v1476, 0
      %1481 = vmatprep.subr.mxu0 0.0
      %1482 = vmatpush1.xpose.msra.mxu0 %v1479
      %1483 = vmatprep.subr.mxu0 0.0
      %1484 = vmatpush1.xpose.msra.mxu0 0.0
      %1485 = vmatprep.subr.mxu0 0.0
      %1486 = vmatpush1.xpose.msra.mxu0 0.0
      %1487 = vmatprep.subr.mxu0 0.0
      %1488 = vmatpush1.xpose.msra.mxu0 0.0
      %1489 = vmatprep.subr.mxu0 0.0
      %1490 = vmatpush1.xpose.msra.mxu0 0.0
      %1491 = vmatprep.subr.mxu0 0.0
      %1492 = vmatpush1.xpose.msra.mxu0 0.0
      %1493 = vmatprep.subr.mxu0 0.0
      %1494 = vmatpush1.xpose.msra.mxu0 0.0
      %1495 = vmatprep.subr.mxu0 0.0
      %1496 = vmatpush1.xpose.msra.mxu0 0.0
      %1497 = vmatprep.subr.mxu0 0.0
      %1498 = vmatpush1.xpose.msra.mxu0 0.0
      %1499 = vmatprep.subr.mxu0 0.0
      %1500 = vmatpush1.xpose.msra.mxu0 0.0
      %1501 = vmatprep.subr.mxu0 0.0
      %1502 = vmatpush1.xpose.msra.mxu0 0.0
      %1503 = vmatprep.subr.mxu0 0.0
      %1504 = vmatpush1.xpose.msra.mxu0 0.0
      %1505 = vmatprep.subr.mxu0 0.0
      %1506 = vmatpush1.xpose.msra.mxu0 0.0
      %1507 = vmatprep.subr.mxu0 0.0
      %1508 = vmatpush1.xpose.msra.mxu0 0.0
      %1509 = vmatprep.subr.mxu0 0.0
      %1510 = vmatpush1.xpose.msra.mxu0 0.0
      %1511 = vmatprep.subr.mxu0 0.0
      %1512 = vmatpush1.xpose.msra.mxu0 0.0
      %1513 = vmatprep.subr.mxu0 0.0
      %1514 = vmatpush1.xpose.msra.mxu0 0.0
      %1515 = vmatprep.subr.mxu0 0.0
      %1516 = vmatpush1.xpose.msra.mxu0 0.0
      %1517 = vmatprep.subr.mxu0 0.0
      %1518 = vmatpush1.xpose.msra.mxu0 0.0
      %1519 = vmatprep.subr.mxu0 0.0
      %1520 = vmatpush1.xpose.msra.mxu0 0.0
      %1521 = vmatprep.subr.mxu0 0.0
      %1522 = vmatpush1.xpose.msra.mxu0 0.0
      %1523 = vmatprep.subr.mxu0 0.0
      %1524 = vmatpush1.xpose.msra.mxu0 0.0
      %1525 = vmatprep.subr.mxu0 0.0
      %1526 = vmatpush1.xpose.msra.mxu0 0.0
      %1527 = vmatprep.subr.mxu0 0.0
      %1528 = vmatpush1.xpose.msra.mxu0 0.0
      %1529 = vmatprep.subr.mxu0 0.0
      %1530 = vmatpush1.xpose.msra.mxu0 0.0
      %1531 = vmatprep.subr.mxu0 0.0
      %1532 = vmatpush1.xpose.msra.mxu0 0.0
      %1533 = vmatprep.subr.mxu0 0.0
      %1534 = vmatpush1.xpose.msra.mxu0 0.0
      %1535 = vmatprep.subr.mxu0 0.0
      %1536 = vmatpush1.xpose.msra.mxu0 0.0
      %1537 = vmatprep.subr.mxu0 0.0
      %1538 = vmatpush1.xpose.msra.mxu0 0.0
      %1539 = vmatprep.subr.mxu0 0.0
      %1540 = vmatpush1.xpose.msra.mxu0 0.0
      %1541 = vmatprep.subr.mxu0 0.0
      %1542 = vmatpush1.xpose.msra.mxu0 0.0
      %1543 = vmatprep.subr.mxu0 0.0
      %1544 = vmatpush1.xpose.msra.mxu0 0.0
      %1545 = vmatprep.mubr.f32.mxu0 0.0
      %1546 = vmatmul.mubr.f32.gmra.mrb[0].mxu0 %v1477
      %v1547 = vpop.f32.mrb[0].mxu0
      %v1548 = vadd.f32 %v682, %v1547
      %v1549 = vpop.f32.mrb[0].mxu0
      %1550 = vdwg.mxu0
      %1552 = vrot.lane.b32.xlu0 %v505, 96
      %v1553 = vpop.permute.xlu0 %1552
      %v1554 = vsel %vm286, %v505, 0
      %v1556 = vsel %vm286, %v1553, 0
      %1558 = vmatprep.subr.mxu0 0.0
      %1559 = vmatpush1.xpose.msra.mxu0 %v1556
      %1560 = vmatprep.subr.mxu0 0.0
      %1561 = vmatpush1.xpose.msra.mxu0 0.0
      %1562 = vmatprep.subr.mxu0 0.0
      %1563 = vmatpush1.xpose.msra.mxu0 0.0
      %1564 = vmatprep.subr.mxu0 0.0
      %1565 = vmatpush1.xpose.msra.mxu0 0.0
      %1566 = vmatprep.subr.mxu0 0.0
      %1567 = vmatpush1.xpose.msra.mxu0 0.0
      %1568 = vmatprep.subr.mxu0 0.0
      %1569 = vmatpush1.xpose.msra.mxu0 0.0
      %1570 = vmatprep.subr.mxu0 0.0
      %1571 = vmatpush1.xpose.msra.mxu0 0.0
      %1572 = vmatprep.subr.mxu0 0.0
      %1573 = vmatpush1.xpose.msra.mxu0 0.0
      %1574 = vmatprep.subr.mxu0 0.0
      %1575 = vmatpush1.xpose.msra.mxu0 0.0
      %1576 = vmatprep.subr.mxu0 0.0
      %1577 = vmatpush1.xpose.msra.mxu0 0.0
      %1578 = vmatprep.subr.mxu0 0.0
      %1579 = vmatpush1.xpose.msra.mxu0 0.0
      %1580 = vmatprep.subr.mxu0 0.0
      %1581 = vmatpush1.xpose.msra.mxu0 0.0
      %1582 = vmatprep.subr.mxu0 0.0
      %1583 = vmatpush1.xpose.msra.mxu0 0.0
      %1584 = vmatprep.subr.mxu0 0.0
      %1585 = vmatpush1.xpose.msra.mxu0 0.0
      %1586 = vmatprep.subr.mxu0 0.0
      %1587 = vmatpush1.xpose.msra.mxu0 0.0
      %1588 = vmatprep.subr.mxu0 0.0
      %1589 = vmatpush1.xpose.msra.mxu0 0.0
      %1590 = vmatprep.subr.mxu0 0.0
      %1591 = vmatpush1.xpose.msra.mxu0 0.0
      %1592 = vmatprep.subr.mxu0 0.0
      %1593 = vmatpush1.xpose.msra.mxu0 0.0
      %1594 = vmatprep.subr.mxu0 0.0
      %1595 = vmatpush1.xpose.msra.mxu0 0.0
      %1596 = vmatprep.subr.mxu0 0.0
      %1597 = vmatpush1.xpose.msra.mxu0 0.0
      %1598 = vmatprep.subr.mxu0 0.0
      %1599 = vmatpush1.xpose.msra.mxu0 0.0
      %1600 = vmatprep.subr.mxu0 0.0
      %1601 = vmatpush1.xpose.msra.mxu0 0.0
      %1602 = vmatprep.subr.mxu0 0.0
      %1603 = vmatpush1.xpose.msra.mxu0 0.0
      %1604 = vmatprep.subr.mxu0 0.0
      %1605 = vmatpush1.xpose.msra.mxu0 0.0
      %1606 = vmatprep.subr.mxu0 0.0
      %1607 = vmatpush1.xpose.msra.mxu0 0.0
      %1608 = vmatprep.subr.mxu0 0.0
      %1609 = vmatpush1.xpose.msra.mxu0 0.0
      %1610 = vmatprep.subr.mxu0 0.0
      %1611 = vmatpush1.xpose.msra.mxu0 0.0
      %1612 = vmatprep.subr.mxu0 0.0
      %1613 = vmatpush1.xpose.msra.mxu0 0.0
      %1614 = vmatprep.subr.mxu0 0.0
      %1615 = vmatpush1.xpose.msra.mxu0 0.0
      %1616 = vmatprep.subr.mxu0 0.0
      %1617 = vmatpush1.xpose.msra.mxu0 0.0
      %1618 = vmatprep.subr.mxu0 0.0
      %1619 = vmatpush1.xpose.msra.mxu0 0.0
      %1620 = vmatprep.subr.mxu0 0.0
      %1621 = vmatpush1.xpose.msra.mxu0 0.0
      %1622 = vmatprep.mubr.f32.mxu0 0.0
      %1623 = vmatmul.mubr.f32.gmra.mrb[0].mxu0 %v1554
      %v1624 = vpop.f32.mrb[0].mxu0
      %v1625 = vadd.f32 %v683, %v1624
      %v1626 = vpop.f32.mrb[0].mxu0
      %1627 = vdwg.mxu0
      %1629 = vrot.lane.b32.xlu0 %v510, 96
      %v1630 = vpop.permute.xlu0 %1629
      %v1631 = vsel %vm286, %v510, 0
      %v1633 = vsel %vm286, %v1630, 0
      %1635 = vmatprep.subr.mxu0 0.0
      %1636 = vmatpush1.xpose.msra.mxu0 %v1633
      %1637 = vmatprep.subr.mxu0 0.0
      %1638 = vmatpush1.xpose.msra.mxu0 0.0
      %1639 = vmatprep.subr.mxu0 0.0
      %1640 = vmatpush1.xpose.msra.mxu0 0.0
      %1641 = vmatprep.subr.mxu0 0.0
      %1642 = vmatpush1.xpose.msra.mxu0 0.0
      %1643 = vmatprep.subr.mxu0 0.0
      %1644 = vmatpush1.xpose.msra.mxu0 0.0
      %1645 = vmatprep.subr.mxu0 0.0
      %1646 = vmatpush1.xpose.msra.mxu0 0.0
      %1647 = vmatprep.subr.mxu0 0.0
      %1648 = vmatpush1.xpose.msra.mxu0 0.0
      %1649 = vmatprep.subr.mxu0 0.0
      %1650 = vmatpush1.xpose.msra.mxu0 0.0
      %1651 = vmatprep.subr.mxu0 0.0
      %1652 = vmatpush1.xpose.msra.mxu0 0.0
      %1653 = vmatprep.subr.mxu0 0.0
      %1654 = vmatpush1.xpose.msra.mxu0 0.0
      %1655 = vmatprep.subr.mxu0 0.0
      %1656 = vmatpush1.xpose.msra.mxu0 0.0
      %1657 = vmatprep.subr.mxu0 0.0
      %1658 = vmatpush1.xpose.msra.mxu0 0.0
      %1659 = vmatprep.subr.mxu0 0.0
      %1660 = vmatpush1.xpose.msra.mxu0 0.0
      %1661 = vmatprep.subr.mxu0 0.0
      %1662 = vmatpush1.xpose.msra.mxu0 0.0
      %1663 = vmatprep.subr.mxu0 0.0
      %1664 = vmatpush1.xpose.msra.mxu0 0.0
      %1665 = vmatprep.subr.mxu0 0.0
      %1666 = vmatpush1.xpose.msra.mxu0 0.0
      %1667 = vmatprep.subr.mxu0 0.0
      %1668 = vmatpush1.xpose.msra.mxu0 0.0
      %1669 = vmatprep.subr.mxu0 0.0
      %1670 = vmatpush1.xpose.msra.mxu0 0.0
      %1671 = vmatprep.subr.mxu0 0.0
      %1672 = vmatpush1.xpose.msra.mxu0 0.0
      %1673 = vmatprep.subr.mxu0 0.0
      %1674 = vmatpush1.xpose.msra.mxu0 0.0
      %1675 = vmatprep.subr.mxu0 0.0
      %1676 = vmatpush1.xpose.msra.mxu0 0.0
      %1677 = vmatprep.subr.mxu0 0.0
      %1678 = vmatpush1.xpose.msra.mxu0 0.0
      %1679 = vmatprep.subr.mxu0 0.0
      %1680 = vmatpush1.xpose.msra.mxu0 0.0
      %1681 = vmatprep.subr.mxu0 0.0
      %1682 = vmatpush1.xpose.msra.mxu0 0.0
      %1683 = vmatprep.subr.mxu0 0.0
      %1684 = vmatpush1.xpose.msra.mxu0 0.0
      %1685 = vmatprep.subr.mxu0 0.0
      %1686 = vmatpush1.xpose.msra.mxu0 0.0
      %1687 = vmatprep.subr.mxu0 0.0
      %1688 = vmatpush1.xpose.msra.mxu0 0.0
      %1689 = vmatprep.subr.mxu0 0.0
      %1690 = vmatpush1.xpose.msra.mxu0 0.0
      %1691 = vmatprep.subr.mxu0 0.0
      %1692 = vmatpush1.xpose.msra.mxu0 0.0
      %1693 = vmatprep.subr.mxu0 0.0
      %1694 = vmatpush1.xpose.msra.mxu0 0.0
      %1695 = vmatprep.subr.mxu0 0.0
      %1696 = vmatpush1.xpose.msra.mxu0 0.0
      %1697 = vmatprep.subr.mxu0 0.0
      %1698 = vmatpush1.xpose.msra.mxu0 0.0
      %1699 = vmatprep.mubr.f32.mxu0 0.0
      %1700 = vmatmul.mubr.f32.gmra.mrb[0].mxu0 %v1631
      %v1701 = vpop.f32.mrb[0].mxu0
      %v1702 = vadd.f32 %v684, %v1701
      %v1703 = vpop.f32.mrb[0].mxu0
      %1704 = vdwg.mxu0
      %1706 = vrot.lane.b32.xlu0 %v515, 96
      %v1707 = vpop.permute.xlu0 %1706
      %v1708 = vsel %vm286, %v515, 0
      %v1710 = vsel %vm286, %v1707, 0
      %1712 = vmatprep.subr.mxu0 0.0
      %1713 = vmatpush1.xpose.msra.mxu0 %v1710
      %1714 = vmatprep.subr.mxu0 0.0
      %1715 = vmatpush1.xpose.msra.mxu0 0.0
      %1716 = vmatprep.subr.mxu0 0.0
      %1717 = vmatpush1.xpose.msra.mxu0 0.0
      %1718 = vmatprep.subr.mxu0 0.0
      %1719 = vmatpush1.xpose.msra.mxu0 0.0
      %1720 = vmatprep.subr.mxu0 0.0
      %1721 = vmatpush1.xpose.msra.mxu0 0.0
      %1722 = vmatprep.subr.mxu0 0.0
      %1723 = vmatpush1.xpose.msra.mxu0 0.0
      %1724 = vmatprep.subr.mxu0 0.0
      %1725 = vmatpush1.xpose.msra.mxu0 0.0
      %1726 = vmatprep.subr.mxu0 0.0
      %1727 = vmatpush1.xpose.msra.mxu0 0.0
      %1728 = vmatprep.subr.mxu0 0.0
      %1729 = vmatpush1.xpose.msra.mxu0 0.0
      %1730 = vmatprep.subr.mxu0 0.0
      %1731 = vmatpush1.xpose.msra.mxu0 0.0
      %1732 = vmatprep.subr.mxu0 0.0
      %1733 = vmatpush1.xpose.msra.mxu0 0.0
      %1734 = vmatprep.subr.mxu0 0.0
      %1735 = vmatpush1.xpose.msra.mxu0 0.0
      %1736 = vmatprep.subr.mxu0 0.0
      %1737 = vmatpush1.xpose.msra.mxu0 0.0
      %1738 = vmatprep.subr.mxu0 0.0
      %1739 = vmatpush1.xpose.msra.mxu0 0.0
      %1740 = vmatprep.subr.mxu0 0.0
      %1741 = vmatpush1.xpose.msra.mxu0 0.0
      %1742 = vmatprep.subr.mxu0 0.0
      %1743 = vmatpush1.xpose.msra.mxu0 0.0
      %1744 = vmatprep.subr.mxu0 0.0
      %1745 = vmatpush1.xpose.msra.mxu0 0.0
      %1746 = vmatprep.subr.mxu0 0.0
      %1747 = vmatpush1.xpose.msra.mxu0 0.0
      %1748 = vmatprep.subr.mxu0 0.0
      %1749 = vmatpush1.xpose.msra.mxu0 0.0
      %1750 = vmatprep.subr.mxu0 0.0
      %1751 = vmatpush1.xpose.msra.mxu0 0.0
      %1752 = vmatprep.subr.mxu0 0.0
      %1753 = vmatpush1.xpose.msra.mxu0 0.0
      %1754 = vmatprep.subr.mxu0 0.0
      %1755 = vmatpush1.xpose.msra.mxu0 0.0
      %1756 = vmatprep.subr.mxu0 0.0
      %1757 = vmatpush1.xpose.msra.mxu0 0.0
      %1758 = vmatprep.subr.mxu0 0.0
      %1759 = vmatpush1.xpose.msra.mxu0 0.0
      %1760 = vmatprep.subr.mxu0 0.0
      %1761 = vmatpush1.xpose.msra.mxu0 0.0
      %1762 = vmatprep.subr.mxu0 0.0
      %1763 = vmatpush1.xpose.msra.mxu0 0.0
      %1764 = vmatprep.subr.mxu0 0.0
      %1765 = vmatpush1.xpose.msra.mxu0 0.0
      %1766 = vmatprep.subr.mxu0 0.0
      %1767 = vmatpush1.xpose.msra.mxu0 0.0
      %1768 = vmatprep.subr.mxu0 0.0
      %1769 = vmatpush1.xpose.msra.mxu0 0.0
      %1770 = vmatprep.subr.mxu0 0.0
      %1771 = vmatpush1.xpose.msra.mxu0 0.0
      %1772 = vmatprep.subr.mxu0 0.0
      %1773 = vmatpush1.xpose.msra.mxu0 0.0
      %1774 = vmatprep.subr.mxu0 0.0
      %1775 = vmatpush1.xpose.msra.mxu0 0.0
      %1776 = vmatprep.mubr.f32.mxu0 0.0
      %1777 = vmatmul.mubr.f32.gmra.mrb[0].mxu0 %v1708
      %v1778 = vpop.f32.mrb[0].mxu0
      %v1779 = vadd.f32 %v685, %v1778
      %v1780 = vpop.f32.mrb[0].mxu0
      %1781 = vdwg.mxu0
      %1783 = vrot.lane.b32.xlu0 %v520, 96
      %v1784 = vpop.permute.xlu0 %1783
      %v1785 = vsel %vm286, %v520, 0
      %v1787 = vsel %vm286, %v1784, 0
      %1789 = vmatprep.subr.mxu0 0.0
      %1790 = vmatpush1.xpose.msra.mxu0 %v1787
      %1791 = vmatprep.subr.mxu0 0.0
      %1792 = vmatpush1.xpose.msra.mxu0 0.0
      %1793 = vmatprep.subr.mxu0 0.0
      %1794 = vmatpush1.xpose.msra.mxu0 0.0
      %1795 = vmatprep.subr.mxu0 0.0
      %1796 = vmatpush1.xpose.msra.mxu0 0.0
      %1797 = vmatprep.subr.mxu0 0.0
      %1798 = vmatpush1.xpose.msra.mxu0 0.0
      %1799 = vmatprep.subr.mxu0 0.0
      %1800 = vmatpush1.xpose.msra.mxu0 0.0
      %1801 = vmatprep.subr.mxu0 0.0
      %1802 = vmatpush1.xpose.msra.mxu0 0.0
      %1803 = vmatprep.subr.mxu0 0.0
      %1804 = vmatpush1.xpose.msra.mxu0 0.0
      %1805 = vmatprep.subr.mxu0 0.0
      %1806 = vmatpush1.xpose.msra.mxu0 0.0
      %1807 = vmatprep.subr.mxu0 0.0
      %1808 = vmatpush1.xpose.msra.mxu0 0.0
      %1809 = vmatprep.subr.mxu0 0.0
      %1810 = vmatpush1.xpose.msra.mxu0 0.0
      %1811 = vmatprep.subr.mxu0 0.0
      %1812 = vmatpush1.xpose.msra.mxu0 0.0
      %1813 = vmatprep.subr.mxu0 0.0
      %1814 = vmatpush1.xpose.msra.mxu0 0.0
      %1815 = vmatprep.subr.mxu0 0.0
      %1816 = vmatpush1.xpose.msra.mxu0 0.0
      %1817 = vmatprep.subr.mxu0 0.0
      %1818 = vmatpush1.xpose.msra.mxu0 0.0
      %1819 = vmatprep.subr.mxu0 0.0
      %1820 = vmatpush1.xpose.msra.mxu0 0.0
      %1821 = vmatprep.subr.mxu0 0.0
      %1822 = vmatpush1.xpose.msra.mxu0 0.0
      %1823 = vmatprep.subr.mxu0 0.0
      %1824 = vmatpush1.xpose.msra.mxu0 0.0
      %1825 = vmatprep.subr.mxu0 0.0
      %1826 = vmatpush1.xpose.msra.mxu0 0.0
      %1827 = vmatprep.subr.mxu0 0.0
      %1828 = vmatpush1.xpose.msra.mxu0 0.0
      %1829 = vmatprep.subr.mxu0 0.0
      %1830 = vmatpush1.xpose.msra.mxu0 0.0
      %1831 = vmatprep.subr.mxu0 0.0
      %1832 = vmatpush1.xpose.msra.mxu0 0.0
      %1833 = vmatprep.subr.mxu0 0.0
      %1834 = vmatpush1.xpose.msra.mxu0 0.0
      %1835 = vmatprep.subr.mxu0 0.0
      %1836 = vmatpush1.xpose.msra.mxu0 0.0
      %1837 = vmatprep.subr.mxu0 0.0
      %1838 = vmatpush1.xpose.msra.mxu0 0.0
      %1839 = vmatprep.subr.mxu0 0.0
      %1840 = vmatpush1.xpose.msra.mxu0 0.0
      %1841 = vmatprep.subr.mxu0 0.0
      %1842 = vmatpush1.xpose.msra.mxu0 0.0
      %1843 = vmatprep.subr.mxu0 0.0
      %1844 = vmatpush1.xpose.msra.mxu0 0.0
      %1845 = vmatprep.subr.mxu0 0.0
      %1846 = vmatpush1.xpose.msra.mxu0 0.0
      %1847 = vmatprep.subr.mxu0 0.0
      %1848 = vmatpush1.xpose.msra.mxu0 0.0
      %1849 = vmatprep.subr.mxu0 0.0
      %1850 = vmatpush1.xpose.msra.mxu0 0.0
      %1851 = vmatprep.subr.mxu0 0.0
      %1852 = vmatpush1.xpose.msra.mxu0 0.0
      %1853 = vmatprep.mubr.f32.mxu0 0.0
      %1854 = vmatmul.mubr.f32.gmra.mrb[0].mxu0 %v1785
      %v1855 = vpop.f32.mrb[0].mxu0
      %v1856 = vadd.f32 %v686, %v1855
      %v1857 = vpop.f32.mrb[0].mxu0
      %1858 = vdwg.mxu0
      %1860 = vrot.lane.b32.xlu0 %v525, 96
      %v1861 = vpop.permute.xlu0 %1860
      %v1862 = vsel %vm286, %v525, 0
      %v1864 = vsel %vm286, %v1861, 0
      %1866 = vmatprep.subr.mxu0 0.0
      %1867 = vmatpush1.xpose.msra.mxu0 %v1864
      %1868 = vmatprep.subr.mxu0 0.0
      %1869 = vmatpush1.xpose.msra.mxu0 0.0
      %1870 = vmatprep.subr.mxu0 0.0
      %1871 = vmatpush1.xpose.msra.mxu0 0.0
      %1872 = vmatprep.subr.mxu0 0.0
      %1873 = vmatpush1.xpose.msra.mxu0 0.0
      %1874 = vmatprep.subr.mxu0 0.0
      %1875 = vmatpush1.xpose.msra.mxu0 0.0
      %1876 = vmatprep.subr.mxu0 0.0
      %1877 = vmatpush1.xpose.msra.mxu0 0.0
      %1878 = vmatprep.subr.mxu0 0.0
      %1879 = vmatpush1.xpose.msra.mxu0 0.0
      %1880 = vmatprep.subr.mxu0 0.0
      %1881 = vmatpush1.xpose.msra.mxu0 0.0
      %1882 = vmatprep.subr.mxu0 0.0
      %1883 = vmatpush1.xpose.msra.mxu0 0.0
      %1884 = vmatprep.subr.mxu0 0.0
      %1885 = vmatpush1.xpose.msra.mxu0 0.0
      %1886 = vmatprep.subr.mxu0 0.0
      %1887 = vmatpush1.xpose.msra.mxu0 0.0
      %1888 = vmatprep.subr.mxu0 0.0
      %1889 = vmatpush1.xpose.msra.mxu0 0.0
      %1890 = vmatprep.subr.mxu0 0.0
      %1891 = vmatpush1.xpose.msra.mxu0 0.0
      %1892 = vmatprep.subr.mxu0 0.0
      %1893 = vmatpush1.xpose.msra.mxu0 0.0
      %1894 = vmatprep.subr.mxu0 0.0
      %1895 = vmatpush1.xpose.msra.mxu0 0.0
      %1896 = vmatprep.subr.mxu0 0.0
      %1897 = vmatpush1.xpose.msra.mxu0 0.0
      %1898 = vmatprep.subr.mxu0 0.0
      %1899 = vmatpush1.xpose.msra.mxu0 0.0
      %1900 = vmatprep.subr.mxu0 0.0
      %1901 = vmatpush1.xpose.msra.mxu0 0.0
      %1902 = vmatprep.subr.mxu0 0.0
      %1903 = vmatpush1.xpose.msra.mxu0 0.0
      %1904 = vmatprep.subr.mxu0 0.0
      %1905 = vmatpush1.xpose.msra.mxu0 0.0
      %1906 = vmatprep.subr.mxu0 0.0
      %1907 = vmatpush1.xpose.msra.mxu0 0.0
      %1908 = vmatprep.subr.mxu0 0.0
      %1909 = vmatpush1.xpose.msra.mxu0 0.0
      %1910 = vmatprep.subr.mxu0 0.0
      %1911 = vmatpush1.xpose.msra.mxu0 0.0
      %1912 = vmatprep.subr.mxu0 0.0
      %1913 = vmatpush1.xpose.msra.mxu0 0.0
      %1914 = vmatprep.subr.mxu0 0.0
      %1915 = vmatpush1.xpose.msra.mxu0 0.0
      %1916 = vmatprep.subr.mxu0 0.0
      %1917 = vmatpush1.xpose.msra.mxu0 0.0
      %1918 = vmatprep.subr.mxu0 0.0
      %1919 = vmatpush1.xpose.msra.mxu0 0.0
      %1920 = vmatprep.subr.mxu0 0.0
      %1921 = vmatpush1.xpose.msra.mxu0 0.0
      %1922 = vmatprep.subr.mxu0 0.0
      %1923 = vmatpush1.xpose.msra.mxu0 0.0
      %1924 = vmatprep.subr.mxu0 0.0
      %1925 = vmatpush1.xpose.msra.mxu0 0.0
      %1926 = vmatprep.subr.mxu0 0.0
      %1927 = vmatpush1.xpose.msra.mxu0 0.0
      %1928 = vmatprep.subr.mxu0 0.0
      %1929 = vmatpush1.xpose.msra.mxu0 0.0
      %1930 = vmatprep.mubr.f32.mxu0 0.0
      %1931 = vmatmul.mubr.f32.gmra.mrb[0].mxu0 %v1862
      %v1932 = vpop.f32.mrb[0].mxu0
      %v1933 = vadd.f32 %v687, %v1932
      %v1934 = vpop.f32.mrb[0].mxu0
      %1935 = vdwg.mxu0
      %1937 = vrot.lane.b32.xlu0 %v530, 96
      %v1938 = vpop.permute.xlu0 %1937
      %v1939 = vsel %vm286, %v530, 0
      %v1941 = vsel %vm286, %v1938, 0
      %1943 = vmatprep.subr.mxu0 0.0
      %1944 = vmatpush1.xpose.msra.mxu0 %v1941
      %1945 = vmatprep.subr.mxu0 0.0
      %1946 = vmatpush1.xpose.msra.mxu0 0.0
      %1947 = vmatprep.subr.mxu0 0.0
      %1948 = vmatpush1.xpose.msra.mxu0 0.0
      %1949 = vmatprep.subr.mxu0 0.0
      %1950 = vmatpush1.xpose.msra.mxu0 0.0
      %1951 = vmatprep.subr.mxu0 0.0
      %1952 = vmatpush1.xpose.msra.mxu0 0.0
      %1953 = vmatprep.subr.mxu0 0.0
      %1954 = vmatpush1.xpose.msra.mxu0 0.0
      %1955 = vmatprep.subr.mxu0 0.0
      %1956 = vmatpush1.xpose.msra.mxu0 0.0
      %1957 = vmatprep.subr.mxu0 0.0
      %1958 = vmatpush1.xpose.msra.mxu0 0.0
      %1959 = vmatprep.subr.mxu0 0.0
      %1960 = vmatpush1.xpose.msra.mxu0 0.0
      %1961 = vmatprep.subr.mxu0 0.0
      %1962 = vmatpush1.xpose.msra.mxu0 0.0
      %1963 = vmatprep.subr.mxu0 0.0
      %1964 = vmatpush1.xpose.msra.mxu0 0.0
      %1965 = vmatprep.subr.mxu0 0.0
      %1966 = vmatpush1.xpose.msra.mxu0 0.0
      %1967 = vmatprep.subr.mxu0 0.0
      %1968 = vmatpush1.xpose.msra.mxu0 0.0
      %1969 = vmatprep.subr.mxu0 0.0
      %1970 = vmatpush1.xpose.msra.mxu0 0.0
      %1971 = vmatprep.subr.mxu0 0.0
      %1972 = vmatpush1.xpose.msra.mxu0 0.0
      %1973 = vmatprep.subr.mxu0 0.0
      %1974 = vmatpush1.xpose.msra.mxu0 0.0
      %1975 = vmatprep.subr.mxu0 0.0
      %1976 = vmatpush1.xpose.msra.mxu0 0.0
      %1977 = vmatprep.subr.mxu0 0.0
      %1978 = vmatpush1.xpose.msra.mxu0 0.0
      %1979 = vmatprep.subr.mxu0 0.0
      %1980 = vmatpush1.xpose.msra.mxu0 0.0
      %1981 = vmatprep.subr.mxu0 0.0
      %1982 = vmatpush1.xpose.msra.mxu0 0.0
      %1983 = vmatprep.subr.mxu0 0.0
      %1984 = vmatpush1.xpose.msra.mxu0 0.0
      %1985 = vmatprep.subr.mxu0 0.0
      %1986 = vmatpush1.xpose.msra.mxu0 0.0
      %1987 = vmatprep.subr.mxu0 0.0
      %1988 = vmatpush1.xpose.msra.mxu0 0.0
      %1989 = vmatprep.subr.mxu0 0.0
      %1990 = vmatpush1.xpose.msra.mxu0 0.0
      %1991 = vmatprep.subr.mxu0 0.0
      %1992 = vmatpush1.xpose.msra.mxu0 0.0
      %1993 = vmatprep.subr.mxu0 0.0
      %1994 = vmatpush1.xpose.msra.mxu0 0.0
      %1995 = vmatprep.subr.mxu0 0.0
      %1996 = vmatpush1.xpose.msra.mxu0 0.0
      %1997 = vmatprep.subr.mxu0 0.0
      %1998 = vmatpush1.xpose.msra.mxu0 0.0
      %1999 = vmatprep.subr.mxu0 0.0
      %2000 = vmatpush1.xpose.msra.mxu0 0.0
      %2001 = vmatprep.subr.mxu0 0.0
      %2002 = vmatpush1.xpose.msra.mxu0 0.0
      %2003 = vmatprep.subr.mxu0 0.0
      %2004 = vmatpush1.xpose.msra.mxu0 0.0
      %2005 = vmatprep.subr.mxu0 0.0
      %2006 = vmatpush1.xpose.msra.mxu0 0.0
      %2007 = vmatprep.mubr.f32.mxu0 0.0
      %2008 = vmatmul.mubr.f32.gmra.mrb[0].mxu0 %v1939
      %v2009 = vpop.f32.mrb[0].mxu0
      %v2010 = vadd.f32 %v688, %v2009
      %v2011 = vpop.f32.mrb[0].mxu0
      %2012 = vdwg.mxu0
      %2014 = vrot.lane.b32.xlu0 %v535, 96
      %v2015 = vpop.permute.xlu0 %2014
      %v2016 = vsel %vm286, %v535, 0
      %v2018 = vsel %vm286, %v2015, 0
      %2020 = vmatprep.subr.mxu0 0.0
      %2021 = vmatpush1.xpose.msra.mxu0 %v2018
      %2022 = vmatprep.subr.mxu0 0.0
      %2023 = vmatpush1.xpose.msra.mxu0 0.0
      %2024 = vmatprep.subr.mxu0 0.0
      %2025 = vmatpush1.xpose.msra.mxu0 0.0
      %2026 = vmatprep.subr.mxu0 0.0
      %2027 = vmatpush1.xpose.msra.mxu0 0.0
      %2028 = vmatprep.subr.mxu0 0.0
      %2029 = vmatpush1.xpose.msra.mxu0 0.0
      %2030 = vmatprep.subr.mxu0 0.0
      %2031 = vmatpush1.xpose.msra.mxu0 0.0
      %2032 = vmatprep.subr.mxu0 0.0
      %2033 = vmatpush1.xpose.msra.mxu0 0.0
      %2034 = vmatprep.subr.mxu0 0.0
      %2035 = vmatpush1.xpose.msra.mxu0 0.0
      %2036 = vmatprep.subr.mxu0 0.0
      %2037 = vmatpush1.xpose.msra.mxu0 0.0
      %2038 = vmatprep.subr.mxu0 0.0
      %2039 = vmatpush1.xpose.msra.mxu0 0.0
      %2040 = vmatprep.subr.mxu0 0.0
      %2041 = vmatpush1.xpose.msra.mxu0 0.0
      %2042 = vmatprep.subr.mxu0 0.0
      %2043 = vmatpush1.xpose.msra.mxu0 0.0
      %2044 = vmatprep.subr.mxu0 0.0
      %2045 = vmatpush1.xpose.msra.mxu0 0.0
      %2046 = vmatprep.subr.mxu0 0.0
      %2047 = vmatpush1.xpose.msra.mxu0 0.0
      %2048 = vmatprep.subr.mxu0 0.0
      %2049 = vmatpush1.xpose.msra.mxu0 0.0
      %2050 = vmatprep.subr.mxu0 0.0
      %2051 = vmatpush1.xpose.msra.mxu0 0.0
      %2052 = vmatprep.subr.mxu0 0.0
      %2053 = vmatpush1.xpose.msra.mxu0 0.0
      %2054 = vmatprep.subr.mxu0 0.0
      %2055 = vmatpush1.xpose.msra.mxu0 0.0
      %2056 = vmatprep.subr.mxu0 0.0
      %2057 = vmatpush1.xpose.msra.mxu0 0.0
      %2058 = vmatprep.subr.mxu0 0.0
      %2059 = vmatpush1.xpose.msra.mxu0 0.0
      %2060 = vmatprep.subr.mxu0 0.0
      %2061 = vmatpush1.xpose.msra.mxu0 0.0
      %2062 = vmatprep.subr.mxu0 0.0
      %2063 = vmatpush1.xpose.msra.mxu0 0.0
      %2064 = vmatprep.subr.mxu0 0.0
      %2065 = vmatpush1.xpose.msra.mxu0 0.0
      %2066 = vmatprep.subr.mxu0 0.0
      %2067 = vmatpush1.xpose.msra.mxu0 0.0
      %2068 = vmatprep.subr.mxu0 0.0
      %2069 = vmatpush1.xpose.msra.mxu0 0.0
      %2070 = vmatprep.subr.mxu0 0.0
      %2071 = vmatpush1.xpose.msra.mxu0 0.0
      %2072 = vmatprep.subr.mxu0 0.0
      %2073 = vmatpush1.xpose.msra.mxu0 0.0
      %2074 = vmatprep.subr.mxu0 0.0
      %2075 = vmatpush1.xpose.msra.mxu0 0.0
      %2076 = vmatprep.subr.mxu0 0.0
      %2077 = vmatpush1.xpose.msra.mxu0 0.0
      %2078 = vmatprep.subr.mxu0 0.0
      %2079 = vmatpush1.xpose.msra.mxu0 0.0
      %2080 = vmatprep.subr.mxu0 0.0
      %2081 = vmatpush1.xpose.msra.mxu0 0.0
      %2082 = vmatprep.subr.mxu0 0.0
      %2083 = vmatpush1.xpose.msra.mxu0 0.0
      %2084 = vmatprep.mubr.f32.mxu0 0.0
      %2085 = vmatmul.mubr.f32.gmra.mrb[0].mxu0 %v2016
      %v2086 = vpop.f32.mrb[0].mxu0
      %v2087 = vadd.f32 %v689, %v2086
      %v2088 = vpop.f32.mrb[0].mxu0
      %2089 = vdwg.mxu0
      %2091 = vrot.lane.b32.xlu0 %v540, 96
      %v2092 = vpop.permute.xlu0 %2091
      %v2093 = vsel %vm286, %v540, 0
      %v2095 = vsel %vm286, %v2092, 0
      %2097 = vmatprep.subr.mxu0 0.0
      %2098 = vmatpush1.xpose.msra.mxu0 %v2095
      %2099 = vmatprep.subr.mxu0 0.0
      %2100 = vmatpush1.xpose.msra.mxu0 0.0
      %2101 = vmatprep.subr.mxu0 0.0
      %2102 = vmatpush1.xpose.msra.mxu0 0.0
      %2103 = vmatprep.subr.mxu0 0.0
      %2104 = vmatpush1.xpose.msra.mxu0 0.0
      %2105 = vmatprep.subr.mxu0 0.0
      %2106 = vmatpush1.xpose.msra.mxu0 0.0
      %2107 = vmatprep.subr.mxu0 0.0
      %2108 = vmatpush1.xpose.msra.mxu0 0.0
      %2109 = vmatprep.subr.mxu0 0.0
      %2110 = vmatpush1.xpose.msra.mxu0 0.0
      %2111 = vmatprep.subr.mxu0 0.0
      %2112 = vmatpush1.xpose.msra.mxu0 0.0
      %2113 = vmatprep.subr.mxu0 0.0
      %2114 = vmatpush1.xpose.msra.mxu0 0.0
      %2115 = vmatprep.subr.mxu0 0.0
      %2116 = vmatpush1.xpose.msra.mxu0 0.0
      %2117 = vmatprep.subr.mxu0 0.0
      %2118 = vmatpush1.xpose.msra.mxu0 0.0
      %2119 = vmatprep.subr.mxu0 0.0
      %2120 = vmatpush1.xpose.msra.mxu0 0.0
      %2121 = vmatprep.subr.mxu0 0.0
      %2122 = vmatpush1.xpose.msra.mxu0 0.0
      %2123 = vmatprep.subr.mxu0 0.0
      %2124 = vmatpush1.xpose.msra.mxu0 0.0
      %2125 = vmatprep.subr.mxu0 0.0
      %2126 = vmatpush1.xpose.msra.mxu0 0.0
      %2127 = vmatprep.subr.mxu0 0.0
      %2128 = vmatpush1.xpose.msra.mxu0 0.0
      %2129 = vmatprep.subr.mxu0 0.0
      %2130 = vmatpush1.xpose.msra.mxu0 0.0
      %2131 = vmatprep.subr.mxu0 0.0
      %2132 = vmatpush1.xpose.msra.mxu0 0.0
      %2133 = vmatprep.subr.mxu0 0.0
      %2134 = vmatpush1.xpose.msra.mxu0 0.0
      %2135 = vmatprep.subr.mxu0 0.0
      %2136 = vmatpush1.xpose.msra.mxu0 0.0
      %2137 = vmatprep.subr.mxu0 0.0
      %2138 = vmatpush1.xpose.msra.mxu0 0.0
      %2139 = vmatprep.subr.mxu0 0.0
      %2140 = vmatpush1.xpose.msra.mxu0 0.0
      %2141 = vmatprep.subr.mxu0 0.0
      %2142 = vmatpush1.xpose.msra.mxu0 0.0
      %2143 = vmatprep.subr.mxu0 0.0
      %2144 = vmatpush1.xpose.msra.mxu0 0.0
      %2145 = vmatprep.subr.mxu0 0.0
      %2146 = vmatpush1.xpose.msra.mxu0 0.0
      %2147 = vmatprep.subr.mxu0 0.0
      %2148 = vmatpush1.xpose.msra.mxu0 0.0
      %2149 = vmatprep.subr.mxu0 0.0
      %2150 = vmatpush1.xpose.msra.mxu0 0.0
      %2151 = vmatprep.subr.mxu0 0.0
      %2152 = vmatpush1.xpose.msra.mxu0 0.0
      %2153 = vmatprep.subr.mxu0 0.0
      %2154 = vmatpush1.xpose.msra.mxu0 0.0
      %2155 = vmatprep.subr.mxu0 0.0
      %2156 = vmatpush1.xpose.msra.mxu0 0.0
      %2157 = vmatprep.subr.mxu0 0.0
      %2158 = vmatpush1.xpose.msra.mxu0 0.0
      %2159 = vmatprep.subr.mxu0 0.0
      %2160 = vmatpush1.xpose.msra.mxu0 0.0
      %2161 = vmatprep.mubr.f32.mxu0 0.0
      %2162 = vmatmul.mubr.f32.gmra.mrb[0].mxu0 %v2093
      %v2163 = vpop.f32.mrb[0].mxu0
      %v2164 = vadd.f32 %v690, %v2163
      %v2165 = vpop.f32.mrb[0].mxu0
      %2166 = vdwg.mxu0
      %2168 = vrot.lane.b32.xlu0 %v545, 96
      %v2169 = vpop.permute.xlu0 %2168
      %v2170 = vsel %vm286, %v545, 0
      %v2172 = vsel %vm286, %v2169, 0
      %2174 = vmatprep.subr.mxu0 0.0
      %2175 = vmatpush1.xpose.msra.mxu0 %v2172
      %2176 = vmatprep.subr.mxu0 0.0
      %2177 = vmatpush1.xpose.msra.mxu0 0.0
      %2178 = vmatprep.subr.mxu0 0.0
      %2179 = vmatpush1.xpose.msra.mxu0 0.0
      %2180 = vmatprep.subr.mxu0 0.0
      %2181 = vmatpush1.xpose.msra.mxu0 0.0
      %2182 = vmatprep.subr.mxu0 0.0
      %2183 = vmatpush1.xpose.msra.mxu0 0.0
      %2184 = vmatprep.subr.mxu0 0.0
      %2185 = vmatpush1.xpose.msra.mxu0 0.0
      %2186 = vmatprep.subr.mxu0 0.0
      %2187 = vmatpush1.xpose.msra.mxu0 0.0
      %2188 = vmatprep.subr.mxu0 0.0
      %2189 = vmatpush1.xpose.msra.mxu0 0.0
      %2190 = vmatprep.subr.mxu0 0.0
      %2191 = vmatpush1.xpose.msra.mxu0 0.0
      %2192 = vmatprep.subr.mxu0 0.0
      %2193 = vmatpush1.xpose.msra.mxu0 0.0
      %2194 = vmatprep.subr.mxu0 0.0
      %2195 = vmatpush1.xpose.msra.mxu0 0.0
      %2196 = vmatprep.subr.mxu0 0.0
      %2197 = vmatpush1.xpose.msra.mxu0 0.0
      %2198 = vmatprep.subr.mxu0 0.0
      %2199 = vmatpush1.xpose.msra.mxu0 0.0
      %2200 = vmatprep.subr.mxu0 0.0
      %2201 = vmatpush1.xpose.msra.mxu0 0.0
      %2202 = vmatprep.subr.mxu0 0.0
      %2203 = vmatpush1.xpose.msra.mxu0 0.0
      %2204 = vmatprep.subr.mxu0 0.0
      %2205 = vmatpush1.xpose.msra.mxu0 0.0
      %2206 = vmatprep.subr.mxu0 0.0
      %2207 = vmatpush1.xpose.msra.mxu0 0.0
      %2208 = vmatprep.subr.mxu0 0.0
      %2209 = vmatpush1.xpose.msra.mxu0 0.0
      %2210 = vmatprep.subr.mxu0 0.0
      %2211 = vmatpush1.xpose.msra.mxu0 0.0
      %2212 = vmatprep.subr.mxu0 0.0
      %2213 = vmatpush1.xpose.msra.mxu0 0.0
      %2214 = vmatprep.subr.mxu0 0.0
      %2215 = vmatpush1.xpose.msra.mxu0 0.0
      %2216 = vmatprep.subr.mxu0 0.0
      %2217 = vmatpush1.xpose.msra.mxu0 0.0
      %2218 = vmatprep.subr.mxu0 0.0
      %2219 = vmatpush1.xpose.msra.mxu0 0.0
      %2220 = vmatprep.subr.mxu0 0.0
      %2221 = vmatpush1.xpose.msra.mxu0 0.0
      %2222 = vmatprep.subr.mxu0 0.0
      %2223 = vmatpush1.xpose.msra.mxu0 0.0
      %2224 = vmatprep.subr.mxu0 0.0
      %2225 = vmatpush1.xpose.msra.mxu0 0.0
      %2226 = vmatprep.subr.mxu0 0.0
      %2227 = vmatpush1.xpose.msra.mxu0 0.0
      %2228 = vmatprep.subr.mxu0 0.0
      %2229 = vmatpush1.xpose.msra.mxu0 0.0
      %2230 = vmatprep.subr.mxu0 0.0
      %2231 = vmatpush1.xpose.msra.mxu0 0.0
      %2232 = vmatprep.subr.mxu0 0.0
      %2233 = vmatpush1.xpose.msra.mxu0 0.0
      %2234 = vmatprep.subr.mxu0 0.0
      %2235 = vmatpush1.xpose.msra.mxu0 0.0
      %2236 = vmatprep.subr.mxu0 0.0
      %2237 = vmatpush1.xpose.msra.mxu0 0.0
      %2238 = vmatprep.mubr.f32.mxu0 0.0
      %2239 = vmatmul.mubr.f32.gmra.mrb[0].mxu0 %v2170
      %v2240 = vpop.f32.mrb[0].mxu0
      %v2241 = vadd.f32 %v691, %v2240
      %v2242 = vpop.f32.mrb[0].mxu0
      %2243 = vdwg.mxu0
      %2245 = vrot.lane.b32.xlu0 %v550, 96
      %v2246 = vpop.permute.xlu0 %2245
      %v2247 = vsel %vm286, %v550, 0
      %v2249 = vsel %vm286, %v2246, 0
      %2251 = vmatprep.subr.mxu0 0.0
      %2252 = vmatpush1.xpose.msra.mxu0 %v2249
      %2253 = vmatprep.subr.mxu0 0.0
      %2254 = vmatpush1.xpose.msra.mxu0 0.0
      %2255 = vmatprep.subr.mxu0 0.0
      %2256 = vmatpush1.xpose.msra.mxu0 0.0
      %2257 = vmatprep.subr.mxu0 0.0
      %2258 = vmatpush1.xpose.msra.mxu0 0.0
      %2259 = vmatprep.subr.mxu0 0.0
      %2260 = vmatpush1.xpose.msra.mxu0 0.0
      %2261 = vmatprep.subr.mxu0 0.0
      %2262 = vmatpush1.xpose.msra.mxu0 0.0
      %2263 = vmatprep.subr.mxu0 0.0
      %2264 = vmatpush1.xpose.msra.mxu0 0.0
      %2265 = vmatprep.subr.mxu0 0.0
      %2266 = vmatpush1.xpose.msra.mxu0 0.0
      %2267 = vmatprep.subr.mxu0 0.0
      %2268 = vmatpush1.xpose.msra.mxu0 0.0
      %2269 = vmatprep.subr.mxu0 0.0
      %2270 = vmatpush1.xpose.msra.mxu0 0.0
      %2271 = vmatprep.subr.mxu0 0.0
      %2272 = vmatpush1.xpose.msra.mxu0 0.0
      %2273 = vmatprep.subr.mxu0 0.0
      %2274 = vmatpush1.xpose.msra.mxu0 0.0
      %2275 = vmatprep.subr.mxu0 0.0
      %2276 = vmatpush1.xpose.msra.mxu0 0.0
      %2277 = vmatprep.subr.mxu0 0.0
      %2278 = vmatpush1.xpose.msra.mxu0 0.0
      %2279 = vmatprep.subr.mxu0 0.0
      %2280 = vmatpush1.xpose.msra.mxu0 0.0
      %2281 = vmatprep.subr.mxu0 0.0
      %2282 = vmatpush1.xpose.msra.mxu0 0.0
      %2283 = vmatprep.subr.mxu0 0.0
      %2284 = vmatpush1.xpose.msra.mxu0 0.0
      %2285 = vmatprep.subr.mxu0 0.0
      %2286 = vmatpush1.xpose.msra.mxu0 0.0
      %2287 = vmatprep.subr.mxu0 0.0
      %2288 = vmatpush1.xpose.msra.mxu0 0.0
      %2289 = vmatprep.subr.mxu0 0.0
      %2290 = vmatpush1.xpose.msra.mxu0 0.0
      %2291 = vmatprep.subr.mxu0 0.0
      %2292 = vmatpush1.xpose.msra.mxu0 0.0
      %2293 = vmatprep.subr.mxu0 0.0
      %2294 = vmatpush1.xpose.msra.mxu0 0.0
      %2295 = vmatprep.subr.mxu0 0.0
      %2296 = vmatpush1.xpose.msra.mxu0 0.0
      %2297 = vmatprep.subr.mxu0 0.0
      %2298 = vmatpush1.xpose.msra.mxu0 0.0
      %2299 = vmatprep.subr.mxu0 0.0
      %2300 = vmatpush1.xpose.msra.mxu0 0.0
      %2301 = vmatprep.subr.mxu0 0.0
      %2302 = vmatpush1.xpose.msra.mxu0 0.0
      %2303 = vmatprep.subr.mxu0 0.0
      %2304 = vmatpush1.xpose.msra.mxu0 0.0
      %2305 = vmatprep.subr.mxu0 0.0
      %2306 = vmatpush1.xpose.msra.mxu0 0.0
      %2307 = vmatprep.subr.mxu0 0.0
      %2308 = vmatpush1.xpose.msra.mxu0 0.0
      %2309 = vmatprep.subr.mxu0 0.0
      %2310 = vmatpush1.xpose.msra.mxu0 0.0
      %2311 = vmatprep.subr.mxu0 0.0
      %2312 = vmatpush1.xpose.msra.mxu0 0.0
      %2313 = vmatprep.subr.mxu0 0.0
      %2314 = vmatpush1.xpose.msra.mxu0 0.0
      %2315 = vmatprep.mubr.f32.mxu0 0.0
      %2316 = vmatmul.mubr.f32.gmra.mrb[0].mxu0 %v2247
      %v2317 = vpop.f32.mrb[0].mxu0
      %v2318 = vadd.f32 %v692, %v2317
      %v2319 = vpop.f32.mrb[0].mxu0
      %2320 = vdwg.mxu0
      %2322 = vrot.lane.b32.xlu0 %v555, 96
      %v2323 = vpop.permute.xlu0 %2322
      %v2324 = vsel %vm286, %v555, 0
      %v2326 = vsel %vm286, %v2323, 0
      %2328 = vmatprep.subr.mxu0 0.0
      %2329 = vmatpush1.xpose.msra.mxu0 %v2326
      %2330 = vmatprep.subr.mxu0 0.0
      %2331 = vmatpush1.xpose.msra.mxu0 0.0
      %2332 = vmatprep.subr.mxu0 0.0
      %2333 = vmatpush1.xpose.msra.mxu0 0.0
      %2334 = vmatprep.subr.mxu0 0.0
      %2335 = vmatpush1.xpose.msra.mxu0 0.0
      %2336 = vmatprep.subr.mxu0 0.0
      %2337 = vmatpush1.xpose.msra.mxu0 0.0
      %2338 = vmatprep.subr.mxu0 0.0
      %2339 = vmatpush1.xpose.msra.mxu0 0.0
      %2340 = vmatprep.subr.mxu0 0.0
      %2341 = vmatpush1.xpose.msra.mxu0 0.0
      %2342 = vmatprep.subr.mxu0 0.0
      %2343 = vmatpush1.xpose.msra.mxu0 0.0
      %2344 = vmatprep.subr.mxu0 0.0
      %2345 = vmatpush1.xpose.msra.mxu0 0.0
      %2346 = vmatprep.subr.mxu0 0.0
      %2347 = vmatpush1.xpose.msra.mxu0 0.0
      %2348 = vmatprep.subr.mxu0 0.0
      %2349 = vmatpush1.xpose.msra.mxu0 0.0
      %2350 = vmatprep.subr.mxu0 0.0
      %2351 = vmatpush1.xpose.msra.mxu0 0.0
      %2352 = vmatprep.subr.mxu0 0.0
      %2353 = vmatpush1.xpose.msra.mxu0 0.0
      %2354 = vmatprep.subr.mxu0 0.0
      %2355 = vmatpush1.xpose.msra.mxu0 0.0
      %2356 = vmatprep.subr.mxu0 0.0
      %2357 = vmatpush1.xpose.msra.mxu0 0.0
      %2358 = vmatprep.subr.mxu0 0.0
      %2359 = vmatpush1.xpose.msra.mxu0 0.0
      %2360 = vmatprep.subr.mxu0 0.0
      %2361 = vmatpush1.xpose.msra.mxu0 0.0
      %2362 = vmatprep.subr.mxu0 0.0
      %2363 = vmatpush1.xpose.msra.mxu0 0.0
      %2364 = vmatprep.subr.mxu0 0.0
      %2365 = vmatpush1.xpose.msra.mxu0 0.0
      %2366 = vmatprep.subr.mxu0 0.0
      %2367 = vmatpush1.xpose.msra.mxu0 0.0
      %2368 = vmatprep.subr.mxu0 0.0
      %2369 = vmatpush1.xpose.msra.mxu0 0.0
      %2370 = vmatprep.subr.mxu0 0.0
      %2371 = vmatpush1.xpose.msra.mxu0 0.0
      %2372 = vmatprep.subr.mxu0 0.0
      %2373 = vmatpush1.xpose.msra.mxu0 0.0
      %2374 = vmatprep.subr.mxu0 0.0
      %2375 = vmatpush1.xpose.msra.mxu0 0.0
      %2376 = vmatprep.subr.mxu0 0.0
      %2377 = vmatpush1.xpose.msra.mxu0 0.0
      %2378 = vmatprep.subr.mxu0 0.0
      %2379 = vmatpush1.xpose.msra.mxu0 0.0
      %2380 = vmatprep.subr.mxu0 0.0
      %2381 = vmatpush1.xpose.msra.mxu0 0.0
      %2382 = vmatprep.subr.mxu0 0.0
      %2383 = vmatpush1.xpose.msra.mxu0 0.0
      %2384 = vmatprep.subr.mxu0 0.0
      %2385 = vmatpush1.xpose.msra.mxu0 0.0
      %2386 = vmatprep.subr.mxu0 0.0
      %2387 = vmatpush1.xpose.msra.mxu0 0.0
      %2388 = vmatprep.subr.mxu0 0.0
      %2389 = vmatpush1.xpose.msra.mxu0 0.0
      %2390 = vmatprep.subr.mxu0 0.0
      %2391 = vmatpush1.xpose.msra.mxu0 0.0
      %2392 = vmatprep.mubr.f32.mxu0 0.0
      %2393 = vmatmul.mubr.f32.gmra.mrb[0].mxu0 %v2324
      %v2394 = vpop.f32.mrb[0].mxu0
      %v2395 = vadd.f32 %v693, %v2394
      %v2396 = vpop.f32.mrb[0].mxu0
      %2397 = vdwg.mxu0
      %2399 = vrot.lane.b32.xlu0 %v560, 96
      %v2400 = vpop.permute.xlu0 %2399
      %v2401 = vsel %vm286, %v560, 0
      %v2403 = vsel %vm286, %v2400, 0
      %2405 = vmatprep.subr.mxu0 0.0
      %2406 = vmatpush1.xpose.msra.mxu0 %v2403
      %2407 = vmatprep.subr.mxu0 0.0
      %2408 = vmatpush1.xpose.msra.mxu0 0.0
      %2409 = vmatprep.subr.mxu0 0.0
      %2410 = vmatpush1.xpose.msra.mxu0 0.0
      %2411 = vmatprep.subr.mxu0 0.0
      %2412 = vmatpush1.xpose.msra.mxu0 0.0
      %2413 = vmatprep.subr.mxu0 0.0
      %2414 = vmatpush1.xpose.msra.mxu0 0.0
      %2415 = vmatprep.subr.mxu0 0.0
      %2416 = vmatpush1.xpose.msra.mxu0 0.0
      %2417 = vmatprep.subr.mxu0 0.0
      %2418 = vmatpush1.xpose.msra.mxu0 0.0
      %2419 = vmatprep.subr.mxu0 0.0
      %2420 = vmatpush1.xpose.msra.mxu0 0.0
      %2421 = vmatprep.subr.mxu0 0.0
      %2422 = vmatpush1.xpose.msra.mxu0 0.0
      %2423 = vmatprep.subr.mxu0 0.0
      %2424 = vmatpush1.xpose.msra.mxu0 0.0
      %2425 = vmatprep.subr.mxu0 0.0
      %2426 = vmatpush1.xpose.msra.mxu0 0.0
      %2427 = vmatprep.subr.mxu0 0.0
      %2428 = vmatpush1.xpose.msra.mxu0 0.0
      %2429 = vmatprep.subr.mxu0 0.0
      %2430 = vmatpush1.xpose.msra.mxu0 0.0
      %2431 = vmatprep.subr.mxu0 0.0
      %2432 = vmatpush1.xpose.msra.mxu0 0.0
      %2433 = vmatprep.subr.mxu0 0.0
      %2434 = vmatpush1.xpose.msra.mxu0 0.0
      %2435 = vmatprep.subr.mxu0 0.0
      %2436 = vmatpush1.xpose.msra.mxu0 0.0
      %2437 = vmatprep.subr.mxu0 0.0
      %2438 = vmatpush1.xpose.msra.mxu0 0.0
      %2439 = vmatprep.subr.mxu0 0.0
      %2440 = vmatpush1.xpose.msra.mxu0 0.0
      %2441 = vmatprep.subr.mxu0 0.0
      %2442 = vmatpush1.xpose.msra.mxu0 0.0
      %2443 = vmatprep.subr.mxu0 0.0
      %2444 = vmatpush1.xpose.msra.mxu0 0.0
      %2445 = vmatprep.subr.mxu0 0.0
      %2446 = vmatpush1.xpose.msra.mxu0 0.0
      %2447 = vmatprep.subr.mxu0 0.0
      %2448 = vmatpush1.xpose.msra.mxu0 0.0
      %2449 = vmatprep.subr.mxu0 0.0
      %2450 = vmatpush1.xpose.msra.mxu0 0.0
      %2451 = vmatprep.subr.mxu0 0.0
      %2452 = vmatpush1.xpose.msra.mxu0 0.0
      %2453 = vmatprep.subr.mxu0 0.0
      %2454 = vmatpush1.xpose.msra.mxu0 0.0
      %2455 = vmatprep.subr.mxu0 0.0
      %2456 = vmatpush1.xpose.msra.mxu0 0.0
      %2457 = vmatprep.subr.mxu0 0.0
      %2458 = vmatpush1.xpose.msra.mxu0 0.0
      %2459 = vmatprep.subr.mxu0 0.0
      %2460 = vmatpush1.xpose.msra.mxu0 0.0
      %2461 = vmatprep.subr.mxu0 0.0
      %2462 = vmatpush1.xpose.msra.mxu0 0.0
      %2463 = vmatprep.subr.mxu0 0.0
      %2464 = vmatpush1.xpose.msra.mxu0 0.0
      %2465 = vmatprep.subr.mxu0 0.0
      %2466 = vmatpush1.xpose.msra.mxu0 0.0
      %2467 = vmatprep.subr.mxu0 0.0
      %2468 = vmatpush1.xpose.msra.mxu0 0.0
      %2469 = vmatprep.mubr.f32.mxu0 0.0
      %2470 = vmatmul.mubr.f32.gmra.mrb[0].mxu0 %v2401
      %v2471 = vpop.f32.mrb[0].mxu0
      %v2472 = vadd.f32 %v694, %v2471
      %v2473 = vpop.f32.mrb[0].mxu0
      %2474 = vdwg.mxu0
      %2476 = vrot.lane.b32.xlu0 %v565, 96
      %v2477 = vpop.permute.xlu0 %2476
      %v2478 = vsel %vm286, %v565, 0
      %v2480 = vsel %vm286, %v2477, 0
      %2482 = vmatprep.subr.mxu0 0.0
      %2483 = vmatpush1.xpose.msra.mxu0 %v2480
      %2484 = vmatprep.subr.mxu0 0.0
      %2485 = vmatpush1.xpose.msra.mxu0 0.0
      %2486 = vmatprep.subr.mxu0 0.0
      %2487 = vmatpush1.xpose.msra.mxu0 0.0
      %2488 = vmatprep.subr.mxu0 0.0
      %2489 = vmatpush1.xpose.msra.mxu0 0.0
      %2490 = vmatprep.subr.mxu0 0.0
      %2491 = vmatpush1.xpose.msra.mxu0 0.0
      %2492 = vmatprep.subr.mxu0 0.0
      %2493 = vmatpush1.xpose.msra.mxu0 0.0
      %2494 = vmatprep.subr.mxu0 0.0
      %2495 = vmatpush1.xpose.msra.mxu0 0.0
      %2496 = vmatprep.subr.mxu0 0.0
      %2497 = vmatpush1.xpose.msra.mxu0 0.0
      %2498 = vmatprep.subr.mxu0 0.0
      %2499 = vmatpush1.xpose.msra.mxu0 0.0
      %2500 = vmatprep.subr.mxu0 0.0
      %2501 = vmatpush1.xpose.msra.mxu0 0.0
      %2502 = vmatprep.subr.mxu0 0.0
      %2503 = vmatpush1.xpose.msra.mxu0 0.0
      %2504 = vmatprep.subr.mxu0 0.0
      %2505 = vmatpush1.xpose.msra.mxu0 0.0
      %2506 = vmatprep.subr.mxu0 0.0
      %2507 = vmatpush1.xpose.msra.mxu0 0.0
      %2508 = vmatprep.subr.mxu0 0.0
      %2509 = vmatpush1.xpose.msra.mxu0 0.0
      %2510 = vmatprep.subr.mxu0 0.0
      %2511 = vmatpush1.xpose.msra.mxu0 0.0
      %2512 = vmatprep.subr.mxu0 0.0
      %2513 = vmatpush1.xpose.msra.mxu0 0.0
      %2514 = vmatprep.subr.mxu0 0.0
      %2515 = vmatpush1.xpose.msra.mxu0 0.0
      %2516 = vmatprep.subr.mxu0 0.0
      %2517 = vmatpush1.xpose.msra.mxu0 0.0
      %2518 = vmatprep.subr.mxu0 0.0
      %2519 = vmatpush1.xpose.msra.mxu0 0.0
      %2520 = vmatprep.subr.mxu0 0.0
      %2521 = vmatpush1.xpose.msra.mxu0 0.0
      %2522 = vmatprep.subr.mxu0 0.0
      %2523 = vmatpush1.xpose.msra.mxu0 0.0
      %2524 = vmatprep.subr.mxu0 0.0
      %2525 = vmatpush1.xpose.msra.mxu0 0.0
      %2526 = vmatprep.subr.mxu0 0.0
      %2527 = vmatpush1.xpose.msra.mxu0 0.0
      %2528 = vmatprep.subr.mxu0 0.0
      %2529 = vmatpush1.xpose.msra.mxu0 0.0
      %2530 = vmatprep.subr.mxu0 0.0
      %2531 = vmatpush1.xpose.msra.mxu0 0.0
      %2532 = vmatprep.subr.mxu0 0.0
      %2533 = vmatpush1.xpose.msra.mxu0 0.0
      %2534 = vmatprep.subr.mxu0 0.0
      %2535 = vmatpush1.xpose.msra.mxu0 0.0
      %2536 = vmatprep.subr.mxu0 0.0
      %2537 = vmatpush1.xpose.msra.mxu0 0.0
      %2538 = vmatprep.subr.mxu0 0.0
      %2539 = vmatpush1.xpose.msra.mxu0 0.0
      %2540 = vmatprep.subr.mxu0 0.0
      %2541 = vmatpush1.xpose.msra.mxu0 0.0
      %2542 = vmatprep.subr.mxu0 0.0
      %2543 = vmatpush1.xpose.msra.mxu0 0.0
      %2544 = vmatprep.subr.mxu0 0.0
      %2545 = vmatpush1.xpose.msra.mxu0 0.0
      %2546 = vmatprep.mubr.f32.mxu0 0.0
      %2547 = vmatmul.mubr.f32.gmra.mrb[0].mxu0 %v2478
      %v2548 = vpop.f32.mrb[0].mxu0
      %v2549 = vadd.f32 %v695, %v2548
      %v2550 = vpop.f32.mrb[0].mxu0
      %2551 = vdwg.mxu0
      %2553 = vrot.lane.b32.xlu0 %v570, 96
      %v2554 = vpop.permute.xlu0 %2553
      %v2555 = vsel %vm286, %v570, 0
      %v2557 = vsel %vm286, %v2554, 0
      %2559 = vmatprep.subr.mxu0 0.0
      %2560 = vmatpush1.xpose.msra.mxu0 %v2557
      %2561 = vmatprep.subr.mxu0 0.0
      %2562 = vmatpush1.xpose.msra.mxu0 0.0
      %2563 = vmatprep.subr.mxu0 0.0
      %2564 = vmatpush1.xpose.msra.mxu0 0.0
      %2565 = vmatprep.subr.mxu0 0.0
      %2566 = vmatpush1.xpose.msra.mxu0 0.0
      %2567 = vmatprep.subr.mxu0 0.0
      %2568 = vmatpush1.xpose.msra.mxu0 0.0
      %2569 = vmatprep.subr.mxu0 0.0
      %2570 = vmatpush1.xpose.msra.mxu0 0.0
      %2571 = vmatprep.subr.mxu0 0.0
      %2572 = vmatpush1.xpose.msra.mxu0 0.0
      %2573 = vmatprep.subr.mxu0 0.0
      %2574 = vmatpush1.xpose.msra.mxu0 0.0
      %2575 = vmatprep.subr.mxu0 0.0
      %2576 = vmatpush1.xpose.msra.mxu0 0.0
      %2577 = vmatprep.subr.mxu0 0.0
      %2578 = vmatpush1.xpose.msra.mxu0 0.0
      %2579 = vmatprep.subr.mxu0 0.0
      %2580 = vmatpush1.xpose.msra.mxu0 0.0
      %2581 = vmatprep.subr.mxu0 0.0
      %2582 = vmatpush1.xpose.msra.mxu0 0.0
      %2583 = vmatprep.subr.mxu0 0.0
      %2584 = vmatpush1.xpose.msra.mxu0 0.0
      %2585 = vmatprep.subr.mxu0 0.0
      %2586 = vmatpush1.xpose.msra.mxu0 0.0
      %2587 = vmatprep.subr.mxu0 0.0
      %2588 = vmatpush1.xpose.msra.mxu0 0.0
      %2589 = vmatprep.subr.mxu0 0.0
      %2590 = vmatpush1.xpose.msra.mxu0 0.0
      %2591 = vmatprep.subr.mxu0 0.0
      %2592 = vmatpush1.xpose.msra.mxu0 0.0
      %2593 = vmatprep.subr.mxu0 0.0
      %2594 = vmatpush1.xpose.msra.mxu0 0.0
      %2595 = vmatprep.subr.mxu0 0.0
      %2596 = vmatpush1.xpose.msra.mxu0 0.0
      %2597 = vmatprep.subr.mxu0 0.0
      %2598 = vmatpush1.xpose.msra.mxu0 0.0
      %2599 = vmatprep.subr.mxu0 0.0
      %2600 = vmatpush1.xpose.msra.mxu0 0.0
      %2601 = vmatprep.subr.mxu0 0.0
      %2602 = vmatpush1.xpose.msra.mxu0 0.0
      %2603 = vmatprep.subr.mxu0 0.0
      %2604 = vmatpush1.xpose.msra.mxu0 0.0
      %2605 = vmatprep.subr.mxu0 0.0
      %2606 = vmatpush1.xpose.msra.mxu0 0.0
      %2607 = vmatprep.subr.mxu0 0.0
      %2608 = vmatpush1.xpose.msra.mxu0 0.0
      %2609 = vmatprep.subr.mxu0 0.0
      %2610 = vmatpush1.xpose.msra.mxu0 0.0
      %2611 = vmatprep.subr.mxu0 0.0
      %2612 = vmatpush1.xpose.msra.mxu0 0.0
      %2613 = vmatprep.subr.mxu0 0.0
      %2614 = vmatpush1.xpose.msra.mxu0 0.0
      %2615 = vmatprep.subr.mxu0 0.0
      %2616 = vmatpush1.xpose.msra.mxu0 0.0
      %2617 = vmatprep.subr.mxu0 0.0
      %2618 = vmatpush1.xpose.msra.mxu0 0.0
      %2619 = vmatprep.subr.mxu0 0.0
      %2620 = vmatpush1.xpose.msra.mxu0 0.0
      %2621 = vmatprep.subr.mxu0 0.0
      %2622 = vmatpush1.xpose.msra.mxu0 0.0
      %2623 = vmatprep.mubr.f32.mxu0 0.0
      %2624 = vmatmul.mubr.f32.gmra.mrb[0].mxu0 %v2555
      %v2625 = vpop.f32.mrb[0].mxu0
      %v2626 = vadd.f32 %v696, %v2625
      %v2627 = vpop.f32.mrb[0].mxu0
      %2628 = vdwg.mxu0
      %2630 = vrot.lane.b32.xlu0 %v575, 96
      %v2631 = vpop.permute.xlu0 %2630
      %v2632 = vsel %vm286, %v575, 0
      %v2634 = vsel %vm286, %v2631, 0
      %2636 = vmatprep.subr.mxu0 0.0
      %2637 = vmatpush1.xpose.msra.mxu0 %v2634
      %2638 = vmatprep.subr.mxu0 0.0
      %2639 = vmatpush1.xpose.msra.mxu0 0.0
      %2640 = vmatprep.subr.mxu0 0.0
      %2641 = vmatpush1.xpose.msra.mxu0 0.0
      %2642 = vmatprep.subr.mxu0 0.0
      %2643 = vmatpush1.xpose.msra.mxu0 0.0
      %2644 = vmatprep.subr.mxu0 0.0
      %2645 = vmatpush1.xpose.msra.mxu0 0.0
      %2646 = vmatprep.subr.mxu0 0.0
      %2647 = vmatpush1.xpose.msra.mxu0 0.0
      %2648 = vmatprep.subr.mxu0 0.0
      %2649 = vmatpush1.xpose.msra.mxu0 0.0
      %2650 = vmatprep.subr.mxu0 0.0
      %2651 = vmatpush1.xpose.msra.mxu0 0.0
      %2652 = vmatprep.subr.mxu0 0.0
      %2653 = vmatpush1.xpose.msra.mxu0 0.0
      %2654 = vmatprep.subr.mxu0 0.0
      %2655 = vmatpush1.xpose.msra.mxu0 0.0
      %2656 = vmatprep.subr.mxu0 0.0
      %2657 = vmatpush1.xpose.msra.mxu0 0.0
      %2658 = vmatprep.subr.mxu0 0.0
      %2659 = vmatpush1.xpose.msra.mxu0 0.0
      %2660 = vmatprep.subr.mxu0 0.0
      %2661 = vmatpush1.xpose.msra.mxu0 0.0
      %2662 = vmatprep.subr.mxu0 0.0
      %2663 = vmatpush1.xpose.msra.mxu0 0.0
      %2664 = vmatprep.subr.mxu0 0.0
      %2665 = vmatpush1.xpose.msra.mxu0 0.0
      %2666 = vmatprep.subr.mxu0 0.0
      %2667 = vmatpush1.xpose.msra.mxu0 0.0
      %2668 = vmatprep.subr.mxu0 0.0
      %2669 = vmatpush1.xpose.msra.mxu0 0.0
      %2670 = vmatprep.subr.mxu0 0.0
      %2671 = vmatpush1.xpose.msra.mxu0 0.0
      %2672 = vmatprep.subr.mxu0 0.0
      %2673 = vmatpush1.xpose.msra.mxu0 0.0
      %2674 = vmatprep.subr.mxu0 0.0
      %2675 = vmatpush1.xpose.msra.mxu0 0.0
      %2676 = vmatprep.subr.mxu0 0.0
      %2677 = vmatpush1.xpose.msra.mxu0 0.0
      %2678 = vmatprep.subr.mxu0 0.0
      %2679 = vmatpush1.xpose.msra.mxu0 0.0
      %2680 = vmatprep.subr.mxu0 0.0
      %2681 = vmatpush1.xpose.msra.mxu0 0.0
      %2682 = vmatprep.subr.mxu0 0.0
      %2683 = vmatpush1.xpose.msra.mxu0 0.0
      %2684 = vmatprep.subr.mxu0 0.0
      %2685 = vmatpush1.xpose.msra.mxu0 0.0
      %2686 = vmatprep.subr.mxu0 0.0
      %2687 = vmatpush1.xpose.msra.mxu0 0.0
      %2688 = vmatprep.subr.mxu0 0.0
      %2689 = vmatpush1.xpose.msra.mxu0 0.0
      %2690 = vmatprep.subr.mxu0 0.0
      %2691 = vmatpush1.xpose.msra.mxu0 0.0
      %2692 = vmatprep.subr.mxu0 0.0
      %2693 = vmatpush1.xpose.msra.mxu0 0.0
      %2694 = vmatprep.subr.mxu0 0.0
      %2695 = vmatpush1.xpose.msra.mxu0 0.0
      %2696 = vmatprep.subr.mxu0 0.0
      %2697 = vmatpush1.xpose.msra.mxu0 0.0
      %2698 = vmatprep.subr.mxu0 0.0
      %2699 = vmatpush1.xpose.msra.mxu0 0.0
      %2700 = vmatprep.mubr.f32.mxu0 0.0
      %2701 = vmatmul.mubr.f32.gmra.mrb[0].mxu0 %v2632
      %v2702 = vpop.f32.mrb[0].mxu0
      %v2703 = vadd.f32 %v697, %v2702
      %v2704 = vpop.f32.mrb[0].mxu0
      %2705 = vdwg.mxu0
      %2707 = vrot.lane.b32.xlu0 %v580, 96
      %v2708 = vpop.permute.xlu0 %2707
      %v2709 = vsel %vm286, %v580, 0
      %v2711 = vsel %vm286, %v2708, 0
      %2713 = vmatprep.subr.mxu0 0.0
      %2714 = vmatpush1.xpose.msra.mxu0 %v2711
      %2715 = vmatprep.subr.mxu0 0.0
      %2716 = vmatpush1.xpose.msra.mxu0 0.0
      %2717 = vmatprep.subr.mxu0 0.0
      %2718 = vmatpush1.xpose.msra.mxu0 0.0
      %2719 = vmatprep.subr.mxu0 0.0
      %2720 = vmatpush1.xpose.msra.mxu0 0.0
      %2721 = vmatprep.subr.mxu0 0.0
      %2722 = vmatpush1.xpose.msra.mxu0 0.0
      %2723 = vmatprep.subr.mxu0 0.0
      %2724 = vmatpush1.xpose.msra.mxu0 0.0
      %2725 = vmatprep.subr.mxu0 0.0
      %2726 = vmatpush1.xpose.msra.mxu0 0.0
      %2727 = vmatprep.subr.mxu0 0.0
      %2728 = vmatpush1.xpose.msra.mxu0 0.0
      %2729 = vmatprep.subr.mxu0 0.0
      %2730 = vmatpush1.xpose.msra.mxu0 0.0
      %2731 = vmatprep.subr.mxu0 0.0
      %2732 = vmatpush1.xpose.msra.mxu0 0.0
      %2733 = vmatprep.subr.mxu0 0.0
      %2734 = vmatpush1.xpose.msra.mxu0 0.0
      %2735 = vmatprep.subr.mxu0 0.0
      %2736 = vmatpush1.xpose.msra.mxu0 0.0
      %2737 = vmatprep.subr.mxu0 0.0
      %2738 = vmatpush1.xpose.msra.mxu0 0.0
      %2739 = vmatprep.subr.mxu0 0.0
      %2740 = vmatpush1.xpose.msra.mxu0 0.0
      %2741 = vmatprep.subr.mxu0 0.0
      %2742 = vmatpush1.xpose.msra.mxu0 0.0
      %2743 = vmatprep.subr.mxu0 0.0
      %2744 = vmatpush1.xpose.msra.mxu0 0.0
      %2745 = vmatprep.subr.mxu0 0.0
      %2746 = vmatpush1.xpose.msra.mxu0 0.0
      %2747 = vmatprep.subr.mxu0 0.0
      %2748 = vmatpush1.xpose.msra.mxu0 0.0
      %2749 = vmatprep.subr.mxu0 0.0
      %2750 = vmatpush1.xpose.msra.mxu0 0.0
      %2751 = vmatprep.subr.mxu0 0.0
      %2752 = vmatpush1.xpose.msra.mxu0 0.0
      %2753 = vmatprep.subr.mxu0 0.0
      %2754 = vmatpush1.xpose.msra.mxu0 0.0
      %2755 = vmatprep.subr.mxu0 0.0
      %2756 = vmatpush1.xpose.msra.mxu0 0.0
      %2757 = vmatprep.subr.mxu0 0.0
      %2758 = vmatpush1.xpose.msra.mxu0 0.0
      %2759 = vmatprep.subr.mxu0 0.0
      %2760 = vmatpush1.xpose.msra.mxu0 0.0
      %2761 = vmatprep.subr.mxu0 0.0
      %2762 = vmatpush1.xpose.msra.mxu0 0.0
      %2763 = vmatprep.subr.mxu0 0.0
      %2764 = vmatpush1.xpose.msra.mxu0 0.0
      %2765 = vmatprep.subr.mxu0 0.0
      %2766 = vmatpush1.xpose.msra.mxu0 0.0
      %2767 = vmatprep.subr.mxu0 0.0
      %2768 = vmatpush1.xpose.msra.mxu0 0.0
      %2769 = vmatprep.subr.mxu0 0.0
      %2770 = vmatpush1.xpose.msra.mxu0 0.0
      %2771 = vmatprep.subr.mxu0 0.0
      %2772 = vmatpush1.xpose.msra.mxu0 0.0
      %2773 = vmatprep.subr.mxu0 0.0
      %2774 = vmatpush1.xpose.msra.mxu0 0.0
      %2775 = vmatprep.subr.mxu0 0.0
      %2776 = vmatpush1.xpose.msra.mxu0 0.0
      %2777 = vmatprep.mubr.f32.mxu0 0.0
      %2778 = vmatmul.mubr.f32.gmra.mrb[0].mxu0 %v2709
      %v2779 = vpop.f32.mrb[0].mxu0
      %v2780 = vadd.f32 %v698, %v2779
      %v2781 = vpop.f32.mrb[0].mxu0
      %2782 = vdwg.mxu0
      %2784 = vrot.lane.b32.xlu0 %v585, 96
      %v2785 = vpop.permute.xlu0 %2784
      %v2786 = vsel %vm286, %v585, 0
      %v2788 = vsel %vm286, %v2785, 0
      %2790 = vmatprep.subr.mxu0 0.0
      %2791 = vmatpush1.xpose.msra.mxu0 %v2788
      %2792 = vmatprep.subr.mxu0 0.0
      %2793 = vmatpush1.xpose.msra.mxu0 0.0
      %2794 = vmatprep.subr.mxu0 0.0
      %2795 = vmatpush1.xpose.msra.mxu0 0.0
      %2796 = vmatprep.subr.mxu0 0.0
      %2797 = vmatpush1.xpose.msra.mxu0 0.0
      %2798 = vmatprep.subr.mxu0 0.0
      %2799 = vmatpush1.xpose.msra.mxu0 0.0
      %2800 = vmatprep.subr.mxu0 0.0
      %2801 = vmatpush1.xpose.msra.mxu0 0.0
      %2802 = vmatprep.subr.mxu0 0.0
      %2803 = vmatpush1.xpose.msra.mxu0 0.0
      %2804 = vmatprep.subr.mxu0 0.0
      %2805 = vmatpush1.xpose.msra.mxu0 0.0
      %2806 = vmatprep.subr.mxu0 0.0
      %2807 = vmatpush1.xpose.msra.mxu0 0.0
      %2808 = vmatprep.subr.mxu0 0.0
      %2809 = vmatpush1.xpose.msra.mxu0 0.0
      %2810 = vmatprep.subr.mxu0 0.0
      %2811 = vmatpush1.xpose.msra.mxu0 0.0
      %2812 = vmatprep.subr.mxu0 0.0
      %2813 = vmatpush1.xpose.msra.mxu0 0.0
      %2814 = vmatprep.subr.mxu0 0.0
      %2815 = vmatpush1.xpose.msra.mxu0 0.0
      %2816 = vmatprep.subr.mxu0 0.0
      %2817 = vmatpush1.xpose.msra.mxu0 0.0
      %2818 = vmatprep.subr.mxu0 0.0
      %2819 = vmatpush1.xpose.msra.mxu0 0.0
      %2820 = vmatprep.subr.mxu0 0.0
      %2821 = vmatpush1.xpose.msra.mxu0 0.0
      %2822 = vmatprep.subr.mxu0 0.0
      %2823 = vmatpush1.xpose.msra.mxu0 0.0
      %2824 = vmatprep.subr.mxu0 0.0
      %2825 = vmatpush1.xpose.msra.mxu0 0.0
      %2826 = vmatprep.subr.mxu0 0.0
      %2827 = vmatpush1.xpose.msra.mxu0 0.0
      %2828 = vmatprep.subr.mxu0 0.0
      %2829 = vmatpush1.xpose.msra.mxu0 0.0
      %2830 = vmatprep.subr.mxu0 0.0
      %2831 = vmatpush1.xpose.msra.mxu0 0.0
      %2832 = vmatprep.subr.mxu0 0.0
      %2833 = vmatpush1.xpose.msra.mxu0 0.0
      %2834 = vmatprep.subr.mxu0 0.0
      %2835 = vmatpush1.xpose.msra.mxu0 0.0
      %2836 = vmatprep.subr.mxu0 0.0
      %2837 = vmatpush1.xpose.msra.mxu0 0.0
      %2838 = vmatprep.subr.mxu0 0.0
      %2839 = vmatpush1.xpose.msra.mxu0 0.0
      %2840 = vmatprep.subr.mxu0 0.0
      %2841 = vmatpush1.xpose.msra.mxu0 0.0
      %2842 = vmatprep.subr.mxu0 0.0
      %2843 = vmatpush1.xpose.msra.mxu0 0.0
      %2844 = vmatprep.subr.mxu0 0.0
      %2845 = vmatpush1.xpose.msra.mxu0 0.0
      %2846 = vmatprep.subr.mxu0 0.0
      %2847 = vmatpush1.xpose.msra.mxu0 0.0
      %2848 = vmatprep.subr.mxu0 0.0
      %2849 = vmatpush1.xpose.msra.mxu0 0.0
      %2850 = vmatprep.subr.mxu0 0.0
      %2851 = vmatpush1.xpose.msra.mxu0 0.0
      %2852 = vmatprep.subr.mxu0 0.0
      %2853 = vmatpush1.xpose.msra.mxu0 0.0
      %2854 = vmatprep.mubr.f32.mxu0 0.0
      %2855 = vmatmul.mubr.f32.gmra.mrb[0].mxu0 %v2786
      %v2856 = vpop.f32.mrb[0].mxu0
      %v2857 = vadd.f32 %v699, %v2856
      %v2858 = vpop.f32.mrb[0].mxu0
      %2859 = vdwg.mxu0
      %2861 = vrot.lane.b32.xlu0 %v590, 96
      %v2862 = vpop.permute.xlu0 %2861
      %v2863 = vsel %vm286, %v590, 0
      %v2865 = vsel %vm286, %v2862, 0
      %2867 = vmatprep.subr.mxu0 0.0
      %2868 = vmatpush1.xpose.msra.mxu0 %v2865
      %2869 = vmatprep.subr.mxu0 0.0
      %2870 = vmatpush1.xpose.msra.mxu0 0.0
      %2871 = vmatprep.subr.mxu0 0.0
      %2872 = vmatpush1.xpose.msra.mxu0 0.0
      %2873 = vmatprep.subr.mxu0 0.0
      %2874 = vmatpush1.xpose.msra.mxu0 0.0
      %2875 = vmatprep.subr.mxu0 0.0
      %2876 = vmatpush1.xpose.msra.mxu0 0.0
      %2877 = vmatprep.subr.mxu0 0.0
      %2878 = vmatpush1.xpose.msra.mxu0 0.0
      %2879 = vmatprep.subr.mxu0 0.0
      %2880 = vmatpush1.xpose.msra.mxu0 0.0
      %2881 = vmatprep.subr.mxu0 0.0
      %2882 = vmatpush1.xpose.msra.mxu0 0.0
      %2883 = vmatprep.subr.mxu0 0.0
      %2884 = vmatpush1.xpose.msra.mxu0 0.0
      %2885 = vmatprep.subr.mxu0 0.0
      %2886 = vmatpush1.xpose.msra.mxu0 0.0
      %2887 = vmatprep.subr.mxu0 0.0
      %2888 = vmatpush1.xpose.msra.mxu0 0.0
      %2889 = vmatprep.subr.mxu0 0.0
      %2890 = vmatpush1.xpose.msra.mxu0 0.0
      %2891 = vmatprep.subr.mxu0 0.0
      %2892 = vmatpush1.xpose.msra.mxu0 0.0
      %2893 = vmatprep.subr.mxu0 0.0
      %2894 = vmatpush1.xpose.msra.mxu0 0.0
      %2895 = vmatprep.subr.mxu0 0.0
      %2896 = vmatpush1.xpose.msra.mxu0 0.0
      %2897 = vmatprep.subr.mxu0 0.0
      %2898 = vmatpush1.xpose.msra.mxu0 0.0
      %2899 = vmatprep.subr.mxu0 0.0
      %2900 = vmatpush1.xpose.msra.mxu0 0.0
      %2901 = vmatprep.subr.mxu0 0.0
      %2902 = vmatpush1.xpose.msra.mxu0 0.0
      %2903 = vmatprep.subr.mxu0 0.0
      %2904 = vmatpush1.xpose.msra.mxu0 0.0
      %2905 = vmatprep.subr.mxu0 0.0
      %2906 = vmatpush1.xpose.msra.mxu0 0.0
      %2907 = vmatprep.subr.mxu0 0.0
      %2908 = vmatpush1.xpose.msra.mxu0 0.0
      %2909 = vmatprep.subr.mxu0 0.0
      %2910 = vmatpush1.xpose.msra.mxu0 0.0
      %2911 = vmatprep.subr.mxu0 0.0
      %2912 = vmatpush1.xpose.msra.mxu0 0.0
      %2913 = vmatprep.subr.mxu0 0.0
      %2914 = vmatpush1.xpose.msra.mxu0 0.0
      %2915 = vmatprep.subr.mxu0 0.0
      %2916 = vmatpush1.xpose.msra.mxu0 0.0
      %2917 = vmatprep.subr.mxu0 0.0
      %2918 = vmatpush1.xpose.msra.mxu0 0.0
      %2919 = vmatprep.subr.mxu0 0.0
      %2920 = vmatpush1.xpose.msra.mxu0 0.0
      %2921 = vmatprep.subr.mxu0 0.0
      %2922 = vmatpush1.xpose.msra.mxu0 0.0
      %2923 = vmatprep.subr.mxu0 0.0
      %2924 = vmatpush1.xpose.msra.mxu0 0.0
      %2925 = vmatprep.subr.mxu0 0.0
      %2926 = vmatpush1.xpose.msra.mxu0 0.0
      %2927 = vmatprep.subr.mxu0 0.0
      %2928 = vmatpush1.xpose.msra.mxu0 0.0
      %2929 = vmatprep.subr.mxu0 0.0
      %2930 = vmatpush1.xpose.msra.mxu0 0.0
      %2931 = vmatprep.mubr.f32.mxu0 0.0
      %2932 = vmatmul.mubr.f32.gmra.mrb[0].mxu0 %v2863
      %v2933 = vpop.f32.mrb[0].mxu0
      %v2934 = vadd.f32 %v700, %v2933
      %v2935 = vpop.f32.mrb[0].mxu0
      %2936 = vdwg.mxu0
      %2938 = vrot.lane.b32.xlu0 %v595, 96
      %v2939 = vpop.permute.xlu0 %2938
      %v2940 = vsel %vm286, %v595, 0
      %v2942 = vsel %vm286, %v2939, 0
      %2944 = vmatprep.subr.mxu0 0.0
      %2945 = vmatpush1.xpose.msra.mxu0 %v2942
      %2946 = vmatprep.subr.mxu0 0.0
      %2947 = vmatpush1.xpose.msra.mxu0 0.0
      %2948 = vmatprep.subr.mxu0 0.0
      %2949 = vmatpush1.xpose.msra.mxu0 0.0
      %2950 = vmatprep.subr.mxu0 0.0
      %2951 = vmatpush1.xpose.msra.mxu0 0.0
      %2952 = vmatprep.subr.mxu0 0.0
      %2953 = vmatpush1.xpose.msra.mxu0 0.0
      %2954 = vmatprep.subr.mxu0 0.0
      %2955 = vmatpush1.xpose.msra.mxu0 0.0
      %2956 = vmatprep.subr.mxu0 0.0
      %2957 = vmatpush1.xpose.msra.mxu0 0.0
      %2958 = vmatprep.subr.mxu0 0.0
      %2959 = vmatpush1.xpose.msra.mxu0 0.0
      %2960 = vmatprep.subr.mxu0 0.0
      %2961 = vmatpush1.xpose.msra.mxu0 0.0
      %2962 = vmatprep.subr.mxu0 0.0
      %2963 = vmatpush1.xpose.msra.mxu0 0.0
      %2964 = vmatprep.subr.mxu0 0.0
      %2965 = vmatpush1.xpose.msra.mxu0 0.0
      %2966 = vmatprep.subr.mxu0 0.0
      %2967 = vmatpush1.xpose.msra.mxu0 0.0
      %2968 = vmatprep.subr.mxu0 0.0
      %2969 = vmatpush1.xpose.msra.mxu0 0.0
      %2970 = vmatprep.subr.mxu0 0.0
      %2971 = vmatpush1.xpose.msra.mxu0 0.0
      %2972 = vmatprep.subr.mxu0 0.0
      %2973 = vmatpush1.xpose.msra.mxu0 0.0
      %2974 = vmatprep.subr.mxu0 0.0
      %2975 = vmatpush1.xpose.msra.mxu0 0.0
      %2976 = vmatprep.subr.mxu0 0.0
      %2977 = vmatpush1.xpose.msra.mxu0 0.0
      %2978 = vmatprep.subr.mxu0 0.0
      %2979 = vmatpush1.xpose.msra.mxu0 0.0
      %2980 = vmatprep.subr.mxu0 0.0
      %2981 = vmatpush1.xpose.msra.mxu0 0.0
      %2982 = vmatprep.subr.mxu0 0.0
      %2983 = vmatpush1.xpose.msra.mxu0 0.0
      %2984 = vmatprep.subr.mxu0 0.0
      %2985 = vmatpush1.xpose.msra.mxu0 0.0
      %2986 = vmatprep.subr.mxu0 0.0
      %2987 = vmatpush1.xpose.msra.mxu0 0.0
      %2988 = vmatprep.subr.mxu0 0.0
      %2989 = vmatpush1.xpose.msra.mxu0 0.0
      %2990 = vmatprep.subr.mxu0 0.0
      %2991 = vmatpush1.xpose.msra.mxu0 0.0
      %2992 = vmatprep.subr.mxu0 0.0
      %2993 = vmatpush1.xpose.msra.mxu0 0.0
      %2994 = vmatprep.subr.mxu0 0.0
      %2995 = vmatpush1.xpose.msra.mxu0 0.0
      %2996 = vmatprep.subr.mxu0 0.0
      %2997 = vmatpush1.xpose.msra.mxu0 0.0
      %2998 = vmatprep.subr.mxu0 0.0
      %2999 = vmatpush1.xpose.msra.mxu0 0.0
      %3000 = vmatprep.subr.mxu0 0.0
      %3001 = vmatpush1.xpose.msra.mxu0 0.0
      %3002 = vmatprep.subr.mxu0 0.0
      %3003 = vmatpush1.xpose.msra.mxu0 0.0
      %3004 = vmatprep.subr.mxu0 0.0
      %3005 = vmatpush1.xpose.msra.mxu0 0.0
      %3006 = vmatprep.subr.mxu0 0.0
      %3007 = vmatpush1.xpose.msra.mxu0 0.0
      %3008 = vmatprep.mubr.f32.mxu0 0.0
      %3009 = vmatmul.mubr.f32.gmra.mrb[0].mxu0 %v2940
      %v3010 = vpop.f32.mrb[0].mxu0
      %v3011 = vadd.f32 %v701, %v3010
      %v3012 = vpop.f32.mrb[0].mxu0
      %3013 = vdwg.mxu0
      %3015 = vrot.lane.b32.xlu0 %v600, 96
      %v3016 = vpop.permute.xlu0 %3015
      %v3017 = vsel %vm286, %v600, 0
      %v3019 = vsel %vm286, %v3016, 0
      %3021 = vmatprep.subr.mxu0 0.0
      %3022 = vmatpush1.xpose.msra.mxu0 %v3019
      %3023 = vmatprep.subr.mxu0 0.0
      %3024 = vmatpush1.xpose.msra.mxu0 0.0
      %3025 = vmatprep.subr.mxu0 0.0
      %3026 = vmatpush1.xpose.msra.mxu0 0.0
      %3027 = vmatprep.subr.mxu0 0.0
      %3028 = vmatpush1.xpose.msra.mxu0 0.0
      %3029 = vmatprep.subr.mxu0 0.0
      %3030 = vmatpush1.xpose.msra.mxu0 0.0
      %3031 = vmatprep.subr.mxu0 0.0
      %3032 = vmatpush1.xpose.msra.mxu0 0.0
      %3033 = vmatprep.subr.mxu0 0.0
      %3034 = vmatpush1.xpose.msra.mxu0 0.0
      %3035 = vmatprep.subr.mxu0 0.0
      %3036 = vmatpush1.xpose.msra.mxu0 0.0
      %3037 = vmatprep.subr.mxu0 0.0
      %3038 = vmatpush1.xpose.msra.mxu0 0.0
      %3039 = vmatprep.subr.mxu0 0.0
      %3040 = vmatpush1.xpose.msra.mxu0 0.0
      %3041 = vmatprep.subr.mxu0 0.0
      %3042 = vmatpush1.xpose.msra.mxu0 0.0
      %3043 = vmatprep.subr.mxu0 0.0
      %3044 = vmatpush1.xpose.msra.mxu0 0.0
      %3045 = vmatprep.subr.mxu0 0.0
      %3046 = vmatpush1.xpose.msra.mxu0 0.0
      %3047 = vmatprep.subr.mxu0 0.0
      %3048 = vmatpush1.xpose.msra.mxu0 0.0
      %3049 = vmatprep.subr.mxu0 0.0
      %3050 = vmatpush1.xpose.msra.mxu0 0.0
      %3051 = vmatprep.subr.mxu0 0.0
      %3052 = vmatpush1.xpose.msra.mxu0 0.0
      %3053 = vmatprep.subr.mxu0 0.0
      %3054 = vmatpush1.xpose.msra.mxu0 0.0
      %3055 = vmatprep.subr.mxu0 0.0
      %3056 = vmatpush1.xpose.msra.mxu0 0.0
      %3057 = vmatprep.subr.mxu0 0.0
      %3058 = vmatpush1.xpose.msra.mxu0 0.0
      %3059 = vmatprep.subr.mxu0 0.0
      %3060 = vmatpush1.xpose.msra.mxu0 0.0
      %3061 = vmatprep.subr.mxu0 0.0
      %3062 = vmatpush1.xpose.msra.mxu0 0.0
      %3063 = vmatprep.subr.mxu0 0.0
      %3064 = vmatpush1.xpose.msra.mxu0 0.0
      %3065 = vmatprep.subr.mxu0 0.0
      %3066 = vmatpush1.xpose.msra.mxu0 0.0
      %3067 = vmatprep.subr.mxu0 0.0
      %3068 = vmatpush1.xpose.msra.mxu0 0.0
      %3069 = vmatprep.subr.mxu0 0.0
      %3070 = vmatpush1.xpose.msra.mxu0 0.0
      %3071 = vmatprep.subr.mxu0 0.0
      %3072 = vmatpush1.xpose.msra.mxu0 0.0
      %3073 = vmatprep.subr.mxu0 0.0
      %3074 = vmatpush1.xpose.msra.mxu0 0.0
      %3075 = vmatprep.subr.mxu0 0.0
      %3076 = vmatpush1.xpose.msra.mxu0 0.0
      %3077 = vmatprep.subr.mxu0 0.0
      %3078 = vmatpush1.xpose.msra.mxu0 0.0
      %3079 = vmatprep.subr.mxu0 0.0
      %3080 = vmatpush1.xpose.msra.mxu0 0.0
      %3081 = vmatprep.subr.mxu0 0.0
      %3082 = vmatpush1.xpose.msra.mxu0 0.0
      %3083 = vmatprep.subr.mxu0 0.0
      %3084 = vmatpush1.xpose.msra.mxu0 0.0
      %3085 = vmatprep.mubr.f32.mxu0 0.0
      %3086 = vmatmul.mubr.f32.gmra.mrb[0].mxu0 %v3017
      %v3087 = vpop.f32.mrb[0].mxu0
      %v3088 = vadd.f32 %v702, %v3087
      %v3089 = vpop.f32.mrb[0].mxu0
      %3090 = vdwg.mxu0
      %3092 = vrot.lane.b32.xlu0 %v605, 96
      %v3093 = vpop.permute.xlu0 %3092
      %v3094 = vsel %vm286, %v605, 0
      %v3096 = vsel %vm286, %v3093, 0
      %3098 = vmatprep.subr.mxu0 0.0
      %3099 = vmatpush1.xpose.msra.mxu0 %v3096
      %3100 = vmatprep.subr.mxu0 0.0
      %3101 = vmatpush1.xpose.msra.mxu0 0.0
      %3102 = vmatprep.subr.mxu0 0.0
      %3103 = vmatpush1.xpose.msra.mxu0 0.0
      %3104 = vmatprep.subr.mxu0 0.0
      %3105 = vmatpush1.xpose.msra.mxu0 0.0
      %3106 = vmatprep.subr.mxu0 0.0
      %3107 = vmatpush1.xpose.msra.mxu0 0.0
      %3108 = vmatprep.subr.mxu0 0.0
      %3109 = vmatpush1.xpose.msra.mxu0 0.0
      %3110 = vmatprep.subr.mxu0 0.0
      %3111 = vmatpush1.xpose.msra.mxu0 0.0
      %3112 = vmatprep.subr.mxu0 0.0
      %3113 = vmatpush1.xpose.msra.mxu0 0.0
      %3114 = vmatprep.subr.mxu0 0.0
      %3115 = vmatpush1.xpose.msra.mxu0 0.0
      %3116 = vmatprep.subr.mxu0 0.0
      %3117 = vmatpush1.xpose.msra.mxu0 0.0
      %3118 = vmatprep.subr.mxu0 0.0
      %3119 = vmatpush1.xpose.msra.mxu0 0.0
      %3120 = vmatprep.subr.mxu0 0.0
      %3121 = vmatpush1.xpose.msra.mxu0 0.0
      %3122 = vmatprep.subr.mxu0 0.0
      %3123 = vmatpush1.xpose.msra.mxu0 0.0
      %3124 = vmatprep.subr.mxu0 0.0
      %3125 = vmatpush1.xpose.msra.mxu0 0.0
      %3126 = vmatprep.subr.mxu0 0.0
      %3127 = vmatpush1.xpose.msra.mxu0 0.0
      %3128 = vmatprep.subr.mxu0 0.0
      %3129 = vmatpush1.xpose.msra.mxu0 0.0
      %3130 = vmatprep.subr.mxu0 0.0
      %3131 = vmatpush1.xpose.msra.mxu0 0.0
      %3132 = vmatprep.subr.mxu0 0.0
      %3133 = vmatpush1.xpose.msra.mxu0 0.0
      %3134 = vmatprep.subr.mxu0 0.0
      %3135 = vmatpush1.xpose.msra.mxu0 0.0
      %3136 = vmatprep.subr.mxu0 0.0
      %3137 = vmatpush1.xpose.msra.mxu0 0.0
      %3138 = vmatprep.subr.mxu0 0.0
      %3139 = vmatpush1.xpose.msra.mxu0 0.0
      %3140 = vmatprep.subr.mxu0 0.0
      %3141 = vmatpush1.xpose.msra.mxu0 0.0
      %3142 = vmatprep.subr.mxu0 0.0
      %3143 = vmatpush1.xpose.msra.mxu0 0.0
      %3144 = vmatprep.subr.mxu0 0.0
      %3145 = vmatpush1.xpose.msra.mxu0 0.0
      %3146 = vmatprep.subr.mxu0 0.0
      %3147 = vmatpush1.xpose.msra.mxu0 0.0
      %3148 = vmatprep.subr.mxu0 0.0
      %3149 = vmatpush1.xpose.msra.mxu0 0.0
      %3150 = vmatprep.subr.mxu0 0.0
      %3151 = vmatpush1.xpose.msra.mxu0 0.0
      %3152 = vmatprep.subr.mxu0 0.0
      %3153 = vmatpush1.xpose.msra.mxu0 0.0
      %3154 = vmatprep.subr.mxu0 0.0
      %3155 = vmatpush1.xpose.msra.mxu0 0.0
      %3156 = vmatprep.subr.mxu0 0.0
      %3157 = vmatpush1.xpose.msra.mxu0 0.0
      %3158 = vmatprep.subr.mxu0 0.0
      %3159 = vmatpush1.xpose.msra.mxu0 0.0
      %3160 = vmatprep.subr.mxu0 0.0
      %3161 = vmatpush1.xpose.msra.mxu0 0.0
      %3162 = vmatprep.mubr.f32.mxu0 0.0
      %3163 = vmatmul.mubr.f32.gmra.mrb[0].mxu0 %v3094
      %v3164 = vpop.f32.mrb[0].mxu0
      %v3165 = vadd.f32 %v703, %v3164
      %v3166 = vpop.f32.mrb[0].mxu0
      %3167 = vdwg.mxu0
      %vm3168 = vcmask 64512
      %v3169 = vsel %vm3168, %v778, -inf
      %3170 = vmax.xlane.f32.xlu0 %v3169
      %v3171 = vpop.xlane.xlu0 %3170
      %v3172 = vsel %vm3168, %v855, -inf
      %3173 = vmax.xlane.f32.xlu0 %v3172
      %v3174 = vpop.xlane.xlu0 %3173
      %v3175 = vsel %vm3168, %v932, -inf
      %3176 = vmax.xlane.f32.xlu0 %v3175
      %v3177 = vpop.xlane.xlu0 %3176
      %v3178 = vsel %vm3168, %v1009, -inf
      %3179 = vmax.xlane.f32.xlu0 %v3178
      %v3180 = vpop.xlane.xlu0 %3179
      %v3181 = vsel %vm3168, %v1086, -inf
      %3182 = vmax.xlane.f32.xlu0 %v3181
      %v3183 = vpop.xlane.xlu0 %3182
      %v3184 = vsel %vm3168, %v1163, -inf
      %3185 = vmax.xlane.f32.xlu0 %v3184
      %v3186 = vpop.xlane.xlu0 %3185
      %v3187 = vsel %vm3168, %v1240, -inf
      %3188 = vmax.xlane.f32.xlu0 %v3187
      %v3189 = vpop.xlane.xlu0 %3188
      %v3190 = vsel %vm3168, %v1317, -inf
      %3191 = vmax.xlane.f32.xlu0 %v3190
      %v3192 = vpop.xlane.xlu0 %3191
      %v3193 = vsel %vm3168, %v1394, -inf
      %3194 = vmax.xlane.f32.xlu0 %v3193
      %v3195 = vpop.xlane.xlu0 %3194
      %v3196 = vsel %vm3168, %v1471, -inf
      %3197 = vmax.xlane.f32.xlu0 %v3196
      %v3198 = vpop.xlane.xlu0 %3197
      %v3199 = vsel %vm3168, %v1548, -inf
      %3200 = vmax.xlane.f32.xlu0 %v3199
      %v3201 = vpop.xlane.xlu0 %3200
      %v3202 = vsel %vm3168, %v1625, -inf
      %3203 = vmax.xlane.f32.xlu0 %v3202
      %v3204 = vpop.xlane.xlu0 %3203
      %v3205 = vsel %vm3168, %v1702, -inf
      %3206 = vmax.xlane.f32.xlu0 %v3205
      %v3207 = vpop.xlane.xlu0 %3206
      %v3208 = vsel %vm3168, %v1779, -inf
      %3209 = vmax.xlane.f32.xlu0 %v3208
      %v3210 = vpop.xlane.xlu0 %3209
      %v3211 = vsel %vm3168, %v1856, -inf
      %3212 = vmax.xlane.f32.xlu0 %v3211
      %v3213 = vpop.xlane.xlu0 %3212
      %v3214 = vsel %vm3168, %v1933, -inf
      %3215 = vmax.xlane.f32.xlu0 %v3214
      %v3216 = vpop.xlane.xlu0 %3215
      %v3217 = vsel %vm3168, %v2010, -inf
      %3218 = vmax.xlane.f32.xlu0 %v3217
      %v3219 = vpop.xlane.xlu0 %3218
      %v3220 = vsel %vm3168, %v2087, -inf
      %3221 = vmax.xlane.f32.xlu0 %v3220
      %v3222 = vpop.xlane.xlu0 %3221
      %v3223 = vsel %vm3168, %v2164, -inf
      %3224 = vmax.xlane.f32.xlu0 %v3223
      %v3225 = vpop.xlane.xlu0 %3224
      %v3226 = vsel %vm3168, %v2241, -inf
      %3227 = vmax.xlane.f32.xlu0 %v3226
      %v3228 = vpop.xlane.xlu0 %3227
      %v3229 = vsel %vm3168, %v2318, -inf
      %3230 = vmax.xlane.f32.xlu0 %v3229
      %v3231 = vpop.xlane.xlu0 %3230
      %v3232 = vsel %vm3168, %v2395, -inf
      %3233 = vmax.xlane.f32.xlu0 %v3232
      %v3234 = vpop.xlane.xlu0 %3233
      %v3235 = vsel %vm3168, %v2472, -inf
      %3236 = vmax.xlane.f32.xlu0 %v3235
      %v3237 = vpop.xlane.xlu0 %3236
      %v3238 = vsel %vm3168, %v2549, -inf
      %3239 = vmax.xlane.f32.xlu0 %v3238
      %v3240 = vpop.xlane.xlu0 %3239
      %v3241 = vsel %vm3168, %v2626, -inf
      %3242 = vmax.xlane.f32.xlu0 %v3241
      %v3243 = vpop.xlane.xlu0 %3242
      %v3244 = vsel %vm3168, %v2703, -inf
      %3245 = vmax.xlane.f32.xlu0 %v3244
      %v3246 = vpop.xlane.xlu0 %3245
      %v3247 = vsel %vm3168, %v2780, -inf
      %3248 = vmax.xlane.f32.xlu0 %v3247
      %v3249 = vpop.xlane.xlu0 %3248
      %v3250 = vsel %vm3168, %v2857, -inf
      %3251 = vmax.xlane.f32.xlu0 %v3250
      %v3252 = vpop.xlane.xlu0 %3251
      %v3253 = vsel %vm3168, %v2934, -inf
      %3254 = vmax.xlane.f32.xlu0 %v3253
      %v3255 = vpop.xlane.xlu0 %3254
      %v3256 = vsel %vm3168, %v3011, -inf
      %3257 = vmax.xlane.f32.xlu0 %v3256
      %v3258 = vpop.xlane.xlu0 %3257
      %v3259 = vsel %vm3168, %v3088, -inf
      %3260 = vmax.xlane.f32.xlu0 %v3259
      %v3261 = vpop.xlane.xlu0 %3260
      %v3262 = vsel %vm3168, %v3165, -inf
      %3263 = vmax.xlane.f32.xlu0 %v3262
      %v3264 = vpop.xlane.xlu0 %3263
      %v3265 = vsub.f32 %v778, %v3171
      %v3266 = vsub.f32 %v855, %v3174
      %v3267 = vsub.f32 %v932, %v3177
      %v3268 = vsub.f32 %v1009, %v3180
      %v3269 = vsub.f32 %v1086, %v3183
      %v3270 = vsub.f32 %v1163, %v3186
      %v3271 = vsub.f32 %v1240, %v3189
      %v3272 = vsub.f32 %v1317, %v3192
      %v3273 = vsub.f32 %v1394, %v3195
      %v3274 = vsub.f32 %v1471, %v3198
      %v3275 = vsub.f32 %v1548, %v3201
      %v3276 = vsub.f32 %v1625, %v3204
      %v3277 = vsub.f32 %v1702, %v3207
      %v3278 = vsub.f32 %v1779, %v3210
      %v3279 = vsub.f32 %v1856, %v3213
      %v3280 = vsub.f32 %v1933, %v3216
      %v3281 = vsub.f32 %v2010, %v3219
      %v3282 = vsub.f32 %v2087, %v3222
      %v3283 = vsub.f32 %v2164, %v3225
      %v3284 = vsub.f32 %v2241, %v3228
      %v3285 = vsub.f32 %v2318, %v3231
      %v3286 = vsub.f32 %v2395, %v3234
      %v3287 = vsub.f32 %v2472, %v3237
      %v3288 = vsub.f32 %v2549, %v3240
      %v3289 = vsub.f32 %v2626, %v3243
      %v3290 = vsub.f32 %v2703, %v3246
      %v3291 = vsub.f32 %v2780, %v3249
      %v3292 = vsub.f32 %v2857, %v3252
      %v3293 = vsub.f32 %v2934, %v3255
      %v3294 = vsub.f32 %v3011, %v3258
      %v3295 = vsub.f32 %v3088, %v3261
      %v3296 = vsub.f32 %v3165, %v3264
      %v3297 = vmul.f32 %v3265, 1.442695
      %v3298 = vpow.pop %v3297
      %v3299 = vmul.f32 %v3266, 1.442695
      %v3300 = vpow.pop %v3299
      %v3301 = vmul.f32 %v3267, 1.442695
      %v3302 = vpow.pop %v3301
      %v3303 = vmul.f32 %v3268, 1.442695
      %v3304 = vpow.pop %v3303
      %v3305 = vmul.f32 %v3269, 1.442695
      %v3306 = vpow.pop %v3305
      %v3307 = vmul.f32 %v3270, 1.442695
      %v3308 = vpow.pop %v3307
      %v3309 = vmul.f32 %v3271, 1.442695
      %v3310 = vpow.pop %v3309
      %v3311 = vmul.f32 %v3272, 1.442695
      %v3312 = vpow.pop %v3311
      %v3313 = vmul.f32 %v3273, 1.442695
      %v3314 = vpow.pop %v3313
      %v3315 = vmul.f32 %v3274, 1.442695
      %v3316 = vpow.pop %v3315
      %v3317 = vmul.f32 %v3275, 1.442695
      %v3318 = vpow.pop %v3317
      %v3319 = vmul.f32 %v3276, 1.442695
      %v3320 = vpow.pop %v3319
      %v3321 = vmul.f32 %v3277, 1.442695
      %v3322 = vpow.pop %v3321
      %v3323 = vmul.f32 %v3278, 1.442695
      %v3324 = vpow.pop %v3323
      %v3325 = vmul.f32 %v3279, 1.442695
      %v3326 = vpow.pop %v3325
      %v3327 = vmul.f32 %v3280, 1.442695
      %v3328 = vpow.pop %v3327
      %v3329 = vmul.f32 %v3281, 1.442695
      %v3330 = vpow.pop %v3329
      %v3331 = vmul.f32 %v3282, 1.442695
      %v3332 = vpow.pop %v3331
      %v3333 = vmul.f32 %v3283, 1.442695
      %v3334 = vpow.pop %v3333
      %v3335 = vmul.f32 %v3284, 1.442695
      %v3336 = vpow.pop %v3335
      %v3337 = vmul.f32 %v3285, 1.442695
      %v3338 = vpow.pop %v3337
      %v3339 = vmul.f32 %v3286, 1.442695
      %v3340 = vpow.pop %v3339
      %v3341 = vmul.f32 %v3287, 1.442695
      %v3342 = vpow.pop %v3341
      %v3343 = vmul.f32 %v3288, 1.442695
      %v3344 = vpow.pop %v3343
      %v3345 = vmul.f32 %v3289, 1.442695
      %v3346 = vpow.pop %v3345
      %v3347 = vmul.f32 %v3290, 1.442695
      %v3348 = vpow.pop %v3347
      %v3349 = vmul.f32 %v3291, 1.442695
      %v3350 = vpow.pop %v3349
      %v3351 = vmul.f32 %v3292, 1.442695
      %v3352 = vpow.pop %v3351
      %v3353 = vmul.f32 %v3293, 1.442695
      %v3354 = vpow.pop %v3353
      %v3355 = vmul.f32 %v3294, 1.442695
      %v3356 = vpow.pop %v3355
      %v3357 = vmul.f32 %v3295, 1.442695
      %v3358 = vpow.pop %v3357
      %v3359 = vmul.f32 %v3296, 1.442695
      %v3360 = vpow.pop %v3359
      %v3361 = vsel %vm3168, %v3298, 0.0
      %3362 = vadd.xlane.f32.xlu0 %v3361
      %v3363 = vpop.xlane.xlu0 %3362
      %v3364 = vsel %vm3168, %v3300, 0.0
      %3365 = vadd.xlane.f32.xlu0 %v3364
      %v3366 = vpop.xlane.xlu0 %3365
      %v3367 = vsel %vm3168, %v3302, 0.0
      %3368 = vadd.xlane.f32.xlu0 %v3367
      %v3369 = vpop.xlane.xlu0 %3368
      %v3370 = vsel %vm3168, %v3304, 0.0
      %3371 = vadd.xlane.f32.xlu0 %v3370
      %v3372 = vpop.xlane.xlu0 %3371
      %v3373 = vsel %vm3168, %v3306, 0.0
      %3374 = vadd.xlane.f32.xlu0 %v3373
      %v3375 = vpop.xlane.xlu0 %3374
      %v3376 = vsel %vm3168, %v3308, 0.0
      %3377 = vadd.xlane.f32.xlu0 %v3376
      %v3378 = vpop.xlane.xlu0 %3377
      %v3379 = vsel %vm3168, %v3310, 0.0
      %3380 = vadd.xlane.f32.xlu0 %v3379
      %v3381 = vpop.xlane.xlu0 %3380
      %v3382 = vsel %vm3168, %v3312, 0.0
      %3383 = vadd.xlane.f32.xlu0 %v3382
      %v3384 = vpop.xlane.xlu0 %3383
      %v3385 = vsel %vm3168, %v3314, 0.0
      %3386 = vadd.xlane.f32.xlu0 %v3385
      %v3387 = vpop.xlane.xlu0 %3386
      %v3388 = vsel %vm3168, %v3316, 0.0
      %3389 = vadd.xlane.f32.xlu0 %v3388
      %v3390 = vpop.xlane.xlu0 %3389
      %v3391 = vsel %vm3168, %v3318, 0.0
      %3392 = vadd.xlane.f32.xlu0 %v3391
      %v3393 = vpop.xlane.xlu0 %3392
      %v3394 = vsel %vm3168, %v3320, 0.0
      %3395 = vadd.xlane.f32.xlu0 %v3394
      %v3396 = vpop.xlane.xlu0 %3395
      %v3397 = vsel %vm3168, %v3322, 0.0
      %3398 = vadd.xlane.f32.xlu0 %v3397
      %v3399 = vpop.xlane.xlu0 %3398
      %v3400 = vsel %vm3168, %v3324, 0.0
      %3401 = vadd.xlane.f32.xlu0 %v3400
      %v3402 = vpop.xlane.xlu0 %3401
      %v3403 = vsel %vm3168, %v3326, 0.0
      %3404 = vadd.xlane.f32.xlu0 %v3403
      %v3405 = vpop.xlane.xlu0 %3404
      %v3406 = vsel %vm3168, %v3328, 0.0
      %3407 = vadd.xlane.f32.xlu0 %v3406
      %v3408 = vpop.xlane.xlu0 %3407
      %v3409 = vsel %vm3168, %v3330, 0.0
      %3410 = vadd.xlane.f32.xlu0 %v3409
      %v3411 = vpop.xlane.xlu0 %3410
      %v3412 = vsel %vm3168, %v3332, 0.0
      %3413 = vadd.xlane.f32.xlu0 %v3412
      %v3414 = vpop.xlane.xlu0 %3413
      %v3415 = vsel %vm3168, %v3334, 0.0
      %3416 = vadd.xlane.f32.xlu0 %v3415
      %v3417 = vpop.xlane.xlu0 %3416
      %v3418 = vsel %vm3168, %v3336, 0.0
      %3419 = vadd.xlane.f32.xlu0 %v3418
      %v3420 = vpop.xlane.xlu0 %3419
      %v3421 = vsel %vm3168, %v3338, 0.0
      %3422 = vadd.xlane.f32.xlu0 %v3421
      %v3423 = vpop.xlane.xlu0 %3422
      %v3424 = vsel %vm3168, %v3340, 0.0
      %3425 = vadd.xlane.f32.xlu0 %v3424
      %v3426 = vpop.xlane.xlu0 %3425
      %v3427 = vsel %vm3168, %v3342, 0.0
      %3428 = vadd.xlane.f32.xlu0 %v3427
      %v3429 = vpop.xlane.xlu0 %3428
      %v3430 = vsel %vm3168, %v3344, 0.0
      %3431 = vadd.xlane.f32.xlu0 %v3430
      %v3432 = vpop.xlane.xlu0 %3431
      %v3433 = vsel %vm3168, %v3346, 0.0
      %3434 = vadd.xlane.f32.xlu0 %v3433
      %v3435 = vpop.xlane.xlu0 %3434
      %v3436 = vsel %vm3168, %v3348, 0.0
      %3437 = vadd.xlane.f32.xlu0 %v3436
      %v3438 = vpop.xlane.xlu0 %3437
      %v3439 = vsel %vm3168, %v3350, 0.0
      %3440 = vadd.xlane.f32.xlu0 %v3439
      %v3441 = vpop.xlane.xlu0 %3440
      %v3442 = vsel %vm3168, %v3352, 0.0
      %3443 = vadd.xlane.f32.xlu0 %v3442
      %v3444 = vpop.xlane.xlu0 %3443
      %v3445 = vsel %vm3168, %v3354, 0.0
      %3446 = vadd.xlane.f32.xlu0 %v3445
      %v3447 = vpop.xlane.xlu0 %3446
      %v3448 = vsel %vm3168, %v3356, 0.0
      %3449 = vadd.xlane.f32.xlu0 %v3448
      %v3450 = vpop.xlane.xlu0 %3449
      %v3451 = vsel %vm3168, %v3358, 0.0
      %3452 = vadd.xlane.f32.xlu0 %v3451
      %v3453 = vpop.xlane.xlu0 %3452
      %v3454 = vsel %vm3168, %v3360, 0.0
      %3455 = vadd.xlane.f32.xlu0 %v3454
      %v3456 = vpop.xlane.xlu0 %3455
      %v3457 = vrcp.pop %v3363
      %v3458 = vmul.f32 %v3298, %v3457
      %v3459 = vrcp.pop %v3366
      %v3460 = vmul.f32 %v3300, %v3459
      %v3461 = vrcp.pop %v3369
      %v3462 = vmul.f32 %v3302, %v3461
      %v3463 = vrcp.pop %v3372
      %v3464 = vmul.f32 %v3304, %v3463
      %v3465 = vrcp.pop %v3375
      %v3466 = vmul.f32 %v3306, %v3465
      %v3467 = vrcp.pop %v3378
      %v3468 = vmul.f32 %v3308, %v3467
      %v3469 = vrcp.pop %v3381
      %v3470 = vmul.f32 %v3310, %v3469
      %v3471 = vrcp.pop %v3384
      %v3472 = vmul.f32 %v3312, %v3471
      %v3473 = vrcp.pop %v3387
      %v3474 = vmul.f32 %v3314, %v3473
      %v3475 = vrcp.pop %v3390
      %v3476 = vmul.f32 %v3316, %v3475
      %v3477 = vrcp.pop %v3393
      %v3478 = vmul.f32 %v3318, %v3477
      %v3479 = vrcp.pop %v3396
      %v3480 = vmul.f32 %v3320, %v3479
      %v3481 = vrcp.pop %v3399
      %v3482 = vmul.f32 %v3322, %v3481
      %v3483 = vrcp.pop %v3402
      %v3484 = vmul.f32 %v3324, %v3483
      %v3485 = vrcp.pop %v3405
      %v3486 = vmul.f32 %v3326, %v3485
      %v3487 = vrcp.pop %v3408
      %v3488 = vmul.f32 %v3328, %v3487
      %v3489 = vrcp.pop %v3411
      %v3490 = vmul.f32 %v3330, %v3489
      %v3491 = vrcp.pop %v3414
      %v3492 = vmul.f32 %v3332, %v3491
      %v3493 = vrcp.pop %v3417
      %v3494 = vmul.f32 %v3334, %v3493
      %v3495 = vrcp.pop %v3420
      %v3496 = vmul.f32 %v3336, %v3495
      %v3497 = vrcp.pop %v3423
      %v3498 = vmul.f32 %v3338, %v3497
      %v3499 = vrcp.pop %v3426
      %v3500 = vmul.f32 %v3340, %v3499
      %v3501 = vrcp.pop %v3429
      %v3502 = vmul.f32 %v3342, %v3501
      %v3503 = vrcp.pop %v3432
      %v3504 = vmul.f32 %v3344, %v3503
      %v3505 = vrcp.pop %v3435
      %v3506 = vmul.f32 %v3346, %v3505
      %v3507 = vrcp.pop %v3438
      %v3508 = vmul.f32 %v3348, %v3507
      %v3509 = vrcp.pop %v3441
      %v3510 = vmul.f32 %v3350, %v3509
      %v3511 = vrcp.pop %v3444
      %v3512 = vmul.f32 %v3352, %v3511
      %v3513 = vrcp.pop %v3447
      %v3514 = vmul.f32 %v3354, %v3513
      %v3515 = vrcp.pop %v3450
      %v3516 = vmul.f32 %v3356, %v3515
      %v3517 = vrcp.pop %v3453
      %v3518 = vmul.f32 %v3358, %v3517
      %v3519 = vrcp.pop %v3456
      %v3520 = vmul.f32 %v3360, %v3519
      %3521 = vrot.lane.b32.xlu0 %v450, 64
      %v3522 = vpop.permute.xlu0 %3521
      %v3525 = vsel %vm3168, %v3458, 0
      %3527 = vmatprep.subr.mxu0 0.0
      %3528 = vmatpush1.msra.mxu0 %v3522
      %3529 = vmatprep.subr.mxu0 0.0
      %3530 = vmatpush1.msra.mxu0 0.0
      %3531 = vmatprep.subr.mxu0 0.0
      %3532 = vmatpush1.msra.mxu0 0.0
      %3533 = vmatprep.subr.mxu0 0.0
      %3534 = vmatpush1.msra.mxu0 0.0
      %3535 = vmatprep.subr.mxu0 0.0
      %3536 = vmatpush1.msra.mxu0 0.0
      %3537 = vmatprep.subr.mxu0 0.0
      %3538 = vmatpush1.msra.mxu0 0.0
      %3539 = vmatprep.subr.mxu0 0.0
      %3540 = vmatpush1.msra.mxu0 0.0
      %3541 = vmatprep.subr.mxu0 0.0
      %3542 = vmatpush1.msra.mxu0 0.0
      %3543 = vmatprep.subr.mxu0 0.0
      %3544 = vmatpush1.msra.mxu0 0.0
      %3545 = vmatprep.subr.mxu0 0.0
      %3546 = vmatpush1.msra.mxu0 0.0
      %3547 = vmatprep.subr.mxu0 0.0
      %3548 = vmatpush1.msra.mxu0 0.0
      %3549 = vmatprep.subr.mxu0 0.0
      %3550 = vmatpush1.msra.mxu0 0.0
      %3551 = vmatprep.subr.mxu0 0.0
      %3552 = vmatpush1.msra.mxu0 0.0
      %3553 = vmatprep.subr.mxu0 0.0
      %3554 = vmatpush1.msra.mxu0 0.0
      %3555 = vmatprep.subr.mxu0 0.0
      %3556 = vmatpush1.msra.mxu0 0.0
      %3557 = vmatprep.subr.mxu0 0.0
      %3558 = vmatpush1.msra.mxu0 0.0
      %3559 = vmatprep.subr.mxu0 0.0
      %3560 = vmatpush1.msra.mxu0 0.0
      %3561 = vmatprep.subr.mxu0 0.0
      %3562 = vmatpush1.msra.mxu0 0.0
      %3563 = vmatprep.subr.mxu0 0.0
      %3564 = vmatpush1.msra.mxu0 0.0
      %3565 = vmatprep.subr.mxu0 0.0
      %3566 = vmatpush1.msra.mxu0 0.0
      %3567 = vmatprep.subr.mxu0 0.0
      %3568 = vmatpush1.msra.mxu0 0.0
      %3569 = vmatprep.subr.mxu0 0.0
      %3570 = vmatpush1.msra.mxu0 0.0
      %3571 = vmatprep.subr.mxu0 0.0
      %3572 = vmatpush1.msra.mxu0 0.0
      %3573 = vmatprep.subr.mxu0 0.0
      %3574 = vmatpush1.msra.mxu0 0.0
      %3575 = vmatprep.subr.mxu0 0.0
      %3576 = vmatpush1.msra.mxu0 0.0
      %3577 = vmatprep.subr.mxu0 0.0
      %3578 = vmatpush1.msra.mxu0 0.0
      %3579 = vmatprep.subr.mxu0 0.0
      %3580 = vmatpush1.msra.mxu0 0.0
      %3581 = vmatprep.subr.mxu0 0.0
      %3582 = vmatpush1.msra.mxu0 0.0
      %3583 = vmatprep.subr.mxu0 0.0
      %3584 = vmatpush1.msra.mxu0 0.0
      %3585 = vmatprep.subr.mxu0 0.0
      %3586 = vmatpush1.msra.mxu0 0.0
      %3587 = vmatprep.subr.mxu0 0.0
      %3588 = vmatpush1.msra.mxu0 0.0
      %3589 = vmatprep.subr.mxu0 0.0
      %3590 = vmatpush1.msra.mxu0 0.0
      %3591 = vmatprep.mubr.f32.mxu0 0.0
      %3592 = vmatmul.mubr.f32.gmra.mrb[0].mxu0 %v3525
      %v3593 = vpop.f32.mrb[0].mxu0
      %v3594 = vadd.f32 0.0, %v3593
      %v3595 = vpop.f32.mrb[0].mxu0
      %3596 = vdwg.mxu0
      %3597 = vrot.lane.b32.xlu0 %v455, 64
      %v3598 = vpop.permute.xlu0 %3597
      %v3601 = vsel %vm3168, %v3460, 0
      %3603 = vmatprep.subr.mxu0 0.0
      %3604 = vmatpush1.msra.mxu0 %v3598
      %3605 = vmatprep.subr.mxu0 0.0
      %3606 = vmatpush1.msra.mxu0 0.0
      %3607 = vmatprep.subr.mxu0 0.0
      %3608 = vmatpush1.msra.mxu0 0.0
      %3609 = vmatprep.subr.mxu0 0.0
      %3610 = vmatpush1.msra.mxu0 0.0
      %3611 = vmatprep.subr.mxu0 0.0
      %3612 = vmatpush1.msra.mxu0 0.0
      %3613 = vmatprep.subr.mxu0 0.0
      %3614 = vmatpush1.msra.mxu0 0.0
      %3615 = vmatprep.subr.mxu0 0.0
      %3616 = vmatpush1.msra.mxu0 0.0
      %3617 = vmatprep.subr.mxu0 0.0
      %3618 = vmatpush1.msra.mxu0 0.0
      %3619 = vmatprep.subr.mxu0 0.0
      %3620 = vmatpush1.msra.mxu0 0.0
      %3621 = vmatprep.subr.mxu0 0.0
      %3622 = vmatpush1.msra.mxu0 0.0
      %3623 = vmatprep.subr.mxu0 0.0
      %3624 = vmatpush1.msra.mxu0 0.0
      %3625 = vmatprep.subr.mxu0 0.0
      %3626 = vmatpush1.msra.mxu0 0.0
      %3627 = vmatprep.subr.mxu0 0.0
      %3628 = vmatpush1.msra.mxu0 0.0
      %3629 = vmatprep.subr.mxu0 0.0
      %3630 = vmatpush1.msra.mxu0 0.0
      %3631 = vmatprep.subr.mxu0 0.0
      %3632 = vmatpush1.msra.mxu0 0.0
      %3633 = vmatprep.subr.mxu0 0.0
      %3634 = vmatpush1.msra.mxu0 0.0
      %3635 = vmatprep.subr.mxu0 0.0
      %3636 = vmatpush1.msra.mxu0 0.0
      %3637 = vmatprep.subr.mxu0 0.0
      %3638 = vmatpush1.msra.mxu0 0.0
      %3639 = vmatprep.subr.mxu0 0.0
      %3640 = vmatpush1.msra.mxu0 0.0
      %3641 = vmatprep.subr.mxu0 0.0
      %3642 = vmatpush1.msra.mxu0 0.0
      %3643 = vmatprep.subr.mxu0 0.0
      %3644 = vmatpush1.msra.mxu0 0.0
      %3645 = vmatprep.subr.mxu0 0.0
      %3646 = vmatpush1.msra.mxu0 0.0
      %3647 = vmatprep.subr.mxu0 0.0
      %3648 = vmatpush1.msra.mxu0 0.0
      %3649 = vmatprep.subr.mxu0 0.0
      %3650 = vmatpush1.msra.mxu0 0.0
      %3651 = vmatprep.subr.mxu0 0.0
      %3652 = vmatpush1.msra.mxu0 0.0
      %3653 = vmatprep.subr.mxu0 0.0
      %3654 = vmatpush1.msra.mxu0 0.0
      %3655 = vmatprep.subr.mxu0 0.0
      %3656 = vmatpush1.msra.mxu0 0.0
      %3657 = vmatprep.subr.mxu0 0.0
      %3658 = vmatpush1.msra.mxu0 0.0
      %3659 = vmatprep.subr.mxu0 0.0
      %3660 = vmatpush1.msra.mxu0 0.0
      %3661 = vmatprep.subr.mxu0 0.0
      %3662 = vmatpush1.msra.mxu0 0.0
      %3663 = vmatprep.subr.mxu0 0.0
      %3664 = vmatpush1.msra.mxu0 0.0
      %3665 = vmatprep.subr.mxu0 0.0
      %3666 = vmatpush1.msra.mxu0 0.0
      %3667 = vmatprep.mubr.f32.mxu0 0.0
      %3668 = vmatmul.mubr.f32.gmra.mrb[0].mxu0 %v3601
      %v3669 = vpop.f32.mrb[0].mxu0
      %v3670 = vadd.f32 0.0, %v3669
      %v3671 = vpop.f32.mrb[0].mxu0
      %3672 = vdwg.mxu0
      %3673 = vrot.lane.b32.xlu0 %v460, 64
      %v3674 = vpop.permute.xlu0 %3673
      %v3677 = vsel %vm3168, %v3462, 0
      %3679 = vmatprep.subr.mxu0 0.0
      %3680 = vmatpush1.msra.mxu0 %v3674
      %3681 = vmatprep.subr.mxu0 0.0
      %3682 = vmatpush1.msra.mxu0 0.0
      %3683 = vmatprep.subr.mxu0 0.0
      %3684 = vmatpush1.msra.mxu0 0.0
      %3685 = vmatprep.subr.mxu0 0.0
      %3686 = vmatpush1.msra.mxu0 0.0
      %3687 = vmatprep.subr.mxu0 0.0
      %3688 = vmatpush1.msra.mxu0 0.0
      %3689 = vmatprep.subr.mxu0 0.0
      %3690 = vmatpush1.msra.mxu0 0.0
      %3691 = vmatprep.subr.mxu0 0.0
      %3692 = vmatpush1.msra.mxu0 0.0
      %3693 = vmatprep.subr.mxu0 0.0
      %3694 = vmatpush1.msra.mxu0 0.0
      %3695 = vmatprep.subr.mxu0 0.0
      %3696 = vmatpush1.msra.mxu0 0.0
      %3697 = vmatprep.subr.mxu0 0.0
      %3698 = vmatpush1.msra.mxu0 0.0
      %3699 = vmatprep.subr.mxu0 0.0
      %3700 = vmatpush1.msra.mxu0 0.0
      %3701 = vmatprep.subr.mxu0 0.0
      %3702 = vmatpush1.msra.mxu0 0.0
      %3703 = vmatprep.subr.mxu0 0.0
      %3704 = vmatpush1.msra.mxu0 0.0
      %3705 = vmatprep.subr.mxu0 0.0
      %3706 = vmatpush1.msra.mxu0 0.0
      %3707 = vmatprep.subr.mxu0 0.0
      %3708 = vmatpush1.msra.mxu0 0.0
      %3709 = vmatprep.subr.mxu0 0.0
      %3710 = vmatpush1.msra.mxu0 0.0
      %3711 = vmatprep.subr.mxu0 0.0
      %3712 = vmatpush1.msra.mxu0 0.0
      %3713 = vmatprep.subr.mxu0 0.0
      %3714 = vmatpush1.msra.mxu0 0.0
      %3715 = vmatprep.subr.mxu0 0.0
      %3716 = vmatpush1.msra.mxu0 0.0
      %3717 = vmatprep.subr.mxu0 0.0
      %3718 = vmatpush1.msra.mxu0 0.0
      %3719 = vmatprep.subr.mxu0 0.0
      %3720 = vmatpush1.msra.mxu0 0.0
      %3721 = vmatprep.subr.mxu0 0.0
      %3722 = vmatpush1.msra.mxu0 0.0
      %3723 = vmatprep.subr.mxu0 0.0
      %3724 = vmatpush1.msra.mxu0 0.0
      %3725 = vmatprep.subr.mxu0 0.0
      %3726 = vmatpush1.msra.mxu0 0.0
      %3727 = vmatprep.subr.mxu0 0.0
      %3728 = vmatpush1.msra.mxu0 0.0
      %3729 = vmatprep.subr.mxu0 0.0
      %3730 = vmatpush1.msra.mxu0 0.0
      %3731 = vmatprep.subr.mxu0 0.0
      %3732 = vmatpush1.msra.mxu0 0.0
      %3733 = vmatprep.subr.mxu0 0.0
      %3734 = vmatpush1.msra.mxu0 0.0
      %3735 = vmatprep.subr.mxu0 0.0
      %3736 = vmatpush1.msra.mxu0 0.0
      %3737 = vmatprep.subr.mxu0 0.0
      %3738 = vmatpush1.msra.mxu0 0.0
      %3739 = vmatprep.subr.mxu0 0.0
      %3740 = vmatpush1.msra.mxu0 0.0
      %3741 = vmatprep.subr.mxu0 0.0
      %3742 = vmatpush1.msra.mxu0 0.0
      %3743 = vmatprep.mubr.f32.mxu0 0.0
      %3744 = vmatmul.mubr.f32.gmra.mrb[0].mxu0 %v3677
      %v3745 = vpop.f32.mrb[0].mxu0
      %v3746 = vadd.f32 0.0, %v3745
      %v3747 = vpop.f32.mrb[0].mxu0
      %3748 = vdwg.mxu0
      %3749 = vrot.lane.b32.xlu0 %v465, 64
      %v3750 = vpop.permute.xlu0 %3749
      %v3753 = vsel %vm3168, %v3464, 0
      %3755 = vmatprep.subr.mxu0 0.0
      %3756 = vmatpush1.msra.mxu0 %v3750
      %3757 = vmatprep.subr.mxu0 0.0
      %3758 = vmatpush1.msra.mxu0 0.0
      %3759 = vmatprep.subr.mxu0 0.0
      %3760 = vmatpush1.msra.mxu0 0.0
      %3761 = vmatprep.subr.mxu0 0.0
      %3762 = vmatpush1.msra.mxu0 0.0
      %3763 = vmatprep.subr.mxu0 0.0
      %3764 = vmatpush1.msra.mxu0 0.0
      %3765 = vmatprep.subr.mxu0 0.0
      %3766 = vmatpush1.msra.mxu0 0.0
      %3767 = vmatprep.subr.mxu0 0.0
      %3768 = vmatpush1.msra.mxu0 0.0
      %3769 = vmatprep.subr.mxu0 0.0
      %3770 = vmatpush1.msra.mxu0 0.0
      %3771 = vmatprep.subr.mxu0 0.0
      %3772 = vmatpush1.msra.mxu0 0.0
      %3773 = vmatprep.subr.mxu0 0.0
      %3774 = vmatpush1.msra.mxu0 0.0
      %3775 = vmatprep.subr.mxu0 0.0
      %3776 = vmatpush1.msra.mxu0 0.0
      %3777 = vmatprep.subr.mxu0 0.0
      %3778 = vmatpush1.msra.mxu0 0.0
      %3779 = vmatprep.subr.mxu0 0.0
      %3780 = vmatpush1.msra.mxu0 0.0
      %3781 = vmatprep.subr.mxu0 0.0
      %3782 = vmatpush1.msra.mxu0 0.0
      %3783 = vmatprep.subr.mxu0 0.0
      %3784 = vmatpush1.msra.mxu0 0.0
      %3785 = vmatprep.subr.mxu0 0.0
      %3786 = vmatpush1.msra.mxu0 0.0
      %3787 = vmatprep.subr.mxu0 0.0
      %3788 = vmatpush1.msra.mxu0 0.0
      %3789 = vmatprep.subr.mxu0 0.0
      %3790 = vmatpush1.msra.mxu0 0.0
      %3791 = vmatprep.subr.mxu0 0.0
      %3792 = vmatpush1.msra.mxu0 0.0
      %3793 = vmatprep.subr.mxu0 0.0
      %3794 = vmatpush1.msra.mxu0 0.0
      %3795 = vmatprep.subr.mxu0 0.0
      %3796 = vmatpush1.msra.mxu0 0.0
      %3797 = vmatprep.subr.mxu0 0.0
      %3798 = vmatpush1.msra.mxu0 0.0
      %3799 = vmatprep.subr.mxu0 0.0
      %3800 = vmatpush1.msra.mxu0 0.0
      %3801 = vmatprep.subr.mxu0 0.0
      %3802 = vmatpush1.msra.mxu0 0.0
      %3803 = vmatprep.subr.mxu0 0.0
      %3804 = vmatpush1.msra.mxu0 0.0
      %3805 = vmatprep.subr.mxu0 0.0
      %3806 = vmatpush1.msra.mxu0 0.0
      %3807 = vmatprep.subr.mxu0 0.0
      %3808 = vmatpush1.msra.mxu0 0.0
      %3809 = vmatprep.subr.mxu0 0.0
      %3810 = vmatpush1.msra.mxu0 0.0
      %3811 = vmatprep.subr.mxu0 0.0
      %3812 = vmatpush1.msra.mxu0 0.0
      %3813 = vmatprep.subr.mxu0 0.0
      %3814 = vmatpush1.msra.mxu0 0.0
      %3815 = vmatprep.subr.mxu0 0.0
      %3816 = vmatpush1.msra.mxu0 0.0
      %3817 = vmatprep.subr.mxu0 0.0
      %3818 = vmatpush1.msra.mxu0 0.0
      %3819 = vmatprep.mubr.f32.mxu0 0.0
      %3820 = vmatmul.mubr.f32.gmra.mrb[0].mxu0 %v3753
      %v3821 = vpop.f32.mrb[0].mxu0
      %v3822 = vadd.f32 0.0, %v3821
      %v3823 = vpop.f32.mrb[0].mxu0
      %3824 = vdwg.mxu0
      %3825 = vrot.lane.b32.xlu0 %v470, 64
      %v3826 = vpop.permute.xlu0 %3825
      %v3829 = vsel %vm3168, %v3466, 0
      %3831 = vmatprep.subr.mxu0 0.0
      %3832 = vmatpush1.msra.mxu0 %v3826
      %3833 = vmatprep.subr.mxu0 0.0
      %3834 = vmatpush1.msra.mxu0 0.0
      %3835 = vmatprep.subr.mxu0 0.0
      %3836 = vmatpush1.msra.mxu0 0.0
      %3837 = vmatprep.subr.mxu0 0.0
      %3838 = vmatpush1.msra.mxu0 0.0
      %3839 = vmatprep.subr.mxu0 0.0
      %3840 = vmatpush1.msra.mxu0 0.0
      %3841 = vmatprep.subr.mxu0 0.0
      %3842 = vmatpush1.msra.mxu0 0.0
      %3843 = vmatprep.subr.mxu0 0.0
      %3844 = vmatpush1.msra.mxu0 0.0
      %3845 = vmatprep.subr.mxu0 0.0
      %3846 = vmatpush1.msra.mxu0 0.0
      %3847 = vmatprep.subr.mxu0 0.0
      %3848 = vmatpush1.msra.mxu0 0.0
      %3849 = vmatprep.subr.mxu0 0.0
      %3850 = vmatpush1.msra.mxu0 0.0
      %3851 = vmatprep.subr.mxu0 0.0
      %3852 = vmatpush1.msra.mxu0 0.0
      %3853 = vmatprep.subr.mxu0 0.0
      %3854 = vmatpush1.msra.mxu0 0.0
      %3855 = vmatprep.subr.mxu0 0.0
      %3856 = vmatpush1.msra.mxu0 0.0
      %3857 = vmatprep.subr.mxu0 0.0
      %3858 = vmatpush1.msra.mxu0 0.0
      %3859 = vmatprep.subr.mxu0 0.0
      %3860 = vmatpush1.msra.mxu0 0.0
      %3861 = vmatprep.subr.mxu0 0.0
      %3862 = vmatpush1.msra.mxu0 0.0
      %3863 = vmatprep.subr.mxu0 0.0
      %3864 = vmatpush1.msra.mxu0 0.0
      %3865 = vmatprep.subr.mxu0 0.0
      %3866 = vmatpush1.msra.mxu0 0.0
      %3867 = vmatprep.subr.mxu0 0.0
      %3868 = vmatpush1.msra.mxu0 0.0
      %3869 = vmatprep.subr.mxu0 0.0
      %3870 = vmatpush1.msra.mxu0 0.0
      %3871 = vmatprep.subr.mxu0 0.0
      %3872 = vmatpush1.msra.mxu0 0.0
      %3873 = vmatprep.subr.mxu0 0.0
      %3874 = vmatpush1.msra.mxu0 0.0
      %3875 = vmatprep.subr.mxu0 0.0
      %3876 = vmatpush1.msra.mxu0 0.0
      %3877 = vmatprep.subr.mxu0 0.0
      %3878 = vmatpush1.msra.mxu0 0.0
      %3879 = vmatprep.subr.mxu0 0.0
      %3880 = vmatpush1.msra.mxu0 0.0
      %3881 = vmatprep.subr.mxu0 0.0
      %3882 = vmatpush1.msra.mxu0 0.0
      %3883 = vmatprep.subr.mxu0 0.0
      %3884 = vmatpush1.msra.mxu0 0.0
      %3885 = vmatprep.subr.mxu0 0.0
      %3886 = vmatpush1.msra.mxu0 0.0
      %3887 = vmatprep.subr.mxu0 0.0
      %3888 = vmatpush1.msra.mxu0 0.0
      %3889 = vmatprep.subr.mxu0 0.0
      %3890 = vmatpush1.msra.mxu0 0.0
      %3891 = vmatprep.subr.mxu0 0.0
      %3892 = vmatpush1.msra.mxu0 0.0
      %3893 = vmatprep.subr.mxu0 0.0
      %3894 = vmatpush1.msra.mxu0 0.0
      %3895 = vmatprep.mubr.f32.mxu0 0.0
      %3896 = vmatmul.mubr.f32.gmra.mrb[0].mxu0 %v3829
      %v3897 = vpop.f32.mrb[0].mxu0
      %v3898 = vadd.f32 0.0, %v3897
      %v3899 = vpop.f32.mrb[0].mxu0
      %3900 = vdwg.mxu0
      %3901 = vrot.lane.b32.xlu0 %v475, 64
      %v3902 = vpop.permute.xlu0 %3901
      %v3905 = vsel %vm3168, %v3468, 0
      %3907 = vmatprep.subr.mxu0 0.0
      %3908 = vmatpush1.msra.mxu0 %v3902
      %3909 = vmatprep.subr.mxu0 0.0
      %3910 = vmatpush1.msra.mxu0 0.0
      %3911 = vmatprep.subr.mxu0 0.0
      %3912 = vmatpush1.msra.mxu0 0.0
      %3913 = vmatprep.subr.mxu0 0.0
      %3914 = vmatpush1.msra.mxu0 0.0
      %3915 = vmatprep.subr.mxu0 0.0
      %3916 = vmatpush1.msra.mxu0 0.0
      %3917 = vmatprep.subr.mxu0 0.0
      %3918 = vmatpush1.msra.mxu0 0.0
      %3919 = vmatprep.subr.mxu0 0.0
      %3920 = vmatpush1.msra.mxu0 0.0
      %3921 = vmatprep.subr.mxu0 0.0
      %3922 = vmatpush1.msra.mxu0 0.0
      %3923 = vmatprep.subr.mxu0 0.0
      %3924 = vmatpush1.msra.mxu0 0.0
      %3925 = vmatprep.subr.mxu0 0.0
      %3926 = vmatpush1.msra.mxu0 0.0
      %3927 = vmatprep.subr.mxu0 0.0
      %3928 = vmatpush1.msra.mxu0 0.0
      %3929 = vmatprep.subr.mxu0 0.0
      %3930 = vmatpush1.msra.mxu0 0.0
      %3931 = vmatprep.subr.mxu0 0.0
      %3932 = vmatpush1.msra.mxu0 0.0
      %3933 = vmatprep.subr.mxu0 0.0
      %3934 = vmatpush1.msra.mxu0 0.0
      %3935 = vmatprep.subr.mxu0 0.0
      %3936 = vmatpush1.msra.mxu0 0.0
      %3937 = vmatprep.subr.mxu0 0.0
      %3938 = vmatpush1.msra.mxu0 0.0
      %3939 = vmatprep.subr.mxu0 0.0
      %3940 = vmatpush1.msra.mxu0 0.0
      %3941 = vmatprep.subr.mxu0 0.0
      %3942 = vmatpush1.msra.mxu0 0.0
      %3943 = vmatprep.subr.mxu0 0.0
      %3944 = vmatpush1.msra.mxu0 0.0
      %3945 = vmatprep.subr.mxu0 0.0
      %3946 = vmatpush1.msra.mxu0 0.0
      %3947 = vmatprep.subr.mxu0 0.0
      %3948 = vmatpush1.msra.mxu0 0.0
      %3949 = vmatprep.subr.mxu0 0.0
      %3950 = vmatpush1.msra.mxu0 0.0
      %3951 = vmatprep.subr.mxu0 0.0
      %3952 = vmatpush1.msra.mxu0 0.0
      %3953 = vmatprep.subr.mxu0 0.0
      %3954 = vmatpush1.msra.mxu0 0.0
      %3955 = vmatprep.subr.mxu0 0.0
      %3956 = vmatpush1.msra.mxu0 0.0
      %3957 = vmatprep.subr.mxu0 0.0
      %3958 = vmatpush1.msra.mxu0 0.0
      %3959 = vmatprep.subr.mxu0 0.0
      %3960 = vmatpush1.msra.mxu0 0.0
      %3961 = vmatprep.subr.mxu0 0.0
      %3962 = vmatpush1.msra.mxu0 0.0
      %3963 = vmatprep.subr.mxu0 0.0
      %3964 = vmatpush1.msra.mxu0 0.0
      %3965 = vmatprep.subr.mxu0 0.0
      %3966 = vmatpush1.msra.mxu0 0.0
      %3967 = vmatprep.subr.mxu0 0.0
      %3968 = vmatpush1.msra.mxu0 0.0
      %3969 = vmatprep.subr.mxu0 0.0
      %3970 = vmatpush1.msra.mxu0 0.0
      %3971 = vmatprep.mubr.f32.mxu0 0.0
      %3972 = vmatmul.mubr.f32.gmra.mrb[0].mxu0 %v3905
      %v3973 = vpop.f32.mrb[0].mxu0
      %v3974 = vadd.f32 0.0, %v3973
      %v3975 = vpop.f32.mrb[0].mxu0
      %3976 = vdwg.mxu0
      %3977 = vrot.lane.b32.xlu0 %v480, 64
      %v3978 = vpop.permute.xlu0 %3977
      %v3981 = vsel %vm3168, %v3470, 0
      %3983 = vmatprep.subr.mxu0 0.0
      %3984 = vmatpush1.msra.mxu0 %v3978
      %3985 = vmatprep.subr.mxu0 0.0
      %3986 = vmatpush1.msra.mxu0 0.0
      %3987 = vmatprep.subr.mxu0 0.0
      %3988 = vmatpush1.msra.mxu0 0.0
      %3989 = vmatprep.subr.mxu0 0.0
      %3990 = vmatpush1.msra.mxu0 0.0
      %3991 = vmatprep.subr.mxu0 0.0
      %3992 = vmatpush1.msra.mxu0 0.0
      %3993 = vmatprep.subr.mxu0 0.0
      %3994 = vmatpush1.msra.mxu0 0.0
      %3995 = vmatprep.subr.mxu0 0.0
      %3996 = vmatpush1.msra.mxu0 0.0
      %3997 = vmatprep.subr.mxu0 0.0
      %3998 = vmatpush1.msra.mxu0 0.0
      %3999 = vmatprep.subr.mxu0 0.0
      %4000 = vmatpush1.msra.mxu0 0.0
      %4001 = vmatprep.subr.mxu0 0.0
      %4002 = vmatpush1.msra.mxu0 0.0
      %4003 = vmatprep.subr.mxu0 0.0
      %4004 = vmatpush1.msra.mxu0 0.0
      %4005 = vmatprep.subr.mxu0 0.0
      %4006 = vmatpush1.msra.mxu0 0.0
      %4007 = vmatprep.subr.mxu0 0.0
      %4008 = vmatpush1.msra.mxu0 0.0
      %4009 = vmatprep.subr.mxu0 0.0
      %4010 = vmatpush1.msra.mxu0 0.0
      %4011 = vmatprep.subr.mxu0 0.0
      %4012 = vmatpush1.msra.mxu0 0.0
      %4013 = vmatprep.subr.mxu0 0.0
      %4014 = vmatpush1.msra.mxu0 0.0
      %4015 = vmatprep.subr.mxu0 0.0
      %4016 = vmatpush1.msra.mxu0 0.0
      %4017 = vmatprep.subr.mxu0 0.0
      %4018 = vmatpush1.msra.mxu0 0.0
      %4019 = vmatprep.subr.mxu0 0.0
      %4020 = vmatpush1.msra.mxu0 0.0
      %4021 = vmatprep.subr.mxu0 0.0
      %4022 = vmatpush1.msra.mxu0 0.0
      %4023 = vmatprep.subr.mxu0 0.0
      %4024 = vmatpush1.msra.mxu0 0.0
      %4025 = vmatprep.subr.mxu0 0.0
      %4026 = vmatpush1.msra.mxu0 0.0
      %4027 = vmatprep.subr.mxu0 0.0
      %4028 = vmatpush1.msra.mxu0 0.0
      %4029 = vmatprep.subr.mxu0 0.0
      %4030 = vmatpush1.msra.mxu0 0.0
      %4031 = vmatprep.subr.mxu0 0.0
      %4032 = vmatpush1.msra.mxu0 0.0
      %4033 = vmatprep.subr.mxu0 0.0
      %4034 = vmatpush1.msra.mxu0 0.0
      %4035 = vmatprep.subr.mxu0 0.0
      %4036 = vmatpush1.msra.mxu0 0.0
      %4037 = vmatprep.subr.mxu0 0.0
      %4038 = vmatpush1.msra.mxu0 0.0
      %4039 = vmatprep.subr.mxu0 0.0
      %4040 = vmatpush1.msra.mxu0 0.0
      %4041 = vmatprep.subr.mxu0 0.0
      %4042 = vmatpush1.msra.mxu0 0.0
      %4043 = vmatprep.subr.mxu0 0.0
      %4044 = vmatpush1.msra.mxu0 0.0
      %4045 = vmatprep.subr.mxu0 0.0
      %4046 = vmatpush1.msra.mxu0 0.0
      %4047 = vmatprep.mubr.f32.mxu0 0.0
      %4048 = vmatmul.mubr.f32.gmra.mrb[0].mxu0 %v3981
      %v4049 = vpop.f32.mrb[0].mxu0
      %v4050 = vadd.f32 0.0, %v4049
      %v4051 = vpop.f32.mrb[0].mxu0
      %4052 = vdwg.mxu0
      %4053 = vrot.lane.b32.xlu0 %v485, 64
      %v4054 = vpop.permute.xlu0 %4053
      %v4057 = vsel %vm3168, %v3472, 0
      %4059 = vmatprep.subr.mxu0 0.0
      %4060 = vmatpush1.msra.mxu0 %v4054
      %4061 = vmatprep.subr.mxu0 0.0
      %4062 = vmatpush1.msra.mxu0 0.0
      %4063 = vmatprep.subr.mxu0 0.0
      %4064 = vmatpush1.msra.mxu0 0.0
      %4065 = vmatprep.subr.mxu0 0.0
      %4066 = vmatpush1.msra.mxu0 0.0
      %4067 = vmatprep.subr.mxu0 0.0
      %4068 = vmatpush1.msra.mxu0 0.0
      %4069 = vmatprep.subr.mxu0 0.0
      %4070 = vmatpush1.msra.mxu0 0.0
      %4071 = vmatprep.subr.mxu0 0.0
      %4072 = vmatpush1.msra.mxu0 0.0
      %4073 = vmatprep.subr.mxu0 0.0
      %4074 = vmatpush1.msra.mxu0 0.0
      %4075 = vmatprep.subr.mxu0 0.0
      %4076 = vmatpush1.msra.mxu0 0.0
      %4077 = vmatprep.subr.mxu0 0.0
      %4078 = vmatpush1.msra.mxu0 0.0
      %4079 = vmatprep.subr.mxu0 0.0
      %4080 = vmatpush1.msra.mxu0 0.0
      %4081 = vmatprep.subr.mxu0 0.0
      %4082 = vmatpush1.msra.mxu0 0.0
      %4083 = vmatprep.subr.mxu0 0.0
      %4084 = vmatpush1.msra.mxu0 0.0
      %4085 = vmatprep.subr.mxu0 0.0
      %4086 = vmatpush1.msra.mxu0 0.0
      %4087 = vmatprep.subr.mxu0 0.0
      %4088 = vmatpush1.msra.mxu0 0.0
      %4089 = vmatprep.subr.mxu0 0.0
      %4090 = vmatpush1.msra.mxu0 0.0
      %4091 = vmatprep.subr.mxu0 0.0
      %4092 = vmatpush1.msra.mxu0 0.0
      %4093 = vmatprep.subr.mxu0 0.0
      %4094 = vmatpush1.msra.mxu0 0.0
      %4095 = vmatprep.subr.mxu0 0.0
      %4096 = vmatpush1.msra.mxu0 0.0
      %4097 = vmatprep.subr.mxu0 0.0
      %4098 = vmatpush1.msra.mxu0 0.0
      %4099 = vmatprep.subr.mxu0 0.0
      %4100 = vmatpush1.msra.mxu0 0.0
      %4101 = vmatprep.subr.mxu0 0.0
      %4102 = vmatpush1.msra.mxu0 0.0
      %4103 = vmatprep.subr.mxu0 0.0
      %4104 = vmatpush1.msra.mxu0 0.0
      %4105 = vmatprep.subr.mxu0 0.0
      %4106 = vmatpush1.msra.mxu0 0.0
      %4107 = vmatprep.subr.mxu0 0.0
      %4108 = vmatpush1.msra.mxu0 0.0
      %4109 = vmatprep.subr.mxu0 0.0
      %4110 = vmatpush1.msra.mxu0 0.0
      %4111 = vmatprep.subr.mxu0 0.0
      %4112 = vmatpush1.msra.mxu0 0.0
      %4113 = vmatprep.subr.mxu0 0.0
      %4114 = vmatpush1.msra.mxu0 0.0
      %4115 = vmatprep.subr.mxu0 0.0
      %4116 = vmatpush1.msra.mxu0 0.0
      %4117 = vmatprep.subr.mxu0 0.0
      %4118 = vmatpush1.msra.mxu0 0.0
      %4119 = vmatprep.subr.mxu0 0.0
      %4120 = vmatpush1.msra.mxu0 0.0
      %4121 = vmatprep.subr.mxu0 0.0
      %4122 = vmatpush1.msra.mxu0 0.0
      %4123 = vmatprep.mubr.f32.mxu0 0.0
      %4124 = vmatmul.mubr.f32.gmra.mrb[0].mxu0 %v4057
      %v4125 = vpop.f32.mrb[0].mxu0
      %v4126 = vadd.f32 0.0, %v4125
      %v4127 = vpop.f32.mrb[0].mxu0
      %4128 = vdwg.mxu0
      %4129 = vrot.lane.b32.xlu0 %v490, 64
      %v4130 = vpop.permute.xlu0 %4129
      %v4133 = vsel %vm3168, %v3474, 0
      %4135 = vmatprep.subr.mxu0 0.0
      %4136 = vmatpush1.msra.mxu0 %v4130
      %4137 = vmatprep.subr.mxu0 0.0
      %4138 = vmatpush1.msra.mxu0 0.0
      %4139 = vmatprep.subr.mxu0 0.0
      %4140 = vmatpush1.msra.mxu0 0.0
      %4141 = vmatprep.subr.mxu0 0.0
      %4142 = vmatpush1.msra.mxu0 0.0
      %4143 = vmatprep.subr.mxu0 0.0
      %4144 = vmatpush1.msra.mxu0 0.0
      %4145 = vmatprep.subr.mxu0 0.0
      %4146 = vmatpush1.msra.mxu0 0.0
      %4147 = vmatprep.subr.mxu0 0.0
      %4148 = vmatpush1.msra.mxu0 0.0
      %4149 = vmatprep.subr.mxu0 0.0
      %4150 = vmatpush1.msra.mxu0 0.0
      %4151 = vmatprep.subr.mxu0 0.0
      %4152 = vmatpush1.msra.mxu0 0.0
      %4153 = vmatprep.subr.mxu0 0.0
      %4154 = vmatpush1.msra.mxu0 0.0
      %4155 = vmatprep.subr.mxu0 0.0
      %4156 = vmatpush1.msra.mxu0 0.0
      %4157 = vmatprep.subr.mxu0 0.0
      %4158 = vmatpush1.msra.mxu0 0.0
      %4159 = vmatprep.subr.mxu0 0.0
      %4160 = vmatpush1.msra.mxu0 0.0
      %4161 = vmatprep.subr.mxu0 0.0
      %4162 = vmatpush1.msra.mxu0 0.0
      %4163 = vmatprep.subr.mxu0 0.0
      %4164 = vmatpush1.msra.mxu0 0.0
      %4165 = vmatprep.subr.mxu0 0.0
      %4166 = vmatpush1.msra.mxu0 0.0
      %4167 = vmatprep.subr.mxu0 0.0
      %4168 = vmatpush1.msra.mxu0 0.0
      %4169 = vmatprep.subr.mxu0 0.0
      %4170 = vmatpush1.msra.mxu0 0.0
      %4171 = vmatprep.subr.mxu0 0.0
      %4172 = vmatpush1.msra.mxu0 0.0
      %4173 = vmatprep.subr.mxu0 0.0
      %4174 = vmatpush1.msra.mxu0 0.0
      %4175 = vmatprep.subr.mxu0 0.0
      %4176 = vmatpush1.msra.mxu0 0.0
      %4177 = vmatprep.subr.mxu0 0.0
      %4178 = vmatpush1.msra.mxu0 0.0
      %4179 = vmatprep.subr.mxu0 0.0
      %4180 = vmatpush1.msra.mxu0 0.0
      %4181 = vmatprep.subr.mxu0 0.0
      %4182 = vmatpush1.msra.mxu0 0.0
      %4183 = vmatprep.subr.mxu0 0.0
      %4184 = vmatpush1.msra.mxu0 0.0
      %4185 = vmatprep.subr.mxu0 0.0
      %4186 = vmatpush1.msra.mxu0 0.0
      %4187 = vmatprep.subr.mxu0 0.0
      %4188 = vmatpush1.msra.mxu0 0.0
      %4189 = vmatprep.subr.mxu0 0.0
      %4190 = vmatpush1.msra.mxu0 0.0
      %4191 = vmatprep.subr.mxu0 0.0
      %4192 = vmatpush1.msra.mxu0 0.0
      %4193 = vmatprep.subr.mxu0 0.0
      %4194 = vmatpush1.msra.mxu0 0.0
      %4195 = vmatprep.subr.mxu0 0.0
      %4196 = vmatpush1.msra.mxu0 0.0
      %4197 = vmatprep.subr.mxu0 0.0
      %4198 = vmatpush1.msra.mxu0 0.0
      %4199 = vmatprep.mubr.f32.mxu0 0.0
      %4200 = vmatmul.mubr.f32.gmra.mrb[0].mxu0 %v4133
      %v4201 = vpop.f32.mrb[0].mxu0
      %v4202 = vadd.f32 0.0, %v4201
      %v4203 = vpop.f32.mrb[0].mxu0
      %4204 = vdwg.mxu0
      %4205 = vrot.lane.b32.xlu0 %v495, 64
      %v4206 = vpop.permute.xlu0 %4205
      %v4209 = vsel %vm3168, %v3476, 0
      %4211 = vmatprep.subr.mxu0 0.0
      %4212 = vmatpush1.msra.mxu0 %v4206
      %4213 = vmatprep.subr.mxu0 0.0
      %4214 = vmatpush1.msra.mxu0 0.0
      %4215 = vmatprep.subr.mxu0 0.0
      %4216 = vmatpush1.msra.mxu0 0.0
      %4217 = vmatprep.subr.mxu0 0.0
      %4218 = vmatpush1.msra.mxu0 0.0
      %4219 = vmatprep.subr.mxu0 0.0
      %4220 = vmatpush1.msra.mxu0 0.0
      %4221 = vmatprep.subr.mxu0 0.0
      %4222 = vmatpush1.msra.mxu0 0.0
      %4223 = vmatprep.subr.mxu0 0.0
      %4224 = vmatpush1.msra.mxu0 0.0
      %4225 = vmatprep.subr.mxu0 0.0
      %4226 = vmatpush1.msra.mxu0 0.0
      %4227 = vmatprep.subr.mxu0 0.0
      %4228 = vmatpush1.msra.mxu0 0.0
      %4229 = vmatprep.subr.mxu0 0.0
      %4230 = vmatpush1.msra.mxu0 0.0
      %4231 = vmatprep.subr.mxu0 0.0
      %4232 = vmatpush1.msra.mxu0 0.0
      %4233 = vmatprep.subr.mxu0 0.0
      %4234 = vmatpush1.msra.mxu0 0.0
      %4235 = vmatprep.subr.mxu0 0.0
      %4236 = vmatpush1.msra.mxu0 0.0
      %4237 = vmatprep.subr.mxu0 0.0
      %4238 = vmatpush1.msra.mxu0 0.0
      %4239 = vmatprep.subr.mxu0 0.0
      %4240 = vmatpush1.msra.mxu0 0.0
      %4241 = vmatprep.subr.mxu0 0.0
      %4242 = vmatpush1.msra.mxu0 0.0
      %4243 = vmatprep.subr.mxu0 0.0
      %4244 = vmatpush1.msra.mxu0 0.0
      %4245 = vmatprep.subr.mxu0 0.0
      %4246 = vmatpush1.msra.mxu0 0.0
      %4247 = vmatprep.subr.mxu0 0.0
      %4248 = vmatpush1.msra.mxu0 0.0
      %4249 = vmatprep.subr.mxu0 0.0
      %4250 = vmatpush1.msra.mxu0 0.0
      %4251 = vmatprep.subr.mxu0 0.0
      %4252 = vmatpush1.msra.mxu0 0.0
      %4253 = vmatprep.subr.mxu0 0.0
      %4254 = vmatpush1.msra.mxu0 0.0
      %4255 = vmatprep.subr.mxu0 0.0
      %4256 = vmatpush1.msra.mxu0 0.0
      %4257 = vmatprep.subr.mxu0 0.0
      %4258 = vmatpush1.msra.mxu0 0.0
      %4259 = vmatprep.subr.mxu0 0.0
      %4260 = vmatpush1.msra.mxu0 0.0
      %4261 = vmatprep.subr.mxu0 0.0
      %4262 = vmatpush1.msra.mxu0 0.0
      %4263 = vmatprep.subr.mxu0 0.0
      %4264 = vmatpush1.msra.mxu0 0.0
      %4265 = vmatprep.subr.mxu0 0.0
      %4266 = vmatpush1.msra.mxu0 0.0
      %4267 = vmatprep.subr.mxu0 0.0
      %4268 = vmatpush1.msra.mxu0 0.0
      %4269 = vmatprep.subr.mxu0 0.0
      %4270 = vmatpush1.msra.mxu0 0.0
      %4271 = vmatprep.subr.mxu0 0.0
      %4272 = vmatpush1.msra.mxu0 0.0
      %4273 = vmatprep.subr.mxu0 0.0
      %4274 = vmatpush1.msra.mxu0 0.0
      %4275 = vmatprep.mubr.f32.mxu0 0.0
      %4276 = vmatmul.mubr.f32.gmra.mrb[0].mxu0 %v4209
      %v4277 = vpop.f32.mrb[0].mxu0
      %v4278 = vadd.f32 0.0, %v4277
      %v4279 = vpop.f32.mrb[0].mxu0
      %4280 = vdwg.mxu0
      %4281 = vrot.lane.b32.xlu0 %v500, 64
      %v4282 = vpop.permute.xlu0 %4281
      %v4285 = vsel %vm3168, %v3478, 0
      %4287 = vmatprep.subr.mxu0 0.0
      %4288 = vmatpush1.msra.mxu0 %v4282
      %4289 = vmatprep.subr.mxu0 0.0
      %4290 = vmatpush1.msra.mxu0 0.0
      %4291 = vmatprep.subr.mxu0 0.0
      %4292 = vmatpush1.msra.mxu0 0.0
      %4293 = vmatprep.subr.mxu0 0.0
      %4294 = vmatpush1.msra.mxu0 0.0
      %4295 = vmatprep.subr.mxu0 0.0
      %4296 = vmatpush1.msra.mxu0 0.0
      %4297 = vmatprep.subr.mxu0 0.0
      %4298 = vmatpush1.msra.mxu0 0.0
      %4299 = vmatprep.subr.mxu0 0.0
      %4300 = vmatpush1.msra.mxu0 0.0
      %4301 = vmatprep.subr.mxu0 0.0
      %4302 = vmatpush1.msra.mxu0 0.0
      %4303 = vmatprep.subr.mxu0 0.0
      %4304 = vmatpush1.msra.mxu0 0.0
      %4305 = vmatprep.subr.mxu0 0.0
      %4306 = vmatpush1.msra.mxu0 0.0
      %4307 = vmatprep.subr.mxu0 0.0
      %4308 = vmatpush1.msra.mxu0 0.0
      %4309 = vmatprep.subr.mxu0 0.0
      %4310 = vmatpush1.msra.mxu0 0.0
      %4311 = vmatprep.subr.mxu0 0.0
      %4312 = vmatpush1.msra.mxu0 0.0
      %4313 = vmatprep.subr.mxu0 0.0
      %4314 = vmatpush1.msra.mxu0 0.0
      %4315 = vmatprep.subr.mxu0 0.0
      %4316 = vmatpush1.msra.mxu0 0.0
      %4317 = vmatprep.subr.mxu0 0.0
      %4318 = vmatpush1.msra.mxu0 0.0
      %4319 = vmatprep.subr.mxu0 0.0
      %4320 = vmatpush1.msra.mxu0 0.0
      %4321 = vmatprep.subr.mxu0 0.0
      %4322 = vmatpush1.msra.mxu0 0.0
      %4323 = vmatprep.subr.mxu0 0.0
      %4324 = vmatpush1.msra.mxu0 0.0
      %4325 = vmatprep.subr.mxu0 0.0
      %4326 = vmatpush1.msra.mxu0 0.0
      %4327 = vmatprep.subr.mxu0 0.0
      %4328 = vmatpush1.msra.mxu0 0.0
      %4329 = vmatprep.subr.mxu0 0.0
      %4330 = vmatpush1.msra.mxu0 0.0
      %4331 = vmatprep.subr.mxu0 0.0
      %4332 = vmatpush1.msra.mxu0 0.0
      %4333 = vmatprep.subr.mxu0 0.0
      %4334 = vmatpush1.msra.mxu0 0.0
      %4335 = vmatprep.subr.mxu0 0.0
      %4336 = vmatpush1.msra.mxu0 0.0
      %4337 = vmatprep.subr.mxu0 0.0
      %4338 = vmatpush1.msra.mxu0 0.0
      %4339 = vmatprep.subr.mxu0 0.0
      %4340 = vmatpush1.msra.mxu0 0.0
      %4341 = vmatprep.subr.mxu0 0.0
      %4342 = vmatpush1.msra.mxu0 0.0
      %4343 = vmatprep.subr.mxu0 0.0
      %4344 = vmatpush1.msra.mxu0 0.0
      %4345 = vmatprep.subr.mxu0 0.0
      %4346 = vmatpush1.msra.mxu0 0.0
      %4347 = vmatprep.subr.mxu0 0.0
      %4348 = vmatpush1.msra.mxu0 0.0
      %4349 = vmatprep.subr.mxu0 0.0
      %4350 = vmatpush1.msra.mxu0 0.0
      %4351 = vmatprep.mubr.f32.mxu0 0.0
      %4352 = vmatmul.mubr.f32.gmra.mrb[0].mxu0 %v4285
      %v4353 = vpop.f32.mrb[0].mxu0
      %v4354 = vadd.f32 0.0, %v4353
      %v4355 = vpop.f32.mrb[0].mxu0
      %4356 = vdwg.mxu0
      %4357 = vrot.lane.b32.xlu0 %v505, 64
      %v4358 = vpop.permute.xlu0 %4357
      %v4361 = vsel %vm3168, %v3480, 0
      %4363 = vmatprep.subr.mxu0 0.0
      %4364 = vmatpush1.msra.mxu0 %v4358
      %4365 = vmatprep.subr.mxu0 0.0
      %4366 = vmatpush1.msra.mxu0 0.0
      %4367 = vmatprep.subr.mxu0 0.0
      %4368 = vmatpush1.msra.mxu0 0.0
      %4369 = vmatprep.subr.mxu0 0.0
      %4370 = vmatpush1.msra.mxu0 0.0
      %4371 = vmatprep.subr.mxu0 0.0
      %4372 = vmatpush1.msra.mxu0 0.0
      %4373 = vmatprep.subr.mxu0 0.0
      %4374 = vmatpush1.msra.mxu0 0.0
      %4375 = vmatprep.subr.mxu0 0.0
      %4376 = vmatpush1.msra.mxu0 0.0
      %4377 = vmatprep.subr.mxu0 0.0
      %4378 = vmatpush1.msra.mxu0 0.0
      %4379 = vmatprep.subr.mxu0 0.0
      %4380 = vmatpush1.msra.mxu0 0.0
      %4381 = vmatprep.subr.mxu0 0.0
      %4382 = vmatpush1.msra.mxu0 0.0
      %4383 = vmatprep.subr.mxu0 0.0
      %4384 = vmatpush1.msra.mxu0 0.0
      %4385 = vmatprep.subr.mxu0 0.0
      %4386 = vmatpush1.msra.mxu0 0.0
      %4387 = vmatprep.subr.mxu0 0.0
      %4388 = vmatpush1.msra.mxu0 0.0
      %4389 = vmatprep.subr.mxu0 0.0
      %4390 = vmatpush1.msra.mxu0 0.0
      %4391 = vmatprep.subr.mxu0 0.0
      %4392 = vmatpush1.msra.mxu0 0.0
      %4393 = vmatprep.subr.mxu0 0.0
      %4394 = vmatpush1.msra.mxu0 0.0
      %4395 = vmatprep.subr.mxu0 0.0
      %4396 = vmatpush1.msra.mxu0 0.0
      %4397 = vmatprep.subr.mxu0 0.0
      %4398 = vmatpush1.msra.mxu0 0.0
      %4399 = vmatprep.subr.mxu0 0.0
      %4400 = vmatpush1.msra.mxu0 0.0
      %4401 = vmatprep.subr.mxu0 0.0
      %4402 = vmatpush1.msra.mxu0 0.0
      %4403 = vmatprep.subr.mxu0 0.0
      %4404 = vmatpush1.msra.mxu0 0.0
      %4405 = vmatprep.subr.mxu0 0.0
      %4406 = vmatpush1.msra.mxu0 0.0
      %4407 = vmatprep.subr.mxu0 0.0
      %4408 = vmatpush1.msra.mxu0 0.0
      %4409 = vmatprep.subr.mxu0 0.0
      %4410 = vmatpush1.msra.mxu0 0.0
      %4411 = vmatprep.subr.mxu0 0.0
      %4412 = vmatpush1.msra.mxu0 0.0
      %4413 = vmatprep.subr.mxu0 0.0
      %4414 = vmatpush1.msra.mxu0 0.0
      %4415 = vmatprep.subr.mxu0 0.0
      %4416 = vmatpush1.msra.mxu0 0.0
      %4417 = vmatprep.subr.mxu0 0.0
      %4418 = vmatpush1.msra.mxu0 0.0
      %4419 = vmatprep.subr.mxu0 0.0
      %4420 = vmatpush1.msra.mxu0 0.0
      %4421 = vmatprep.subr.mxu0 0.0
      %4422 = vmatpush1.msra.mxu0 0.0
      %4423 = vmatprep.subr.mxu0 0.0
      %4424 = vmatpush1.msra.mxu0 0.0
      %4425 = vmatprep.subr.mxu0 0.0
      %4426 = vmatpush1.msra.mxu0 0.0
      %4427 = vmatprep.mubr.f32.mxu0 0.0
      %4428 = vmatmul.mubr.f32.gmra.mrb[0].mxu0 %v4361
      %v4429 = vpop.f32.mrb[0].mxu0
      %v4430 = vadd.f32 0.0, %v4429
      %v4431 = vpop.f32.mrb[0].mxu0
      %4432 = vdwg.mxu0
      %4433 = vrot.lane.b32.xlu0 %v510, 64
      %v4434 = vpop.permute.xlu0 %4433
      %v4437 = vsel %vm3168, %v3482, 0
      %4439 = vmatprep.subr.mxu0 0.0
      %4440 = vmatpush1.msra.mxu0 %v4434
      %4441 = vmatprep.subr.mxu0 0.0
      %4442 = vmatpush1.msra.mxu0 0.0
      %4443 = vmatprep.subr.mxu0 0.0
      %4444 = vmatpush1.msra.mxu0 0.0
      %4445 = vmatprep.subr.mxu0 0.0
      %4446 = vmatpush1.msra.mxu0 0.0
      %4447 = vmatprep.subr.mxu0 0.0
      %4448 = vmatpush1.msra.mxu0 0.0
      %4449 = vmatprep.subr.mxu0 0.0
      %4450 = vmatpush1.msra.mxu0 0.0
      %4451 = vmatprep.subr.mxu0 0.0
      %4452 = vmatpush1.msra.mxu0 0.0
      %4453 = vmatprep.subr.mxu0 0.0
      %4454 = vmatpush1.msra.mxu0 0.0
      %4455 = vmatprep.subr.mxu0 0.0
      %4456 = vmatpush1.msra.mxu0 0.0
      %4457 = vmatprep.subr.mxu0 0.0
      %4458 = vmatpush1.msra.mxu0 0.0
      %4459 = vmatprep.subr.mxu0 0.0
      %4460 = vmatpush1.msra.mxu0 0.0
      %4461 = vmatprep.subr.mxu0 0.0
      %4462 = vmatpush1.msra.mxu0 0.0
      %4463 = vmatprep.subr.mxu0 0.0
      %4464 = vmatpush1.msra.mxu0 0.0
      %4465 = vmatprep.subr.mxu0 0.0
      %4466 = vmatpush1.msra.mxu0 0.0
      %4467 = vmatprep.subr.mxu0 0.0
      %4468 = vmatpush1.msra.mxu0 0.0
      %4469 = vmatprep.subr.mxu0 0.0
      %4470 = vmatpush1.msra.mxu0 0.0
      %4471 = vmatprep.subr.mxu0 0.0
      %4472 = vmatpush1.msra.mxu0 0.0
      %4473 = vmatprep.subr.mxu0 0.0
      %4474 = vmatpush1.msra.mxu0 0.0
      %4475 = vmatprep.subr.mxu0 0.0
      %4476 = vmatpush1.msra.mxu0 0.0
      %4477 = vmatprep.subr.mxu0 0.0
      %4478 = vmatpush1.msra.mxu0 0.0
      %4479 = vmatprep.subr.mxu0 0.0
      %4480 = vmatpush1.msra.mxu0 0.0
      %4481 = vmatprep.subr.mxu0 0.0
      %4482 = vmatpush1.msra.mxu0 0.0
      %4483 = vmatprep.subr.mxu0 0.0
      %4484 = vmatpush1.msra.mxu0 0.0
      %4485 = vmatprep.subr.mxu0 0.0
      %4486 = vmatpush1.msra.mxu0 0.0
      %4487 = vmatprep.subr.mxu0 0.0
      %4488 = vmatpush1.msra.mxu0 0.0
      %4489 = vmatprep.subr.mxu0 0.0
      %4490 = vmatpush1.msra.mxu0 0.0
      %4491 = vmatprep.subr.mxu0 0.0
      %4492 = vmatpush1.msra.mxu0 0.0
      %4493 = vmatprep.subr.mxu0 0.0
      %4494 = vmatpush1.msra.mxu0 0.0
      %4495 = vmatprep.subr.mxu0 0.0
      %4496 = vmatpush1.msra.mxu0 0.0
      %4497 = vmatprep.subr.mxu0 0.0
      %4498 = vmatpush1.msra.mxu0 0.0
      %4499 = vmatprep.subr.mxu0 0.0
      %4500 = vmatpush1.msra.mxu0 0.0
      %4501 = vmatprep.subr.mxu0 0.0
      %4502 = vmatpush1.msra.mxu0 0.0
      %4503 = vmatprep.mubr.f32.mxu0 0.0
      %4504 = vmatmul.mubr.f32.gmra.mrb[0].mxu0 %v4437
      %v4505 = vpop.f32.mrb[0].mxu0
      %v4506 = vadd.f32 0.0, %v4505
      %v4507 = vpop.f32.mrb[0].mxu0
      %4508 = vdwg.mxu0
      %4509 = vrot.lane.b32.xlu0 %v515, 64
      %v4510 = vpop.permute.xlu0 %4509
      %v4513 = vsel %vm3168, %v3484, 0
      %4515 = vmatprep.subr.mxu0 0.0
      %4516 = vmatpush1.msra.mxu0 %v4510
      %4517 = vmatprep.subr.mxu0 0.0
      %4518 = vmatpush1.msra.mxu0 0.0
      %4519 = vmatprep.subr.mxu0 0.0
      %4520 = vmatpush1.msra.mxu0 0.0
      %4521 = vmatprep.subr.mxu0 0.0
      %4522 = vmatpush1.msra.mxu0 0.0
      %4523 = vmatprep.subr.mxu0 0.0
      %4524 = vmatpush1.msra.mxu0 0.0
      %4525 = vmatprep.subr.mxu0 0.0
      %4526 = vmatpush1.msra.mxu0 0.0
      %4527 = vmatprep.subr.mxu0 0.0
      %4528 = vmatpush1.msra.mxu0 0.0
      %4529 = vmatprep.subr.mxu0 0.0
      %4530 = vmatpush1.msra.mxu0 0.0
      %4531 = vmatprep.subr.mxu0 0.0
      %4532 = vmatpush1.msra.mxu0 0.0
      %4533 = vmatprep.subr.mxu0 0.0
      %4534 = vmatpush1.msra.mxu0 0.0
      %4535 = vmatprep.subr.mxu0 0.0
      %4536 = vmatpush1.msra.mxu0 0.0
      %4537 = vmatprep.subr.mxu0 0.0
      %4538 = vmatpush1.msra.mxu0 0.0
      %4539 = vmatprep.subr.mxu0 0.0
      %4540 = vmatpush1.msra.mxu0 0.0
      %4541 = vmatprep.subr.mxu0 0.0
      %4542 = vmatpush1.msra.mxu0 0.0
      %4543 = vmatprep.subr.mxu0 0.0
      %4544 = vmatpush1.msra.mxu0 0.0
      %4545 = vmatprep.subr.mxu0 0.0
      %4546 = vmatpush1.msra.mxu0 0.0
      %4547 = vmatprep.subr.mxu0 0.0
      %4548 = vmatpush1.msra.mxu0 0.0
      %4549 = vmatprep.subr.mxu0 0.0
      %4550 = vmatpush1.msra.mxu0 0.0
      %4551 = vmatprep.subr.mxu0 0.0
      %4552 = vmatpush1.msra.mxu0 0.0
      %4553 = vmatprep.subr.mxu0 0.0
      %4554 = vmatpush1.msra.mxu0 0.0
      %4555 = vmatprep.subr.mxu0 0.0
      %4556 = vmatpush1.msra.mxu0 0.0
      %4557 = vmatprep.subr.mxu0 0.0
      %4558 = vmatpush1.msra.mxu0 0.0
      %4559 = vmatprep.subr.mxu0 0.0
      %4560 = vmatpush1.msra.mxu0 0.0
      %4561 = vmatprep.subr.mxu0 0.0
      %4562 = vmatpush1.msra.mxu0 0.0
      %4563 = vmatprep.subr.mxu0 0.0
      %4564 = vmatpush1.msra.mxu0 0.0
      %4565 = vmatprep.subr.mxu0 0.0
      %4566 = vmatpush1.msra.mxu0 0.0
      %4567 = vmatprep.subr.mxu0 0.0
      %4568 = vmatpush1.msra.mxu0 0.0
      %4569 = vmatprep.subr.mxu0 0.0
      %4570 = vmatpush1.msra.mxu0 0.0
      %4571 = vmatprep.subr.mxu0 0.0
      %4572 = vmatpush1.msra.mxu0 0.0
      %4573 = vmatprep.subr.mxu0 0.0
      %4574 = vmatpush1.msra.mxu0 0.0
      %4575 = vmatprep.subr.mxu0 0.0
      %4576 = vmatpush1.msra.mxu0 0.0
      %4577 = vmatprep.subr.mxu0 0.0
      %4578 = vmatpush1.msra.mxu0 0.0
      %4579 = vmatprep.mubr.f32.mxu0 0.0
      %4580 = vmatmul.mubr.f32.gmra.mrb[0].mxu0 %v4513
      %v4581 = vpop.f32.mrb[0].mxu0
      %v4582 = vadd.f32 0.0, %v4581
      %v4583 = vpop.f32.mrb[0].mxu0
      %4584 = vdwg.mxu0
      %4585 = vrot.lane.b32.xlu0 %v520, 64
      %v4586 = vpop.permute.xlu0 %4585
      %v4589 = vsel %vm3168, %v3486, 0
      %4591 = vmatprep.subr.mxu0 0.0
      %4592 = vmatpush1.msra.mxu0 %v4586
      %4593 = vmatprep.subr.mxu0 0.0
      %4594 = vmatpush1.msra.mxu0 0.0
      %4595 = vmatprep.subr.mxu0 0.0
      %4596 = vmatpush1.msra.mxu0 0.0
      %4597 = vmatprep.subr.mxu0 0.0
      %4598 = vmatpush1.msra.mxu0 0.0
      %4599 = vmatprep.subr.mxu0 0.0
      %4600 = vmatpush1.msra.mxu0 0.0
      %4601 = vmatprep.subr.mxu0 0.0
      %4602 = vmatpush1.msra.mxu0 0.0
      %4603 = vmatprep.subr.mxu0 0.0
      %4604 = vmatpush1.msra.mxu0 0.0
      %4605 = vmatprep.subr.mxu0 0.0
      %4606 = vmatpush1.msra.mxu0 0.0
      %4607 = vmatprep.subr.mxu0 0.0
      %4608 = vmatpush1.msra.mxu0 0.0
      %4609 = vmatprep.subr.mxu0 0.0
      %4610 = vmatpush1.msra.mxu0 0.0
      %4611 = vmatprep.subr.mxu0 0.0
      %4612 = vmatpush1.msra.mxu0 0.0
      %4613 = vmatprep.subr.mxu0 0.0
      %4614 = vmatpush1.msra.mxu0 0.0
      %4615 = vmatprep.subr.mxu0 0.0
      %4616 = vmatpush1.msra.mxu0 0.0
      %4617 = vmatprep.subr.mxu0 0.0
      %4618 = vmatpush1.msra.mxu0 0.0
      %4619 = vmatprep.subr.mxu0 0.0
      %4620 = vmatpush1.msra.mxu0 0.0
      %4621 = vmatprep.subr.mxu0 0.0
      %4622 = vmatpush1.msra.mxu0 0.0
      %4623 = vmatprep.subr.mxu0 0.0
      %4624 = vmatpush1.msra.mxu0 0.0
      %4625 = vmatprep.subr.mxu0 0.0
      %4626 = vmatpush1.msra.mxu0 0.0
      %4627 = vmatprep.subr.mxu0 0.0
      %4628 = vmatpush1.msra.mxu0 0.0
      %4629 = vmatprep.subr.mxu0 0.0
      %4630 = vmatpush1.msra.mxu0 0.0
      %4631 = vmatprep.subr.mxu0 0.0
      %4632 = vmatpush1.msra.mxu0 0.0
      %4633 = vmatprep.subr.mxu0 0.0
      %4634 = vmatpush1.msra.mxu0 0.0
      %4635 = vmatprep.subr.mxu0 0.0
      %4636 = vmatpush1.msra.mxu0 0.0
      %4637 = vmatprep.subr.mxu0 0.0
      %4638 = vmatpush1.msra.mxu0 0.0
      %4639 = vmatprep.subr.mxu0 0.0
      %4640 = vmatpush1.msra.mxu0 0.0
      %4641 = vmatprep.subr.mxu0 0.0
      %4642 = vmatpush1.msra.mxu0 0.0
      %4643 = vmatprep.subr.mxu0 0.0
      %4644 = vmatpush1.msra.mxu0 0.0
      %4645 = vmatprep.subr.mxu0 0.0
      %4646 = vmatpush1.msra.mxu0 0.0
      %4647 = vmatprep.subr.mxu0 0.0
      %4648 = vmatpush1.msra.mxu0 0.0
      %4649 = vmatprep.subr.mxu0 0.0
      %4650 = vmatpush1.msra.mxu0 0.0
      %4651 = vmatprep.subr.mxu0 0.0
      %4652 = vmatpush1.msra.mxu0 0.0
      %4653 = vmatprep.subr.mxu0 0.0
      %4654 = vmatpush1.msra.mxu0 0.0
      %4655 = vmatprep.mubr.f32.mxu0 0.0
      %4656 = vmatmul.mubr.f32.gmra.mrb[0].mxu0 %v4589
      %v4657 = vpop.f32.mrb[0].mxu0
      %v4658 = vadd.f32 0.0, %v4657
      %v4659 = vpop.f32.mrb[0].mxu0
      %4660 = vdwg.mxu0
      %4661 = vrot.lane.b32.xlu0 %v525, 64
      %v4662 = vpop.permute.xlu0 %4661
      %v4665 = vsel %vm3168, %v3488, 0
      %4667 = vmatprep.subr.mxu0 0.0
      %4668 = vmatpush1.msra.mxu0 %v4662
      %4669 = vmatprep.subr.mxu0 0.0
      %4670 = vmatpush1.msra.mxu0 0.0
      %4671 = vmatprep.subr.mxu0 0.0
      %4672 = vmatpush1.msra.mxu0 0.0
      %4673 = vmatprep.subr.mxu0 0.0
      %4674 = vmatpush1.msra.mxu0 0.0
      %4675 = vmatprep.subr.mxu0 0.0
      %4676 = vmatpush1.msra.mxu0 0.0
      %4677 = vmatprep.subr.mxu0 0.0
      %4678 = vmatpush1.msra.mxu0 0.0
      %4679 = vmatprep.subr.mxu0 0.0
      %4680 = vmatpush1.msra.mxu0 0.0
      %4681 = vmatprep.subr.mxu0 0.0
      %4682 = vmatpush1.msra.mxu0 0.0
      %4683 = vmatprep.subr.mxu0 0.0
      %4684 = vmatpush1.msra.mxu0 0.0
      %4685 = vmatprep.subr.mxu0 0.0
      %4686 = vmatpush1.msra.mxu0 0.0
      %4687 = vmatprep.subr.mxu0 0.0
      %4688 = vmatpush1.msra.mxu0 0.0
      %4689 = vmatprep.subr.mxu0 0.0
      %4690 = vmatpush1.msra.mxu0 0.0
      %4691 = vmatprep.subr.mxu0 0.0
      %4692 = vmatpush1.msra.mxu0 0.0
      %4693 = vmatprep.subr.mxu0 0.0
      %4694 = vmatpush1.msra.mxu0 0.0
      %4695 = vmatprep.subr.mxu0 0.0
      %4696 = vmatpush1.msra.mxu0 0.0
      %4697 = vmatprep.subr.mxu0 0.0
      %4698 = vmatpush1.msra.mxu0 0.0
      %4699 = vmatprep.subr.mxu0 0.0
      %4700 = vmatpush1.msra.mxu0 0.0
      %4701 = vmatprep.subr.mxu0 0.0
      %4702 = vmatpush1.msra.mxu0 0.0
      %4703 = vmatprep.subr.mxu0 0.0
      %4704 = vmatpush1.msra.mxu0 0.0
      %4705 = vmatprep.subr.mxu0 0.0
      %4706 = vmatpush1.msra.mxu0 0.0
      %4707 = vmatprep.subr.mxu0 0.0
      %4708 = vmatpush1.msra.mxu0 0.0
      %4709 = vmatprep.subr.mxu0 0.0
      %4710 = vmatpush1.msra.mxu0 0.0
      %4711 = vmatprep.subr.mxu0 0.0
      %4712 = vmatpush1.msra.mxu0 0.0
      %4713 = vmatprep.subr.mxu0 0.0
      %4714 = vmatpush1.msra.mxu0 0.0
      %4715 = vmatprep.subr.mxu0 0.0
      %4716 = vmatpush1.msra.mxu0 0.0
      %4717 = vmatprep.subr.mxu0 0.0
      %4718 = vmatpush1.msra.mxu0 0.0
      %4719 = vmatprep.subr.mxu0 0.0
      %4720 = vmatpush1.msra.mxu0 0.0
      %4721 = vmatprep.subr.mxu0 0.0
      %4722 = vmatpush1.msra.mxu0 0.0
      %4723 = vmatprep.subr.mxu0 0.0
      %4724 = vmatpush1.msra.mxu0 0.0
      %4725 = vmatprep.subr.mxu0 0.0
      %4726 = vmatpush1.msra.mxu0 0.0
      %4727 = vmatprep.subr.mxu0 0.0
      %4728 = vmatpush1.msra.mxu0 0.0
      %4729 = vmatprep.subr.mxu0 0.0
      %4730 = vmatpush1.msra.mxu0 0.0
      %4731 = vmatprep.mubr.f32.mxu0 0.0
      %4732 = vmatmul.mubr.f32.gmra.mrb[0].mxu0 %v4665
      %v4733 = vpop.f32.mrb[0].mxu0
      %v4734 = vadd.f32 0.0, %v4733
      %v4735 = vpop.f32.mrb[0].mxu0
      %4736 = vdwg.mxu0
      %4737 = vrot.lane.b32.xlu0 %v530, 64
      %v4738 = vpop.permute.xlu0 %4737
      %v4741 = vsel %vm3168, %v3490, 0
      %4743 = vmatprep.subr.mxu0 0.0
      %4744 = vmatpush1.msra.mxu0 %v4738
      %4745 = vmatprep.subr.mxu0 0.0
      %4746 = vmatpush1.msra.mxu0 0.0
      %4747 = vmatprep.subr.mxu0 0.0
      %4748 = vmatpush1.msra.mxu0 0.0
      %4749 = vmatprep.subr.mxu0 0.0
      %4750 = vmatpush1.msra.mxu0 0.0
      %4751 = vmatprep.subr.mxu0 0.0
      %4752 = vmatpush1.msra.mxu0 0.0
      %4753 = vmatprep.subr.mxu0 0.0
      %4754 = vmatpush1.msra.mxu0 0.0
      %4755 = vmatprep.subr.mxu0 0.0
      %4756 = vmatpush1.msra.mxu0 0.0
      %4757 = vmatprep.subr.mxu0 0.0
      %4758 = vmatpush1.msra.mxu0 0.0
      %4759 = vmatprep.subr.mxu0 0.0
      %4760 = vmatpush1.msra.mxu0 0.0
      %4761 = vmatprep.subr.mxu0 0.0
      %4762 = vmatpush1.msra.mxu0 0.0
      %4763 = vmatprep.subr.mxu0 0.0
      %4764 = vmatpush1.msra.mxu0 0.0
      %4765 = vmatprep.subr.mxu0 0.0
      %4766 = vmatpush1.msra.mxu0 0.0
      %4767 = vmatprep.subr.mxu0 0.0
      %4768 = vmatpush1.msra.mxu0 0.0
      %4769 = vmatprep.subr.mxu0 0.0
      %4770 = vmatpush1.msra.mxu0 0.0
      %4771 = vmatprep.subr.mxu0 0.0
      %4772 = vmatpush1.msra.mxu0 0.0
      %4773 = vmatprep.subr.mxu0 0.0
      %4774 = vmatpush1.msra.mxu0 0.0
      %4775 = vmatprep.subr.mxu0 0.0
      %4776 = vmatpush1.msra.mxu0 0.0
      %4777 = vmatprep.subr.mxu0 0.0
      %4778 = vmatpush1.msra.mxu0 0.0
      %4779 = vmatprep.subr.mxu0 0.0
      %4780 = vmatpush1.msra.mxu0 0.0
      %4781 = vmatprep.subr.mxu0 0.0
      %4782 = vmatpush1.msra.mxu0 0.0
      %4783 = vmatprep.subr.mxu0 0.0
      %4784 = vmatpush1.msra.mxu0 0.0
      %4785 = vmatprep.subr.mxu0 0.0
      %4786 = vmatpush1.msra.mxu0 0.0
      %4787 = vmatprep.subr.mxu0 0.0
      %4788 = vmatpush1.msra.mxu0 0.0
      %4789 = vmatprep.subr.mxu0 0.0
      %4790 = vmatpush1.msra.mxu0 0.0
      %4791 = vmatprep.subr.mxu0 0.0
      %4792 = vmatpush1.msra.mxu0 0.0
      %4793 = vmatprep.subr.mxu0 0.0
      %4794 = vmatpush1.msra.mxu0 0.0
      %4795 = vmatprep.subr.mxu0 0.0
      %4796 = vmatpush1.msra.mxu0 0.0
      %4797 = vmatprep.subr.mxu0 0.0
      %4798 = vmatpush1.msra.mxu0 0.0
      %4799 = vmatprep.subr.mxu0 0.0
      %4800 = vmatpush1.msra.mxu0 0.0
      %4801 = vmatprep.subr.mxu0 0.0
      %4802 = vmatpush1.msra.mxu0 0.0
      %4803 = vmatprep.subr.mxu0 0.0
      %4804 = vmatpush1.msra.mxu0 0.0
      %4805 = vmatprep.subr.mxu0 0.0
      %4806 = vmatpush1.msra.mxu0 0.0
      %4807 = vmatprep.mubr.f32.mxu0 0.0
      %4808 = vmatmul.mubr.f32.gmra.mrb[0].mxu0 %v4741
      %v4809 = vpop.f32.mrb[0].mxu0
      %v4810 = vadd.f32 0.0, %v4809
      %v4811 = vpop.f32.mrb[0].mxu0
      %4812 = vdwg.mxu0
      %4813 = vrot.lane.b32.xlu0 %v535, 64
      %v4814 = vpop.permute.xlu0 %4813
      %v4817 = vsel %vm3168, %v3492, 0
      %4819 = vmatprep.subr.mxu0 0.0
      %4820 = vmatpush1.msra.mxu0 %v4814
      %4821 = vmatprep.subr.mxu0 0.0
      %4822 = vmatpush1.msra.mxu0 0.0
      %4823 = vmatprep.subr.mxu0 0.0
      %4824 = vmatpush1.msra.mxu0 0.0
      %4825 = vmatprep.subr.mxu0 0.0
      %4826 = vmatpush1.msra.mxu0 0.0
      %4827 = vmatprep.subr.mxu0 0.0
      %4828 = vmatpush1.msra.mxu0 0.0
      %4829 = vmatprep.subr.mxu0 0.0
      %4830 = vmatpush1.msra.mxu0 0.0
      %4831 = vmatprep.subr.mxu0 0.0
      %4832 = vmatpush1.msra.mxu0 0.0
      %4833 = vmatprep.subr.mxu0 0.0
      %4834 = vmatpush1.msra.mxu0 0.0
      %4835 = vmatprep.subr.mxu0 0.0
      %4836 = vmatpush1.msra.mxu0 0.0
      %4837 = vmatprep.subr.mxu0 0.0
      %4838 = vmatpush1.msra.mxu0 0.0
      %4839 = vmatprep.subr.mxu0 0.0
      %4840 = vmatpush1.msra.mxu0 0.0
      %4841 = vmatprep.subr.mxu0 0.0
      %4842 = vmatpush1.msra.mxu0 0.0
      %4843 = vmatprep.subr.mxu0 0.0
      %4844 = vmatpush1.msra.mxu0 0.0
      %4845 = vmatprep.subr.mxu0 0.0
      %4846 = vmatpush1.msra.mxu0 0.0
      %4847 = vmatprep.subr.mxu0 0.0
      %4848 = vmatpush1.msra.mxu0 0.0
      %4849 = vmatprep.subr.mxu0 0.0
      %4850 = vmatpush1.msra.mxu0 0.0
      %4851 = vmatprep.subr.mxu0 0.0
      %4852 = vmatpush1.msra.mxu0 0.0
      %4853 = vmatprep.subr.mxu0 0.0
      %4854 = vmatpush1.msra.mxu0 0.0
      %4855 = vmatprep.subr.mxu0 0.0
      %4856 = vmatpush1.msra.mxu0 0.0
      %4857 = vmatprep.subr.mxu0 0.0
      %4858 = vmatpush1.msra.mxu0 0.0
      %4859 = vmatprep.subr.mxu0 0.0
      %4860 = vmatpush1.msra.mxu0 0.0
      %4861 = vmatprep.subr.mxu0 0.0
      %4862 = vmatpush1.msra.mxu0 0.0
      %4863 = vmatprep.subr.mxu0 0.0
      %4864 = vmatpush1.msra.mxu0 0.0
      %4865 = vmatprep.subr.mxu0 0.0
      %4866 = vmatpush1.msra.mxu0 0.0
      %4867 = vmatprep.subr.mxu0 0.0
      %4868 = vmatpush1.msra.mxu0 0.0
      %4869 = vmatprep.subr.mxu0 0.0
      %4870 = vmatpush1.msra.mxu0 0.0
      %4871 = vmatprep.subr.mxu0 0.0
      %4872 = vmatpush1.msra.mxu0 0.0
      %4873 = vmatprep.subr.mxu0 0.0
      %4874 = vmatpush1.msra.mxu0 0.0
      %4875 = vmatprep.subr.mxu0 0.0
      %4876 = vmatpush1.msra.mxu0 0.0
      %4877 = vmatprep.subr.mxu0 0.0
      %4878 = vmatpush1.msra.mxu0 0.0
      %4879 = vmatprep.subr.mxu0 0.0
      %4880 = vmatpush1.msra.mxu0 0.0
      %4881 = vmatprep.subr.mxu0 0.0
      %4882 = vmatpush1.msra.mxu0 0.0
      %4883 = vmatprep.mubr.f32.mxu0 0.0
      %4884 = vmatmul.mubr.f32.gmra.mrb[0].mxu0 %v4817
      %v4885 = vpop.f32.mrb[0].mxu0
      %v4886 = vadd.f32 0.0, %v4885
      %v4887 = vpop.f32.mrb[0].mxu0
      %4888 = vdwg.mxu0
      %4889 = vrot.lane.b32.xlu0 %v540, 64
      %v4890 = vpop.permute.xlu0 %4889
      %v4893 = vsel %vm3168, %v3494, 0
      %4895 = vmatprep.subr.mxu0 0.0
      %4896 = vmatpush1.msra.mxu0 %v4890
      %4897 = vmatprep.subr.mxu0 0.0
      %4898 = vmatpush1.msra.mxu0 0.0
      %4899 = vmatprep.subr.mxu0 0.0
      %4900 = vmatpush1.msra.mxu0 0.0
      %4901 = vmatprep.subr.mxu0 0.0
      %4902 = vmatpush1.msra.mxu0 0.0
      %4903 = vmatprep.subr.mxu0 0.0
      %4904 = vmatpush1.msra.mxu0 0.0
      %4905 = vmatprep.subr.mxu0 0.0
      %4906 = vmatpush1.msra.mxu0 0.0
      %4907 = vmatprep.subr.mxu0 0.0
      %4908 = vmatpush1.msra.mxu0 0.0
      %4909 = vmatprep.subr.mxu0 0.0
      %4910 = vmatpush1.msra.mxu0 0.0
      %4911 = vmatprep.subr.mxu0 0.0
      %4912 = vmatpush1.msra.mxu0 0.0
      %4913 = vmatprep.subr.mxu0 0.0
      %4914 = vmatpush1.msra.mxu0 0.0
      %4915 = vmatprep.subr.mxu0 0.0
      %4916 = vmatpush1.msra.mxu0 0.0
      %4917 = vmatprep.subr.mxu0 0.0
      %4918 = vmatpush1.msra.mxu0 0.0
      %4919 = vmatprep.subr.mxu0 0.0
      %4920 = vmatpush1.msra.mxu0 0.0
      %4921 = vmatprep.subr.mxu0 0.0
      %4922 = vmatpush1.msra.mxu0 0.0
      %4923 = vmatprep.subr.mxu0 0.0
      %4924 = vmatpush1.msra.mxu0 0.0
      %4925 = vmatprep.subr.mxu0 0.0
      %4926 = vmatpush1.msra.mxu0 0.0
      %4927 = vmatprep.subr.mxu0 0.0
      %4928 = vmatpush1.msra.mxu0 0.0
      %4929 = vmatprep.subr.mxu0 0.0
      %4930 = vmatpush1.msra.mxu0 0.0
      %4931 = vmatprep.subr.mxu0 0.0
      %4932 = vmatpush1.msra.mxu0 0.0
      %4933 = vmatprep.subr.mxu0 0.0
      %4934 = vmatpush1.msra.mxu0 0.0
      %4935 = vmatprep.subr.mxu0 0.0
      %4936 = vmatpush1.msra.mxu0 0.0
      %4937 = vmatprep.subr.mxu0 0.0
      %4938 = vmatpush1.msra.mxu0 0.0
      %4939 = vmatprep.subr.mxu0 0.0
      %4940 = vmatpush1.msra.mxu0 0.0
      %4941 = vmatprep.subr.mxu0 0.0
      %4942 = vmatpush1.msra.mxu0 0.0
      %4943 = vmatprep.subr.mxu0 0.0
      %4944 = vmatpush1.msra.mxu0 0.0
      %4945 = vmatprep.subr.mxu0 0.0
      %4946 = vmatpush1.msra.mxu0 0.0
      %4947 = vmatprep.subr.mxu0 0.0
      %4948 = vmatpush1.msra.mxu0 0.0
      %4949 = vmatprep.subr.mxu0 0.0
      %4950 = vmatpush1.msra.mxu0 0.0
      %4951 = vmatprep.subr.mxu0 0.0
      %4952 = vmatpush1.msra.mxu0 0.0
      %4953 = vmatprep.subr.mxu0 0.0
      %4954 = vmatpush1.msra.mxu0 0.0
      %4955 = vmatprep.subr.mxu0 0.0
      %4956 = vmatpush1.msra.mxu0 0.0
      %4957 = vmatprep.subr.mxu0 0.0
      %4958 = vmatpush1.msra.mxu0 0.0
      %4959 = vmatprep.mubr.f32.mxu0 0.0
      %4960 = vmatmul.mubr.f32.gmra.mrb[0].mxu0 %v4893
      %v4961 = vpop.f32.mrb[0].mxu0
      %v4962 = vadd.f32 0.0, %v4961
      %v4963 = vpop.f32.mrb[0].mxu0
      %4964 = vdwg.mxu0
      %4965 = vrot.lane.b32.xlu0 %v545, 64
      %v4966 = vpop.permute.xlu0 %4965
      %v4969 = vsel %vm3168, %v3496, 0
      %4971 = vmatprep.subr.mxu0 0.0
      %4972 = vmatpush1.msra.mxu0 %v4966
      %4973 = vmatprep.subr.mxu0 0.0
      %4974 = vmatpush1.msra.mxu0 0.0
      %4975 = vmatprep.subr.mxu0 0.0
      %4976 = vmatpush1.msra.mxu0 0.0
      %4977 = vmatprep.subr.mxu0 0.0
      %4978 = vmatpush1.msra.mxu0 0.0
      %4979 = vmatprep.subr.mxu0 0.0
      %4980 = vmatpush1.msra.mxu0 0.0
      %4981 = vmatprep.subr.mxu0 0.0
      %4982 = vmatpush1.msra.mxu0 0.0
      %4983 = vmatprep.subr.mxu0 0.0
      %4984 = vmatpush1.msra.mxu0 0.0
      %4985 = vmatprep.subr.mxu0 0.0
      %4986 = vmatpush1.msra.mxu0 0.0
      %4987 = vmatprep.subr.mxu0 0.0
      %4988 = vmatpush1.msra.mxu0 0.0
      %4989 = vmatprep.subr.mxu0 0.0
      %4990 = vmatpush1.msra.mxu0 0.0
      %4991 = vmatprep.subr.mxu0 0.0
      %4992 = vmatpush1.msra.mxu0 0.0
      %4993 = vmatprep.subr.mxu0 0.0
      %4994 = vmatpush1.msra.mxu0 0.0
      %4995 = vmatprep.subr.mxu0 0.0
      %4996 = vmatpush1.msra.mxu0 0.0
      %4997 = vmatprep.subr.mxu0 0.0
      %4998 = vmatpush1.msra.mxu0 0.0
      %4999 = vmatprep.subr.mxu0 0.0
      %5000 = vmatpush1.msra.mxu0 0.0
      %5001 = vmatprep.subr.mxu0 0.0
      %5002 = vmatpush1.msra.mxu0 0.0
      %5003 = vmatprep.subr.mxu0 0.0
      %5004 = vmatpush1.msra.mxu0 0.0
      %5005 = vmatprep.subr.mxu0 0.0
      %5006 = vmatpush1.msra.mxu0 0.0
      %5007 = vmatprep.subr.mxu0 0.0
      %5008 = vmatpush1.msra.mxu0 0.0
      %5009 = vmatprep.subr.mxu0 0.0
      %5010 = vmatpush1.msra.mxu0 0.0
      %5011 = vmatprep.subr.mxu0 0.0
      %5012 = vmatpush1.msra.mxu0 0.0
      %5013 = vmatprep.subr.mxu0 0.0
      %5014 = vmatpush1.msra.mxu0 0.0
      %5015 = vmatprep.subr.mxu0 0.0
      %5016 = vmatpush1.msra.mxu0 0.0
      %5017 = vmatprep.subr.mxu0 0.0
      %5018 = vmatpush1.msra.mxu0 0.0
      %5019 = vmatprep.subr.mxu0 0.0
      %5020 = vmatpush1.msra.mxu0 0.0
      %5021 = vmatprep.subr.mxu0 0.0
      %5022 = vmatpush1.msra.mxu0 0.0
      %5023 = vmatprep.subr.mxu0 0.0
      %5024 = vmatpush1.msra.mxu0 0.0
      %5025 = vmatprep.subr.mxu0 0.0
      %5026 = vmatpush1.msra.mxu0 0.0
      %5027 = vmatprep.subr.mxu0 0.0
      %5028 = vmatpush1.msra.mxu0 0.0
      %5029 = vmatprep.subr.mxu0 0.0
      %5030 = vmatpush1.msra.mxu0 0.0
      %5031 = vmatprep.subr.mxu0 0.0
      %5032 = vmatpush1.msra.mxu0 0.0
      %5033 = vmatprep.subr.mxu0 0.0
      %5034 = vmatpush1.msra.mxu0 0.0
      %5035 = vmatprep.mubr.f32.mxu0 0.0
      %5036 = vmatmul.mubr.f32.gmra.mrb[0].mxu0 %v4969
      %v5037 = vpop.f32.mrb[0].mxu0
      %v5038 = vadd.f32 0.0, %v5037
      %v5039 = vpop.f32.mrb[0].mxu0
      %5040 = vdwg.mxu0
      %5041 = vrot.lane.b32.xlu0 %v550, 64
      %v5042 = vpop.permute.xlu0 %5041
      %v5045 = vsel %vm3168, %v3498, 0
      %5047 = vmatprep.subr.mxu0 0.0
      %5048 = vmatpush1.msra.mxu0 %v5042
      %5049 = vmatprep.subr.mxu0 0.0
      %5050 = vmatpush1.msra.mxu0 0.0
      %5051 = vmatprep.subr.mxu0 0.0
      %5052 = vmatpush1.msra.mxu0 0.0
      %5053 = vmatprep.subr.mxu0 0.0
      %5054 = vmatpush1.msra.mxu0 0.0
      %5055 = vmatprep.subr.mxu0 0.0
      %5056 = vmatpush1.msra.mxu0 0.0
      %5057 = vmatprep.subr.mxu0 0.0
      %5058 = vmatpush1.msra.mxu0 0.0
      %5059 = vmatprep.subr.mxu0 0.0
      %5060 = vmatpush1.msra.mxu0 0.0
      %5061 = vmatprep.subr.mxu0 0.0
      %5062 = vmatpush1.msra.mxu0 0.0
      %5063 = vmatprep.subr.mxu0 0.0
      %5064 = vmatpush1.msra.mxu0 0.0
      %5065 = vmatprep.subr.mxu0 0.0
      %5066 = vmatpush1.msra.mxu0 0.0
      %5067 = vmatprep.subr.mxu0 0.0
      %5068 = vmatpush1.msra.mxu0 0.0
      %5069 = vmatprep.subr.mxu0 0.0
      %5070 = vmatpush1.msra.mxu0 0.0
      %5071 = vmatprep.subr.mxu0 0.0
      %5072 = vmatpush1.msra.mxu0 0.0
      %5073 = vmatprep.subr.mxu0 0.0
      %5074 = vmatpush1.msra.mxu0 0.0
      %5075 = vmatprep.subr.mxu0 0.0
      %5076 = vmatpush1.msra.mxu0 0.0
      %5077 = vmatprep.subr.mxu0 0.0
      %5078 = vmatpush1.msra.mxu0 0.0
      %5079 = vmatprep.subr.mxu0 0.0
      %5080 = vmatpush1.msra.mxu0 0.0
      %5081 = vmatprep.subr.mxu0 0.0
      %5082 = vmatpush1.msra.mxu0 0.0
      %5083 = vmatprep.subr.mxu0 0.0
      %5084 = vmatpush1.msra.mxu0 0.0
      %5085 = vmatprep.subr.mxu0 0.0
      %5086 = vmatpush1.msra.mxu0 0.0
      %5087 = vmatprep.subr.mxu0 0.0
      %5088 = vmatpush1.msra.mxu0 0.0
      %5089 = vmatprep.subr.mxu0 0.0
      %5090 = vmatpush1.msra.mxu0 0.0
      %5091 = vmatprep.subr.mxu0 0.0
      %5092 = vmatpush1.msra.mxu0 0.0
      %5093 = vmatprep.subr.mxu0 0.0
      %5094 = vmatpush1.msra.mxu0 0.0
      %5095 = vmatprep.subr.mxu0 0.0
      %5096 = vmatpush1.msra.mxu0 0.0
      %5097 = vmatprep.subr.mxu0 0.0
      %5098 = vmatpush1.msra.mxu0 0.0
      %5099 = vmatprep.subr.mxu0 0.0
      %5100 = vmatpush1.msra.mxu0 0.0
      %5101 = vmatprep.subr.mxu0 0.0
      %5102 = vmatpush1.msra.mxu0 0.0
      %5103 = vmatprep.subr.mxu0 0.0
      %5104 = vmatpush1.msra.mxu0 0.0
      %5105 = vmatprep.subr.mxu0 0.0
      %5106 = vmatpush1.msra.mxu0 0.0
      %5107 = vmatprep.subr.mxu0 0.0
      %5108 = vmatpush1.msra.mxu0 0.0
      %5109 = vmatprep.subr.mxu0 0.0
      %5110 = vmatpush1.msra.mxu0 0.0
      %5111 = vmatprep.mubr.f32.mxu0 0.0
      %5112 = vmatmul.mubr.f32.gmra.mrb[0].mxu0 %v5045
      %v5113 = vpop.f32.mrb[0].mxu0
      %v5114 = vadd.f32 0.0, %v5113
      %v5115 = vpop.f32.mrb[0].mxu0
      %5116 = vdwg.mxu0
      %5117 = vrot.lane.b32.xlu0 %v555, 64
      %v5118 = vpop.permute.xlu0 %5117
      %v5121 = vsel %vm3168, %v3500, 0
      %5123 = vmatprep.subr.mxu0 0.0
      %5124 = vmatpush1.msra.mxu0 %v5118
      %5125 = vmatprep.subr.mxu0 0.0
      %5126 = vmatpush1.msra.mxu0 0.0
      %5127 = vmatprep.subr.mxu0 0.0
      %5128 = vmatpush1.msra.mxu0 0.0
      %5129 = vmatprep.subr.mxu0 0.0
      %5130 = vmatpush1.msra.mxu0 0.0
      %5131 = vmatprep.subr.mxu0 0.0
      %5132 = vmatpush1.msra.mxu0 0.0
      %5133 = vmatprep.subr.mxu0 0.0
      %5134 = vmatpush1.msra.mxu0 0.0
      %5135 = vmatprep.subr.mxu0 0.0
      %5136 = vmatpush1.msra.mxu0 0.0
      %5137 = vmatprep.subr.mxu0 0.0
      %5138 = vmatpush1.msra.mxu0 0.0
      %5139 = vmatprep.subr.mxu0 0.0
      %5140 = vmatpush1.msra.mxu0 0.0
      %5141 = vmatprep.subr.mxu0 0.0
      %5142 = vmatpush1.msra.mxu0 0.0
      %5143 = vmatprep.subr.mxu0 0.0
      %5144 = vmatpush1.msra.mxu0 0.0
      %5145 = vmatprep.subr.mxu0 0.0
      %5146 = vmatpush1.msra.mxu0 0.0
      %5147 = vmatprep.subr.mxu0 0.0
      %5148 = vmatpush1.msra.mxu0 0.0
      %5149 = vmatprep.subr.mxu0 0.0
      %5150 = vmatpush1.msra.mxu0 0.0
      %5151 = vmatprep.subr.mxu0 0.0
      %5152 = vmatpush1.msra.mxu0 0.0
      %5153 = vmatprep.subr.mxu0 0.0
      %5154 = vmatpush1.msra.mxu0 0.0
      %5155 = vmatprep.subr.mxu0 0.0
      %5156 = vmatpush1.msra.mxu0 0.0
      %5157 = vmatprep.subr.mxu0 0.0
      %5158 = vmatpush1.msra.mxu0 0.0
      %5159 = vmatprep.subr.mxu0 0.0
      %5160 = vmatpush1.msra.mxu0 0.0
      %5161 = vmatprep.subr.mxu0 0.0
      %5162 = vmatpush1.msra.mxu0 0.0
      %5163 = vmatprep.subr.mxu0 0.0
      %5164 = vmatpush1.msra.mxu0 0.0
      %5165 = vmatprep.subr.mxu0 0.0
      %5166 = vmatpush1.msra.mxu0 0.0
      %5167 = vmatprep.subr.mxu0 0.0
      %5168 = vmatpush1.msra.mxu0 0.0
      %5169 = vmatprep.subr.mxu0 0.0
      %5170 = vmatpush1.msra.mxu0 0.0
      %5171 = vmatprep.subr.mxu0 0.0
      %5172 = vmatpush1.msra.mxu0 0.0
      %5173 = vmatprep.subr.mxu0 0.0
      %5174 = vmatpush1.msra.mxu0 0.0
      %5175 = vmatprep.subr.mxu0 0.0
      %5176 = vmatpush1.msra.mxu0 0.0
      %5177 = vmatprep.subr.mxu0 0.0
      %5178 = vmatpush1.msra.mxu0 0.0
      %5179 = vmatprep.subr.mxu0 0.0
      %5180 = vmatpush1.msra.mxu0 0.0
      %5181 = vmatprep.subr.mxu0 0.0
      %5182 = vmatpush1.msra.mxu0 0.0
      %5183 = vmatprep.subr.mxu0 0.0
      %5184 = vmatpush1.msra.mxu0 0.0
      %5185 = vmatprep.subr.mxu0 0.0
      %5186 = vmatpush1.msra.mxu0 0.0
      %5187 = vmatprep.mubr.f32.mxu0 0.0
      %5188 = vmatmul.mubr.f32.gmra.mrb[0].mxu0 %v5121
      %v5189 = vpop.f32.mrb[0].mxu0
      %v5190 = vadd.f32 0.0, %v5189
      %v5191 = vpop.f32.mrb[0].mxu0
      %5192 = vdwg.mxu0
      %5193 = vrot.lane.b32.xlu0 %v560, 64
      %v5194 = vpop.permute.xlu0 %5193
      %v5197 = vsel %vm3168, %v3502, 0
      %5199 = vmatprep.subr.mxu0 0.0
      %5200 = vmatpush1.msra.mxu0 %v5194
      %5201 = vmatprep.subr.mxu0 0.0
      %5202 = vmatpush1.msra.mxu0 0.0
      %5203 = vmatprep.subr.mxu0 0.0
      %5204 = vmatpush1.msra.mxu0 0.0
      %5205 = vmatprep.subr.mxu0 0.0
      %5206 = vmatpush1.msra.mxu0 0.0
      %5207 = vmatprep.subr.mxu0 0.0
      %5208 = vmatpush1.msra.mxu0 0.0
      %5209 = vmatprep.subr.mxu0 0.0
      %5210 = vmatpush1.msra.mxu0 0.0
      %5211 = vmatprep.subr.mxu0 0.0
      %5212 = vmatpush1.msra.mxu0 0.0
      %5213 = vmatprep.subr.mxu0 0.0
      %5214 = vmatpush1.msra.mxu0 0.0
      %5215 = vmatprep.subr.mxu0 0.0
      %5216 = vmatpush1.msra.mxu0 0.0
      %5217 = vmatprep.subr.mxu0 0.0
      %5218 = vmatpush1.msra.mxu0 0.0
      %5219 = vmatprep.subr.mxu0 0.0
      %5220 = vmatpush1.msra.mxu0 0.0
      %5221 = vmatprep.subr.mxu0 0.0
      %5222 = vmatpush1.msra.mxu0 0.0
      %5223 = vmatprep.subr.mxu0 0.0
      %5224 = vmatpush1.msra.mxu0 0.0
      %5225 = vmatprep.subr.mxu0 0.0
      %5226 = vmatpush1.msra.mxu0 0.0
      %5227 = vmatprep.subr.mxu0 0.0
      %5228 = vmatpush1.msra.mxu0 0.0
      %5229 = vmatprep.subr.mxu0 0.0
      %5230 = vmatpush1.msra.mxu0 0.0
      %5231 = vmatprep.subr.mxu0 0.0
      %5232 = vmatpush1.msra.mxu0 0.0
      %5233 = vmatprep.subr.mxu0 0.0
      %5234 = vmatpush1.msra.mxu0 0.0
      %5235 = vmatprep.subr.mxu0 0.0
      %5236 = vmatpush1.msra.mxu0 0.0
      %5237 = vmatprep.subr.mxu0 0.0
      %5238 = vmatpush1.msra.mxu0 0.0
      %5239 = vmatprep.subr.mxu0 0.0
      %5240 = vmatpush1.msra.mxu0 0.0
      %5241 = vmatprep.subr.mxu0 0.0
      %5242 = vmatpush1.msra.mxu0 0.0
      %5243 = vmatprep.subr.mxu0 0.0
      %5244 = vmatpush1.msra.mxu0 0.0
      %5245 = vmatprep.subr.mxu0 0.0
      %5246 = vmatpush1.msra.mxu0 0.0
      %5247 = vmatprep.subr.mxu0 0.0
      %5248 = vmatpush1.msra.mxu0 0.0
      %5249 = vmatprep.subr.mxu0 0.0
      %5250 = vmatpush1.msra.mxu0 0.0
      %5251 = vmatprep.subr.mxu0 0.0
      %5252 = vmatpush1.msra.mxu0 0.0
      %5253 = vmatprep.subr.mxu0 0.0
      %5254 = vmatpush1.msra.mxu0 0.0
      %5255 = vmatprep.subr.mxu0 0.0
      %5256 = vmatpush1.msra.mxu0 0.0
      %5257 = vmatprep.subr.mxu0 0.0
      %5258 = vmatpush1.msra.mxu0 0.0
      %5259 = vmatprep.subr.mxu0 0.0
      %5260 = vmatpush1.msra.mxu0 0.0
      %5261 = vmatprep.subr.mxu0 0.0
      %5262 = vmatpush1.msra.mxu0 0.0
      %5263 = vmatprep.mubr.f32.mxu0 0.0
      %5264 = vmatmul.mubr.f32.gmra.mrb[0].mxu0 %v5197
      %v5265 = vpop.f32.mrb[0].mxu0
      %v5266 = vadd.f32 0.0, %v5265
      %v5267 = vpop.f32.mrb[0].mxu0
      %5268 = vdwg.mxu0
      %5269 = vrot.lane.b32.xlu0 %v565, 64
      %v5270 = vpop.permute.xlu0 %5269
      %v5273 = vsel %vm3168, %v3504, 0
      %5275 = vmatprep.subr.mxu0 0.0
      %5276 = vmatpush1.msra.mxu0 %v5270
      %5277 = vmatprep.subr.mxu0 0.0
      %5278 = vmatpush1.msra.mxu0 0.0
      %5279 = vmatprep.subr.mxu0 0.0
      %5280 = vmatpush1.msra.mxu0 0.0
      %5281 = vmatprep.subr.mxu0 0.0
      %5282 = vmatpush1.msra.mxu0 0.0
      %5283 = vmatprep.subr.mxu0 0.0
      %5284 = vmatpush1.msra.mxu0 0.0
      %5285 = vmatprep.subr.mxu0 0.0
      %5286 = vmatpush1.msra.mxu0 0.0
      %5287 = vmatprep.subr.mxu0 0.0
      %5288 = vmatpush1.msra.mxu0 0.0
      %5289 = vmatprep.subr.mxu0 0.0
      %5290 = vmatpush1.msra.mxu0 0.0
      %5291 = vmatprep.subr.mxu0 0.0
      %5292 = vmatpush1.msra.mxu0 0.0
      %5293 = vmatprep.subr.mxu0 0.0
      %5294 = vmatpush1.msra.mxu0 0.0
      %5295 = vmatprep.subr.mxu0 0.0
      %5296 = vmatpush1.msra.mxu0 0.0
      %5297 = vmatprep.subr.mxu0 0.0
      %5298 = vmatpush1.msra.mxu0 0.0
      %5299 = vmatprep.subr.mxu0 0.0
      %5300 = vmatpush1.msra.mxu0 0.0
      %5301 = vmatprep.subr.mxu0 0.0
      %5302 = vmatpush1.msra.mxu0 0.0
      %5303 = vmatprep.subr.mxu0 0.0
      %5304 = vmatpush1.msra.mxu0 0.0
      %5305 = vmatprep.subr.mxu0 0.0
      %5306 = vmatpush1.msra.mxu0 0.0
      %5307 = vmatprep.subr.mxu0 0.0
      %5308 = vmatpush1.msra.mxu0 0.0
      %5309 = vmatprep.subr.mxu0 0.0
      %5310 = vmatpush1.msra.mxu0 0.0
      %5311 = vmatprep.subr.mxu0 0.0
      %5312 = vmatpush1.msra.mxu0 0.0
      %5313 = vmatprep.subr.mxu0 0.0
      %5314 = vmatpush1.msra.mxu0 0.0
      %5315 = vmatprep.subr.mxu0 0.0
      %5316 = vmatpush1.msra.mxu0 0.0
      %5317 = vmatprep.subr.mxu0 0.0
      %5318 = vmatpush1.msra.mxu0 0.0
      %5319 = vmatprep.subr.mxu0 0.0
      %5320 = vmatpush1.msra.mxu0 0.0
      %5321 = vmatprep.subr.mxu0 0.0
      %5322 = vmatpush1.msra.mxu0 0.0
      %5323 = vmatprep.subr.mxu0 0.0
      %5324 = vmatpush1.msra.mxu0 0.0
      %5325 = vmatprep.subr.mxu0 0.0
      %5326 = vmatpush1.msra.mxu0 0.0
      %5327 = vmatprep.subr.mxu0 0.0
      %5328 = vmatpush1.msra.mxu0 0.0
      %5329 = vmatprep.subr.mxu0 0.0
      %5330 = vmatpush1.msra.mxu0 0.0
      %5331 = vmatprep.subr.mxu0 0.0
      %5332 = vmatpush1.msra.mxu0 0.0
      %5333 = vmatprep.subr.mxu0 0.0
      %5334 = vmatpush1.msra.mxu0 0.0
      %5335 = vmatprep.subr.mxu0 0.0
      %5336 = vmatpush1.msra.mxu0 0.0
      %5337 = vmatprep.subr.mxu0 0.0
      %5338 = vmatpush1.msra.mxu0 0.0
      %5339 = vmatprep.mubr.f32.mxu0 0.0
      %5340 = vmatmul.mubr.f32.gmra.mrb[0].mxu0 %v5273
      %v5341 = vpop.f32.mrb[0].mxu0
      %v5342 = vadd.f32 0.0, %v5341
      %v5343 = vpop.f32.mrb[0].mxu0
      %5344 = vdwg.mxu0
      %5345 = vrot.lane.b32.xlu0 %v570, 64
      %v5346 = vpop.permute.xlu0 %5345
      %v5349 = vsel %vm3168, %v3506, 0
      %5351 = vmatprep.subr.mxu0 0.0
      %5352 = vmatpush1.msra.mxu0 %v5346
      %5353 = vmatprep.subr.mxu0 0.0
      %5354 = vmatpush1.msra.mxu0 0.0
      %5355 = vmatprep.subr.mxu0 0.0
      %5356 = vmatpush1.msra.mxu0 0.0
      %5357 = vmatprep.subr.mxu0 0.0
      %5358 = vmatpush1.msra.mxu0 0.0
      %5359 = vmatprep.subr.mxu0 0.0
      %5360 = vmatpush1.msra.mxu0 0.0
      %5361 = vmatprep.subr.mxu0 0.0
      %5362 = vmatpush1.msra.mxu0 0.0
      %5363 = vmatprep.subr.mxu0 0.0
      %5364 = vmatpush1.msra.mxu0 0.0
      %5365 = vmatprep.subr.mxu0 0.0
      %5366 = vmatpush1.msra.mxu0 0.0
      %5367 = vmatprep.subr.mxu0 0.0
      %5368 = vmatpush1.msra.mxu0 0.0
      %5369 = vmatprep.subr.mxu0 0.0
      %5370 = vmatpush1.msra.mxu0 0.0
      %5371 = vmatprep.subr.mxu0 0.0
      %5372 = vmatpush1.msra.mxu0 0.0
      %5373 = vmatprep.subr.mxu0 0.0
      %5374 = vmatpush1.msra.mxu0 0.0
      %5375 = vmatprep.subr.mxu0 0.0
      %5376 = vmatpush1.msra.mxu0 0.0
      %5377 = vmatprep.subr.mxu0 0.0
      %5378 = vmatpush1.msra.mxu0 0.0
      %5379 = vmatprep.subr.mxu0 0.0
      %5380 = vmatpush1.msra.mxu0 0.0
      %5381 = vmatprep.subr.mxu0 0.0
      %5382 = vmatpush1.msra.mxu0 0.0
      %5383 = vmatprep.subr.mxu0 0.0
      %5384 = vmatpush1.msra.mxu0 0.0
      %5385 = vmatprep.subr.mxu0 0.0
      %5386 = vmatpush1.msra.mxu0 0.0
      %5387 = vmatprep.subr.mxu0 0.0
      %5388 = vmatpush1.msra.mxu0 0.0
      %5389 = vmatprep.subr.mxu0 0.0
      %5390 = vmatpush1.msra.mxu0 0.0
      %5391 = vmatprep.subr.mxu0 0.0
      %5392 = vmatpush1.msra.mxu0 0.0
      %5393 = vmatprep.subr.mxu0 0.0
      %5394 = vmatpush1.msra.mxu0 0.0
      %5395 = vmatprep.subr.mxu0 0.0
      %5396 = vmatpush1.msra.mxu0 0.0
      %5397 = vmatprep.subr.mxu0 0.0
      %5398 = vmatpush1.msra.mxu0 0.0
      %5399 = vmatprep.subr.mxu0 0.0
      %5400 = vmatpush1.msra.mxu0 0.0
      %5401 = vmatprep.subr.mxu0 0.0
      %5402 = vmatpush1.msra.mxu0 0.0
      %5403 = vmatprep.subr.mxu0 0.0
      %5404 = vmatpush1.msra.mxu0 0.0
      %5405 = vmatprep.subr.mxu0 0.0
      %5406 = vmatpush1.msra.mxu0 0.0
      %5407 = vmatprep.subr.mxu0 0.0
      %5408 = vmatpush1.msra.mxu0 0.0
      %5409 = vmatprep.subr.mxu0 0.0
      %5410 = vmatpush1.msra.mxu0 0.0
      %5411 = vmatprep.subr.mxu0 0.0
      %5412 = vmatpush1.msra.mxu0 0.0
      %5413 = vmatprep.subr.mxu0 0.0
      %5414 = vmatpush1.msra.mxu0 0.0
      %5415 = vmatprep.mubr.f32.mxu0 0.0
      %5416 = vmatmul.mubr.f32.gmra.mrb[0].mxu0 %v5349
      %v5417 = vpop.f32.mrb[0].mxu0
      %v5418 = vadd.f32 0.0, %v5417
      %v5419 = vpop.f32.mrb[0].mxu0
      %5420 = vdwg.mxu0
      %5421 = vrot.lane.b32.xlu0 %v575, 64
      %v5422 = vpop.permute.xlu0 %5421
      %v5425 = vsel %vm3168, %v3508, 0
      %5427 = vmatprep.subr.mxu0 0.0
      %5428 = vmatpush1.msra.mxu0 %v5422
      %5429 = vmatprep.subr.mxu0 0.0
      %5430 = vmatpush1.msra.mxu0 0.0
      %5431 = vmatprep.subr.mxu0 0.0
      %5432 = vmatpush1.msra.mxu0 0.0
      %5433 = vmatprep.subr.mxu0 0.0
      %5434 = vmatpush1.msra.mxu0 0.0
      %5435 = vmatprep.subr.mxu0 0.0
      %5436 = vmatpush1.msra.mxu0 0.0
      %5437 = vmatprep.subr.mxu0 0.0
      %5438 = vmatpush1.msra.mxu0 0.0
      %5439 = vmatprep.subr.mxu0 0.0
      %5440 = vmatpush1.msra.mxu0 0.0
      %5441 = vmatprep.subr.mxu0 0.0
      %5442 = vmatpush1.msra.mxu0 0.0
      %5443 = vmatprep.subr.mxu0 0.0
      %5444 = vmatpush1.msra.mxu0 0.0
      %5445 = vmatprep.subr.mxu0 0.0
      %5446 = vmatpush1.msra.mxu0 0.0
      %5447 = vmatprep.subr.mxu0 0.0
      %5448 = vmatpush1.msra.mxu0 0.0
      %5449 = vmatprep.subr.mxu0 0.0
      %5450 = vmatpush1.msra.mxu0 0.0
      %5451 = vmatprep.subr.mxu0 0.0
      %5452 = vmatpush1.msra.mxu0 0.0
      %5453 = vmatprep.subr.mxu0 0.0
      %5454 = vmatpush1.msra.mxu0 0.0
      %5455 = vmatprep.subr.mxu0 0.0
      %5456 = vmatpush1.msra.mxu0 0.0
      %5457 = vmatprep.subr.mxu0 0.0
      %5458 = vmatpush1.msra.mxu0 0.0
      %5459 = vmatprep.subr.mxu0 0.0
      %5460 = vmatpush1.msra.mxu0 0.0
      %5461 = vmatprep.subr.mxu0 0.0
      %5462 = vmatpush1.msra.mxu0 0.0
      %5463 = vmatprep.subr.mxu0 0.0
      %5464 = vmatpush1.msra.mxu0 0.0
      %5465 = vmatprep.subr.mxu0 0.0
      %5466 = vmatpush1.msra.mxu0 0.0
      %5467 = vmatprep.subr.mxu0 0.0
      %5468 = vmatpush1.msra.mxu0 0.0
      %5469 = vmatprep.subr.mxu0 0.0
      %5470 = vmatpush1.msra.mxu0 0.0
      %5471 = vmatprep.subr.mxu0 0.0
      %5472 = vmatpush1.msra.mxu0 0.0
      %5473 = vmatprep.subr.mxu0 0.0
      %5474 = vmatpush1.msra.mxu0 0.0
      %5475 = vmatprep.subr.mxu0 0.0
      %5476 = vmatpush1.msra.mxu0 0.0
      %5477 = vmatprep.subr.mxu0 0.0
      %5478 = vmatpush1.msra.mxu0 0.0
      %5479 = vmatprep.subr.mxu0 0.0
      %5480 = vmatpush1.msra.mxu0 0.0
      %5481 = vmatprep.subr.mxu0 0.0
      %5482 = vmatpush1.msra.mxu0 0.0
      %5483 = vmatprep.subr.mxu0 0.0
      %5484 = vmatpush1.msra.mxu0 0.0
      %5485 = vmatprep.subr.mxu0 0.0
      %5486 = vmatpush1.msra.mxu0 0.0
      %5487 = vmatprep.subr.mxu0 0.0
      %5488 = vmatpush1.msra.mxu0 0.0
      %5489 = vmatprep.subr.mxu0 0.0
      %5490 = vmatpush1.msra.mxu0 0.0
      %5491 = vmatprep.mubr.f32.mxu0 0.0
      %5492 = vmatmul.mubr.f32.gmra.mrb[0].mxu0 %v5425
      %v5493 = vpop.f32.mrb[0].mxu0
      %v5494 = vadd.f32 0.0, %v5493
      %v5495 = vpop.f32.mrb[0].mxu0
      %5496 = vdwg.mxu0
      %5497 = vrot.lane.b32.xlu0 %v580, 64
      %v5498 = vpop.permute.xlu0 %5497
      %v5501 = vsel %vm3168, %v3510, 0
      %5503 = vmatprep.subr.mxu0 0.0
      %5504 = vmatpush1.msra.mxu0 %v5498
      %5505 = vmatprep.subr.mxu0 0.0
      %5506 = vmatpush1.msra.mxu0 0.0
      %5507 = vmatprep.subr.mxu0 0.0
      %5508 = vmatpush1.msra.mxu0 0.0
      %5509 = vmatprep.subr.mxu0 0.0
      %5510 = vmatpush1.msra.mxu0 0.0
      %5511 = vmatprep.subr.mxu0 0.0
      %5512 = vmatpush1.msra.mxu0 0.0
      %5513 = vmatprep.subr.mxu0 0.0
      %5514 = vmatpush1.msra.mxu0 0.0
      %5515 = vmatprep.subr.mxu0 0.0
      %5516 = vmatpush1.msra.mxu0 0.0
      %5517 = vmatprep.subr.mxu0 0.0
      %5518 = vmatpush1.msra.mxu0 0.0
      %5519 = vmatprep.subr.mxu0 0.0
      %5520 = vmatpush1.msra.mxu0 0.0
      %5521 = vmatprep.subr.mxu0 0.0
      %5522 = vmatpush1.msra.mxu0 0.0
      %5523 = vmatprep.subr.mxu0 0.0
      %5524 = vmatpush1.msra.mxu0 0.0
      %5525 = vmatprep.subr.mxu0 0.0
      %5526 = vmatpush1.msra.mxu0 0.0
      %5527 = vmatprep.subr.mxu0 0.0
      %5528 = vmatpush1.msra.mxu0 0.0
      %5529 = vmatprep.subr.mxu0 0.0
      %5530 = vmatpush1.msra.mxu0 0.0
      %5531 = vmatprep.subr.mxu0 0.0
      %5532 = vmatpush1.msra.mxu0 0.0
      %5533 = vmatprep.subr.mxu0 0.0
      %5534 = vmatpush1.msra.mxu0 0.0
      %5535 = vmatprep.subr.mxu0 0.0
      %5536 = vmatpush1.msra.mxu0 0.0
      %5537 = vmatprep.subr.mxu0 0.0
      %5538 = vmatpush1.msra.mxu0 0.0
      %5539 = vmatprep.subr.mxu0 0.0
      %5540 = vmatpush1.msra.mxu0 0.0
      %5541 = vmatprep.subr.mxu0 0.0
      %5542 = vmatpush1.msra.mxu0 0.0
      %5543 = vmatprep.subr.mxu0 0.0
      %5544 = vmatpush1.msra.mxu0 0.0
      %5545 = vmatprep.subr.mxu0 0.0
      %5546 = vmatpush1.msra.mxu0 0.0
      %5547 = vmatprep.subr.mxu0 0.0
      %5548 = vmatpush1.msra.mxu0 0.0
      %5549 = vmatprep.subr.mxu0 0.0
      %5550 = vmatpush1.msra.mxu0 0.0
      %5551 = vmatprep.subr.mxu0 0.0
      %5552 = vmatpush1.msra.mxu0 0.0
      %5553 = vmatprep.subr.mxu0 0.0
      %5554 = vmatpush1.msra.mxu0 0.0
      %5555 = vmatprep.subr.mxu0 0.0
      %5556 = vmatpush1.msra.mxu0 0.0
      %5557 = vmatprep.subr.mxu0 0.0
      %5558 = vmatpush1.msra.mxu0 0.0
      %5559 = vmatprep.subr.mxu0 0.0
      %5560 = vmatpush1.msra.mxu0 0.0
      %5561 = vmatprep.subr.mxu0 0.0
      %5562 = vmatpush1.msra.mxu0 0.0
      %5563 = vmatprep.subr.mxu0 0.0
      %5564 = vmatpush1.msra.mxu0 0.0
      %5565 = vmatprep.subr.mxu0 0.0
      %5566 = vmatpush1.msra.mxu0 0.0
      %5567 = vmatprep.mubr.f32.mxu0 0.0
      %5568 = vmatmul.mubr.f32.gmra.mrb[0].mxu0 %v5501
      %v5569 = vpop.f32.mrb[0].mxu0
      %v5570 = vadd.f32 0.0, %v5569
      %v5571 = vpop.f32.mrb[0].mxu0
      %5572 = vdwg.mxu0
      %5573 = vrot.lane.b32.xlu0 %v585, 64
      %v5574 = vpop.permute.xlu0 %5573
      %v5577 = vsel %vm3168, %v3512, 0
      %5579 = vmatprep.subr.mxu0 0.0
      %5580 = vmatpush1.msra.mxu0 %v5574
      %5581 = vmatprep.subr.mxu0 0.0
      %5582 = vmatpush1.msra.mxu0 0.0
      %5583 = vmatprep.subr.mxu0 0.0
      %5584 = vmatpush1.msra.mxu0 0.0
      %5585 = vmatprep.subr.mxu0 0.0
      %5586 = vmatpush1.msra.mxu0 0.0
      %5587 = vmatprep.subr.mxu0 0.0
      %5588 = vmatpush1.msra.mxu0 0.0
      %5589 = vmatprep.subr.mxu0 0.0
      %5590 = vmatpush1.msra.mxu0 0.0
      %5591 = vmatprep.subr.mxu0 0.0
      %5592 = vmatpush1.msra.mxu0 0.0
      %5593 = vmatprep.subr.mxu0 0.0
      %5594 = vmatpush1.msra.mxu0 0.0
      %5595 = vmatprep.subr.mxu0 0.0
      %5596 = vmatpush1.msra.mxu0 0.0
      %5597 = vmatprep.subr.mxu0 0.0
      %5598 = vmatpush1.msra.mxu0 0.0
      %5599 = vmatprep.subr.mxu0 0.0
      %5600 = vmatpush1.msra.mxu0 0.0
      %5601 = vmatprep.subr.mxu0 0.0
      %5602 = vmatpush1.msra.mxu0 0.0
      %5603 = vmatprep.subr.mxu0 0.0
      %5604 = vmatpush1.msra.mxu0 0.0
      %5605 = vmatprep.subr.mxu0 0.0
      %5606 = vmatpush1.msra.mxu0 0.0
      %5607 = vmatprep.subr.mxu0 0.0
      %5608 = vmatpush1.msra.mxu0 0.0
      %5609 = vmatprep.subr.mxu0 0.0
      %5610 = vmatpush1.msra.mxu0 0.0
      %5611 = vmatprep.subr.mxu0 0.0
      %5612 = vmatpush1.msra.mxu0 0.0
      %5613 = vmatprep.subr.mxu0 0.0
      %5614 = vmatpush1.msra.mxu0 0.0
      %5615 = vmatprep.subr.mxu0 0.0
      %5616 = vmatpush1.msra.mxu0 0.0
      %5617 = vmatprep.subr.mxu0 0.0
      %5618 = vmatpush1.msra.mxu0 0.0
      %5619 = vmatprep.subr.mxu0 0.0
      %5620 = vmatpush1.msra.mxu0 0.0
      %5621 = vmatprep.subr.mxu0 0.0
      %5622 = vmatpush1.msra.mxu0 0.0
      %5623 = vmatprep.subr.mxu0 0.0
      %5624 = vmatpush1.msra.mxu0 0.0
      %5625 = vmatprep.subr.mxu0 0.0
      %5626 = vmatpush1.msra.mxu0 0.0
      %5627 = vmatprep.subr.mxu0 0.0
      %5628 = vmatpush1.msra.mxu0 0.0
      %5629 = vmatprep.subr.mxu0 0.0
      %5630 = vmatpush1.msra.mxu0 0.0
      %5631 = vmatprep.subr.mxu0 0.0
      %5632 = vmatpush1.msra.mxu0 0.0
      %5633 = vmatprep.subr.mxu0 0.0
      %5634 = vmatpush1.msra.mxu0 0.0
      %5635 = vmatprep.subr.mxu0 0.0
      %5636 = vmatpush1.msra.mxu0 0.0
      %5637 = vmatprep.subr.mxu0 0.0
      %5638 = vmatpush1.msra.mxu0 0.0
      %5639 = vmatprep.subr.mxu0 0.0
      %5640 = vmatpush1.msra.mxu0 0.0
      %5641 = vmatprep.subr.mxu0 0.0
      %5642 = vmatpush1.msra.mxu0 0.0
      %5643 = vmatprep.mubr.f32.mxu0 0.0
      %5644 = vmatmul.mubr.f32.gmra.mrb[0].mxu0 %v5577
      %v5645 = vpop.f32.mrb[0].mxu0
      %v5646 = vadd.f32 0.0, %v5645
      %v5647 = vpop.f32.mrb[0].mxu0
      %5648 = vdwg.mxu0
      %5649 = vrot.lane.b32.xlu0 %v590, 64
      %v5650 = vpop.permute.xlu0 %5649
      %v5653 = vsel %vm3168, %v3514, 0
      %5655 = vmatprep.subr.mxu0 0.0
      %5656 = vmatpush1.msra.mxu0 %v5650
      %5657 = vmatprep.subr.mxu0 0.0
      %5658 = vmatpush1.msra.mxu0 0.0
      %5659 = vmatprep.subr.mxu0 0.0
      %5660 = vmatpush1.msra.mxu0 0.0
      %5661 = vmatprep.subr.mxu0 0.0
      %5662 = vmatpush1.msra.mxu0 0.0
      %5663 = vmatprep.subr.mxu0 0.0
      %5664 = vmatpush1.msra.mxu0 0.0
      %5665 = vmatprep.subr.mxu0 0.0
      %5666 = vmatpush1.msra.mxu0 0.0
      %5667 = vmatprep.subr.mxu0 0.0
      %5668 = vmatpush1.msra.mxu0 0.0
      %5669 = vmatprep.subr.mxu0 0.0
      %5670 = vmatpush1.msra.mxu0 0.0
      %5671 = vmatprep.subr.mxu0 0.0
      %5672 = vmatpush1.msra.mxu0 0.0
      %5673 = vmatprep.subr.mxu0 0.0
      %5674 = vmatpush1.msra.mxu0 0.0
      %5675 = vmatprep.subr.mxu0 0.0
      %5676 = vmatpush1.msra.mxu0 0.0
      %5677 = vmatprep.subr.mxu0 0.0
      %5678 = vmatpush1.msra.mxu0 0.0
      %5679 = vmatprep.subr.mxu0 0.0
      %5680 = vmatpush1.msra.mxu0 0.0
      %5681 = vmatprep.subr.mxu0 0.0
      %5682 = vmatpush1.msra.mxu0 0.0
      %5683 = vmatprep.subr.mxu0 0.0
      %5684 = vmatpush1.msra.mxu0 0.0
      %5685 = vmatprep.subr.mxu0 0.0
      %5686 = vmatpush1.msra.mxu0 0.0
      %5687 = vmatprep.subr.mxu0 0.0
      %5688 = vmatpush1.msra.mxu0 0.0
      %5689 = vmatprep.subr.mxu0 0.0
      %5690 = vmatpush1.msra.mxu0 0.0
      %5691 = vmatprep.subr.mxu0 0.0
      %5692 = vmatpush1.msra.mxu0 0.0
      %5693 = vmatprep.subr.mxu0 0.0
      %5694 = vmatpush1.msra.mxu0 0.0
      %5695 = vmatprep.subr.mxu0 0.0
      %5696 = vmatpush1.msra.mxu0 0.0
      %5697 = vmatprep.subr.mxu0 0.0
      %5698 = vmatpush1.msra.mxu0 0.0
      %5699 = vmatprep.subr.mxu0 0.0
      %5700 = vmatpush1.msra.mxu0 0.0
      %5701 = vmatprep.subr.mxu0 0.0
      %5702 = vmatpush1.msra.mxu0 0.0
      %5703 = vmatprep.subr.mxu0 0.0
      %5704 = vmatpush1.msra.mxu0 0.0
      %5705 = vmatprep.subr.mxu0 0.0
      %5706 = vmatpush1.msra.mxu0 0.0
      %5707 = vmatprep.subr.mxu0 0.0
      %5708 = vmatpush1.msra.mxu0 0.0
      %5709 = vmatprep.subr.mxu0 0.0
      %5710 = vmatpush1.msra.mxu0 0.0
      %5711 = vmatprep.subr.mxu0 0.0
      %5712 = vmatpush1.msra.mxu0 0.0
      %5713 = vmatprep.subr.mxu0 0.0
      %5714 = vmatpush1.msra.mxu0 0.0
      %5715 = vmatprep.subr.mxu0 0.0
      %5716 = vmatpush1.msra.mxu0 0.0
      %5717 = vmatprep.subr.mxu0 0.0
      %5718 = vmatpush1.msra.mxu0 0.0
      %5719 = vmatprep.mubr.f32.mxu0 0.0
      %5720 = vmatmul.mubr.f32.gmra.mrb[0].mxu0 %v5653
      %v5721 = vpop.f32.mrb[0].mxu0
      %v5722 = vadd.f32 0.0, %v5721
      %v5723 = vpop.f32.mrb[0].mxu0
      %5724 = vdwg.mxu0
      %5725 = vrot.lane.b32.xlu0 %v595, 64
      %v5726 = vpop.permute.xlu0 %5725
      %v5729 = vsel %vm3168, %v3516, 0
      %5731 = vmatprep.subr.mxu0 0.0
      %5732 = vmatpush1.msra.mxu0 %v5726
      %5733 = vmatprep.subr.mxu0 0.0
      %5734 = vmatpush1.msra.mxu0 0.0
      %5735 = vmatprep.subr.mxu0 0.0
      %5736 = vmatpush1.msra.mxu0 0.0
      %5737 = vmatprep.subr.mxu0 0.0
      %5738 = vmatpush1.msra.mxu0 0.0
      %5739 = vmatprep.subr.mxu0 0.0
      %5740 = vmatpush1.msra.mxu0 0.0
      %5741 = vmatprep.subr.mxu0 0.0
      %5742 = vmatpush1.msra.mxu0 0.0
      %5743 = vmatprep.subr.mxu0 0.0
      %5744 = vmatpush1.msra.mxu0 0.0
      %5745 = vmatprep.subr.mxu0 0.0
      %5746 = vmatpush1.msra.mxu0 0.0
      %5747 = vmatprep.subr.mxu0 0.0
      %5748 = vmatpush1.msra.mxu0 0.0
      %5749 = vmatprep.subr.mxu0 0.0
      %5750 = vmatpush1.msra.mxu0 0.0
      %5751 = vmatprep.subr.mxu0 0.0
      %5752 = vmatpush1.msra.mxu0 0.0
      %5753 = vmatprep.subr.mxu0 0.0
      %5754 = vmatpush1.msra.mxu0 0.0
      %5755 = vmatprep.subr.mxu0 0.0
      %5756 = vmatpush1.msra.mxu0 0.0
      %5757 = vmatprep.subr.mxu0 0.0
      %5758 = vmatpush1.msra.mxu0 0.0
      %5759 = vmatprep.subr.mxu0 0.0
      %5760 = vmatpush1.msra.mxu0 0.0
      %5761 = vmatprep.subr.mxu0 0.0
      %5762 = vmatpush1.msra.mxu0 0.0
      %5763 = vmatprep.subr.mxu0 0.0
      %5764 = vmatpush1.msra.mxu0 0.0
      %5765 = vmatprep.subr.mxu0 0.0
      %5766 = vmatpush1.msra.mxu0 0.0
      %5767 = vmatprep.subr.mxu0 0.0
      %5768 = vmatpush1.msra.mxu0 0.0
      %5769 = vmatprep.subr.mxu0 0.0
      %5770 = vmatpush1.msra.mxu0 0.0
      %5771 = vmatprep.subr.mxu0 0.0
      %5772 = vmatpush1.msra.mxu0 0.0
      %5773 = vmatprep.subr.mxu0 0.0
      %5774 = vmatpush1.msra.mxu0 0.0
      %5775 = vmatprep.subr.mxu0 0.0
      %5776 = vmatpush1.msra.mxu0 0.0
      %5777 = vmatprep.subr.mxu0 0.0
      %5778 = vmatpush1.msra.mxu0 0.0
      %5779 = vmatprep.subr.mxu0 0.0
      %5780 = vmatpush1.msra.mxu0 0.0
      %5781 = vmatprep.subr.mxu0 0.0
      %5782 = vmatpush1.msra.mxu0 0.0
      %5783 = vmatprep.subr.mxu0 0.0
      %5784 = vmatpush1.msra.mxu0 0.0
      %5785 = vmatprep.subr.mxu0 0.0
      %5786 = vmatpush1.msra.mxu0 0.0
      %5787 = vmatprep.subr.mxu0 0.0
      %5788 = vmatpush1.msra.mxu0 0.0
      %5789 = vmatprep.subr.mxu0 0.0
      %5790 = vmatpush1.msra.mxu0 0.0
      %5791 = vmatprep.subr.mxu0 0.0
      %5792 = vmatpush1.msra.mxu0 0.0
      %5793 = vmatprep.subr.mxu0 0.0
      %5794 = vmatpush1.msra.mxu0 0.0
      %5795 = vmatprep.mubr.f32.mxu0 0.0
      %5796 = vmatmul.mubr.f32.gmra.mrb[0].mxu0 %v5729
      %v5797 = vpop.f32.mrb[0].mxu0
      %v5798 = vadd.f32 0.0, %v5797
      %v5799 = vpop.f32.mrb[0].mxu0
      %5800 = vdwg.mxu0
      %5801 = vrot.lane.b32.xlu0 %v600, 64
      %v5802 = vpop.permute.xlu0 %5801
      %v5805 = vsel %vm3168, %v3518, 0
      %5807 = vmatprep.subr.mxu0 0.0
      %5808 = vmatpush1.msra.mxu0 %v5802
      %5809 = vmatprep.subr.mxu0 0.0
      %5810 = vmatpush1.msra.mxu0 0.0
      %5811 = vmatprep.subr.mxu0 0.0
      %5812 = vmatpush1.msra.mxu0 0.0
      %5813 = vmatprep.subr.mxu0 0.0
      %5814 = vmatpush1.msra.mxu0 0.0
      %5815 = vmatprep.subr.mxu0 0.0
      %5816 = vmatpush1.msra.mxu0 0.0
      %5817 = vmatprep.subr.mxu0 0.0
      %5818 = vmatpush1.msra.mxu0 0.0
      %5819 = vmatprep.subr.mxu0 0.0
      %5820 = vmatpush1.msra.mxu0 0.0
      %5821 = vmatprep.subr.mxu0 0.0
      %5822 = vmatpush1.msra.mxu0 0.0
      %5823 = vmatprep.subr.mxu0 0.0
      %5824 = vmatpush1.msra.mxu0 0.0
      %5825 = vmatprep.subr.mxu0 0.0
      %5826 = vmatpush1.msra.mxu0 0.0
      %5827 = vmatprep.subr.mxu0 0.0
      %5828 = vmatpush1.msra.mxu0 0.0
      %5829 = vmatprep.subr.mxu0 0.0
      %5830 = vmatpush1.msra.mxu0 0.0
      %5831 = vmatprep.subr.mxu0 0.0
      %5832 = vmatpush1.msra.mxu0 0.0
      %5833 = vmatprep.subr.mxu0 0.0
      %5834 = vmatpush1.msra.mxu0 0.0
      %5835 = vmatprep.subr.mxu0 0.0
      %5836 = vmatpush1.msra.mxu0 0.0
      %5837 = vmatprep.subr.mxu0 0.0
      %5838 = vmatpush1.msra.mxu0 0.0
      %5839 = vmatprep.subr.mxu0 0.0
      %5840 = vmatpush1.msra.mxu0 0.0
      %5841 = vmatprep.subr.mxu0 0.0
      %5842 = vmatpush1.msra.mxu0 0.0
      %5843 = vmatprep.subr.mxu0 0.0
      %5844 = vmatpush1.msra.mxu0 0.0
      %5845 = vmatprep.subr.mxu0 0.0
      %5846 = vmatpush1.msra.mxu0 0.0
      %5847 = vmatprep.subr.mxu0 0.0
      %5848 = vmatpush1.msra.mxu0 0.0
      %5849 = vmatprep.subr.mxu0 0.0
      %5850 = vmatpush1.msra.mxu0 0.0
      %5851 = vmatprep.subr.mxu0 0.0
      %5852 = vmatpush1.msra.mxu0 0.0
      %5853 = vmatprep.subr.mxu0 0.0
      %5854 = vmatpush1.msra.mxu0 0.0
      %5855 = vmatprep.subr.mxu0 0.0
      %5856 = vmatpush1.msra.mxu0 0.0
      %5857 = vmatprep.subr.mxu0 0.0
      %5858 = vmatpush1.msra.mxu0 0.0
      %5859 = vmatprep.subr.mxu0 0.0
      %5860 = vmatpush1.msra.mxu0 0.0
      %5861 = vmatprep.subr.mxu0 0.0
      %5862 = vmatpush1.msra.mxu0 0.0
      %5863 = vmatprep.subr.mxu0 0.0
      %5864 = vmatpush1.msra.mxu0 0.0
      %5865 = vmatprep.subr.mxu0 0.0
      %5866 = vmatpush1.msra.mxu0 0.0
      %5867 = vmatprep.subr.mxu0 0.0
      %5868 = vmatpush1.msra.mxu0 0.0
      %5869 = vmatprep.subr.mxu0 0.0
      %5870 = vmatpush1.msra.mxu0 0.0
      %5871 = vmatprep.mubr.f32.mxu0 0.0
      %5872 = vmatmul.mubr.f32.gmra.mrb[0].mxu0 %v5805
      %v5873 = vpop.f32.mrb[0].mxu0
      %v5874 = vadd.f32 0.0, %v5873
      %v5875 = vpop.f32.mrb[0].mxu0
      %5876 = vdwg.mxu0
      %5877 = vrot.lane.b32.xlu0 %v605, 64
      %v5878 = vpop.permute.xlu0 %5877
      %v5881 = vsel %vm3168, %v3520, 0
      %5883 = vmatprep.subr.mxu0 0.0
      %5884 = vmatpush1.msra.mxu0 %v5878
      %5885 = vmatprep.subr.mxu0 0.0
      %5886 = vmatpush1.msra.mxu0 0.0
      %5887 = vmatprep.subr.mxu0 0.0
      %5888 = vmatpush1.msra.mxu0 0.0
      %5889 = vmatprep.subr.mxu0 0.0
      %5890 = vmatpush1.msra.mxu0 0.0
      %5891 = vmatprep.subr.mxu0 0.0
      %5892 = vmatpush1.msra.mxu0 0.0
      %5893 = vmatprep.subr.mxu0 0.0
      %5894 = vmatpush1.msra.mxu0 0.0
      %5895 = vmatprep.subr.mxu0 0.0
      %5896 = vmatpush1.msra.mxu0 0.0
      %5897 = vmatprep.subr.mxu0 0.0
      %5898 = vmatpush1.msra.mxu0 0.0
      %5899 = vmatprep.subr.mxu0 0.0
      %5900 = vmatpush1.msra.mxu0 0.0
      %5901 = vmatprep.subr.mxu0 0.0
      %5902 = vmatpush1.msra.mxu0 0.0
      %5903 = vmatprep.subr.mxu0 0.0
      %5904 = vmatpush1.msra.mxu0 0.0
      %5905 = vmatprep.subr.mxu0 0.0
      %5906 = vmatpush1.msra.mxu0 0.0
      %5907 = vmatprep.subr.mxu0 0.0
      %5908 = vmatpush1.msra.mxu0 0.0
      %5909 = vmatprep.subr.mxu0 0.0
      %5910 = vmatpush1.msra.mxu0 0.0
      %5911 = vmatprep.subr.mxu0 0.0
      %5912 = vmatpush1.msra.mxu0 0.0
      %5913 = vmatprep.subr.mxu0 0.0
      %5914 = vmatpush1.msra.mxu0 0.0
      %5915 = vmatprep.subr.mxu0 0.0
      %5916 = vmatpush1.msra.mxu0 0.0
      %5917 = vmatprep.subr.mxu0 0.0
      %5918 = vmatpush1.msra.mxu0 0.0
      %5919 = vmatprep.subr.mxu0 0.0
      %5920 = vmatpush1.msra.mxu0 0.0
      %5921 = vmatprep.subr.mxu0 0.0
      %5922 = vmatpush1.msra.mxu0 0.0
      %5923 = vmatprep.subr.mxu0 0.0
      %5924 = vmatpush1.msra.mxu0 0.0
      %5925 = vmatprep.subr.mxu0 0.0
      %5926 = vmatpush1.msra.mxu0 0.0
      %5927 = vmatprep.subr.mxu0 0.0
      %5928 = vmatpush1.msra.mxu0 0.0
      %5929 = vmatprep.subr.mxu0 0.0
      %5930 = vmatpush1.msra.mxu0 0.0
      %5931 = vmatprep.subr.mxu0 0.0
      %5932 = vmatpush1.msra.mxu0 0.0
      %5933 = vmatprep.subr.mxu0 0.0
      %5934 = vmatpush1.msra.mxu0 0.0
      %5935 = vmatprep.subr.mxu0 0.0
      %5936 = vmatpush1.msra.mxu0 0.0
      %5937 = vmatprep.subr.mxu0 0.0
      %5938 = vmatpush1.msra.mxu0 0.0
      %5939 = vmatprep.subr.mxu0 0.0
      %5940 = vmatpush1.msra.mxu0 0.0
      %5941 = vmatprep.subr.mxu0 0.0
      %5942 = vmatpush1.msra.mxu0 0.0
      %5943 = vmatprep.subr.mxu0 0.0
      %5944 = vmatpush1.msra.mxu0 0.0
      %5945 = vmatprep.subr.mxu0 0.0
      %5946 = vmatpush1.msra.mxu0 0.0
      %5947 = vmatprep.mubr.f32.mxu0 0.0
      %5948 = vmatmul.mubr.f32.gmra.mrb[0].mxu0 %v5881
      %v5949 = vpop.f32.mrb[0].mxu0
      %v5950 = vadd.f32 0.0, %v5949
      %v5951 = vpop.f32.mrb[0].mxu0
      %5952 = vdwg.mxu0
      %v5953 = vld [vmem:[%s3] sm:$0x1]
      %v5954 = vld [vmem:[%s3 + $0x1] sm:$0x1]
      %v5955 = vld [vmem:[%s3 + $0x2] sm:$0x1]
      %v5956 = vld [vmem:[%s3 + $0x3] sm:$0x1]
      %v5957 = vld [vmem:[%s3 + $0x4] sm:$0x1]
      %v5958 = vld [vmem:[%s3 + $0x5] sm:$0x1]
      %v5959 = vld [vmem:[%s3 + $0x6] sm:$0x1]
      %v5960 = vld [vmem:[%s3 + $0x7] sm:$0x1]
      %v5961 = vld [vmem:[%s4] sm:$0xff]
      %v5962 = vld [vmem:[%s4 + $0x8] sm:$0xff]
      %v5963 = vld [vmem:[%s4 + $0x10] sm:$0xff]
      %v5964 = vld [vmem:[%s4 + $0x18] sm:$0xff]
      %v5965 = vxor.u32 %v3594, 2147483648
      %v5966 = vxor.u32 %v3670, 2147483648
      %v5967 = vxor.u32 %v3746, 2147483648
      %v5968 = vxor.u32 %v3822, 2147483648
      %v5969 = vxor.u32 %v3898, 2147483648
      %v5970 = vxor.u32 %v3974, 2147483648
      %v5971 = vxor.u32 %v4050, 2147483648
      %v5972 = vxor.u32 %v4126, 2147483648
      %v5973 = vxor.u32 %v4202, 2147483648
      %v5974 = vxor.u32 %v4278, 2147483648
      %v5975 = vxor.u32 %v4354, 2147483648
      %v5976 = vxor.u32 %v4430, 2147483648
      %v5977 = vxor.u32 %v4506, 2147483648
      %v5978 = vxor.u32 %v4582, 2147483648
      %v5979 = vxor.u32 %v4658, 2147483648
      %v5980 = vxor.u32 %v4734, 2147483648
      %v5981 = vxor.u32 %v4810, 2147483648
      %v5982 = vxor.u32 %v4886, 2147483648
      %v5983 = vxor.u32 %v4962, 2147483648
      %v5984 = vxor.u32 %v5038, 2147483648
      %v5985 = vxor.u32 %v5114, 2147483648
      %v5986 = vxor.u32 %v5190, 2147483648
      %v5987 = vxor.u32 %v5266, 2147483648
      %v5988 = vxor.u32 %v5342, 2147483648
      %v5989 = vxor.u32 %v5418, 2147483648
      %v5990 = vxor.u32 %v5494, 2147483648
      %v5991 = vxor.u32 %v5570, 2147483648
      %v5992 = vxor.u32 %v5646, 2147483648
      %v5993 = vxor.u32 %v5722, 2147483648
      %v5994 = vxor.u32 %v5798, 2147483648
      %v5995 = vxor.u32 %v5874, 2147483648
      %v5996 = vxor.u32 %v5950, 2147483648
      %v5997 = vmul.f32 %v5965, 1.442695
      %v5998 = vpow.pop %v5997
      %v5999 = vmul.f32 %v5966, 1.442695
      %v6000 = vpow.pop %v5999
      %v6001 = vmul.f32 %v5967, 1.442695
      %v6002 = vpow.pop %v6001
      %v6003 = vmul.f32 %v5968, 1.442695
      %v6004 = vpow.pop %v6003
      %v6005 = vmul.f32 %v5969, 1.442695
      %v6006 = vpow.pop %v6005
      %v6007 = vmul.f32 %v5970, 1.442695
      %v6008 = vpow.pop %v6007
      %v6009 = vmul.f32 %v5971, 1.442695
      %v6010 = vpow.pop %v6009
      %v6011 = vmul.f32 %v5972, 1.442695
      %v6012 = vpow.pop %v6011
      %v6013 = vmul.f32 %v5973, 1.442695
      %v6014 = vpow.pop %v6013
      %v6015 = vmul.f32 %v5974, 1.442695
      %v6016 = vpow.pop %v6015
      %v6017 = vmul.f32 %v5975, 1.442695
      %v6018 = vpow.pop %v6017
      %v6019 = vmul.f32 %v5976, 1.442695
      %v6020 = vpow.pop %v6019
      %v6021 = vmul.f32 %v5977, 1.442695
      %v6022 = vpow.pop %v6021
      %v6023 = vmul.f32 %v5978, 1.442695
      %v6024 = vpow.pop %v6023
      %v6025 = vmul.f32 %v5979, 1.442695
      %v6026 = vpow.pop %v6025
      %v6027 = vmul.f32 %v5980, 1.442695
      %v6028 = vpow.pop %v6027
      %v6029 = vmul.f32 %v5981, 1.442695
      %v6030 = vpow.pop %v6029
      %v6031 = vmul.f32 %v5982, 1.442695
      %v6032 = vpow.pop %v6031
      %v6033 = vmul.f32 %v5983, 1.442695
      %v6034 = vpow.pop %v6033
      %v6035 = vmul.f32 %v5984, 1.442695
      %v6036 = vpow.pop %v6035
      %v6037 = vmul.f32 %v5985, 1.442695
      %v6038 = vpow.pop %v6037
      %v6039 = vmul.f32 %v5986, 1.442695
      %v6040 = vpow.pop %v6039
      %v6041 = vmul.f32 %v5987, 1.442695
      %v6042 = vpow.pop %v6041
      %v6043 = vmul.f32 %v5988, 1.442695
      %v6044 = vpow.pop %v6043
      %v6045 = vmul.f32 %v5989, 1.442695
      %v6046 = vpow.pop %v6045
      %v6047 = vmul.f32 %v5990, 1.442695
      %v6048 = vpow.pop %v6047
      %v6049 = vmul.f32 %v5991, 1.442695
      %v6050 = vpow.pop %v6049
      %v6051 = vmul.f32 %v5992, 1.442695
      %v6052 = vpow.pop %v6051
      %v6053 = vmul.f32 %v5993, 1.442695
      %v6054 = vpow.pop %v6053
      %v6055 = vmul.f32 %v5994, 1.442695
      %v6056 = vpow.pop %v6055
      %v6057 = vmul.f32 %v5995, 1.442695
      %v6058 = vpow.pop %v6057
      %v6059 = vmul.f32 %v5996, 1.442695
      %v6060 = vpow.pop %v6059
      %v6061 = vadd.f32 %v5998, 1.0
      %v6062 = vadd.f32 %v6000, 1.0
      %v6063 = vadd.f32 %v6002, 1.0
      %v6064 = vadd.f32 %v6004, 1.0
      %v6065 = vadd.f32 %v6006, 1.0
      %v6066 = vadd.f32 %v6008, 1.0
      %v6067 = vadd.f32 %v6010, 1.0
      %v6068 = vadd.f32 %v6012, 1.0
      %v6069 = vadd.f32 %v6014, 1.0
      %v6070 = vadd.f32 %v6016, 1.0
      %v6071 = vadd.f32 %v6018, 1.0
      %v6072 = vadd.f32 %v6020, 1.0
      %v6073 = vadd.f32 %v6022, 1.0
      %v6074 = vadd.f32 %v6024, 1.0
      %v6075 = vadd.f32 %v6026, 1.0
      %v6076 = vadd.f32 %v6028, 1.0
      %v6077 = vadd.f32 %v6030, 1.0
      %v6078 = vadd.f32 %v6032, 1.0
      %v6079 = vadd.f32 %v6034, 1.0
      %v6080 = vadd.f32 %v6036, 1.0
      %v6081 = vadd.f32 %v6038, 1.0
      %v6082 = vadd.f32 %v6040, 1.0
      %v6083 = vadd.f32 %v6042, 1.0
      %v6084 = vadd.f32 %v6044, 1.0
      %v6085 = vadd.f32 %v6046, 1.0
      %v6086 = vadd.f32 %v6048, 1.0
      %v6087 = vadd.f32 %v6050, 1.0
      %v6088 = vadd.f32 %v6052, 1.0
      %v6089 = vadd.f32 %v6054, 1.0
      %v6090 = vadd.f32 %v6056, 1.0
      %v6091 = vadd.f32 %v6058, 1.0
      %v6092 = vadd.f32 %v6060, 1.0
      %v6093 = vrcp.pop %v6061
      %v6094 = vmul.f32 1.0, %v6093
      %v6095 = vrcp.pop %v6062
      %v6096 = vmul.f32 1.0, %v6095
      %v6097 = vrcp.pop %v6063
      %v6098 = vmul.f32 1.0, %v6097
      %v6099 = vrcp.pop %v6064
      %v6100 = vmul.f32 1.0, %v6099
      %v6101 = vrcp.pop %v6065
      %v6102 = vmul.f32 1.0, %v6101
      %v6103 = vrcp.pop %v6066
      %v6104 = vmul.f32 1.0, %v6103
      %v6105 = vrcp.pop %v6067
      %v6106 = vmul.f32 1.0, %v6105
      %v6107 = vrcp.pop %v6068
      %v6108 = vmul.f32 1.0, %v6107
      %v6109 = vrcp.pop %v6069
      %v6110 = vmul.f32 1.0, %v6109
      %v6111 = vrcp.pop %v6070
      %v6112 = vmul.f32 1.0, %v6111
      %v6113 = vrcp.pop %v6071
      %v6114 = vmul.f32 1.0, %v6113
      %v6115 = vrcp.pop %v6072
      %v6116 = vmul.f32 1.0, %v6115
      %v6117 = vrcp.pop %v6073
      %v6118 = vmul.f32 1.0, %v6117
      %v6119 = vrcp.pop %v6074
      %v6120 = vmul.f32 1.0, %v6119
      %v6121 = vrcp.pop %v6075
      %v6122 = vmul.f32 1.0, %v6121
      %v6123 = vrcp.pop %v6076
      %v6124 = vmul.f32 1.0, %v6123
      %v6125 = vrcp.pop %v6077
      %v6126 = vmul.f32 1.0, %v6125
      %v6127 = vrcp.pop %v6078
      %v6128 = vmul.f32 1.0, %v6127
      %v6129 = vrcp.pop %v6079
      %v6130 = vmul.f32 1.0, %v6129
      %v6131 = vrcp.pop %v6080
      %v6132 = vmul.f32 1.0, %v6131
      %v6133 = vrcp.pop %v6081
      %v6134 = vmul.f32 1.0, %v6133
      %v6135 = vrcp.pop %v6082
      %v6136 = vmul.f32 1.0, %v6135
      %v6137 = vrcp.pop %v6083
      %v6138 = vmul.f32 1.0, %v6137
      %v6139 = vrcp.pop %v6084
      %v6140 = vmul.f32 1.0, %v6139
      %v6141 = vrcp.pop %v6085
      %v6142 = vmul.f32 1.0, %v6141
      %v6143 = vrcp.pop %v6086
      %v6144 = vmul.f32 1.0, %v6143
      %v6145 = vrcp.pop %v6087
      %v6146 = vmul.f32 1.0, %v6145
      %v6147 = vrcp.pop %v6088
      %v6148 = vmul.f32 1.0, %v6147
      %v6149 = vrcp.pop %v6089
      %v6150 = vmul.f32 1.0, %v6149
      %v6151 = vrcp.pop %v6090
      %v6152 = vmul.f32 1.0, %v6151
      %v6153 = vrcp.pop %v6091
      %v6154 = vmul.f32 1.0, %v6153
      %v6155 = vrcp.pop %v6092
      %v6156 = vmul.f32 1.0, %v6155
      %v6157 = vmul.f32 %v3594, %v6094
      %v6158 = vmul.f32 %v3670, %v6096
      %v6159 = vmul.f32 %v3746, %v6098
      %v6160 = vmul.f32 %v3822, %v6100
      %v6161 = vmul.f32 %v3898, %v6102
      %v6162 = vmul.f32 %v3974, %v6104
      %v6163 = vmul.f32 %v4050, %v6106
      %v6164 = vmul.f32 %v4126, %v6108
      %v6165 = vmul.f32 %v4202, %v6110
      %v6166 = vmul.f32 %v4278, %v6112
      %v6167 = vmul.f32 %v4354, %v6114
      %v6168 = vmul.f32 %v4430, %v6116
      %v6169 = vmul.f32 %v4506, %v6118
      %v6170 = vmul.f32 %v4582, %v6120
      %v6171 = vmul.f32 %v4658, %v6122
      %v6172 = vmul.f32 %v4734, %v6124
      %v6173 = vmul.f32 %v4810, %v6126
      %v6174 = vmul.f32 %v4886, %v6128
      %v6175 = vmul.f32 %v4962, %v6130
      %v6176 = vmul.f32 %v5038, %v6132
      %v6177 = vmul.f32 %v5114, %v6134
      %v6178 = vmul.f32 %v5190, %v6136
      %v6179 = vmul.f32 %v5266, %v6138
      %v6180 = vmul.f32 %v5342, %v6140
      %v6181 = vmul.f32 %v5418, %v6142
      %v6182 = vmul.f32 %v5494, %v6144
      %v6183 = vmul.f32 %v5570, %v6146
      %v6184 = vmul.f32 %v5646, %v6148
      %v6185 = vmul.f32 %v5722, %v6150
      %v6186 = vmul.f32 %v5798, %v6152
      %v6187 = vmul.f32 %v5874, %v6154
      %v6188 = vmul.f32 %v5950, %v6156
      %v6189 = vsel %vm286, %v6157, 0.0
      %6190 = vadd.xlane.f32.xlu0 %v6189
      %v6191 = vpop.xlane.xlu0 %6190
      %v6192 = vsel %vm286, %v6158, 0.0
      %6193 = vadd.xlane.f32.xlu0 %v6192
      %v6194 = vpop.xlane.xlu0 %6193
      %v6195 = vsel %vm286, %v6159, 0.0
      %6196 = vadd.xlane.f32.xlu0 %v6195
      %v6197 = vpop.xlane.xlu0 %6196
      %v6198 = vsel %vm286, %v6160, 0.0
      %6199 = vadd.xlane.f32.xlu0 %v6198
      %v6200 = vpop.xlane.xlu0 %6199
      %v6201 = vsel %vm286, %v6161, 0.0
      %6202 = vadd.xlane.f32.xlu0 %v6201
      %v6203 = vpop.xlane.xlu0 %6202
      %v6204 = vsel %vm286, %v6162, 0.0
      %6205 = vadd.xlane.f32.xlu0 %v6204
      %v6206 = vpop.xlane.xlu0 %6205
      %v6207 = vsel %vm286, %v6163, 0.0
      %6208 = vadd.xlane.f32.xlu0 %v6207
      %v6209 = vpop.xlane.xlu0 %6208
      %v6210 = vsel %vm286, %v6164, 0.0
      %6211 = vadd.xlane.f32.xlu0 %v6210
      %v6212 = vpop.xlane.xlu0 %6211
      %v6213 = vsel %vm286, %v6165, 0.0
      %6214 = vadd.xlane.f32.xlu0 %v6213
      %v6215 = vpop.xlane.xlu0 %6214
      %v6216 = vsel %vm286, %v6166, 0.0
      %6217 = vadd.xlane.f32.xlu0 %v6216
      %v6218 = vpop.xlane.xlu0 %6217
      %v6219 = vsel %vm286, %v6167, 0.0
      %6220 = vadd.xlane.f32.xlu0 %v6219
      %v6221 = vpop.xlane.xlu0 %6220
      %v6222 = vsel %vm286, %v6168, 0.0
      %6223 = vadd.xlane.f32.xlu0 %v6222
      %v6224 = vpop.xlane.xlu0 %6223
      %v6225 = vsel %vm286, %v6169, 0.0
      %6226 = vadd.xlane.f32.xlu0 %v6225
      %v6227 = vpop.xlane.xlu0 %6226
      %v6228 = vsel %vm286, %v6170, 0.0
      %6229 = vadd.xlane.f32.xlu0 %v6228
      %v6230 = vpop.xlane.xlu0 %6229
      %v6231 = vsel %vm286, %v6171, 0.0
      %6232 = vadd.xlane.f32.xlu0 %v6231
      %v6233 = vpop.xlane.xlu0 %6232
      %v6234 = vsel %vm286, %v6172, 0.0
      %6235 = vadd.xlane.f32.xlu0 %v6234
      %v6236 = vpop.xlane.xlu0 %6235
      %v6237 = vsel %vm286, %v6173, 0.0
      %6238 = vadd.xlane.f32.xlu0 %v6237
      %v6239 = vpop.xlane.xlu0 %6238
      %v6240 = vsel %vm286, %v6174, 0.0
      %6241 = vadd.xlane.f32.xlu0 %v6240
      %v6242 = vpop.xlane.xlu0 %6241
      %v6243 = vsel %vm286, %v6175, 0.0
      %6244 = vadd.xlane.f32.xlu0 %v6243
      %v6245 = vpop.xlane.xlu0 %6244
      %v6246 = vsel %vm286, %v6176, 0.0
      %6247 = vadd.xlane.f32.xlu0 %v6246
      %v6248 = vpop.xlane.xlu0 %6247
      %v6249 = vsel %vm286, %v6177, 0.0
      %6250 = vadd.xlane.f32.xlu0 %v6249
      %v6251 = vpop.xlane.xlu0 %6250
      %v6252 = vsel %vm286, %v6178, 0.0
      %6253 = vadd.xlane.f32.xlu0 %v6252
      %v6254 = vpop.xlane.xlu0 %6253
      %v6255 = vsel %vm286, %v6179, 0.0
      %6256 = vadd.xlane.f32.xlu0 %v6255
      %v6257 = vpop.xlane.xlu0 %6256
      %v6258 = vsel %vm286, %v6180, 0.0
      %6259 = vadd.xlane.f32.xlu0 %v6258
      %v6260 = vpop.xlane.xlu0 %6259
      %v6261 = vsel %vm286, %v6181, 0.0
      %6262 = vadd.xlane.f32.xlu0 %v6261
      %v6263 = vpop.xlane.xlu0 %6262
      %v6264 = vsel %vm286, %v6182, 0.0
      %6265 = vadd.xlane.f32.xlu0 %v6264
      %v6266 = vpop.xlane.xlu0 %6265
      %v6267 = vsel %vm286, %v6183, 0.0
      %6268 = vadd.xlane.f32.xlu0 %v6267
      %v6269 = vpop.xlane.xlu0 %6268
      %v6270 = vsel %vm286, %v6184, 0.0
      %6271 = vadd.xlane.f32.xlu0 %v6270
      %v6272 = vpop.xlane.xlu0 %6271
      %v6273 = vsel %vm286, %v6185, 0.0
      %6274 = vadd.xlane.f32.xlu0 %v6273
      %v6275 = vpop.xlane.xlu0 %6274
      %v6276 = vsel %vm286, %v6186, 0.0
      %6277 = vadd.xlane.f32.xlu0 %v6276
      %v6278 = vpop.xlane.xlu0 %6277
      %v6279 = vsel %vm286, %v6187, 0.0
      %6280 = vadd.xlane.f32.xlu0 %v6279
      %v6281 = vpop.xlane.xlu0 %6280
      %v6282 = vsel %vm286, %v6188, 0.0
      %6283 = vadd.xlane.f32.xlu0 %v6282
      %v6284 = vpop.xlane.xlu0 %6283
      %v6285 = vrcp.pop 32.0
      %v6286 = vmul.f32 %v6191, %v6285
      %v6287 = vmul.f32 %v6194, %v6285
      %v6288 = vmul.f32 %v6197, %v6285
      %v6289 = vmul.f32 %v6200, %v6285
      %v6290 = vmul.f32 %v6203, %v6285
      %v6291 = vmul.f32 %v6206, %v6285
      %v6292 = vmul.f32 %v6209, %v6285
      %v6293 = vmul.f32 %v6212, %v6285
      %v6294 = vmul.f32 %v6215, %v6285
      %v6295 = vmul.f32 %v6218, %v6285
      %v6296 = vmul.f32 %v6221, %v6285
      %v6297 = vmul.f32 %v6224, %v6285
      %v6298 = vmul.f32 %v6227, %v6285
      %v6299 = vmul.f32 %v6230, %v6285
      %v6300 = vmul.f32 %v6233, %v6285
      %v6301 = vmul.f32 %v6236, %v6285
      %v6302 = vmul.f32 %v6239, %v6285
      %v6303 = vmul.f32 %v6242, %v6285
      %v6304 = vmul.f32 %v6245, %v6285
      %v6305 = vmul.f32 %v6248, %v6285
      %v6306 = vmul.f32 %v6251, %v6285
      %v6307 = vmul.f32 %v6254, %v6285
      %v6308 = vmul.f32 %v6257, %v6285
      %v6309 = vmul.f32 %v6260, %v6285
      %v6310 = vmul.f32 %v6263, %v6285
      %v6311 = vmul.f32 %v6266, %v6285
      %v6312 = vmul.f32 %v6269, %v6285
      %v6313 = vmul.f32 %v6272, %v6285
      %v6314 = vmul.f32 %v6275, %v6285
      %v6315 = vmul.f32 %v6278, %v6285
      %v6316 = vmul.f32 %v6281, %v6285
      %v6317 = vmul.f32 %v6284, %v6285
      %v6318 = vsub.f32 %v6157, %v6286
      %v6319 = vsub.f32 %v6158, %v6287
      %v6320 = vsub.f32 %v6159, %v6288
      %v6321 = vsub.f32 %v6160, %v6289
      %v6322 = vsub.f32 %v6161, %v6290
      %v6323 = vsub.f32 %v6162, %v6291
      %v6324 = vsub.f32 %v6163, %v6292
      %v6325 = vsub.f32 %v6164, %v6293
      %v6326 = vsub.f32 %v6165, %v6294
      %v6327 = vsub.f32 %v6166, %v6295
      %v6328 = vsub.f32 %v6167, %v6296
      %v6329 = vsub.f32 %v6168, %v6297
      %v6330 = vsub.f32 %v6169, %v6298
      %v6331 = vsub.f32 %v6170, %v6299
      %v6332 = vsub.f32 %v6171, %v6300
      %v6333 = vsub.f32 %v6172, %v6301
      %v6334 = vsub.f32 %v6173, %v6302
      %v6335 = vsub.f32 %v6174, %v6303
      %v6336 = vsub.f32 %v6175, %v6304
      %v6337 = vsub.f32 %v6176, %v6305
      %v6338 = vsub.f32 %v6177, %v6306
      %v6339 = vsub.f32 %v6178, %v6307
      %v6340 = vsub.f32 %v6179, %v6308
      %v6341 = vsub.f32 %v6180, %v6309
      %v6342 = vsub.f32 %v6181, %v6310
      %v6343 = vsub.f32 %v6182, %v6311
      %v6344 = vsub.f32 %v6183, %v6312
      %v6345 = vsub.f32 %v6184, %v6313
      %v6346 = vsub.f32 %v6185, %v6314
      %v6347 = vsub.f32 %v6186, %v6315
      %v6348 = vsub.f32 %v6187, %v6316
      %v6349 = vsub.f32 %v6188, %v6317
      %v6350 = vmul.f32 %v6318, %v6318
      %v6351 = vmul.f32 %v6319, %v6319
      %v6352 = vmul.f32 %v6320, %v6320
      %v6353 = vmul.f32 %v6321, %v6321
      %v6354 = vmul.f32 %v6322, %v6322
      %v6355 = vmul.f32 %v6323, %v6323
      %v6356 = vmul.f32 %v6324, %v6324
      %v6357 = vmul.f32 %v6325, %v6325
      %v6358 = vmul.f32 %v6326, %v6326
      %v6359 = vmul.f32 %v6327, %v6327
      %v6360 = vmul.f32 %v6328, %v6328
      %v6361 = vmul.f32 %v6329, %v6329
      %v6362 = vmul.f32 %v6330, %v6330
      %v6363 = vmul.f32 %v6331, %v6331
      %v6364 = vmul.f32 %v6332, %v6332
      %v6365 = vmul.f32 %v6333, %v6333
      %v6366 = vmul.f32 %v6334, %v6334
      %v6367 = vmul.f32 %v6335, %v6335
      %v6368 = vmul.f32 %v6336, %v6336
      %v6369 = vmul.f32 %v6337, %v6337
      %v6370 = vmul.f32 %v6338, %v6338
      %v6371 = vmul.f32 %v6339, %v6339
      %v6372 = vmul.f32 %v6340, %v6340
      %v6373 = vmul.f32 %v6341, %v6341
      %v6374 = vmul.f32 %v6342, %v6342
      %v6375 = vmul.f32 %v6343, %v6343
      %v6376 = vmul.f32 %v6344, %v6344
      %v6377 = vmul.f32 %v6345, %v6345
      %v6378 = vmul.f32 %v6346, %v6346
      %v6379 = vmul.f32 %v6347, %v6347
      %v6380 = vmul.f32 %v6348, %v6348
      %v6381 = vmul.f32 %v6349, %v6349
      %v6382 = vsel %vm286, %v6350, 0.0
      %6383 = vadd.xlane.f32.xlu0 %v6382
      %v6384 = vpop.xlane.xlu0 %6383
      %v6385 = vsel %vm286, %v6351, 0.0
      %6386 = vadd.xlane.f32.xlu0 %v6385
      %v6387 = vpop.xlane.xlu0 %6386
      %v6388 = vsel %vm286, %v6352, 0.0
      %6389 = vadd.xlane.f32.xlu0 %v6388
      %v6390 = vpop.xlane.xlu0 %6389
      %v6391 = vsel %vm286, %v6353, 0.0
      %6392 = vadd.xlane.f32.xlu0 %v6391
      %v6393 = vpop.xlane.xlu0 %6392
      %v6394 = vsel %vm286, %v6354, 0.0
      %6395 = vadd.xlane.f32.xlu0 %v6394
      %v6396 = vpop.xlane.xlu0 %6395
      %v6397 = vsel %vm286, %v6355, 0.0
      %6398 = vadd.xlane.f32.xlu0 %v6397
      %v6399 = vpop.xlane.xlu0 %6398
      %v6400 = vsel %vm286, %v6356, 0.0
      %6401 = vadd.xlane.f32.xlu0 %v6400
      %v6402 = vpop.xlane.xlu0 %6401
      %v6403 = vsel %vm286, %v6357, 0.0
      %6404 = vadd.xlane.f32.xlu0 %v6403
      %v6405 = vpop.xlane.xlu0 %6404
      %v6406 = vsel %vm286, %v6358, 0.0
      %6407 = vadd.xlane.f32.xlu0 %v6406
      %v6408 = vpop.xlane.xlu0 %6407
      %v6409 = vsel %vm286, %v6359, 0.0
      %6410 = vadd.xlane.f32.xlu0 %v6409
      %v6411 = vpop.xlane.xlu0 %6410
      %v6412 = vsel %vm286, %v6360, 0.0
      %6413 = vadd.xlane.f32.xlu0 %v6412
      %v6414 = vpop.xlane.xlu0 %6413
      %v6415 = vsel %vm286, %v6361, 0.0
      %6416 = vadd.xlane.f32.xlu0 %v6415
      %v6417 = vpop.xlane.xlu0 %6416
      %v6418 = vsel %vm286, %v6362, 0.0
      %6419 = vadd.xlane.f32.xlu0 %v6418
      %v6420 = vpop.xlane.xlu0 %6419
      %v6421 = vsel %vm286, %v6363, 0.0
      %6422 = vadd.xlane.f32.xlu0 %v6421
      %v6423 = vpop.xlane.xlu0 %6422
      %v6424 = vsel %vm286, %v6364, 0.0
      %6425 = vadd.xlane.f32.xlu0 %v6424
      %v6426 = vpop.xlane.xlu0 %6425
      %v6427 = vsel %vm286, %v6365, 0.0
      %6428 = vadd.xlane.f32.xlu0 %v6427
      %v6429 = vpop.xlane.xlu0 %6428
      %v6430 = vsel %vm286, %v6366, 0.0
      %6431 = vadd.xlane.f32.xlu0 %v6430
      %v6432 = vpop.xlane.xlu0 %6431
      %v6433 = vsel %vm286, %v6367, 0.0
      %6434 = vadd.xlane.f32.xlu0 %v6433
      %v6435 = vpop.xlane.xlu0 %6434
      %v6436 = vsel %vm286, %v6368, 0.0
      %6437 = vadd.xlane.f32.xlu0 %v6436
      %v6438 = vpop.xlane.xlu0 %6437
      %v6439 = vsel %vm286, %v6369, 0.0
      %6440 = vadd.xlane.f32.xlu0 %v6439
      %v6441 = vpop.xlane.xlu0 %6440
      %v6442 = vsel %vm286, %v6370, 0.0
      %6443 = vadd.xlane.f32.xlu0 %v6442
      %v6444 = vpop.xlane.xlu0 %6443
      %v6445 = vsel %vm286, %v6371, 0.0
      %6446 = vadd.xlane.f32.xlu0 %v6445
      %v6447 = vpop.xlane.xlu0 %6446
      %v6448 = vsel %vm286, %v6372, 0.0
      %6449 = vadd.xlane.f32.xlu0 %v6448
      %v6450 = vpop.xlane.xlu0 %6449
      %v6451 = vsel %vm286, %v6373, 0.0
      %6452 = vadd.xlane.f32.xlu0 %v6451
      %v6453 = vpop.xlane.xlu0 %6452
      %v6454 = vsel %vm286, %v6374, 0.0
      %6455 = vadd.xlane.f32.xlu0 %v6454
      %v6456 = vpop.xlane.xlu0 %6455
      %v6457 = vsel %vm286, %v6375, 0.0
      %6458 = vadd.xlane.f32.xlu0 %v6457
      %v6459 = vpop.xlane.xlu0 %6458
      %v6460 = vsel %vm286, %v6376, 0.0
      %6461 = vadd.xlane.f32.xlu0 %v6460
      %v6462 = vpop.xlane.xlu0 %6461
      %v6463 = vsel %vm286, %v6377, 0.0
      %6464 = vadd.xlane.f32.xlu0 %v6463
      %v6465 = vpop.xlane.xlu0 %6464
      %v6466 = vsel %vm286, %v6378, 0.0
      %6467 = vadd.xlane.f32.xlu0 %v6466
      %v6468 = vpop.xlane.xlu0 %6467
      %v6469 = vsel %vm286, %v6379, 0.0
      %6470 = vadd.xlane.f32.xlu0 %v6469
      %v6471 = vpop.xlane.xlu0 %6470
      %v6472 = vsel %vm286, %v6380, 0.0
      %6473 = vadd.xlane.f32.xlu0 %v6472
      %v6474 = vpop.xlane.xlu0 %6473
      %v6475 = vsel %vm286, %v6381, 0.0
      %6476 = vadd.xlane.f32.xlu0 %v6475
      %v6477 = vpop.xlane.xlu0 %6476
      %v6478 = vmul.f32 %v6384, %v6285
      %v6479 = vmul.f32 %v6387, %v6285
      %v6480 = vmul.f32 %v6390, %v6285
      %v6481 = vmul.f32 %v6393, %v6285
      %v6482 = vmul.f32 %v6396, %v6285
      %v6483 = vmul.f32 %v6399, %v6285
      %v6484 = vmul.f32 %v6402, %v6285
      %v6485 = vmul.f32 %v6405, %v6285
      %v6486 = vmul.f32 %v6408, %v6285
      %v6487 = vmul.f32 %v6411, %v6285
      %v6488 = vmul.f32 %v6414, %v6285
      %v6489 = vmul.f32 %v6417, %v6285
      %v6490 = vmul.f32 %v6420, %v6285
      %v6491 = vmul.f32 %v6423, %v6285
      %v6492 = vmul.f32 %v6426, %v6285
      %v6493 = vmul.f32 %v6429, %v6285
      %v6494 = vmul.f32 %v6432, %v6285
      %v6495 = vmul.f32 %v6435, %v6285
      %v6496 = vmul.f32 %v6438, %v6285
      %v6497 = vmul.f32 %v6441, %v6285
      %v6498 = vmul.f32 %v6444, %v6285
      %v6499 = vmul.f32 %v6447, %v6285
      %v6500 = vmul.f32 %v6450, %v6285
      %v6501 = vmul.f32 %v6453, %v6285
      %v6502 = vmul.f32 %v6456, %v6285
      %v6503 = vmul.f32 %v6459, %v6285
      %v6504 = vmul.f32 %v6462, %v6285
      %v6505 = vmul.f32 %v6465, %v6285
      %v6506 = vmul.f32 %v6468, %v6285
      %v6507 = vmul.f32 %v6471, %v6285
      %v6508 = vmul.f32 %v6474, %v6285
      %v6509 = vmul.f32 %v6477, %v6285
      %v6510 = vadd.f32 %v6478, 1e-05
      %v6511 = vadd.f32 %v6479, 1e-05
      %v6512 = vadd.f32 %v6480, 1e-05
      %v6513 = vadd.f32 %v6481, 1e-05
      %v6514 = vadd.f32 %v6482, 1e-05
      %v6515 = vadd.f32 %v6483, 1e-05
      %v6516 = vadd.f32 %v6484, 1e-05
      %v6517 = vadd.f32 %v6485, 1e-05
      %v6518 = vadd.f32 %v6486, 1e-05
      %v6519 = vadd.f32 %v6487, 1e-05
      %v6520 = vadd.f32 %v6488, 1e-05
      %v6521 = vadd.f32 %v6489, 1e-05
      %v6522 = vadd.f32 %v6490, 1e-05
      %v6523 = vadd.f32 %v6491, 1e-05
      %v6524 = vadd.f32 %v6492, 1e-05
      %v6525 = vadd.f32 %v6493, 1e-05
      %v6526 = vadd.f32 %v6494, 1e-05
      %v6527 = vadd.f32 %v6495, 1e-05
      %v6528 = vadd.f32 %v6496, 1e-05
      %v6529 = vadd.f32 %v6497, 1e-05
      %v6530 = vadd.f32 %v6498, 1e-05
      %v6531 = vadd.f32 %v6499, 1e-05
      %v6532 = vadd.f32 %v6500, 1e-05
      %v6533 = vadd.f32 %v6501, 1e-05
      %v6534 = vadd.f32 %v6502, 1e-05
      %v6535 = vadd.f32 %v6503, 1e-05
      %v6536 = vadd.f32 %v6504, 1e-05
      %v6537 = vadd.f32 %v6505, 1e-05
      %v6538 = vadd.f32 %v6506, 1e-05
      %v6539 = vadd.f32 %v6507, 1e-05
      %v6540 = vadd.f32 %v6508, 1e-05
      %v6541 = vadd.f32 %v6509, 1e-05
      %v6542 = vrsqrt.pop %v6510
      %v6543 = vrsqrt.pop %v6511
      %v6544 = vrsqrt.pop %v6512
      %v6545 = vrsqrt.pop %v6513
      %v6546 = vrsqrt.pop %v6514
      %v6547 = vrsqrt.pop %v6515
      %v6548 = vrsqrt.pop %v6516
      %v6549 = vrsqrt.pop %v6517
      %v6550 = vrsqrt.pop %v6518
      %v6551 = vrsqrt.pop %v6519
      %v6552 = vrsqrt.pop %v6520
      %v6553 = vrsqrt.pop %v6521
      %v6554 = vrsqrt.pop %v6522
      %v6555 = vrsqrt.pop %v6523
      %v6556 = vrsqrt.pop %v6524
      %v6557 = vrsqrt.pop %v6525
      %v6558 = vrsqrt.pop %v6526
      %v6559 = vrsqrt.pop %v6527
      %v6560 = vrsqrt.pop %v6528
      %v6561 = vrsqrt.pop %v6529
      %v6562 = vrsqrt.pop %v6530
      %v6563 = vrsqrt.pop %v6531
      %v6564 = vrsqrt.pop %v6532
      %v6565 = vrsqrt.pop %v6533
      %v6566 = vrsqrt.pop %v6534
      %v6567 = vrsqrt.pop %v6535
      %v6568 = vrsqrt.pop %v6536
      %v6569 = vrsqrt.pop %v6537
      %v6570 = vrsqrt.pop %v6538
      %v6571 = vrsqrt.pop %v6539
      %v6572 = vrsqrt.pop %v6540
      %v6573 = vrsqrt.pop %v6541
      %v6574 = vmul.f32 %v6318, %v6542
      %v6575 = vmul.f32 %v6319, %v6543
      %v6576 = vmul.f32 %v6320, %v6544
      %v6577 = vmul.f32 %v6321, %v6545
      %v6578 = vmul.f32 %v6322, %v6546
      %v6579 = vmul.f32 %v6323, %v6547
      %v6580 = vmul.f32 %v6324, %v6548
      %v6581 = vmul.f32 %v6325, %v6549
      %v6582 = vmul.f32 %v6326, %v6550
      %v6583 = vmul.f32 %v6327, %v6551
      %v6584 = vmul.f32 %v6328, %v6552
      %v6585 = vmul.f32 %v6329, %v6553
      %v6586 = vmul.f32 %v6330, %v6554
      %v6587 = vmul.f32 %v6331, %v6555
      %v6588 = vmul.f32 %v6332, %v6556
      %v6589 = vmul.f32 %v6333, %v6557
      %v6590 = vmul.f32 %v6334, %v6558
      %v6591 = vmul.f32 %v6335, %v6559
      %v6592 = vmul.f32 %v6336, %v6560
      %v6593 = vmul.f32 %v6337, %v6561
      %v6594 = vmul.f32 %v6338, %v6562
      %v6595 = vmul.f32 %v6339, %v6563
      %v6596 = vmul.f32 %v6340, %v6564
      %v6597 = vmul.f32 %v6341, %v6565
      %v6598 = vmul.f32 %v6342, %v6566
      %v6599 = vmul.f32 %v6343, %v6567
      %v6600 = vmul.f32 %v6344, %v6568
      %v6601 = vmul.f32 %v6345, %v6569
      %v6602 = vmul.f32 %v6346, %v6570
      %v6603 = vmul.f32 %v6347, %v6571
      %v6604 = vmul.f32 %v6348, %v6572
      %v6605 = vmul.f32 %v6349, %v6573
      %v6606 = vlaneseq
      %v6607 = vshrl.u32 %v6606, 7
      %v6608 = vsub.s32 0, %v6607
      %v6609 = vrot.slane %v5953, %v6608
      %v6610 = vmul.f32 %v6574, %v6609
      %v6611 = vmul.f32 %v6575, %v6609
      %v6612 = vmul.f32 %v6576, %v6609
      %v6613 = vmul.f32 %v6577, %v6609
      %v6614 = vmul.f32 %v6578, %v6609
      %v6615 = vmul.f32 %v6579, %v6609
      %v6616 = vmul.f32 %v6580, %v6609
      %v6617 = vmul.f32 %v6581, %v6609
      %v6618 = vmul.f32 %v6582, %v6609
      %v6619 = vmul.f32 %v6583, %v6609
      %v6620 = vmul.f32 %v6584, %v6609
      %v6621 = vmul.f32 %v6585, %v6609
      %v6622 = vmul.f32 %v6586, %v6609
      %v6623 = vmul.f32 %v6587, %v6609
      %v6624 = vmul.f32 %v6588, %v6609
      %v6625 = vmul.f32 %v6589, %v6609
      %v6626 = vmul.f32 %v6590, %v6609
      %v6627 = vmul.f32 %v6591, %v6609
      %v6628 = vmul.f32 %v6592, %v6609
      %v6629 = vmul.f32 %v6593, %v6609
      %v6630 = vmul.f32 %v6594, %v6609
      %v6631 = vmul.f32 %v6595, %v6609
      %v6632 = vmul.f32 %v6596, %v6609
      %v6633 = vmul.f32 %v6597, %v6609
      %v6634 = vmul.f32 %v6598, %v6609
      %v6635 = vmul.f32 %v6599, %v6609
      %v6636 = vmul.f32 %v6600, %v6609
      %v6637 = vmul.f32 %v6601, %v6609
      %v6638 = vmul.f32 %v6602, %v6609
      %v6639 = vmul.f32 %v6603, %v6609
      %v6640 = vmul.f32 %v6604, %v6609
      %v6641 = vmul.f32 %v6605, %v6609
      %v6642 = vlaneseq
      %v6643 = vshrl.u32 %v6642, 7
      %v6644 = vsub.s32 0, %v6643
      %v6645 = vrot.slane %v5954, %v6644
      %v6646 = vadd.f32 %v6610, %v6645
      %v6647 = vadd.f32 %v6611, %v6645
      %v6648 = vadd.f32 %v6612, %v6645
      %v6649 = vadd.f32 %v6613, %v6645
      %v6650 = vadd.f32 %v6614, %v6645
      %v6651 = vadd.f32 %v6615, %v6645
      %v6652 = vadd.f32 %v6616, %v6645
      %v6653 = vadd.f32 %v6617, %v6645
      %v6654 = vadd.f32 %v6618, %v6645
      %v6655 = vadd.f32 %v6619, %v6645
      %v6656 = vadd.f32 %v6620, %v6645
      %v6657 = vadd.f32 %v6621, %v6645
      %v6658 = vadd.f32 %v6622, %v6645
      %v6659 = vadd.f32 %v6623, %v6645
      %v6660 = vadd.f32 %v6624, %v6645
      %v6661 = vadd.f32 %v6625, %v6645
      %v6662 = vadd.f32 %v6626, %v6645
      %v6663 = vadd.f32 %v6627, %v6645
      %v6664 = vadd.f32 %v6628, %v6645
      %v6665 = vadd.f32 %v6629, %v6645
      %v6666 = vadd.f32 %v6630, %v6645
      %v6667 = vadd.f32 %v6631, %v6645
      %v6668 = vadd.f32 %v6632, %v6645
      %v6669 = vadd.f32 %v6633, %v6645
      %v6670 = vadd.f32 %v6634, %v6645
      %v6671 = vadd.f32 %v6635, %v6645
      %v6672 = vadd.f32 %v6636, %v6645
      %v6673 = vadd.f32 %v6637, %v6645
      %v6674 = vadd.f32 %v6638, %v6645
      %v6675 = vadd.f32 %v6639, %v6645
      %v6676 = vadd.f32 %v6640, %v6645
      %v6677 = vadd.f32 %v6641, %v6645
      %v6678 = vlaneseq
      %v6679 = vshrl.u32 %v6678, 7
      %v6680 = vsub.s32 0, %v6679
      %v6681 = vrot.slane %v5955, %v6680
      %v6683 = vsel %vm286, %v6646, 0
      %v6686 = vsel %vm286, %v6647, 0
      %v6689 = vsel %vm286, %v6648, 0
      %v6692 = vsel %vm286, %v6649, 0
      %v6695 = vsel %vm286, %v6650, 0
      %v6698 = vsel %vm286, %v6651, 0
      %v6701 = vsel %vm286, %v6652, 0
      %v6704 = vsel %vm286, %v6653, 0
      %v6707 = vsel %vm286, %v6654, 0
      %v6710 = vsel %vm286, %v6655, 0
      %v6713 = vsel %vm286, %v6656, 0
      %v6716 = vsel %vm286, %v6657, 0
      %v6719 = vsel %vm286, %v6658, 0
      %v6722 = vsel %vm286, %v6659, 0
      %v6725 = vsel %vm286, %v6660, 0
      %v6728 = vsel %vm286, %v6661, 0
      %v6731 = vsel %vm286, %v6662, 0
      %v6734 = vsel %vm286, %v6663, 0
      %v6737 = vsel %vm286, %v6664, 0
      %v6740 = vsel %vm286, %v6665, 0
      %v6743 = vsel %vm286, %v6666, 0
      %v6746 = vsel %vm286, %v6667, 0
      %v6749 = vsel %vm286, %v6668, 0
      %v6752 = vsel %vm286, %v6669, 0
      %v6755 = vsel %vm286, %v6670, 0
      %v6758 = vsel %vm286, %v6671, 0
      %v6761 = vsel %vm286, %v6672, 0
      %v6764 = vsel %vm286, %v6673, 0
      %v6767 = vsel %vm286, %v6674, 0
      %v6770 = vsel %vm286, %v6675, 0
      %v6773 = vsel %vm286, %v6676, 0
      %v6776 = vsel %vm286, %v6677, 0
      %6778 = vmatprep.subr.mxu0 0.0
      %6779 = vmatpush1.msra.mxu0 %v5961
      %6780 = vmatprep.subr.mxu0 0.0
      %6781 = vmatpush1.msra.mxu0 %v5962
      %6782 = vmatprep.subr.mxu0 0.0
      %6783 = vmatpush1.msra.mxu0 %v5963
      %6784 = vmatprep.subr.mxu0 0.0
      %6785 = vmatpush1.msra.mxu0 %v5964
      %6786 = vmatprep.subr.mxu0 0.0
      %6787 = vmatpush1.msra.mxu0 0.0
      %6788 = vmatprep.subr.mxu0 0.0
      %6789 = vmatpush1.msra.mxu0 0.0
      %6790 = vmatprep.subr.mxu0 0.0
      %6791 = vmatpush1.msra.mxu0 0.0
      %6792 = vmatprep.subr.mxu0 0.0
      %6793 = vmatpush1.msra.mxu0 0.0
      %6794 = vmatprep.subr.mxu0 0.0
      %6795 = vmatpush1.msra.mxu0 0.0
      %6796 = vmatprep.subr.mxu0 0.0
      %6797 = vmatpush1.msra.mxu0 0.0
      %6798 = vmatprep.subr.mxu0 0.0
      %6799 = vmatpush1.msra.mxu0 0.0
      %6800 = vmatprep.subr.mxu0 0.0
      %6801 = vmatpush1.msra.mxu0 0.0
      %6802 = vmatprep.subr.mxu0 0.0
      %6803 = vmatpush1.msra.mxu0 0.0
      %6804 = vmatprep.subr.mxu0 0.0
      %6805 = vmatpush1.msra.mxu0 0.0
      %6806 = vmatprep.subr.mxu0 0.0
      %6807 = vmatpush1.msra.mxu0 0.0
      %6808 = vmatprep.subr.mxu0 0.0
      %6809 = vmatpush1.msra.mxu0 0.0
      %6810 = vmatprep.subr.mxu0 0.0
      %6811 = vmatpush1.msra.mxu0 0.0
      %6812 = vmatprep.subr.mxu0 0.0
      %6813 = vmatpush1.msra.mxu0 0.0
      %6814 = vmatprep.subr.mxu0 0.0
      %6815 = vmatpush1.msra.mxu0 0.0
      %6816 = vmatprep.subr.mxu0 0.0
      %6817 = vmatpush1.msra.mxu0 0.0
      %6818 = vmatprep.subr.mxu0 0.0
      %6819 = vmatpush1.msra.mxu0 0.0
      %6820 = vmatprep.subr.mxu0 0.0
      %6821 = vmatpush1.msra.mxu0 0.0
      %6822 = vmatprep.subr.mxu0 0.0
      %6823 = vmatpush1.msra.mxu0 0.0
      %6824 = vmatprep.subr.mxu0 0.0
      %6825 = vmatpush1.msra.mxu0 0.0
      %6826 = vmatprep.subr.mxu0 0.0
      %6827 = vmatpush1.msra.mxu0 0.0
      %6828 = vmatprep.subr.mxu0 0.0
      %6829 = vmatpush1.msra.mxu0 0.0
      %6830 = vmatprep.subr.mxu0 0.0
      %6831 = vmatpush1.msra.mxu0 0.0
      %6832 = vmatprep.subr.mxu0 0.0
      %6833 = vmatpush1.msra.mxu0 0.0
      %6834 = vmatprep.subr.mxu0 0.0
      %6835 = vmatpush1.msra.mxu0 0.0
      %6836 = vmatprep.subr.mxu0 0.0
      %6837 = vmatpush1.msra.mxu0 0.0
      %6838 = vmatprep.subr.mxu0 0.0
      %6839 = vmatpush1.msra.mxu0 0.0
      %6840 = vmatprep.subr.mxu0 0.0
      %6841 = vmatpush1.msra.mxu0 0.0
      %6842 = vmatprep.mubr.f32.mxu0 0.0
      %6843 = vmatmul.mubr.f32.gmra.mrb[0].mxu0 %v6683
      %v6844 = vpop.f32.mrb[0].mxu0
      %v6845 = vadd.f32 %v6681, %v6844
      %v6846 = vpop.f32.mrb[0].mxu0
      %6847 = vmatprep.mubr.f32.mxu0 0.0
      %6848 = vmatmul.mubr.f32.gmra.mrb[0].mxu0 %v6686
      %v6849 = vpop.f32.mrb[0].mxu0
      %v6850 = vadd.f32 %v6681, %v6849
      %v6851 = vpop.f32.mrb[0].mxu0
      %6852 = vmatprep.mubr.f32.mxu0 0.0
      %6853 = vmatmul.mubr.f32.gmra.mrb[0].mxu0 %v6689
      %v6854 = vpop.f32.mrb[0].mxu0
      %v6855 = vadd.f32 %v6681, %v6854
      %v6856 = vpop.f32.mrb[0].mxu0
      %6857 = vmatprep.mubr.f32.mxu0 0.0
      %6858 = vmatmul.mubr.f32.gmra.mrb[0].mxu0 %v6692
      %v6859 = vpop.f32.mrb[0].mxu0
      %v6860 = vadd.f32 %v6681, %v6859
      %v6861 = vpop.f32.mrb[0].mxu0
      %6862 = vmatprep.mubr.f32.mxu0 0.0
      %6863 = vmatmul.mubr.f32.gmra.mrb[0].mxu0 %v6695
      %v6864 = vpop.f32.mrb[0].mxu0
      %v6865 = vadd.f32 %v6681, %v6864
      %v6866 = vpop.f32.mrb[0].mxu0
      %6867 = vmatprep.mubr.f32.mxu0 0.0
      %6868 = vmatmul.mubr.f32.gmra.mrb[0].mxu0 %v6698
      %v6869 = vpop.f32.mrb[0].mxu0
      %v6870 = vadd.f32 %v6681, %v6869
      %v6871 = vpop.f32.mrb[0].mxu0
      %6872 = vmatprep.mubr.f32.mxu0 0.0
      %6873 = vmatmul.mubr.f32.gmra.mrb[0].mxu0 %v6701
      %v6874 = vpop.f32.mrb[0].mxu0
      %v6875 = vadd.f32 %v6681, %v6874
      %v6876 = vpop.f32.mrb[0].mxu0
      %6877 = vmatprep.mubr.f32.mxu0 0.0
      %6878 = vmatmul.mubr.f32.gmra.mrb[0].mxu0 %v6704
      %v6879 = vpop.f32.mrb[0].mxu0
      %v6880 = vadd.f32 %v6681, %v6879
      %v6881 = vpop.f32.mrb[0].mxu0
      %6882 = vmatprep.mubr.f32.mxu0 0.0
      %6883 = vmatmul.mubr.f32.gmra.mrb[0].mxu0 %v6707
      %v6884 = vpop.f32.mrb[0].mxu0
      %v6885 = vadd.f32 %v6681, %v6884
      %v6886 = vpop.f32.mrb[0].mxu0
      %6887 = vmatprep.mubr.f32.mxu0 0.0
      %6888 = vmatmul.mubr.f32.gmra.mrb[0].mxu0 %v6710
      %v6889 = vpop.f32.mrb[0].mxu0
      %v6890 = vadd.f32 %v6681, %v6889
      %v6891 = vpop.f32.mrb[0].mxu0
      %6892 = vmatprep.mubr.f32.mxu0 0.0
      %6893 = vmatmul.mubr.f32.gmra.mrb[0].mxu0 %v6713
      %v6894 = vpop.f32.mrb[0].mxu0
      %v6895 = vadd.f32 %v6681, %v6894
      %v6896 = vpop.f32.mrb[0].mxu0
      %6897 = vmatprep.mubr.f32.mxu0 0.0
      %6898 = vmatmul.mubr.f32.gmra.mrb[0].mxu0 %v6716
      %v6899 = vpop.f32.mrb[0].mxu0
      %v6900 = vadd.f32 %v6681, %v6899
      %v6901 = vpop.f32.mrb[0].mxu0
      %6902 = vmatprep.mubr.f32.mxu0 0.0
      %6903 = vmatmul.mubr.f32.gmra.mrb[0].mxu0 %v6719
      %v6904 = vpop.f32.mrb[0].mxu0
      %v6905 = vadd.f32 %v6681, %v6904
      %v6906 = vpop.f32.mrb[0].mxu0
      %6907 = vmatprep.mubr.f32.mxu0 0.0
      %6908 = vmatmul.mubr.f32.gmra.mrb[0].mxu0 %v6722
      %v6909 = vpop.f32.mrb[0].mxu0
      %v6910 = vadd.f32 %v6681, %v6909
      %v6911 = vpop.f32.mrb[0].mxu0
      %6912 = vmatprep.mubr.f32.mxu0 0.0
      %6913 = vmatmul.mubr.f32.gmra.mrb[0].mxu0 %v6725
      %v6914 = vpop.f32.mrb[0].mxu0
      %v6915 = vadd.f32 %v6681, %v6914
      %v6916 = vpop.f32.mrb[0].mxu0
      %6917 = vmatprep.mubr.f32.mxu0 0.0
      %6918 = vmatmul.mubr.f32.gmra.mrb[0].mxu0 %v6728
      %v6919 = vpop.f32.mrb[0].mxu0
      %v6920 = vadd.f32 %v6681, %v6919
      %v6921 = vpop.f32.mrb[0].mxu0
      %6922 = vmatprep.mubr.f32.mxu0 0.0
      %6923 = vmatmul.mubr.f32.gmra.mrb[0].mxu0 %v6731
      %v6924 = vpop.f32.mrb[0].mxu0
      %v6925 = vadd.f32 %v6681, %v6924
      %v6926 = vpop.f32.mrb[0].mxu0
      %6927 = vmatprep.mubr.f32.mxu0 0.0
      %6928 = vmatmul.mubr.f32.gmra.mrb[0].mxu0 %v6734
      %v6929 = vpop.f32.mrb[0].mxu0
      %v6930 = vadd.f32 %v6681, %v6929
      %v6931 = vpop.f32.mrb[0].mxu0
      %6932 = vmatprep.mubr.f32.mxu0 0.0
      %6933 = vmatmul.mubr.f32.gmra.mrb[0].mxu0 %v6737
      %v6934 = vpop.f32.mrb[0].mxu0
      %v6935 = vadd.f32 %v6681, %v6934
      %v6936 = vpop.f32.mrb[0].mxu0
      %6937 = vmatprep.mubr.f32.mxu0 0.0
      %6938 = vmatmul.mubr.f32.gmra.mrb[0].mxu0 %v6740
      %v6939 = vpop.f32.mrb[0].mxu0
      %v6940 = vadd.f32 %v6681, %v6939
      %v6941 = vpop.f32.mrb[0].mxu0
      %6942 = vmatprep.mubr.f32.mxu0 0.0
      %6943 = vmatmul.mubr.f32.gmra.mrb[0].mxu0 %v6743
      %v6944 = vpop.f32.mrb[0].mxu0
      %v6945 = vadd.f32 %v6681, %v6944
      %v6946 = vpop.f32.mrb[0].mxu0
      %6947 = vmatprep.mubr.f32.mxu0 0.0
      %6948 = vmatmul.mubr.f32.gmra.mrb[0].mxu0 %v6746
      %v6949 = vpop.f32.mrb[0].mxu0
      %v6950 = vadd.f32 %v6681, %v6949
      %v6951 = vpop.f32.mrb[0].mxu0
      %6952 = vmatprep.mubr.f32.mxu0 0.0
      %6953 = vmatmul.mubr.f32.gmra.mrb[0].mxu0 %v6749
      %v6954 = vpop.f32.mrb[0].mxu0
      %v6955 = vadd.f32 %v6681, %v6954
      %v6956 = vpop.f32.mrb[0].mxu0
      %6957 = vmatprep.mubr.f32.mxu0 0.0
      %6958 = vmatmul.mubr.f32.gmra.mrb[0].mxu0 %v6752
      %v6959 = vpop.f32.mrb[0].mxu0
      %v6960 = vadd.f32 %v6681, %v6959
      %v6961 = vpop.f32.mrb[0].mxu0
      %6962 = vmatprep.mubr.f32.mxu0 0.0
      %6963 = vmatmul.mubr.f32.gmra.mrb[0].mxu0 %v6755
      %v6964 = vpop.f32.mrb[0].mxu0
      %v6965 = vadd.f32 %v6681, %v6964
      %v6966 = vpop.f32.mrb[0].mxu0
      %6967 = vmatprep.mubr.f32.mxu0 0.0
      %6968 = vmatmul.mubr.f32.gmra.mrb[0].mxu0 %v6758
      %v6969 = vpop.f32.mrb[0].mxu0
      %v6970 = vadd.f32 %v6681, %v6969
      %v6971 = vpop.f32.mrb[0].mxu0
      %6972 = vmatprep.mubr.f32.mxu0 0.0
      %6973 = vmatmul.mubr.f32.gmra.mrb[0].mxu0 %v6761
      %v6974 = vpop.f32.mrb[0].mxu0
      %v6975 = vadd.f32 %v6681, %v6974
      %v6976 = vpop.f32.mrb[0].mxu0
      %6977 = vmatprep.mubr.f32.mxu0 0.0
      %6978 = vmatmul.mubr.f32.gmra.mrb[0].mxu0 %v6764
      %v6979 = vpop.f32.mrb[0].mxu0
      %v6980 = vadd.f32 %v6681, %v6979
      %v6981 = vpop.f32.mrb[0].mxu0
      %6982 = vmatprep.mubr.f32.mxu0 0.0
      %6983 = vmatmul.mubr.f32.gmra.mrb[0].mxu0 %v6767
      %v6984 = vpop.f32.mrb[0].mxu0
      %v6985 = vadd.f32 %v6681, %v6984
      %v6986 = vpop.f32.mrb[0].mxu0
      %6987 = vmatprep.mubr.f32.mxu0 0.0
      %6988 = vmatmul.mubr.f32.gmra.mrb[0].mxu0 %v6770
      %v6989 = vpop.f32.mrb[0].mxu0
      %v6990 = vadd.f32 %v6681, %v6989
      %v6991 = vpop.f32.mrb[0].mxu0
      %6992 = vmatprep.mubr.f32.mxu0 0.0
      %6993 = vmatmul.mubr.f32.gmra.mrb[0].mxu0 %v6773
      %v6994 = vpop.f32.mrb[0].mxu0
      %v6995 = vadd.f32 %v6681, %v6994
      %v6996 = vpop.f32.mrb[0].mxu0
      %6997 = vmatprep.mubr.f32.mxu0 0.0
      %6998 = vmatmul.mubr.f32.gmra.mrb[0].mxu0 %v6776
      %v6999 = vpop.f32.mrb[0].mxu0
      %v7000 = vadd.f32 %v6681, %v6999
      %v7001 = vpop.f32.mrb[0].mxu0
      %7002 = vdwg.mxu0
      %v7003 = vxor.u32 %v6845, 2147483648
      %v7004 = vxor.u32 %v6850, 2147483648
      %v7005 = vxor.u32 %v6855, 2147483648
      %v7006 = vxor.u32 %v6860, 2147483648
      %v7007 = vxor.u32 %v6865, 2147483648
      %v7008 = vxor.u32 %v6870, 2147483648
      %v7009 = vxor.u32 %v6875, 2147483648
      %v7010 = vxor.u32 %v6880, 2147483648
      %v7011 = vxor.u32 %v6885, 2147483648
      %v7012 = vxor.u32 %v6890, 2147483648
      %v7013 = vxor.u32 %v6895, 2147483648
      %v7014 = vxor.u32 %v6900, 2147483648
      %v7015 = vxor.u32 %v6905, 2147483648
      %v7016 = vxor.u32 %v6910, 2147483648
      %v7017 = vxor.u32 %v6915, 2147483648
      %v7018 = vxor.u32 %v6920, 2147483648
      %v7019 = vxor.u32 %v6925, 2147483648
      %v7020 = vxor.u32 %v6930, 2147483648
      %v7021 = vxor.u32 %v6935, 2147483648
      %v7022 = vxor.u32 %v6940, 2147483648
      %v7023 = vxor.u32 %v6945, 2147483648
      %v7024 = vxor.u32 %v6950, 2147483648
      %v7025 = vxor.u32 %v6955, 2147483648
      %v7026 = vxor.u32 %v6960, 2147483648
      %v7027 = vxor.u32 %v6965, 2147483648
      %v7028 = vxor.u32 %v6970, 2147483648
      %v7029 = vxor.u32 %v6975, 2147483648
      %v7030 = vxor.u32 %v6980, 2147483648
      %v7031 = vxor.u32 %v6985, 2147483648
      %v7032 = vxor.u32 %v6990, 2147483648
      %v7033 = vxor.u32 %v6995, 2147483648
      %v7034 = vxor.u32 %v7000, 2147483648
      %v7035 = vmul.f32 %v7003, 1.442695
      %v7036 = vpow.pop %v7035
      %v7037 = vmul.f32 %v7004, 1.442695
      %v7038 = vpow.pop %v7037
      %v7039 = vmul.f32 %v7005, 1.442695
      %v7040 = vpow.pop %v7039
      %v7041 = vmul.f32 %v7006, 1.442695
      %v7042 = vpow.pop %v7041
      %v7043 = vmul.f32 %v7007, 1.442695
      %v7044 = vpow.pop %v7043
      %v7045 = vmul.f32 %v7008, 1.442695
      %v7046 = vpow.pop %v7045
      %v7047 = vmul.f32 %v7009, 1.442695
      %v7048 = vpow.pop %v7047
      %v7049 = vmul.f32 %v7010, 1.442695
      %v7050 = vpow.pop %v7049
      %v7051 = vmul.f32 %v7011, 1.442695
      %v7052 = vpow.pop %v7051
      %v7053 = vmul.f32 %v7012, 1.442695
      %v7054 = vpow.pop %v7053
      %v7055 = vmul.f32 %v7013, 1.442695
      %v7056 = vpow.pop %v7055
      %v7057 = vmul.f32 %v7014, 1.442695
      %v7058 = vpow.pop %v7057
      %v7059 = vmul.f32 %v7015, 1.442695
      %v7060 = vpow.pop %v7059
      %v7061 = vmul.f32 %v7016, 1.442695
      %v7062 = vpow.pop %v7061
      %v7063 = vmul.f32 %v7017, 1.442695
      %v7064 = vpow.pop %v7063
      %v7065 = vmul.f32 %v7018, 1.442695
      %v7066 = vpow.pop %v7065
      %v7067 = vmul.f32 %v7019, 1.442695
      %v7068 = vpow.pop %v7067
      %v7069 = vmul.f32 %v7020, 1.442695
      %v7070 = vpow.pop %v7069
      %v7071 = vmul.f32 %v7021, 1.442695
      %v7072 = vpow.pop %v7071
      %v7073 = vmul.f32 %v7022, 1.442695
      %v7074 = vpow.pop %v7073
      %v7075 = vmul.f32 %v7023, 1.442695
      %v7076 = vpow.pop %v7075
      %v7077 = vmul.f32 %v7024, 1.442695
      %v7078 = vpow.pop %v7077
      %v7079 = vmul.f32 %v7025, 1.442695
      %v7080 = vpow.pop %v7079
      %v7081 = vmul.f32 %v7026, 1.442695
      %v7082 = vpow.pop %v7081
      %v7083 = vmul.f32 %v7027, 1.442695
      %v7084 = vpow.pop %v7083
      %v7085 = vmul.f32 %v7028, 1.442695
      %v7086 = vpow.pop %v7085
      %v7087 = vmul.f32 %v7029, 1.442695
      %v7088 = vpow.pop %v7087
      %v7089 = vmul.f32 %v7030, 1.442695
      %v7090 = vpow.pop %v7089
      %v7091 = vmul.f32 %v7031, 1.442695
      %v7092 = vpow.pop %v7091
      %v7093 = vmul.f32 %v7032, 1.442695
      %v7094 = vpow.pop %v7093
      %v7095 = vmul.f32 %v7033, 1.442695
      %v7096 = vpow.pop %v7095
      %v7097 = vmul.f32 %v7034, 1.442695
      %v7098 = vpow.pop %v7097
      %v7099 = vadd.f32 %v7036, 1.0
      %v7100 = vadd.f32 %v7038, 1.0
      %v7101 = vadd.f32 %v7040, 1.0
      %v7102 = vadd.f32 %v7042, 1.0
      %v7103 = vadd.f32 %v7044, 1.0
      %v7104 = vadd.f32 %v7046, 1.0
      %v7105 = vadd.f32 %v7048, 1.0
      %v7106 = vadd.f32 %v7050, 1.0
      %v7107 = vadd.f32 %v7052, 1.0
      %v7108 = vadd.f32 %v7054, 1.0
      %v7109 = vadd.f32 %v7056, 1.0
      %v7110 = vadd.f32 %v7058, 1.0
      %v7111 = vadd.f32 %v7060, 1.0
      %v7112 = vadd.f32 %v7062, 1.0
      %v7113 = vadd.f32 %v7064, 1.0
      %v7114 = vadd.f32 %v7066, 1.0
      %v7115 = vadd.f32 %v7068, 1.0
      %v7116 = vadd.f32 %v7070, 1.0
      %v7117 = vadd.f32 %v7072, 1.0
      %v7118 = vadd.f32 %v7074, 1.0
      %v7119 = vadd.f32 %v7076, 1.0
      %v7120 = vadd.f32 %v7078, 1.0
      %v7121 = vadd.f32 %v7080, 1.0
      %v7122 = vadd.f32 %v7082, 1.0
      %v7123 = vadd.f32 %v7084, 1.0
      %v7124 = vadd.f32 %v7086, 1.0
      %v7125 = vadd.f32 %v7088, 1.0
      %v7126 = vadd.f32 %v7090, 1.0
      %v7127 = vadd.f32 %v7092, 1.0
      %v7128 = vadd.f32 %v7094, 1.0
      %v7129 = vadd.f32 %v7096, 1.0
      %v7130 = vadd.f32 %v7098, 1.0
      %v7131 = vrcp.pop %v7099
      %v7132 = vmul.f32 1.0, %v7131
      %v7133 = vrcp.pop %v7100
      %v7134 = vmul.f32 1.0, %v7133
      %v7135 = vrcp.pop %v7101
      %v7136 = vmul.f32 1.0, %v7135
      %v7137 = vrcp.pop %v7102
      %v7138 = vmul.f32 1.0, %v7137
      %v7139 = vrcp.pop %v7103
      %v7140 = vmul.f32 1.0, %v7139
      %v7141 = vrcp.pop %v7104
      %v7142 = vmul.f32 1.0, %v7141
      %v7143 = vrcp.pop %v7105
      %v7144 = vmul.f32 1.0, %v7143
      %v7145 = vrcp.pop %v7106
      %v7146 = vmul.f32 1.0, %v7145
      %v7147 = vrcp.pop %v7107
      %v7148 = vmul.f32 1.0, %v7147
      %v7149 = vrcp.pop %v7108
      %v7150 = vmul.f32 1.0, %v7149
      %v7151 = vrcp.pop %v7109
      %v7152 = vmul.f32 1.0, %v7151
      %v7153 = vrcp.pop %v7110
      %v7154 = vmul.f32 1.0, %v7153
      %v7155 = vrcp.pop %v7111
      %v7156 = vmul.f32 1.0, %v7155
      %v7157 = vrcp.pop %v7112
      %v7158 = vmul.f32 1.0, %v7157
      %v7159 = vrcp.pop %v7113
      %v7160 = vmul.f32 1.0, %v7159
      %v7161 = vrcp.pop %v7114
      %v7162 = vmul.f32 1.0, %v7161
      %v7163 = vrcp.pop %v7115
      %v7164 = vmul.f32 1.0, %v7163
      %v7165 = vrcp.pop %v7116
      %v7166 = vmul.f32 1.0, %v7165
      %v7167 = vrcp.pop %v7117
      %v7168 = vmul.f32 1.0, %v7167
      %v7169 = vrcp.pop %v7118
      %v7170 = vmul.f32 1.0, %v7169
      %v7171 = vrcp.pop %v7119
      %v7172 = vmul.f32 1.0, %v7171
      %v7173 = vrcp.pop %v7120
      %v7174 = vmul.f32 1.0, %v7173
      %v7175 = vrcp.pop %v7121
      %v7176 = vmul.f32 1.0, %v7175
      %v7177 = vrcp.pop %v7122
      %v7178 = vmul.f32 1.0, %v7177
      %v7179 = vrcp.pop %v7123
      %v7180 = vmul.f32 1.0, %v7179
      %v7181 = vrcp.pop %v7124
      %v7182 = vmul.f32 1.0, %v7181
      %v7183 = vrcp.pop %v7125
      %v7184 = vmul.f32 1.0, %v7183
      %v7185 = vrcp.pop %v7126
      %v7186 = vmul.f32 1.0, %v7185
      %v7187 = vrcp.pop %v7127
      %v7188 = vmul.f32 1.0, %v7187
      %v7189 = vrcp.pop %v7128
      %v7190 = vmul.f32 1.0, %v7189
      %v7191 = vrcp.pop %v7129
      %v7192 = vmul.f32 1.0, %v7191
      %v7193 = vrcp.pop %v7130
      %v7194 = vmul.f32 1.0, %v7193
      %v7195 = vmul.f32 %v6845, %v7132
      %v7196 = vmul.f32 %v6850, %v7134
      %v7197 = vmul.f32 %v6855, %v7136
      %v7198 = vmul.f32 %v6860, %v7138
      %v7199 = vmul.f32 %v6865, %v7140
      %v7200 = vmul.f32 %v6870, %v7142
      %v7201 = vmul.f32 %v6875, %v7144
      %v7202 = vmul.f32 %v6880, %v7146
      %v7203 = vmul.f32 %v6885, %v7148
      %v7204 = vmul.f32 %v6890, %v7150
      %v7205 = vmul.f32 %v6895, %v7152
      %v7206 = vmul.f32 %v6900, %v7154
      %v7207 = vmul.f32 %v6905, %v7156
      %v7208 = vmul.f32 %v6910, %v7158
      %v7209 = vmul.f32 %v6915, %v7160
      %v7210 = vmul.f32 %v6920, %v7162
      %v7211 = vmul.f32 %v6925, %v7164
      %v7212 = vmul.f32 %v6930, %v7166
      %v7213 = vmul.f32 %v6935, %v7168
      %v7214 = vmul.f32 %v6940, %v7170
      %v7215 = vmul.f32 %v6945, %v7172
      %v7216 = vmul.f32 %v6950, %v7174
      %v7217 = vmul.f32 %v6955, %v7176
      %v7218 = vmul.f32 %v6960, %v7178
      %v7219 = vmul.f32 %v6965, %v7180
      %v7220 = vmul.f32 %v6970, %v7182
      %v7221 = vmul.f32 %v6975, %v7184
      %v7222 = vmul.f32 %v6980, %v7186
      %v7223 = vmul.f32 %v6985, %v7188
      %v7224 = vmul.f32 %v6990, %v7190
      %v7225 = vmul.f32 %v6995, %v7192
      %v7226 = vmul.f32 %v7000, %v7194
      %v7227 = vsel %vm286, %v7195, 0.0
      %7228 = vadd.xlane.f32.xlu0 %v7227
      %v7229 = vpop.xlane.xlu0 %7228
      %v7230 = vsel %vm286, %v7196, 0.0
      %7231 = vadd.xlane.f32.xlu0 %v7230
      %v7232 = vpop.xlane.xlu0 %7231
      %v7233 = vsel %vm286, %v7197, 0.0
      %7234 = vadd.xlane.f32.xlu0 %v7233
      %v7235 = vpop.xlane.xlu0 %7234
      %v7236 = vsel %vm286, %v7198, 0.0
      %7237 = vadd.xlane.f32.xlu0 %v7236
      %v7238 = vpop.xlane.xlu0 %7237
      %v7239 = vsel %vm286, %v7199, 0.0
      %7240 = vadd.xlane.f32.xlu0 %v7239
      %v7241 = vpop.xlane.xlu0 %7240
      %v7242 = vsel %vm286, %v7200, 0.0
      %7243 = vadd.xlane.f32.xlu0 %v7242
      %v7244 = vpop.xlane.xlu0 %7243
      %v7245 = vsel %vm286, %v7201, 0.0
      %7246 = vadd.xlane.f32.xlu0 %v7245
      %v7247 = vpop.xlane.xlu0 %7246
      %v7248 = vsel %vm286, %v7202, 0.0
      %7249 = vadd.xlane.f32.xlu0 %v7248
      %v7250 = vpop.xlane.xlu0 %7249
      %v7251 = vsel %vm286, %v7203, 0.0
      %7252 = vadd.xlane.f32.xlu0 %v7251
      %v7253 = vpop.xlane.xlu0 %7252
      %v7254 = vsel %vm286, %v7204, 0.0
      %7255 = vadd.xlane.f32.xlu0 %v7254
      %v7256 = vpop.xlane.xlu0 %7255
      %v7257 = vsel %vm286, %v7205, 0.0
      %7258 = vadd.xlane.f32.xlu0 %v7257
      %v7259 = vpop.xlane.xlu0 %7258
      %v7260 = vsel %vm286, %v7206, 0.0
      %7261 = vadd.xlane.f32.xlu0 %v7260
      %v7262 = vpop.xlane.xlu0 %7261
      %v7263 = vsel %vm286, %v7207, 0.0
      %7264 = vadd.xlane.f32.xlu0 %v7263
      %v7265 = vpop.xlane.xlu0 %7264
      %v7266 = vsel %vm286, %v7208, 0.0
      %7267 = vadd.xlane.f32.xlu0 %v7266
      %v7268 = vpop.xlane.xlu0 %7267
      %v7269 = vsel %vm286, %v7209, 0.0
      %7270 = vadd.xlane.f32.xlu0 %v7269
      %v7271 = vpop.xlane.xlu0 %7270
      %v7272 = vsel %vm286, %v7210, 0.0
      %7273 = vadd.xlane.f32.xlu0 %v7272
      %v7274 = vpop.xlane.xlu0 %7273
      %v7275 = vsel %vm286, %v7211, 0.0
      %7276 = vadd.xlane.f32.xlu0 %v7275
      %v7277 = vpop.xlane.xlu0 %7276
      %v7278 = vsel %vm286, %v7212, 0.0
      %7279 = vadd.xlane.f32.xlu0 %v7278
      %v7280 = vpop.xlane.xlu0 %7279
      %v7281 = vsel %vm286, %v7213, 0.0
      %7282 = vadd.xlane.f32.xlu0 %v7281
      %v7283 = vpop.xlane.xlu0 %7282
      %v7284 = vsel %vm286, %v7214, 0.0
      %7285 = vadd.xlane.f32.xlu0 %v7284
      %v7286 = vpop.xlane.xlu0 %7285
      %v7287 = vsel %vm286, %v7215, 0.0
      %7288 = vadd.xlane.f32.xlu0 %v7287
      %v7289 = vpop.xlane.xlu0 %7288
      %v7290 = vsel %vm286, %v7216, 0.0
      %7291 = vadd.xlane.f32.xlu0 %v7290
      %v7292 = vpop.xlane.xlu0 %7291
      %v7293 = vsel %vm286, %v7217, 0.0
      %7294 = vadd.xlane.f32.xlu0 %v7293
      %v7295 = vpop.xlane.xlu0 %7294
      %v7296 = vsel %vm286, %v7218, 0.0
      %7297 = vadd.xlane.f32.xlu0 %v7296
      %v7298 = vpop.xlane.xlu0 %7297
      %v7299 = vsel %vm286, %v7219, 0.0
      %7300 = vadd.xlane.f32.xlu0 %v7299
      %v7301 = vpop.xlane.xlu0 %7300
      %v7302 = vsel %vm286, %v7220, 0.0
      %7303 = vadd.xlane.f32.xlu0 %v7302
      %v7304 = vpop.xlane.xlu0 %7303
      %v7305 = vsel %vm286, %v7221, 0.0
      %7306 = vadd.xlane.f32.xlu0 %v7305
      %v7307 = vpop.xlane.xlu0 %7306
      %v7308 = vsel %vm286, %v7222, 0.0
      %7309 = vadd.xlane.f32.xlu0 %v7308
      %v7310 = vpop.xlane.xlu0 %7309
      %v7311 = vsel %vm286, %v7223, 0.0
      %7312 = vadd.xlane.f32.xlu0 %v7311
      %v7313 = vpop.xlane.xlu0 %7312
      %v7314 = vsel %vm286, %v7224, 0.0
      %7315 = vadd.xlane.f32.xlu0 %v7314
      %v7316 = vpop.xlane.xlu0 %7315
      %v7317 = vsel %vm286, %v7225, 0.0
      %7318 = vadd.xlane.f32.xlu0 %v7317
      %v7319 = vpop.xlane.xlu0 %7318
      %v7320 = vsel %vm286, %v7226, 0.0
      %7321 = vadd.xlane.f32.xlu0 %v7320
      %v7322 = vpop.xlane.xlu0 %7321
      %v7323 = vmul.f32 %v7229, %v6285
      %v7324 = vmul.f32 %v7232, %v6285
      %v7325 = vmul.f32 %v7235, %v6285
      %v7326 = vmul.f32 %v7238, %v6285
      %v7327 = vmul.f32 %v7241, %v6285
      %v7328 = vmul.f32 %v7244, %v6285
      %v7329 = vmul.f32 %v7247, %v6285
      %v7330 = vmul.f32 %v7250, %v6285
      %v7331 = vmul.f32 %v7253, %v6285
      %v7332 = vmul.f32 %v7256, %v6285
      %v7333 = vmul.f32 %v7259, %v6285
      %v7334 = vmul.f32 %v7262, %v6285
      %v7335 = vmul.f32 %v7265, %v6285
      %v7336 = vmul.f32 %v7268, %v6285
      %v7337 = vmul.f32 %v7271, %v6285
      %v7338 = vmul.f32 %v7274, %v6285
      %v7339 = vmul.f32 %v7277, %v6285
      %v7340 = vmul.f32 %v7280, %v6285
      %v7341 = vmul.f32 %v7283, %v6285
      %v7342 = vmul.f32 %v7286, %v6285
      %v7343 = vmul.f32 %v7289, %v6285
      %v7344 = vmul.f32 %v7292, %v6285
      %v7345 = vmul.f32 %v7295, %v6285
      %v7346 = vmul.f32 %v7298, %v6285
      %v7347 = vmul.f32 %v7301, %v6285
      %v7348 = vmul.f32 %v7304, %v6285
      %v7349 = vmul.f32 %v7307, %v6285
      %v7350 = vmul.f32 %v7310, %v6285
      %v7351 = vmul.f32 %v7313, %v6285
      %v7352 = vmul.f32 %v7316, %v6285
      %v7353 = vmul.f32 %v7319, %v6285
      %v7354 = vmul.f32 %v7322, %v6285
      %v7355 = vsub.f32 %v7195, %v7323
      %v7356 = vsub.f32 %v7196, %v7324
      %v7357 = vsub.f32 %v7197, %v7325
      %v7358 = vsub.f32 %v7198, %v7326
      %v7359 = vsub.f32 %v7199, %v7327
      %v7360 = vsub.f32 %v7200, %v7328
      %v7361 = vsub.f32 %v7201, %v7329
      %v7362 = vsub.f32 %v7202, %v7330
      %v7363 = vsub.f32 %v7203, %v7331
      %v7364 = vsub.f32 %v7204, %v7332
      %v7365 = vsub.f32 %v7205, %v7333
      %v7366 = vsub.f32 %v7206, %v7334
      %v7367 = vsub.f32 %v7207, %v7335
      %v7368 = vsub.f32 %v7208, %v7336
      %v7369 = vsub.f32 %v7209, %v7337
      %v7370 = vsub.f32 %v7210, %v7338
      %v7371 = vsub.f32 %v7211, %v7339
      %v7372 = vsub.f32 %v7212, %v7340
      %v7373 = vsub.f32 %v7213, %v7341
      %v7374 = vsub.f32 %v7214, %v7342
      %v7375 = vsub.f32 %v7215, %v7343
      %v7376 = vsub.f32 %v7216, %v7344
      %v7377 = vsub.f32 %v7217, %v7345
      %v7378 = vsub.f32 %v7218, %v7346
      %v7379 = vsub.f32 %v7219, %v7347
      %v7380 = vsub.f32 %v7220, %v7348
      %v7381 = vsub.f32 %v7221, %v7349
      %v7382 = vsub.f32 %v7222, %v7350
      %v7383 = vsub.f32 %v7223, %v7351
      %v7384 = vsub.f32 %v7224, %v7352
      %v7385 = vsub.f32 %v7225, %v7353
      %v7386 = vsub.f32 %v7226, %v7354
      %v7387 = vmul.f32 %v7355, %v7355
      %v7388 = vmul.f32 %v7356, %v7356
      %v7389 = vmul.f32 %v7357, %v7357
      %v7390 = vmul.f32 %v7358, %v7358
      %v7391 = vmul.f32 %v7359, %v7359
      %v7392 = vmul.f32 %v7360, %v7360
      %v7393 = vmul.f32 %v7361, %v7361
      %v7394 = vmul.f32 %v7362, %v7362
      %v7395 = vmul.f32 %v7363, %v7363
      %v7396 = vmul.f32 %v7364, %v7364
      %v7397 = vmul.f32 %v7365, %v7365
      %v7398 = vmul.f32 %v7366, %v7366
      %v7399 = vmul.f32 %v7367, %v7367
      %v7400 = vmul.f32 %v7368, %v7368
      %v7401 = vmul.f32 %v7369, %v7369
      %v7402 = vmul.f32 %v7370, %v7370
      %v7403 = vmul.f32 %v7371, %v7371
      %v7404 = vmul.f32 %v7372, %v7372
      %v7405 = vmul.f32 %v7373, %v7373
      %v7406 = vmul.f32 %v7374, %v7374
      %v7407 = vmul.f32 %v7375, %v7375
      %v7408 = vmul.f32 %v7376, %v7376
      %v7409 = vmul.f32 %v7377, %v7377
      %v7410 = vmul.f32 %v7378, %v7378
      %v7411 = vmul.f32 %v7379, %v7379
      %v7412 = vmul.f32 %v7380, %v7380
      %v7413 = vmul.f32 %v7381, %v7381
      %v7414 = vmul.f32 %v7382, %v7382
      %v7415 = vmul.f32 %v7383, %v7383
      %v7416 = vmul.f32 %v7384, %v7384
      %v7417 = vmul.f32 %v7385, %v7385
      %v7418 = vmul.f32 %v7386, %v7386
      %v7419 = vsel %vm286, %v7387, 0.0
      %7420 = vadd.xlane.f32.xlu0 %v7419
      %v7421 = vpop.xlane.xlu0 %7420
      %v7422 = vsel %vm286, %v7388, 0.0
      %7423 = vadd.xlane.f32.xlu0 %v7422
      %v7424 = vpop.xlane.xlu0 %7423
      %v7425 = vsel %vm286, %v7389, 0.0
      %7426 = vadd.xlane.f32.xlu0 %v7425
      %v7427 = vpop.xlane.xlu0 %7426
      %v7428 = vsel %vm286, %v7390, 0.0
      %7429 = vadd.xlane.f32.xlu0 %v7428
      %v7430 = vpop.xlane.xlu0 %7429
      %v7431 = vsel %vm286, %v7391, 0.0
      %7432 = vadd.xlane.f32.xlu0 %v7431
      %v7433 = vpop.xlane.xlu0 %7432
      %v7434 = vsel %vm286, %v7392, 0.0
      %7435 = vadd.xlane.f32.xlu0 %v7434
      %v7436 = vpop.xlane.xlu0 %7435
      %v7437 = vsel %vm286, %v7393, 0.0
      %7438 = vadd.xlane.f32.xlu0 %v7437
      %v7439 = vpop.xlane.xlu0 %7438
      %v7440 = vsel %vm286, %v7394, 0.0
      %7441 = vadd.xlane.f32.xlu0 %v7440
      %v7442 = vpop.xlane.xlu0 %7441
      %v7443 = vsel %vm286, %v7395, 0.0
      %7444 = vadd.xlane.f32.xlu0 %v7443
      %v7445 = vpop.xlane.xlu0 %7444
      %v7446 = vsel %vm286, %v7396, 0.0
      %7447 = vadd.xlane.f32.xlu0 %v7446
      %v7448 = vpop.xlane.xlu0 %7447
      %v7449 = vsel %vm286, %v7397, 0.0
      %7450 = vadd.xlane.f32.xlu0 %v7449
      %v7451 = vpop.xlane.xlu0 %7450
      %v7452 = vsel %vm286, %v7398, 0.0
      %7453 = vadd.xlane.f32.xlu0 %v7452
      %v7454 = vpop.xlane.xlu0 %7453
      %v7455 = vsel %vm286, %v7399, 0.0
      %7456 = vadd.xlane.f32.xlu0 %v7455
      %v7457 = vpop.xlane.xlu0 %7456
      %v7458 = vsel %vm286, %v7400, 0.0
      %7459 = vadd.xlane.f32.xlu0 %v7458
      %v7460 = vpop.xlane.xlu0 %7459
      %v7461 = vsel %vm286, %v7401, 0.0
      %7462 = vadd.xlane.f32.xlu0 %v7461
      %v7463 = vpop.xlane.xlu0 %7462
      %v7464 = vsel %vm286, %v7402, 0.0
      %7465 = vadd.xlane.f32.xlu0 %v7464
      %v7466 = vpop.xlane.xlu0 %7465
      %v7467 = vsel %vm286, %v7403, 0.0
      %7468 = vadd.xlane.f32.xlu0 %v7467
      %v7469 = vpop.xlane.xlu0 %7468
      %v7470 = vsel %vm286, %v7404, 0.0
      %7471 = vadd.xlane.f32.xlu0 %v7470
      %v7472 = vpop.xlane.xlu0 %7471
      %v7473 = vsel %vm286, %v7405, 0.0
      %7474 = vadd.xlane.f32.xlu0 %v7473
      %v7475 = vpop.xlane.xlu0 %7474
      %v7476 = vsel %vm286, %v7406, 0.0
      %7477 = vadd.xlane.f32.xlu0 %v7476
      %v7478 = vpop.xlane.xlu0 %7477
      %v7479 = vsel %vm286, %v7407, 0.0
      %7480 = vadd.xlane.f32.xlu0 %v7479
      %v7481 = vpop.xlane.xlu0 %7480
      %v7482 = vsel %vm286, %v7408, 0.0
      %7483 = vadd.xlane.f32.xlu0 %v7482
      %v7484 = vpop.xlane.xlu0 %7483
      %v7485 = vsel %vm286, %v7409, 0.0
      %7486 = vadd.xlane.f32.xlu0 %v7485
      %v7487 = vpop.xlane.xlu0 %7486
      %v7488 = vsel %vm286, %v7410, 0.0
      %7489 = vadd.xlane.f32.xlu0 %v7488
      %v7490 = vpop.xlane.xlu0 %7489
      %v7491 = vsel %vm286, %v7411, 0.0
      %7492 = vadd.xlane.f32.xlu0 %v7491
      %v7493 = vpop.xlane.xlu0 %7492
      %v7494 = vsel %vm286, %v7412, 0.0
      %7495 = vadd.xlane.f32.xlu0 %v7494
      %v7496 = vpop.xlane.xlu0 %7495
      %v7497 = vsel %vm286, %v7413, 0.0
      %7498 = vadd.xlane.f32.xlu0 %v7497
      %v7499 = vpop.xlane.xlu0 %7498
      %v7500 = vsel %vm286, %v7414, 0.0
      %7501 = vadd.xlane.f32.xlu0 %v7500
      %v7502 = vpop.xlane.xlu0 %7501
      %v7503 = vsel %vm286, %v7415, 0.0
      %7504 = vadd.xlane.f32.xlu0 %v7503
      %v7505 = vpop.xlane.xlu0 %7504
      %v7506 = vsel %vm286, %v7416, 0.0
      %7507 = vadd.xlane.f32.xlu0 %v7506
      %v7508 = vpop.xlane.xlu0 %7507
      %v7509 = vsel %vm286, %v7417, 0.0
      %7510 = vadd.xlane.f32.xlu0 %v7509
      %v7511 = vpop.xlane.xlu0 %7510
      %v7512 = vsel %vm286, %v7418, 0.0
      %7513 = vadd.xlane.f32.xlu0 %v7512
      %v7514 = vpop.xlane.xlu0 %7513
      %v7515 = vmul.f32 %v7421, %v6285
      %v7516 = vmul.f32 %v7424, %v6285
      %v7517 = vmul.f32 %v7427, %v6285
      %v7518 = vmul.f32 %v7430, %v6285
      %v7519 = vmul.f32 %v7433, %v6285
      %v7520 = vmul.f32 %v7436, %v6285
      %v7521 = vmul.f32 %v7439, %v6285
      %v7522 = vmul.f32 %v7442, %v6285
      %v7523 = vmul.f32 %v7445, %v6285
      %v7524 = vmul.f32 %v7448, %v6285
      %v7525 = vmul.f32 %v7451, %v6285
      %v7526 = vmul.f32 %v7454, %v6285
      %v7527 = vmul.f32 %v7457, %v6285
      %v7528 = vmul.f32 %v7460, %v6285
      %v7529 = vmul.f32 %v7463, %v6285
      %v7530 = vmul.f32 %v7466, %v6285
      %v7531 = vmul.f32 %v7469, %v6285
      %v7532 = vmul.f32 %v7472, %v6285
      %v7533 = vmul.f32 %v7475, %v6285
      %v7534 = vmul.f32 %v7478, %v6285
      %v7535 = vmul.f32 %v7481, %v6285
      %v7536 = vmul.f32 %v7484, %v6285
      %v7537 = vmul.f32 %v7487, %v6285
      %v7538 = vmul.f32 %v7490, %v6285
      %v7539 = vmul.f32 %v7493, %v6285
      %v7540 = vmul.f32 %v7496, %v6285
      %v7541 = vmul.f32 %v7499, %v6285
      %v7542 = vmul.f32 %v7502, %v6285
      %v7543 = vmul.f32 %v7505, %v6285
      %v7544 = vmul.f32 %v7508, %v6285
      %v7545 = vmul.f32 %v7511, %v6285
      %v7546 = vmul.f32 %v7514, %v6285
      %v7547 = vadd.f32 %v7515, 1e-05
      %v7548 = vadd.f32 %v7516, 1e-05
      %v7549 = vadd.f32 %v7517, 1e-05
      %v7550 = vadd.f32 %v7518, 1e-05
      %v7551 = vadd.f32 %v7519, 1e-05
      %v7552 = vadd.f32 %v7520, 1e-05
      %v7553 = vadd.f32 %v7521, 1e-05
      %v7554 = vadd.f32 %v7522, 1e-05
      %v7555 = vadd.f32 %v7523, 1e-05
      %v7556 = vadd.f32 %v7524, 1e-05
      %v7557 = vadd.f32 %v7525, 1e-05
      %v7558 = vadd.f32 %v7526, 1e-05
      %v7559 = vadd.f32 %v7527, 1e-05
      %v7560 = vadd.f32 %v7528, 1e-05
      %v7561 = vadd.f32 %v7529, 1e-05
      %v7562 = vadd.f32 %v7530, 1e-05
      %v7563 = vadd.f32 %v7531, 1e-05
      %v7564 = vadd.f32 %v7532, 1e-05
      %v7565 = vadd.f32 %v7533, 1e-05
      %v7566 = vadd.f32 %v7534, 1e-05
      %v7567 = vadd.f32 %v7535, 1e-05
      %v7568 = vadd.f32 %v7536, 1e-05
      %v7569 = vadd.f32 %v7537, 1e-05
      %v7570 = vadd.f32 %v7538, 1e-05
      %v7571 = vadd.f32 %v7539, 1e-05
      %v7572 = vadd.f32 %v7540, 1e-05
      %v7573 = vadd.f32 %v7541, 1e-05
      %v7574 = vadd.f32 %v7542, 1e-05
      %v7575 = vadd.f32 %v7543, 1e-05
      %v7576 = vadd.f32 %v7544, 1e-05
      %v7577 = vadd.f32 %v7545, 1e-05
      %v7578 = vadd.f32 %v7546, 1e-05
      %v7579 = vrsqrt.pop %v7547
      %v7580 = vrsqrt.pop %v7548
      %v7581 = vrsqrt.pop %v7549
      %v7582 = vrsqrt.pop %v7550
      %v7583 = vrsqrt.pop %v7551
      %v7584 = vrsqrt.pop %v7552
      %v7585 = vrsqrt.pop %v7553
      %v7586 = vrsqrt.pop %v7554
      %v7587 = vrsqrt.pop %v7555
      %v7588 = vrsqrt.pop %v7556
      %v7589 = vrsqrt.pop %v7557
      %v7590 = vrsqrt.pop %v7558
      %v7591 = vrsqrt.pop %v7559
      %v7592 = vrsqrt.pop %v7560
      %v7593 = vrsqrt.pop %v7561
      %v7594 = vrsqrt.pop %v7562
      %v7595 = vrsqrt.pop %v7563
      %v7596 = vrsqrt.pop %v7564
      %v7597 = vrsqrt.pop %v7565
      %v7598 = vrsqrt.pop %v7566
      %v7599 = vrsqrt.pop %v7567
      %v7600 = vrsqrt.pop %v7568
      %v7601 = vrsqrt.pop %v7569
      %v7602 = vrsqrt.pop %v7570
      %v7603 = vrsqrt.pop %v7571
      %v7604 = vrsqrt.pop %v7572
      %v7605 = vrsqrt.pop %v7573
      %v7606 = vrsqrt.pop %v7574
      %v7607 = vrsqrt.pop %v7575
      %v7608 = vrsqrt.pop %v7576
      %v7609 = vrsqrt.pop %v7577
      %v7610 = vrsqrt.pop %v7578
      %v7611 = vmul.f32 %v7355, %v7579
      %v7612 = vmul.f32 %v7356, %v7580
      %v7613 = vmul.f32 %v7357, %v7581
      %v7614 = vmul.f32 %v7358, %v7582
      %v7615 = vmul.f32 %v7359, %v7583
      %v7616 = vmul.f32 %v7360, %v7584
      %v7617 = vmul.f32 %v7361, %v7585
      %v7618 = vmul.f32 %v7362, %v7586
      %v7619 = vmul.f32 %v7363, %v7587
      %v7620 = vmul.f32 %v7364, %v7588
      %v7621 = vmul.f32 %v7365, %v7589
      %v7622 = vmul.f32 %v7366, %v7590
      %v7623 = vmul.f32 %v7367, %v7591
      %v7624 = vmul.f32 %v7368, %v7592
      %v7625 = vmul.f32 %v7369, %v7593
      %v7626 = vmul.f32 %v7370, %v7594
      %v7627 = vmul.f32 %v7371, %v7595
      %v7628 = vmul.f32 %v7372, %v7596
      %v7629 = vmul.f32 %v7373, %v7597
      %v7630 = vmul.f32 %v7374, %v7598
      %v7631 = vmul.f32 %v7375, %v7599
      %v7632 = vmul.f32 %v7376, %v7600
      %v7633 = vmul.f32 %v7377, %v7601
      %v7634 = vmul.f32 %v7378, %v7602
      %v7635 = vmul.f32 %v7379, %v7603
      %v7636 = vmul.f32 %v7380, %v7604
      %v7637 = vmul.f32 %v7381, %v7605
      %v7638 = vmul.f32 %v7382, %v7606
      %v7639 = vmul.f32 %v7383, %v7607
      %v7640 = vmul.f32 %v7384, %v7608
      %v7641 = vmul.f32 %v7385, %v7609
      %v7642 = vmul.f32 %v7386, %v7610
      %v7643 = vlaneseq
      %v7644 = vshrl.u32 %v7643, 7
      %v7645 = vsub.s32 0, %v7644
      %v7646 = vrot.slane %v5956, %v7645
      %v7647 = vmul.f32 %v7611, %v7646
      %v7648 = vmul.f32 %v7612, %v7646
      %v7649 = vmul.f32 %v7613, %v7646
      %v7650 = vmul.f32 %v7614, %v7646
      %v7651 = vmul.f32 %v7615, %v7646
      %v7652 = vmul.f32 %v7616, %v7646
      %v7653 = vmul.f32 %v7617, %v7646
      %v7654 = vmul.f32 %v7618, %v7646
      %v7655 = vmul.f32 %v7619, %v7646
      %v7656 = vmul.f32 %v7620, %v7646
      %v7657 = vmul.f32 %v7621, %v7646
      %v7658 = vmul.f32 %v7622, %v7646
      %v7659 = vmul.f32 %v7623, %v7646
      %v7660 = vmul.f32 %v7624, %v7646
      %v7661 = vmul.f32 %v7625, %v7646
      %v7662 = vmul.f32 %v7626, %v7646
      %v7663 = vmul.f32 %v7627, %v7646
      %v7664 = vmul.f32 %v7628, %v7646
      %v7665 = vmul.f32 %v7629, %v7646
      %v7666 = vmul.f32 %v7630, %v7646
      %v7667 = vmul.f32 %v7631, %v7646
      %v7668 = vmul.f32 %v7632, %v7646
      %v7669 = vmul.f32 %v7633, %v7646
      %v7670 = vmul.f32 %v7634, %v7646
      %v7671 = vmul.f32 %v7635, %v7646
      %v7672 = vmul.f32 %v7636, %v7646
      %v7673 = vmul.f32 %v7637, %v7646
      %v7674 = vmul.f32 %v7638, %v7646
      %v7675 = vmul.f32 %v7639, %v7646
      %v7676 = vmul.f32 %v7640, %v7646
      %v7677 = vmul.f32 %v7641, %v7646
      %v7678 = vmul.f32 %v7642, %v7646
      %v7679 = vlaneseq
      %v7680 = vshrl.u32 %v7679, 7
      %v7681 = vsub.s32 0, %v7680
      %v7682 = vrot.slane %v5957, %v7681
      %v7683 = vadd.f32 %v7647, %v7682
      %v7684 = vadd.f32 %v7648, %v7682
      %v7685 = vadd.f32 %v7649, %v7682
      %v7686 = vadd.f32 %v7650, %v7682
      %v7687 = vadd.f32 %v7651, %v7682
      %v7688 = vadd.f32 %v7652, %v7682
      %v7689 = vadd.f32 %v7653, %v7682
      %v7690 = vadd.f32 %v7654, %v7682
      %v7691 = vadd.f32 %v7655, %v7682
      %v7692 = vadd.f32 %v7656, %v7682
      %v7693 = vadd.f32 %v7657, %v7682
      %v7694 = vadd.f32 %v7658, %v7682
      %v7695 = vadd.f32 %v7659, %v7682
      %v7696 = vadd.f32 %v7660, %v7682
      %v7697 = vadd.f32 %v7661, %v7682
      %v7698 = vadd.f32 %v7662, %v7682
      %v7699 = vadd.f32 %v7663, %v7682
      %v7700 = vadd.f32 %v7664, %v7682
      %v7701 = vadd.f32 %v7665, %v7682
      %v7702 = vadd.f32 %v7666, %v7682
      %v7703 = vadd.f32 %v7667, %v7682
      %v7704 = vadd.f32 %v7668, %v7682
      %v7705 = vadd.f32 %v7669, %v7682
      %v7706 = vadd.f32 %v7670, %v7682
      %v7707 = vadd.f32 %v7671, %v7682
      %v7708 = vadd.f32 %v7672, %v7682
      %v7709 = vadd.f32 %v7673, %v7682
      %v7710 = vadd.f32 %v7674, %v7682
      %v7711 = vadd.f32 %v7675, %v7682
      %v7712 = vadd.f32 %v7676, %v7682
      %v7713 = vadd.f32 %v7677, %v7682
      %v7714 = vadd.f32 %v7678, %v7682
      %v7715 = vlaneseq
      %v7716 = vshrl.u32 %v7715, 7
      %v7717 = vsub.s32 0, %v7716
      %v7718 = vrot.slane %v5958, %v7717
      %7723 = vrot.lane.b32.xlu0 %v5961, 96
      %v7724 = vpop.permute.xlu0 %7723
      %7725 = vrot.lane.b32.xlu0 %v5962, 96
      %v7726 = vpop.permute.xlu0 %7725
      %7727 = vrot.lane.b32.xlu0 %v5963, 96
      %v7728 = vpop.permute.xlu0 %7727
      %7729 = vrot.lane.b32.xlu0 %v5964, 96
      %v7730 = vpop.permute.xlu0 %7729
      %v7736 = vsel %vm286, %v7683, 0
      %v7739 = vsel %vm286, %v7684, 0
      %v7742 = vsel %vm286, %v7685, 0
      %v7745 = vsel %vm286, %v7686, 0
      %v7748 = vsel %vm286, %v7687, 0
      %v7751 = vsel %vm286, %v7688, 0
      %v7754 = vsel %vm286, %v7689, 0
      %v7757 = vsel %vm286, %v7690, 0
      %v7760 = vsel %vm286, %v7691, 0
      %v7763 = vsel %vm286, %v7692, 0
      %v7766 = vsel %vm286, %v7693, 0
      %v7769 = vsel %vm286, %v7694, 0
      %v7772 = vsel %vm286, %v7695, 0
      %v7775 = vsel %vm286, %v7696, 0
      %v7778 = vsel %vm286, %v7697, 0
      %v7781 = vsel %vm286, %v7698, 0
      %v7784 = vsel %vm286, %v7699, 0
      %v7787 = vsel %vm286, %v7700, 0
      %v7790 = vsel %vm286, %v7701, 0
      %v7793 = vsel %vm286, %v7702, 0
      %v7796 = vsel %vm286, %v7703, 0
      %v7799 = vsel %vm286, %v7704, 0
      %v7802 = vsel %vm286, %v7705, 0
      %v7805 = vsel %vm286, %v7706, 0
      %v7808 = vsel %vm286, %v7707, 0
      %v7811 = vsel %vm286, %v7708, 0
      %v7814 = vsel %vm286, %v7709, 0
      %v7817 = vsel %vm286, %v7710, 0
      %v7820 = vsel %vm286, %v7711, 0
      %v7823 = vsel %vm286, %v7712, 0
      %v7826 = vsel %vm286, %v7713, 0
      %v7829 = vsel %vm286, %v7714, 0
      %7831 = vmatprep.subr.mxu0 0.0
      %7832 = vmatpush1.msra.mxu0 %v7724
      %7833 = vmatprep.subr.mxu0 0.0
      %7834 = vmatpush1.msra.mxu0 %v7726
      %7835 = vmatprep.subr.mxu0 0.0
      %7836 = vmatpush1.msra.mxu0 %v7728
      %7837 = vmatprep.subr.mxu0 0.0
      %7838 = vmatpush1.msra.mxu0 %v7730
      %7839 = vmatprep.subr.mxu0 0.0
      %7840 = vmatpush1.msra.mxu0 0.0
      %7841 = vmatprep.subr.mxu0 0.0
      %7842 = vmatpush1.msra.mxu0 0.0
      %7843 = vmatprep.subr.mxu0 0.0
      %7844 = vmatpush1.msra.mxu0 0.0
      %7845 = vmatprep.subr.mxu0 0.0
      %7846 = vmatpush1.msra.mxu0 0.0
      %7847 = vmatprep.subr.mxu0 0.0
      %7848 = vmatpush1.msra.mxu0 0.0
      %7849 = vmatprep.subr.mxu0 0.0
      %7850 = vmatpush1.msra.mxu0 0.0
      %7851 = vmatprep.subr.mxu0 0.0
      %7852 = vmatpush1.msra.mxu0 0.0
      %7853 = vmatprep.subr.mxu0 0.0
      %7854 = vmatpush1.msra.mxu0 0.0
      %7855 = vmatprep.subr.mxu0 0.0
      %7856 = vmatpush1.msra.mxu0 0.0
      %7857 = vmatprep.subr.mxu0 0.0
      %7858 = vmatpush1.msra.mxu0 0.0
      %7859 = vmatprep.subr.mxu0 0.0
      %7860 = vmatpush1.msra.mxu0 0.0
      %7861 = vmatprep.subr.mxu0 0.0
      %7862 = vmatpush1.msra.mxu0 0.0
      %7863 = vmatprep.subr.mxu0 0.0
      %7864 = vmatpush1.msra.mxu0 0.0
      %7865 = vmatprep.subr.mxu0 0.0
      %7866 = vmatpush1.msra.mxu0 0.0
      %7867 = vmatprep.subr.mxu0 0.0
      %7868 = vmatpush1.msra.mxu0 0.0
      %7869 = vmatprep.subr.mxu0 0.0
      %7870 = vmatpush1.msra.mxu0 0.0
      %7871 = vmatprep.subr.mxu0 0.0
      %7872 = vmatpush1.msra.mxu0 0.0
      %7873 = vmatprep.subr.mxu0 0.0
      %7874 = vmatpush1.msra.mxu0 0.0
      %7875 = vmatprep.subr.mxu0 0.0
      %7876 = vmatpush1.msra.mxu0 0.0
      %7877 = vmatprep.subr.mxu0 0.0
      %7878 = vmatpush1.msra.mxu0 0.0
      %7879 = vmatprep.subr.mxu0 0.0
      %7880 = vmatpush1.msra.mxu0 0.0
      %7881 = vmatprep.subr.mxu0 0.0
      %7882 = vmatpush1.msra.mxu0 0.0
      %7883 = vmatprep.subr.mxu0 0.0
      %7884 = vmatpush1.msra.mxu0 0.0
      %7885 = vmatprep.subr.mxu0 0.0
      %7886 = vmatpush1.msra.mxu0 0.0
      %7887 = vmatprep.subr.mxu0 0.0
      %7888 = vmatpush1.msra.mxu0 0.0
      %7889 = vmatprep.subr.mxu0 0.0
      %7890 = vmatpush1.msra.mxu0 0.0
      %7891 = vmatprep.subr.mxu0 0.0
      %7892 = vmatpush1.msra.mxu0 0.0
      %7893 = vmatprep.subr.mxu0 0.0
      %7894 = vmatpush1.msra.mxu0 0.0
      %7895 = vmatprep.mubr.f32.mxu0 0.0
      %7896 = vmatmul.mubr.f32.gmra.mrb[0].mxu0 %v7736
      %v7897 = vpop.f32.mrb[0].mxu0
      %v7898 = vadd.f32 %v7718, %v7897
      %v7899 = vpop.f32.mrb[0].mxu0
      %7900 = vmatprep.mubr.f32.mxu0 0.0
      %7901 = vmatmul.mubr.f32.gmra.mrb[0].mxu0 %v7739
      %v7902 = vpop.f32.mrb[0].mxu0
      %v7903 = vadd.f32 %v7718, %v7902
      %v7904 = vpop.f32.mrb[0].mxu0
      %7905 = vmatprep.mubr.f32.mxu0 0.0
      %7906 = vmatmul.mubr.f32.gmra.mrb[0].mxu0 %v7742
      %v7907 = vpop.f32.mrb[0].mxu0
      %v7908 = vadd.f32 %v7718, %v7907
      %v7909 = vpop.f32.mrb[0].mxu0
      %7910 = vmatprep.mubr.f32.mxu0 0.0
      %7911 = vmatmul.mubr.f32.gmra.mrb[0].mxu0 %v7745
      %v7912 = vpop.f32.mrb[0].mxu0
      %v7913 = vadd.f32 %v7718, %v7912
      %v7914 = vpop.f32.mrb[0].mxu0
      %7915 = vmatprep.mubr.f32.mxu0 0.0
      %7916 = vmatmul.mubr.f32.gmra.mrb[0].mxu0 %v7748
      %v7917 = vpop.f32.mrb[0].mxu0
      %v7918 = vadd.f32 %v7718, %v7917
      %v7919 = vpop.f32.mrb[0].mxu0
      %7920 = vmatprep.mubr.f32.mxu0 0.0
      %7921 = vmatmul.mubr.f32.gmra.mrb[0].mxu0 %v7751
      %v7922 = vpop.f32.mrb[0].mxu0
      %v7923 = vadd.f32 %v7718, %v7922
      %v7924 = vpop.f32.mrb[0].mxu0
      %7925 = vmatprep.mubr.f32.mxu0 0.0
      %7926 = vmatmul.mubr.f32.gmra.mrb[0].mxu0 %v7754
      %v7927 = vpop.f32.mrb[0].mxu0
      %v7928 = vadd.f32 %v7718, %v7927
      %v7929 = vpop.f32.mrb[0].mxu0
      %7930 = vmatprep.mubr.f32.mxu0 0.0
      %7931 = vmatmul.mubr.f32.gmra.mrb[0].mxu0 %v7757
      %v7932 = vpop.f32.mrb[0].mxu0
      %v7933 = vadd.f32 %v7718, %v7932
      %v7934 = vpop.f32.mrb[0].mxu0
      %7935 = vmatprep.mubr.f32.mxu0 0.0
      %7936 = vmatmul.mubr.f32.gmra.mrb[0].mxu0 %v7760
      %v7937 = vpop.f32.mrb[0].mxu0
      %v7938 = vadd.f32 %v7718, %v7937
      %v7939 = vpop.f32.mrb[0].mxu0
      %7940 = vmatprep.mubr.f32.mxu0 0.0
      %7941 = vmatmul.mubr.f32.gmra.mrb[0].mxu0 %v7763
      %v7942 = vpop.f32.mrb[0].mxu0
      %v7943 = vadd.f32 %v7718, %v7942
      %v7944 = vpop.f32.mrb[0].mxu0
      %7945 = vmatprep.mubr.f32.mxu0 0.0
      %7946 = vmatmul.mubr.f32.gmra.mrb[0].mxu0 %v7766
      %v7947 = vpop.f32.mrb[0].mxu0
      %v7948 = vadd.f32 %v7718, %v7947
      %v7949 = vpop.f32.mrb[0].mxu0
      %7950 = vmatprep.mubr.f32.mxu0 0.0
      %7951 = vmatmul.mubr.f32.gmra.mrb[0].mxu0 %v7769
      %v7952 = vpop.f32.mrb[0].mxu0
      %v7953 = vadd.f32 %v7718, %v7952
      %v7954 = vpop.f32.mrb[0].mxu0
      %7955 = vmatprep.mubr.f32.mxu0 0.0
      %7956 = vmatmul.mubr.f32.gmra.mrb[0].mxu0 %v7772
      %v7957 = vpop.f32.mrb[0].mxu0
      %v7958 = vadd.f32 %v7718, %v7957
      %v7959 = vpop.f32.mrb[0].mxu0
      %7960 = vmatprep.mubr.f32.mxu0 0.0
      %7961 = vmatmul.mubr.f32.gmra.mrb[0].mxu0 %v7775
      %v7962 = vpop.f32.mrb[0].mxu0
      %v7963 = vadd.f32 %v7718, %v7962
      %v7964 = vpop.f32.mrb[0].mxu0
      %7965 = vmatprep.mubr.f32.mxu0 0.0
      %7966 = vmatmul.mubr.f32.gmra.mrb[0].mxu0 %v7778
      %v7967 = vpop.f32.mrb[0].mxu0
      %v7968 = vadd.f32 %v7718, %v7967
      %v7969 = vpop.f32.mrb[0].mxu0
      %7970 = vmatprep.mubr.f32.mxu0 0.0
      %7971 = vmatmul.mubr.f32.gmra.mrb[0].mxu0 %v7781
      %v7972 = vpop.f32.mrb[0].mxu0
      %v7973 = vadd.f32 %v7718, %v7972
      %v7974 = vpop.f32.mrb[0].mxu0
      %7975 = vmatprep.mubr.f32.mxu0 0.0
      %7976 = vmatmul.mubr.f32.gmra.mrb[0].mxu0 %v7784
      %v7977 = vpop.f32.mrb[0].mxu0
      %v7978 = vadd.f32 %v7718, %v7977
      %v7979 = vpop.f32.mrb[0].mxu0
      %7980 = vmatprep.mubr.f32.mxu0 0.0
      %7981 = vmatmul.mubr.f32.gmra.mrb[0].mxu0 %v7787
      %v7982 = vpop.f32.mrb[0].mxu0
      %v7983 = vadd.f32 %v7718, %v7982
      %v7984 = vpop.f32.mrb[0].mxu0
      %7985 = vmatprep.mubr.f32.mxu0 0.0
      %7986 = vmatmul.mubr.f32.gmra.mrb[0].mxu0 %v7790
      %v7987 = vpop.f32.mrb[0].mxu0
      %v7988 = vadd.f32 %v7718, %v7987
      %v7989 = vpop.f32.mrb[0].mxu0
      %7990 = vmatprep.mubr.f32.mxu0 0.0
      %7991 = vmatmul.mubr.f32.gmra.mrb[0].mxu0 %v7793
      %v7992 = vpop.f32.mrb[0].mxu0
      %v7993 = vadd.f32 %v7718, %v7992
      %v7994 = vpop.f32.mrb[0].mxu0
      %7995 = vmatprep.mubr.f32.mxu0 0.0
      %7996 = vmatmul.mubr.f32.gmra.mrb[0].mxu0 %v7796
      %v7997 = vpop.f32.mrb[0].mxu0
      %v7998 = vadd.f32 %v7718, %v7997
      %v7999 = vpop.f32.mrb[0].mxu0
      %8000 = vmatprep.mubr.f32.mxu0 0.0
      %8001 = vmatmul.mubr.f32.gmra.mrb[0].mxu0 %v7799
      %v8002 = vpop.f32.mrb[0].mxu0
      %v8003 = vadd.f32 %v7718, %v8002
      %v8004 = vpop.f32.mrb[0].mxu0
      %8005 = vmatprep.mubr.f32.mxu0 0.0
      %8006 = vmatmul.mubr.f32.gmra.mrb[0].mxu0 %v7802
      %v8007 = vpop.f32.mrb[0].mxu0
      %v8008 = vadd.f32 %v7718, %v8007
      %v8009 = vpop.f32.mrb[0].mxu0
      %8010 = vmatprep.mubr.f32.mxu0 0.0
      %8011 = vmatmul.mubr.f32.gmra.mrb[0].mxu0 %v7805
      %v8012 = vpop.f32.mrb[0].mxu0
      %v8013 = vadd.f32 %v7718, %v8012
      %v8014 = vpop.f32.mrb[0].mxu0
      %8015 = vmatprep.mubr.f32.mxu0 0.0
      %8016 = vmatmul.mubr.f32.gmra.mrb[0].mxu0 %v7808
      %v8017 = vpop.f32.mrb[0].mxu0
      %v8018 = vadd.f32 %v7718, %v8017
      %v8019 = vpop.f32.mrb[0].mxu0
      %8020 = vmatprep.mubr.f32.mxu0 0.0
      %8021 = vmatmul.mubr.f32.gmra.mrb[0].mxu0 %v7811
      %v8022 = vpop.f32.mrb[0].mxu0
      %v8023 = vadd.f32 %v7718, %v8022
      %v8024 = vpop.f32.mrb[0].mxu0
      %8025 = vmatprep.mubr.f32.mxu0 0.0
      %8026 = vmatmul.mubr.f32.gmra.mrb[0].mxu0 %v7814
      %v8027 = vpop.f32.mrb[0].mxu0
      %v8028 = vadd.f32 %v7718, %v8027
      %v8029 = vpop.f32.mrb[0].mxu0
      %8030 = vmatprep.mubr.f32.mxu0 0.0
      %8031 = vmatmul.mubr.f32.gmra.mrb[0].mxu0 %v7817
      %v8032 = vpop.f32.mrb[0].mxu0
      %v8033 = vadd.f32 %v7718, %v8032
      %v8034 = vpop.f32.mrb[0].mxu0
      %8035 = vmatprep.mubr.f32.mxu0 0.0
      %8036 = vmatmul.mubr.f32.gmra.mrb[0].mxu0 %v7820
      %v8037 = vpop.f32.mrb[0].mxu0
      %v8038 = vadd.f32 %v7718, %v8037
      %v8039 = vpop.f32.mrb[0].mxu0
      %8040 = vmatprep.mubr.f32.mxu0 0.0
      %8041 = vmatmul.mubr.f32.gmra.mrb[0].mxu0 %v7823
      %v8042 = vpop.f32.mrb[0].mxu0
      %v8043 = vadd.f32 %v7718, %v8042
      %v8044 = vpop.f32.mrb[0].mxu0
      %8045 = vmatprep.mubr.f32.mxu0 0.0
      %8046 = vmatmul.mubr.f32.gmra.mrb[0].mxu0 %v7826
      %v8047 = vpop.f32.mrb[0].mxu0
      %v8048 = vadd.f32 %v7718, %v8047
      %v8049 = vpop.f32.mrb[0].mxu0
      %8050 = vmatprep.mubr.f32.mxu0 0.0
      %8051 = vmatmul.mubr.f32.gmra.mrb[0].mxu0 %v7829
      %v8052 = vpop.f32.mrb[0].mxu0
      %v8053 = vadd.f32 %v7718, %v8052
      %v8054 = vpop.f32.mrb[0].mxu0
      %8055 = vdwg.mxu0
      %v8056 = vsel %vm286, %v7898, 0.0
      %8057 = vadd.xlane.f32.xlu0 %v8056
      %v8058 = vpop.xlane.xlu0 %8057
      %v8059 = vsel %vm286, %v7903, 0.0
      %8060 = vadd.xlane.f32.xlu0 %v8059
      %v8061 = vpop.xlane.xlu0 %8060
      %v8062 = vsel %vm286, %v7908, 0.0
      %8063 = vadd.xlane.f32.xlu0 %v8062
      %v8064 = vpop.xlane.xlu0 %8063
      %v8065 = vsel %vm286, %v7913, 0.0
      %8066 = vadd.xlane.f32.xlu0 %v8065
      %v8067 = vpop.xlane.xlu0 %8066
      %v8068 = vsel %vm286, %v7918, 0.0
      %8069 = vadd.xlane.f32.xlu0 %v8068
      %v8070 = vpop.xlane.xlu0 %8069
      %v8071 = vsel %vm286, %v7923, 0.0
      %8072 = vadd.xlane.f32.xlu0 %v8071
      %v8073 = vpop.xlane.xlu0 %8072
      %v8074 = vsel %vm286, %v7928, 0.0
      %8075 = vadd.xlane.f32.xlu0 %v8074
      %v8076 = vpop.xlane.xlu0 %8075
      %v8077 = vsel %vm286, %v7933, 0.0
      %8078 = vadd.xlane.f32.xlu0 %v8077
      %v8079 = vpop.xlane.xlu0 %8078
      %v8080 = vsel %vm286, %v7938, 0.0
      %8081 = vadd.xlane.f32.xlu0 %v8080
      %v8082 = vpop.xlane.xlu0 %8081
      %v8083 = vsel %vm286, %v7943, 0.0
      %8084 = vadd.xlane.f32.xlu0 %v8083
      %v8085 = vpop.xlane.xlu0 %8084
      %v8086 = vsel %vm286, %v7948, 0.0
      %8087 = vadd.xlane.f32.xlu0 %v8086
      %v8088 = vpop.xlane.xlu0 %8087
      %v8089 = vsel %vm286, %v7953, 0.0
      %8090 = vadd.xlane.f32.xlu0 %v8089
      %v8091 = vpop.xlane.xlu0 %8090
      %v8092 = vsel %vm286, %v7958, 0.0
      %8093 = vadd.xlane.f32.xlu0 %v8092
      %v8094 = vpop.xlane.xlu0 %8093
      %v8095 = vsel %vm286, %v7963, 0.0
      %8096 = vadd.xlane.f32.xlu0 %v8095
      %v8097 = vpop.xlane.xlu0 %8096
      %v8098 = vsel %vm286, %v7968, 0.0
      %8099 = vadd.xlane.f32.xlu0 %v8098
      %v8100 = vpop.xlane.xlu0 %8099
      %v8101 = vsel %vm286, %v7973, 0.0
      %8102 = vadd.xlane.f32.xlu0 %v8101
      %v8103 = vpop.xlane.xlu0 %8102
      %v8104 = vsel %vm286, %v7978, 0.0
      %8105 = vadd.xlane.f32.xlu0 %v8104
      %v8106 = vpop.xlane.xlu0 %8105
      %v8107 = vsel %vm286, %v7983, 0.0
      %8108 = vadd.xlane.f32.xlu0 %v8107
      %v8109 = vpop.xlane.xlu0 %8108
      %v8110 = vsel %vm286, %v7988, 0.0
      %8111 = vadd.xlane.f32.xlu0 %v8110
      %v8112 = vpop.xlane.xlu0 %8111
      %v8113 = vsel %vm286, %v7993, 0.0
      %8114 = vadd.xlane.f32.xlu0 %v8113
      %v8115 = vpop.xlane.xlu0 %8114
      %v8116 = vsel %vm286, %v7998, 0.0
      %8117 = vadd.xlane.f32.xlu0 %v8116
      %v8118 = vpop.xlane.xlu0 %8117
      %v8119 = vsel %vm286, %v8003, 0.0
      %8120 = vadd.xlane.f32.xlu0 %v8119
      %v8121 = vpop.xlane.xlu0 %8120
      %v8122 = vsel %vm286, %v8008, 0.0
      %8123 = vadd.xlane.f32.xlu0 %v8122
      %v8124 = vpop.xlane.xlu0 %8123
      %v8125 = vsel %vm286, %v8013, 0.0
      %8126 = vadd.xlane.f32.xlu0 %v8125
      %v8127 = vpop.xlane.xlu0 %8126
      %v8128 = vsel %vm286, %v8018, 0.0
      %8129 = vadd.xlane.f32.xlu0 %v8128
      %v8130 = vpop.xlane.xlu0 %8129
      %v8131 = vsel %vm286, %v8023, 0.0
      %8132 = vadd.xlane.f32.xlu0 %v8131
      %v8133 = vpop.xlane.xlu0 %8132
      %v8134 = vsel %vm286, %v8028, 0.0
      %8135 = vadd.xlane.f32.xlu0 %v8134
      %v8136 = vpop.xlane.xlu0 %8135
      %v8137 = vsel %vm286, %v8033, 0.0
      %8138 = vadd.xlane.f32.xlu0 %v8137
      %v8139 = vpop.xlane.xlu0 %8138
      %v8140 = vsel %vm286, %v8038, 0.0
      %8141 = vadd.xlane.f32.xlu0 %v8140
      %v8142 = vpop.xlane.xlu0 %8141
      %v8143 = vsel %vm286, %v8043, 0.0
      %8144 = vadd.xlane.f32.xlu0 %v8143
      %v8145 = vpop.xlane.xlu0 %8144
      %v8146 = vsel %vm286, %v8048, 0.0
      %8147 = vadd.xlane.f32.xlu0 %v8146
      %v8148 = vpop.xlane.xlu0 %8147
      %v8149 = vsel %vm286, %v8053, 0.0
      %8150 = vadd.xlane.f32.xlu0 %v8149
      %v8151 = vpop.xlane.xlu0 %8150
      %v8152 = vmul.f32 %v8058, %v6285
      %v8153 = vmul.f32 %v8061, %v6285
      %v8154 = vmul.f32 %v8064, %v6285
      %v8155 = vmul.f32 %v8067, %v6285
      %v8156 = vmul.f32 %v8070, %v6285
      %v8157 = vmul.f32 %v8073, %v6285
      %v8158 = vmul.f32 %v8076, %v6285
      %v8159 = vmul.f32 %v8079, %v6285
      %v8160 = vmul.f32 %v8082, %v6285
      %v8161 = vmul.f32 %v8085, %v6285
      %v8162 = vmul.f32 %v8088, %v6285
      %v8163 = vmul.f32 %v8091, %v6285
      %v8164 = vmul.f32 %v8094, %v6285
      %v8165 = vmul.f32 %v8097, %v6285
      %v8166 = vmul.f32 %v8100, %v6285
      %v8167 = vmul.f32 %v8103, %v6285
      %v8168 = vmul.f32 %v8106, %v6285
      %v8169 = vmul.f32 %v8109, %v6285
      %v8170 = vmul.f32 %v8112, %v6285
      %v8171 = vmul.f32 %v8115, %v6285
      %v8172 = vmul.f32 %v8118, %v6285
      %v8173 = vmul.f32 %v8121, %v6285
      %v8174 = vmul.f32 %v8124, %v6285
      %v8175 = vmul.f32 %v8127, %v6285
      %v8176 = vmul.f32 %v8130, %v6285
      %v8177 = vmul.f32 %v8133, %v6285
      %v8178 = vmul.f32 %v8136, %v6285
      %v8179 = vmul.f32 %v8139, %v6285
      %v8180 = vmul.f32 %v8142, %v6285
      %v8181 = vmul.f32 %v8145, %v6285
      %v8182 = vmul.f32 %v8148, %v6285
      %v8183 = vmul.f32 %v8151, %v6285
      %v8184 = vsub.f32 %v7898, %v8152
      %v8185 = vsub.f32 %v7903, %v8153
      %v8186 = vsub.f32 %v7908, %v8154
      %v8187 = vsub.f32 %v7913, %v8155
      %v8188 = vsub.f32 %v7918, %v8156
      %v8189 = vsub.f32 %v7923, %v8157
      %v8190 = vsub.f32 %v7928, %v8158
      %v8191 = vsub.f32 %v7933, %v8159
      %v8192 = vsub.f32 %v7938, %v8160
      %v8193 = vsub.f32 %v7943, %v8161
      %v8194 = vsub.f32 %v7948, %v8162
      %v8195 = vsub.f32 %v7953, %v8163
      %v8196 = vsub.f32 %v7958, %v8164
      %v8197 = vsub.f32 %v7963, %v8165
      %v8198 = vsub.f32 %v7968, %v8166
      %v8199 = vsub.f32 %v7973, %v8167
      %v8200 = vsub.f32 %v7978, %v8168
      %v8201 = vsub.f32 %v7983, %v8169
      %v8202 = vsub.f32 %v7988, %v8170
      %v8203 = vsub.f32 %v7993, %v8171
      %v8204 = vsub.f32 %v7998, %v8172
      %v8205 = vsub.f32 %v8003, %v8173
      %v8206 = vsub.f32 %v8008, %v8174
      %v8207 = vsub.f32 %v8013, %v8175
      %v8208 = vsub.f32 %v8018, %v8176
      %v8209 = vsub.f32 %v8023, %v8177
      %v8210 = vsub.f32 %v8028, %v8178
      %v8211 = vsub.f32 %v8033, %v8179
      %v8212 = vsub.f32 %v8038, %v8180
      %v8213 = vsub.f32 %v8043, %v8181
      %v8214 = vsub.f32 %v8048, %v8182
      %v8215 = vsub.f32 %v8053, %v8183
      %v8216 = vmul.f32 %v8184, %v8184
      %v8217 = vmul.f32 %v8185, %v8185
      %v8218 = vmul.f32 %v8186, %v8186
      %v8219 = vmul.f32 %v8187, %v8187
      %v8220 = vmul.f32 %v8188, %v8188
      %v8221 = vmul.f32 %v8189, %v8189
      %v8222 = vmul.f32 %v8190, %v8190
      %v8223 = vmul.f32 %v8191, %v8191
      %v8224 = vmul.f32 %v8192, %v8192
      %v8225 = vmul.f32 %v8193, %v8193
      %v8226 = vmul.f32 %v8194, %v8194
      %v8227 = vmul.f32 %v8195, %v8195
      %v8228 = vmul.f32 %v8196, %v8196
      %v8229 = vmul.f32 %v8197, %v8197
      %v8230 = vmul.f32 %v8198, %v8198
      %v8231 = vmul.f32 %v8199, %v8199
      %v8232 = vmul.f32 %v8200, %v8200
      %v8233 = vmul.f32 %v8201, %v8201
      %v8234 = vmul.f32 %v8202, %v8202
      %v8235 = vmul.f32 %v8203, %v8203
      %v8236 = vmul.f32 %v8204, %v8204
      %v8237 = vmul.f32 %v8205, %v8205
      %v8238 = vmul.f32 %v8206, %v8206
      %v8239 = vmul.f32 %v8207, %v8207
      %v8240 = vmul.f32 %v8208, %v8208
      %v8241 = vmul.f32 %v8209, %v8209
      %v8242 = vmul.f32 %v8210, %v8210
      %v8243 = vmul.f32 %v8211, %v8211
      %v8244 = vmul.f32 %v8212, %v8212
      %v8245 = vmul.f32 %v8213, %v8213
      %v8246 = vmul.f32 %v8214, %v8214
      %v8247 = vmul.f32 %v8215, %v8215
      %v8248 = vsel %vm286, %v8216, 0.0
      %8249 = vadd.xlane.f32.xlu0 %v8248
      %v8250 = vpop.xlane.xlu0 %8249
      %v8251 = vsel %vm286, %v8217, 0.0
      %8252 = vadd.xlane.f32.xlu0 %v8251
      %v8253 = vpop.xlane.xlu0 %8252
      %v8254 = vsel %vm286, %v8218, 0.0
      %8255 = vadd.xlane.f32.xlu0 %v8254
      %v8256 = vpop.xlane.xlu0 %8255
      %v8257 = vsel %vm286, %v8219, 0.0
      %8258 = vadd.xlane.f32.xlu0 %v8257
      %v8259 = vpop.xlane.xlu0 %8258
      %v8260 = vsel %vm286, %v8220, 0.0
      %8261 = vadd.xlane.f32.xlu0 %v8260
      %v8262 = vpop.xlane.xlu0 %8261
      %v8263 = vsel %vm286, %v8221, 0.0
      %8264 = vadd.xlane.f32.xlu0 %v8263
      %v8265 = vpop.xlane.xlu0 %8264
      %v8266 = vsel %vm286, %v8222, 0.0
      %8267 = vadd.xlane.f32.xlu0 %v8266
      %v8268 = vpop.xlane.xlu0 %8267
      %v8269 = vsel %vm286, %v8223, 0.0
      %8270 = vadd.xlane.f32.xlu0 %v8269
      %v8271 = vpop.xlane.xlu0 %8270
      %v8272 = vsel %vm286, %v8224, 0.0
      %8273 = vadd.xlane.f32.xlu0 %v8272
      %v8274 = vpop.xlane.xlu0 %8273
      %v8275 = vsel %vm286, %v8225, 0.0
      %8276 = vadd.xlane.f32.xlu0 %v8275
      %v8277 = vpop.xlane.xlu0 %8276
      %v8278 = vsel %vm286, %v8226, 0.0
      %8279 = vadd.xlane.f32.xlu0 %v8278
      %v8280 = vpop.xlane.xlu0 %8279
      %v8281 = vsel %vm286, %v8227, 0.0
      %8282 = vadd.xlane.f32.xlu0 %v8281
      %v8283 = vpop.xlane.xlu0 %8282
      %v8284 = vsel %vm286, %v8228, 0.0
      %8285 = vadd.xlane.f32.xlu0 %v8284
      %v8286 = vpop.xlane.xlu0 %8285
      %v8287 = vsel %vm286, %v8229, 0.0
      %8288 = vadd.xlane.f32.xlu0 %v8287
      %v8289 = vpop.xlane.xlu0 %8288
      %v8290 = vsel %vm286, %v8230, 0.0
      %8291 = vadd.xlane.f32.xlu0 %v8290
      %v8292 = vpop.xlane.xlu0 %8291
      %v8293 = vsel %vm286, %v8231, 0.0
      %8294 = vadd.xlane.f32.xlu0 %v8293
      %v8295 = vpop.xlane.xlu0 %8294
      %v8296 = vsel %vm286, %v8232, 0.0
      %8297 = vadd.xlane.f32.xlu0 %v8296
      %v8298 = vpop.xlane.xlu0 %8297
      %v8299 = vsel %vm286, %v8233, 0.0
      %8300 = vadd.xlane.f32.xlu0 %v8299
      %v8301 = vpop.xlane.xlu0 %8300
      %v8302 = vsel %vm286, %v8234, 0.0
      %8303 = vadd.xlane.f32.xlu0 %v8302
      %v8304 = vpop.xlane.xlu0 %8303
      %v8305 = vsel %vm286, %v8235, 0.0
      %8306 = vadd.xlane.f32.xlu0 %v8305
      %v8307 = vpop.xlane.xlu0 %8306
      %v8308 = vsel %vm286, %v8236, 0.0
      %8309 = vadd.xlane.f32.xlu0 %v8308
      %v8310 = vpop.xlane.xlu0 %8309
      %v8311 = vsel %vm286, %v8237, 0.0
      %8312 = vadd.xlane.f32.xlu0 %v8311
      %v8313 = vpop.xlane.xlu0 %8312
      %v8314 = vsel %vm286, %v8238, 0.0
      %8315 = vadd.xlane.f32.xlu0 %v8314
      %v8316 = vpop.xlane.xlu0 %8315
      %v8317 = vsel %vm286, %v8239, 0.0
      %8318 = vadd.xlane.f32.xlu0 %v8317
      %v8319 = vpop.xlane.xlu0 %8318
      %v8320 = vsel %vm286, %v8240, 0.0
      %8321 = vadd.xlane.f32.xlu0 %v8320
      %v8322 = vpop.xlane.xlu0 %8321
      %v8323 = vsel %vm286, %v8241, 0.0
      %8324 = vadd.xlane.f32.xlu0 %v8323
      %v8325 = vpop.xlane.xlu0 %8324
      %v8326 = vsel %vm286, %v8242, 0.0
      %8327 = vadd.xlane.f32.xlu0 %v8326
      %v8328 = vpop.xlane.xlu0 %8327
      %v8329 = vsel %vm286, %v8243, 0.0
      %8330 = vadd.xlane.f32.xlu0 %v8329
      %v8331 = vpop.xlane.xlu0 %8330
      %v8332 = vsel %vm286, %v8244, 0.0
      %8333 = vadd.xlane.f32.xlu0 %v8332
      %v8334 = vpop.xlane.xlu0 %8333
      %v8335 = vsel %vm286, %v8245, 0.0
      %8336 = vadd.xlane.f32.xlu0 %v8335
      %v8337 = vpop.xlane.xlu0 %8336
      %v8338 = vsel %vm286, %v8246, 0.0
      %8339 = vadd.xlane.f32.xlu0 %v8338
      %v8340 = vpop.xlane.xlu0 %8339
      %v8341 = vsel %vm286, %v8247, 0.0
      %8342 = vadd.xlane.f32.xlu0 %v8341
      %v8343 = vpop.xlane.xlu0 %8342
      %v8344 = vmul.f32 %v8250, %v6285
      %v8345 = vmul.f32 %v8253, %v6285
      %v8346 = vmul.f32 %v8256, %v6285
      %v8347 = vmul.f32 %v8259, %v6285
      %v8348 = vmul.f32 %v8262, %v6285
      %v8349 = vmul.f32 %v8265, %v6285
      %v8350 = vmul.f32 %v8268, %v6285
      %v8351 = vmul.f32 %v8271, %v6285
      %v8352 = vmul.f32 %v8274, %v6285
      %v8353 = vmul.f32 %v8277, %v6285
      %v8354 = vmul.f32 %v8280, %v6285
      %v8355 = vmul.f32 %v8283, %v6285
      %v8356 = vmul.f32 %v8286, %v6285
      %v8357 = vmul.f32 %v8289, %v6285
      %v8358 = vmul.f32 %v8292, %v6285
      %v8359 = vmul.f32 %v8295, %v6285
      %v8360 = vmul.f32 %v8298, %v6285
      %v8361 = vmul.f32 %v8301, %v6285
      %v8362 = vmul.f32 %v8304, %v6285
      %v8363 = vmul.f32 %v8307, %v6285
      %v8364 = vmul.f32 %v8310, %v6285
      %v8365 = vmul.f32 %v8313, %v6285
      %v8366 = vmul.f32 %v8316, %v6285
      %v8367 = vmul.f32 %v8319, %v6285
      %v8368 = vmul.f32 %v8322, %v6285
      %v8369 = vmul.f32 %v8325, %v6285
      %v8370 = vmul.f32 %v8328, %v6285
      %v8371 = vmul.f32 %v8331, %v6285
      %v8372 = vmul.f32 %v8334, %v6285
      %v8373 = vmul.f32 %v8337, %v6285
      %v8374 = vmul.f32 %v8340, %v6285
      %v8375 = vmul.f32 %v8343, %v6285
      %v8376 = vadd.f32 %v8344, 1e-05
      %v8377 = vadd.f32 %v8345, 1e-05
      %v8378 = vadd.f32 %v8346, 1e-05
      %v8379 = vadd.f32 %v8347, 1e-05
      %v8380 = vadd.f32 %v8348, 1e-05
      %v8381 = vadd.f32 %v8349, 1e-05
      %v8382 = vadd.f32 %v8350, 1e-05
      %v8383 = vadd.f32 %v8351, 1e-05
      %v8384 = vadd.f32 %v8352, 1e-05
      %v8385 = vadd.f32 %v8353, 1e-05
      %v8386 = vadd.f32 %v8354, 1e-05
      %v8387 = vadd.f32 %v8355, 1e-05
      %v8388 = vadd.f32 %v8356, 1e-05
      %v8389 = vadd.f32 %v8357, 1e-05
      %v8390 = vadd.f32 %v8358, 1e-05
      %v8391 = vadd.f32 %v8359, 1e-05
      %v8392 = vadd.f32 %v8360, 1e-05
      %v8393 = vadd.f32 %v8361, 1e-05
      %v8394 = vadd.f32 %v8362, 1e-05
      %v8395 = vadd.f32 %v8363, 1e-05
      %v8396 = vadd.f32 %v8364, 1e-05
      %v8397 = vadd.f32 %v8365, 1e-05
      %v8398 = vadd.f32 %v8366, 1e-05
      %v8399 = vadd.f32 %v8367, 1e-05
      %v8400 = vadd.f32 %v8368, 1e-05
      %v8401 = vadd.f32 %v8369, 1e-05
      %v8402 = vadd.f32 %v8370, 1e-05
      %v8403 = vadd.f32 %v8371, 1e-05
      %v8404 = vadd.f32 %v8372, 1e-05
      %v8405 = vadd.f32 %v8373, 1e-05
      %v8406 = vadd.f32 %v8374, 1e-05
      %v8407 = vadd.f32 %v8375, 1e-05
      %v8408 = vrsqrt.pop %v8376
      %v8409 = vrsqrt.pop %v8377
      %v8410 = vrsqrt.pop %v8378
      %v8411 = vrsqrt.pop %v8379
      %v8412 = vrsqrt.pop %v8380
      %v8413 = vrsqrt.pop %v8381
      %v8414 = vrsqrt.pop %v8382
      %v8415 = vrsqrt.pop %v8383
      %v8416 = vrsqrt.pop %v8384
      %v8417 = vrsqrt.pop %v8385
      %v8418 = vrsqrt.pop %v8386
      %v8419 = vrsqrt.pop %v8387
      %v8420 = vrsqrt.pop %v8388
      %v8421 = vrsqrt.pop %v8389
      %v8422 = vrsqrt.pop %v8390
      %v8423 = vrsqrt.pop %v8391
      %v8424 = vrsqrt.pop %v8392
      %v8425 = vrsqrt.pop %v8393
      %v8426 = vrsqrt.pop %v8394
      %v8427 = vrsqrt.pop %v8395
      %v8428 = vrsqrt.pop %v8396
      %v8429 = vrsqrt.pop %v8397
      %v8430 = vrsqrt.pop %v8398
      %v8431 = vrsqrt.pop %v8399
      %v8432 = vrsqrt.pop %v8400
      %v8433 = vrsqrt.pop %v8401
      %v8434 = vrsqrt.pop %v8402
      %v8435 = vrsqrt.pop %v8403
      %v8436 = vrsqrt.pop %v8404
      %v8437 = vrsqrt.pop %v8405
      %v8438 = vrsqrt.pop %v8406
      %v8439 = vrsqrt.pop %v8407
      %v8440 = vmul.f32 %v8184, %v8408
      %v8441 = vmul.f32 %v8185, %v8409
      %v8442 = vmul.f32 %v8186, %v8410
      %v8443 = vmul.f32 %v8187, %v8411
      %v8444 = vmul.f32 %v8188, %v8412
      %v8445 = vmul.f32 %v8189, %v8413
      %v8446 = vmul.f32 %v8190, %v8414
      %v8447 = vmul.f32 %v8191, %v8415
      %v8448 = vmul.f32 %v8192, %v8416
      %v8449 = vmul.f32 %v8193, %v8417
      %v8450 = vmul.f32 %v8194, %v8418
      %v8451 = vmul.f32 %v8195, %v8419
      %v8452 = vmul.f32 %v8196, %v8420
      %v8453 = vmul.f32 %v8197, %v8421
      %v8454 = vmul.f32 %v8198, %v8422
      %v8455 = vmul.f32 %v8199, %v8423
      %v8456 = vmul.f32 %v8200, %v8424
      %v8457 = vmul.f32 %v8201, %v8425
      %v8458 = vmul.f32 %v8202, %v8426
      %v8459 = vmul.f32 %v8203, %v8427
      %v8460 = vmul.f32 %v8204, %v8428
      %v8461 = vmul.f32 %v8205, %v8429
      %v8462 = vmul.f32 %v8206, %v8430
      %v8463 = vmul.f32 %v8207, %v8431
      %v8464 = vmul.f32 %v8208, %v8432
      %v8465 = vmul.f32 %v8209, %v8433
      %v8466 = vmul.f32 %v8210, %v8434
      %v8467 = vmul.f32 %v8211, %v8435
      %v8468 = vmul.f32 %v8212, %v8436
      %v8469 = vmul.f32 %v8213, %v8437
      %v8470 = vmul.f32 %v8214, %v8438
      %v8471 = vmul.f32 %v8215, %v8439
      %v8472 = vlaneseq
      %v8473 = vshrl.u32 %v8472, 7
      %v8474 = vsub.s32 0, %v8473
      %v8475 = vrot.slane %v5959, %v8474
      %v8476 = vmul.f32 %v8440, %v8475
      %v8477 = vmul.f32 %v8441, %v8475
      %v8478 = vmul.f32 %v8442, %v8475
      %v8479 = vmul.f32 %v8443, %v8475
      %v8480 = vmul.f32 %v8444, %v8475
      %v8481 = vmul.f32 %v8445, %v8475
      %v8482 = vmul.f32 %v8446, %v8475
      %v8483 = vmul.f32 %v8447, %v8475
      %v8484 = vmul.f32 %v8448, %v8475
      %v8485 = vmul.f32 %v8449, %v8475
      %v8486 = vmul.f32 %v8450, %v8475
      %v8487 = vmul.f32 %v8451, %v8475
      %v8488 = vmul.f32 %v8452, %v8475
      %v8489 = vmul.f32 %v8453, %v8475
      %v8490 = vmul.f32 %v8454, %v8475
      %v8491 = vmul.f32 %v8455, %v8475
      %v8492 = vmul.f32 %v8456, %v8475
      %v8493 = vmul.f32 %v8457, %v8475
      %v8494 = vmul.f32 %v8458, %v8475
      %v8495 = vmul.f32 %v8459, %v8475
      %v8496 = vmul.f32 %v8460, %v8475
      %v8497 = vmul.f32 %v8461, %v8475
      %v8498 = vmul.f32 %v8462, %v8475
      %v8499 = vmul.f32 %v8463, %v8475
      %v8500 = vmul.f32 %v8464, %v8475
      %v8501 = vmul.f32 %v8465, %v8475
      %v8502 = vmul.f32 %v8466, %v8475
      %v8503 = vmul.f32 %v8467, %v8475
      %v8504 = vmul.f32 %v8468, %v8475
      %v8505 = vmul.f32 %v8469, %v8475
      %v8506 = vmul.f32 %v8470, %v8475
      %v8507 = vmul.f32 %v8471, %v8475
      %v8508 = vlaneseq
      %v8509 = vshrl.u32 %v8508, 7
      %v8510 = vsub.s32 0, %v8509
      %v8511 = vrot.slane %v5960, %v8510
      %v8512 = vadd.f32 %v8476, %v8511
      %v8513 = vadd.f32 %v8477, %v8511
      %v8514 = vadd.f32 %v8478, %v8511
      %v8515 = vadd.f32 %v8479, %v8511
      %v8516 = vadd.f32 %v8480, %v8511
      %v8517 = vadd.f32 %v8481, %v8511
      %v8518 = vadd.f32 %v8482, %v8511
      %v8519 = vadd.f32 %v8483, %v8511
      %v8520 = vadd.f32 %v8484, %v8511
      %v8521 = vadd.f32 %v8485, %v8511
      %v8522 = vadd.f32 %v8486, %v8511
      %v8523 = vadd.f32 %v8487, %v8511
      %v8524 = vadd.f32 %v8488, %v8511
      %v8525 = vadd.f32 %v8489, %v8511
      %v8526 = vadd.f32 %v8490, %v8511
      %v8527 = vadd.f32 %v8491, %v8511
      %v8528 = vadd.f32 %v8492, %v8511
      %v8529 = vadd.f32 %v8493, %v8511
      %v8530 = vadd.f32 %v8494, %v8511
      %v8531 = vadd.f32 %v8495, %v8511
      %v8532 = vadd.f32 %v8496, %v8511
      %v8533 = vadd.f32 %v8497, %v8511
      %v8534 = vadd.f32 %v8498, %v8511
      %v8535 = vadd.f32 %v8499, %v8511
      %v8536 = vadd.f32 %v8500, %v8511
      %v8537 = vadd.f32 %v8501, %v8511
      %v8538 = vadd.f32 %v8502, %v8511
      %v8539 = vadd.f32 %v8503, %v8511
      %v8540 = vadd.f32 %v8504, %v8511
      %v8541 = vadd.f32 %v8505, %v8511
      %v8542 = vadd.f32 %v8506, %v8511
      %v8543 = vadd.f32 %v8507, %v8511
      %8544 = vst.msk [vmem:[%s248] sm:$0xff] %vm286, %v8512
      %8545 = vst.msk [vmem:[%s248 + $0x8] sm:$0xff] %vm286, %v8513
      %8546 = vst.msk [vmem:[%s248 + $0x10] sm:$0xff] %vm286, %v8514
      %8547 = vst.msk [vmem:[%s248 + $0x18] sm:$0xff] %vm286, %v8515
      %8548 = vst.msk [vmem:[%s248 + $0x20] sm:$0xff] %vm286, %v8516
      %8549 = vst.msk [vmem:[%s248 + $0x28] sm:$0xff] %vm286, %v8517
      %8550 = vst.msk [vmem:[%s248 + $0x30] sm:$0xff] %vm286, %v8518
      %8551 = vst.msk [vmem:[%s248 + $0x38] sm:$0xff] %vm286, %v8519
      %8552 = vst.msk [vmem:[%s248 + $0x40] sm:$0xff] %vm286, %v8520
      %8553 = vst.msk [vmem:[%s248 + $0x48] sm:$0xff] %vm286, %v8521
      %8554 = vst.msk [vmem:[%s248 + $0x50] sm:$0xff] %vm286, %v8522
      %8555 = vst.msk [vmem:[%s248 + $0x58] sm:$0xff] %vm286, %v8523
      %8556 = vst.msk [vmem:[%s248 + $0x60] sm:$0xff] %vm286, %v8524
      %8557 = vst.msk [vmem:[%s248 + $0x68] sm:$0xff] %vm286, %v8525
      %8558 = vst.msk [vmem:[%s248 + $0x70] sm:$0xff] %vm286, %v8526
      %8559 = vst.msk [vmem:[%s248 + $0x78] sm:$0xff] %vm286, %v8527
      %8560 = vst.msk [vmem:[%s248 + $0x80] sm:$0xff] %vm286, %v8528
      %8561 = vst.msk [vmem:[%s248 + $0x88] sm:$0xff] %vm286, %v8529
      %8562 = vst.msk [vmem:[%s248 + $0x90] sm:$0xff] %vm286, %v8530
      %8563 = vst.msk [vmem:[%s248 + $0x98] sm:$0xff] %vm286, %v8531
      %8564 = vst.msk [vmem:[%s248 + $0xa0] sm:$0xff] %vm286, %v8532
      %8565 = vst.msk [vmem:[%s248 + $0xa8] sm:$0xff] %vm286, %v8533
      %8566 = vst.msk [vmem:[%s248 + $0xb0] sm:$0xff] %vm286, %v8534
      %8567 = vst.msk [vmem:[%s248 + $0xb8] sm:$0xff] %vm286, %v8535
      %8568 = vst.msk [vmem:[%s248 + $0xc0] sm:$0xff] %vm286, %v8536
      %8569 = vst.msk [vmem:[%s248 + $0xc8] sm:$0xff] %vm286, %v8537
      %8570 = vst.msk [vmem:[%s248 + $0xd0] sm:$0xff] %vm286, %v8538
      %8571 = vst.msk [vmem:[%s248 + $0xd8] sm:$0xff] %vm286, %v8539
      %8572 = vst.msk [vmem:[%s248 + $0xe0] sm:$0xff] %vm286, %v8540
      %8573 = vst.msk [vmem:[%s248 + $0xe8] sm:$0xff] %vm286, %v8541
      %8574 = vst.msk [vmem:[%s248 + $0xf0] sm:$0xff] %vm286, %v8542
      %8575 = vst.msk [vmem:[%s248 + $0xf8] sm:$0xff] %vm286, %v8543
      %s8576 = smul.u32 32, %s16
      %p8577 = scmp.lt.s32.totalorder %s8576, 95
      %s8578 = scalar_select %p8577, %s8576, 95
      %s8579 = smul.addr %s8578, 8
      %s8580 = scalar_lea.vmem %s5, %s8579
      // Predicated region
      $region41: #{tpu_custom_call.1} parent=39 // pred_check
        %p8581 = pneg %p149
      $region42: #{tpu_custom_call.1} parent=39 // pred_check_branch
        %8583 = sbr.rel (%p8581) target = $region44
      $region43: #{tpu_custom_call.1} parent=39 // pred_region
        %s8584 = smul.u32 32, %s16
      $region44: #{tpu_custom_call.1} parent=39 // pred_fallthru
        _
    $region40: #{tpu_custom_call.1} parent=5 // pred_fallthru
      _
    %p8585 = scmp.le.s32.totalorder 2, %s11
    // Predicated region
    $region45: #{tpu_custom_call.1} parent=5 // pred_check
      %p8586 = pneg %p8585
    $region46: #{tpu_custom_call.1} parent=5 // pred_check_branch
      %8588 = sbr.rel (%p8586) target = $region48
    $region47: #{tpu_custom_call.1} parent=5 // pred_region
      %s8589 = ssub.s32 %s11, 2
      // Predicated region
      $region49: #{tpu_custom_call.1} parent=47 // pred_check
        %p8590 = pneg %p155
      $region50: #{tpu_custom_call.1} parent=47 // pred_check_branch
        %8592 = sbr.rel (%p8590) target = $region52
      $region51: #{tpu_custom_call.1} parent=47 // pred_region
        %s8593 = smul.u32 32, %s17
        %p8594 = scmp.lt.s32.totalorder %s8593, 95
        %s8595 = scalar_select %p8594, %s8593, 95
        %s8596 = smul.addr %s8595, 8
        %s8597 = scalar_lea.vmem %s5, %s8596
      $region52: #{tpu_custom_call.1} parent=47 // pred_fallthru
        _
    $region48: #{tpu_custom_call.1} parent=5 // pred_fallthru
      _
  $region6: #{tpu_custom_call.1} parent=0 // loop_footer
    %s15 = sadd.s32 1, %s11
  $region7: #{tpu_custom_call.1} parent=0 // loop_footer_branch
    %10 = sbr.rel target = $region3
  $region8: #{tpu_custom_call.1} parent=0 // loop_exit
    _

</llo_original>
